<compile_context>
chip_gen: v7x
topology: tpu7x:2x2x1
jax: 0.10.0
libtpu: 0.0.40
codegen_flags: <defaults>
</compile_context>

<pallas_src>
import functools

import jax
import jax.numpy as jnp
from jax.experimental import pallas as pl
from jax.experimental.pallas import tpu as pltpu


def _round_up(x, m):
    return (x + m - 1) // m * m


# -----------------------------------------------------------------------------
# Fused Pallas kernel: all LSTM layers + FC projection in one invocation.
# -----------------------------------------------------------------------------
def _fused_lstm_fc_kernel(x_ref, wih0_t_ref, wih_rest_t_ref, whh_t_ref,
                          b_ref, h0_ref, c0_ref, fc_w_t_ref, fc_b_ref,
                          out_ref, hn_ref, cn_ref,
                          gx_sc, y_sc, yfc_sc,
                          *, num_layers, seq_len, b_tile, hidden_pad, unroll):
    T, Bt, Hp = seq_len, b_tile, hidden_pad
    G = 4 * Hp

    for layer in range(num_layers):                        # static layer loop
        # --- hoisted input projection: all T timesteps in one bf16 matmul ---
        if layer == 0:
            layer_in = x_ref[...].reshape(T * Bt, -1)      # (T*Bt, D_pad) f32
            w_ih_t = wih0_t_ref[...]                       # (D_pad, 4Hp) bf16
        else:
            layer_in = y_sc[...].reshape(T * Bt, Hp)       # (T*Bt, Hp)  f32
            w_ih_t = wih_rest_t_ref[layer - 1]             # (Hp, 4Hp)   bf16
        gx = jnp.dot(layer_in.astype(jnp.bfloat16), w_ih_t,
                     preferred_element_type=jnp.float32)
        gx_sc[...] = (gx + b_ref[layer]).reshape(T, Bt, G)

        # --- serial recurrence: (h, c) are loop-carried (no VMEM round-trip)
        def step(t, carry):
            h_prev, c_prev = carry
            gates = gx_sc[t] + jnp.dot(h_prev.astype(jnp.bfloat16),
                                       whh_t_ref[layer],
                                       preferred_element_type=jnp.float32)
            # gate order permuted to [i, f, o, g] in the wrapper:
            sig = jax.nn.sigmoid(gates[:, :3 * Hp])        # one EUP slab (i,f,o)
            i_g = sig[:, 0 * Hp:1 * Hp]
            f_g = sig[:, 1 * Hp:2 * Hp]
            o_g = sig[:, 2 * Hp:3 * Hp]
            g_g = jnp.tanh(gates[:, 3 * Hp:4 * Hp])
            c_new = f_g * c_prev + i_g * g_g
            h_new = o_g * jnp.tanh(c_new)
            y_sc[t] = h_new                                # leading-axis store
            return (h_new, c_new)

        h_fin, c_fin = jax.lax.fori_loop(
            0, T, step, (h0_ref[layer], c0_ref[layer]), unroll=unroll)

        hn_ref[layer] = h_fin                              # one write per layer
        cn_ref[layer] = c_fin

    # --- FC head: single deep-K (Bt, T*Hp) @ (T*Hp, O_pad) matmul -----------
    for t in range(T):                                     # static, lane-aligned
        yfc_sc[:, t * Hp:(t + 1) * Hp] = y_sc[t]
    out_ref[...] = (jnp.dot(yfc_sc[...].astype(jnp.bfloat16), fc_w_t_ref[...],
                            preferred_element_type=jnp.float32)
                    + fc_b_ref[...])                       # lane-dense store


# -----------------------------------------------------------------------------
# Model wrapper
# -----------------------------------------------------------------------------
class LSTMRegressorPallas:
    """JAX/Pallas equivalent of the PyTorch LSTMRegressor (unidirectional)."""

    def __init__(self, input_size, hidden_size, num_layers, out_size,
                 max_length, key):
        self.input_size = input_size
        self.hidden_size = hidden_size
        self.num_layers = num_layers
        self.out_size = out_size
        self.max_length = max_length
        self.bidirectional = 1

        k = 1.0 / jnp.sqrt(hidden_size)
        keys = jax.random.split(key, num_layers * 4 + 2)
        self.lstm_params = []
        for layer in range(num_layers):
            d_in = input_size if layer == 0 else hidden_size
            kk = keys[layer * 4: layer * 4 + 4]
            w_ih = jax.random.uniform(kk[0], (4 * hidden_size, d_in),
                                      jnp.float32, -k, k)
            w_hh = jax.random.uniform(kk[1], (4 * hidden_size, hidden_size),
                                      jnp.float32, -k, k)
            b_ih = jax.random.uniform(kk[2], (4 * hidden_size,),
                                      jnp.float32, -k, k)
            b_hh = jax.random.uniform(kk[3], (4 * hidden_size,),
                                      jnp.float32, -k, k)
            self.lstm_params.append((w_ih, w_hh, b_ih, b_hh))

        fc_in = hidden_size * self.bidirectional * max_length
        kf = 1.0 / jnp.sqrt(fc_in)
        self.fc_w = jax.random.uniform(keys[-2], (out_size, fc_in),
                                       jnp.float32, -kf, kf)
        self.fc_b = jax.random.uniform(keys[-1], (out_size,),
                                       jnp.float32, -kf, kf)

    def init_hidden(self, batch_size):
        shape = (self.num_layers * self.bidirectional, batch_size,
                 self.hidden_size)
        return (jnp.zeros(shape, jnp.float32), jnp.zeros(shape, jnp.float32))

    def forward(self, x, hidden):
        # x: (batch, seq, input_size); hidden = (h0, c0), each (L, B, H)
        h0_all, c0_all = hidden
        B, T, D = x.shape
        H, L, O = self.hidden_size, self.num_layers, self.out_size
        assert T == self.max_length, "sequence length must equal max_length"

        B_TILE = 8
        B_pad = _round_up(max(B, B_TILE), B_TILE)
        D_pad = _round_up(D, 128)
        H_pad = _round_up(H, 128)
        O_pad = _round_up(O, 128)
        G = 4 * H_pad
        f32, bf16 = jnp.float32, jnp.bfloat16

        # --- inputs: time-major, zero-padded batch / feature lanes -----------
        x_t = jnp.transpose(x, (1, 0, 2))                           # (T, B, D)
        x_p = jnp.zeros((T, B_pad, D_pad), f32).at[:, :B, :D].set(x_t)
        h0_p = jnp.zeros((L, B_pad, H_pad), f32).at[:, :B, :H].set(h0_all)
        c0_p = jnp.zeros((L, B_pad, H_pad), f32).at[:, :B, :H].set(c0_all)

        # --- weights: PyTorch gate order [i,f,g,o] -> [i,f,o,g], transposed,
        #     zero-padded to (·_pad) lanes, bf16 for single-pass MXU. ---------
        def prep_ih(w, d_in, d_pad):
            blocks = (w[0 * H:1 * H], w[1 * H:2 * H],
                      w[3 * H:4 * H], w[2 * H:3 * H])               # i, f, o, g
            out = jnp.zeros((d_pad, G), f32)
            for gi, blk in enumerate(blocks):
                out = out.at[:d_in, gi * H_pad:gi * H_pad + H].set(blk.T)
            return out.astype(bf16)

        def prep_bias(b_ih, b_hh):
            b = b_ih + b_hh
            blocks = (b[0 * H:1 * H], b[1 * H:2 * H],
                      b[3 * H:4 * H], b[2 * H:3 * H])               # i, f, o, g
            out = jnp.zeros((1, G), f32)
            for gi, blk in enumerate(blocks):
                out = out.at[0, gi * H_pad:gi * H_pad + H].set(blk)
            return out

        wih0_t = prep_ih(self.lstm_params[0][0], D, D_pad)          # (D_pad, 4Hp)
        if L > 1:
            wih_rest_t = jnp.stack(
                [prep_ih(self.lstm_params[l][0], H, H_pad) for l in range(1, L)])
        else:
            wih_rest_t = jnp.zeros((1, H_pad, G), bf16)             # unused dummy
        whh_t = jnp.stack([prep_ih(p[1], H, H_pad)
                           for p in self.lstm_params])              # (L, Hp, 4Hp)
        bias = jnp.stack([prep_bias(p[2], p[3])
                          for p in self.lstm_params])               # (L, 1, 4Hp)

        # --- FC weights, lane-dense + PyTorch (B, T*H) flatten order ---------
        fc_w_3d = self.fc_w.reshape(O, T, H)
        fc_w_t = jnp.zeros((T, H_pad, O_pad), f32)
        fc_w_t = fc_w_t.at[:, :H, :O].set(jnp.transpose(fc_w_3d, (1, 2, 0)))
        fc_w_t = fc_w_t.reshape(T * H_pad, O_pad).astype(bf16)
        fc_b = jnp.zeros((1, O_pad), f32).at[0, :O].set(self.fc_b)

        kernel = functools.partial(
            _fused_lstm_fc_kernel, num_layers=L, seq_len=T, b_tile=B_TILE,
            hidden_pad=H_pad, unroll=(T if T <= 8 else 8))

        # --- explicit VMEM budget (inputs are double-buffered by pipeline) ---
        def nbytes(a):
            return int(a.size) * a.dtype.itemsize
        est = sum(map(nbytes, (x_p, wih0_t, wih_rest_t, whh_t, bias, h0_p,
                               c0_p, fc_w_t, fc_b)))
        est += 4 * (B_pad * O_pad + 2 * L * B_pad * H_pad)             # outputs
        est += 4 * (T * B_TILE * (G + H_pad) + B_TILE * T * H_pad)     # scratch
        vmem_limit = int(min(48 * 2**20, max(16 * 2**20, 3 * est)))

        grid = (B_pad // B_TILE,)
        in_specs = [
            pl.BlockSpec((T, B_TILE, D_pad), lambda b: (0, b, 0)),       # x
            pl.BlockSpec((D_pad, G), lambda b: (0, 0)),                  # W_ih^T L0
            pl.BlockSpec((max(L - 1, 1), H_pad, G), lambda b: (0, 0, 0)),
            pl.BlockSpec((L, H_pad, G), lambda b: (0, 0, 0)),            # W_hh^T
            pl.BlockSpec((L, 1, G), lambda b: (0, 0, 0)),                # bias
            pl.BlockSpec((L, B_TILE, H_pad), lambda b: (0, b, 0)),       # h0
            pl.BlockSpec((L, B_TILE, H_pad), lambda b: (0, b, 0)),       # c0
            pl.BlockSpec((T * H_pad, O_pad), lambda b: (0, 0)),          # fc W^T
            pl.BlockSpec((1, O_pad), lambda b: (0, 0)),                  # fc b
        ]
        out_specs = [
            pl.BlockSpec((B_TILE, O_pad), lambda b: (b, 0)),
            pl.BlockSpec((L, B_TILE, H_pad), lambda b: (0, b, 0)),
            pl.BlockSpec((L, B_TILE, H_pad), lambda b: (0, b, 0)),
        ]
        out_shape = (
            jax.ShapeDtypeStruct((B_pad, O_pad), f32),
            jax.ShapeDtypeStruct((L, B_pad, H_pad), f32),
            jax.ShapeDtypeStruct((L, B_pad, H_pad), f32),
        )
        scratch_shapes = [
            pltpu.VMEM((T, B_TILE, G), f32),          # hoisted gate pre-acts
            pltpu.VMEM((T, B_TILE, H_pad), f32),      # per-layer outputs
            pltpu.VMEM((B_TILE, T * H_pad), f32),     # (B, T*H) slab for FC
        ]

        out_pad, h_n, c_n = pl.pallas_call(
            kernel,
            grid=grid,
            in_specs=in_specs,
            out_specs=out_specs,
            out_shape=out_shape,
            scratch_shapes=scratch_shapes,
            compiler_params=pltpu.CompilerParams(
                dimension_semantics=("parallel",),
                vmem_limit_bytes=vmem_limit),
        )(x_p, wih0_t, wih_rest_t, whh_t, bias, h0_p, c0_p, fc_w_t, fc_b)

        out = out_pad[:B, :O]
        return out, (h_n[:, :B, :H], c_n[:, :B, :H])


# -----------------------------------------------------------------------------
# Main
# -----------------------------------------------------------------------------
if __name__ == "__main__":
    key = jax.random.PRNGKey(0)
    k_model, k_x = jax.random.split(key)

    # Small shapes consistent with the module's forward:
    batch = 2
    input_size = 16
    hidden_size = 32
    num_layers = 2
    out_size = 4
    max_length = 8      # sequence length (must equal max_length for the fc)

    model = LSTMRegressorPallas(input_size, hidden_size, num_layers,
                                out_size, max_length, k_model)

    x = jax.random.normal(k_x, (batch, max_length, input_size), jnp.float32)
    hidden = model.init_hidden(batch)

    out, (h_n, c_n) = model.forward(x, hidden)
    jax.block_until_ready((out, h_n, c_n))

    assert out.shape == (batch, out_size)
    assert h_n.shape == (num_layers, batch, hidden_size)
    assert c_n.shape == (num_layers, batch, hidden_size)
    print("KERNEL_OK")
</pallas_src>

<mosaic_0001>
module attributes {stable_mosaic.version = 11 : i64} {
  func.func @_fused_lstm_fc_kernel(%arg0: i32, %arg1: memref<8x8x128xf32, #tpu.memory_space<vmem>>, %arg2: memref<128x512xbf16, #tpu.memory_space<vmem>>, %arg3: memref<1x128x512xbf16, #tpu.memory_space<vmem>>, %arg4: memref<2x128x512xbf16, #tpu.memory_space<vmem>>, %arg5: memref<2x1x512xf32, #tpu.memory_space<vmem>>, %arg6: memref<2x8x128xf32, #tpu.memory_space<vmem>>, %arg7: memref<2x8x128xf32, #tpu.memory_space<vmem>>, %arg8: memref<1024x128xbf16, #tpu.memory_space<vmem>>, %arg9: memref<1x128xf32, #tpu.memory_space<vmem>>, %arg10: memref<8x128xf32, #tpu.memory_space<vmem>>, %arg11: memref<2x8x128xf32, #tpu.memory_space<vmem>>, %arg12: memref<2x8x128xf32, #tpu.memory_space<vmem>>, %arg13: memref<8x8x512xf32, #tpu.memory_space<vmem>>, %arg14: memref<8x8x128xf32, #tpu.memory_space<vmem>>, %arg15: memref<8x1024xf32, #tpu.memory_space<vmem>>) attributes {dimension_semantics = [#tpu.dimension_semantics<parallel>], iteration_bounds = array<i64: 1>, scalar_prefetch = 0 : i64, scratch_operands = 3 : i64, tpu.core_type = #tpu.core_type<tc>, window_params = [{transform_indices = @transform_0, window_bounds = array<i64: 8, 8, 128>}, {pipeline_mode = #tpu.pipeline_mode<synchronous>, transform_indices = @transform_1, window_bounds = array<i64: 128, 512>}, {pipeline_mode = #tpu.pipeline_mode<synchronous>, transform_indices = @transform_2, window_bounds = array<i64: 1, 128, 512>}, {pipeline_mode = #tpu.pipeline_mode<synchronous>, transform_indices = @transform_3, window_bounds = array<i64: 2, 128, 512>}, {pipeline_mode = #tpu.pipeline_mode<synchronous>, transform_indices = @transform_4, window_bounds = array<i64: 2, 1, 512>}, {transform_indices = @transform_5, window_bounds = array<i64: 2, 8, 128>}, {transform_indices = @transform_6, window_bounds = array<i64: 2, 8, 128>}, {pipeline_mode = #tpu.pipeline_mode<synchronous>, transform_indices = @transform_7, window_bounds = array<i64: 1024, 128>}, {pipeline_mode = #tpu.pipeline_mode<synchronous>, transform_indices = @transform_8, window_bounds = array<i64: 1, 128>}, {transform_indices = @transform_9, window_bounds = array<i64: 8, 128>}, {transform_indices = @transform_10, window_bounds = array<i64: 2, 8, 128>}, {transform_indices = @transform_11, window_bounds = array<i64: 2, 8, 128>}]} {
    %c0 = arith.constant 0 : index
    %c0_0 = arith.constant 0 : index
    %c0_1 = arith.constant 0 : index
    %0 = vector.load %arg1[%c0, %c0_0, %c0_1] : memref<8x8x128xf32, #tpu.memory_space<vmem>>, vector<8x8x128xf32>
    %1 = vector.shape_cast %0 : vector<8x8x128xf32> to vector<64x128xf32>
    %c0_2 = arith.constant 0 : index
    %c0_3 = arith.constant 0 : index
    %2 = vector.load %arg2[%c0_2, %c0_3] : memref<128x512xbf16, #tpu.memory_space<vmem>>, vector<128x512xbf16>
    %3 = arith.truncf %1 : vector<64x128xf32> to vector<64x128xbf16>
    %cst = arith.constant dense<0.000000e+00> : vector<64x512xf32>
    %4 = tpu.matmul %3, %2, %cst {dimension_numbers = #tpu.dot_dimension_numbers<[1], [0], [0], [1], [0, 0, 1, 1], [], []>} : vector<64x128xbf16>, vector<128x512xbf16>, vector<64x512xf32> -> vector<64x512xf32>
    %c0_4 = arith.constant 0 : index
    %c0_5 = arith.constant 0 : index
    %c0_6 = arith.constant 0 : index
    %5 = vector.load %arg5[%c0_4, %c0_5, %c0_6] : memref<2x1x512xf32, #tpu.memory_space<vmem>>, vector<1x1x512xf32>
    %6 = vector.shape_cast %5 : vector<1x1x512xf32> to vector<1x512xf32>
    %7 = vector.broadcast %6 : vector<1x512xf32> to vector<64x512xf32>
    %8 = arith.addf %4, %7 : vector<64x512xf32>
    %9 = vector.shape_cast %8 : vector<64x512xf32> to vector<8x8x512xf32>
    %c0_7 = arith.constant 0 : index
    %c0_8 = arith.constant 0 : index
    %c0_9 = arith.constant 0 : index
    %10 = vector.load %arg13[%c0_7, %c0_8, %c0_9] : memref<8x8x512xf32, #tpu.memory_space<vmem>>, vector<8x8x512xf32>
    tpu.vector_store %arg13[%c0_7, %c0_8, %c0_9], %9 {strides = array<i32>} : memref<8x8x512xf32, #tpu.memory_space<vmem>>, vector<8x8x512xf32>,
    %c0_10 = arith.constant 0 : index
    %c0_11 = arith.constant 0 : index
    %c0_12 = arith.constant 0 : index
    %11 = vector.load %arg6[%c0_10, %c0_11, %c0_12] : memref<2x8x128xf32, #tpu.memory_space<vmem>>, vector<1x8x128xf32>
    %12 = vector.shape_cast %11 : vector<1x8x128xf32> to vector<8x128xf32>
    %c0_13 = arith.constant 0 : index
    %c0_14 = arith.constant 0 : index
    %c0_15 = arith.constant 0 : index
    %13 = vector.load %arg7[%c0_13, %c0_14, %c0_15] : memref<2x8x128xf32, #tpu.memory_space<vmem>>, vector<1x8x128xf32>
    %14 = vector.shape_cast %13 : vector<1x8x128xf32> to vector<8x128xf32>
    %c0_i32 = arith.constant 0 : i32
    %15 = arith.index_cast %c0_i32 : i32 to index
    %c0_16 = arith.constant 0 : index
    %c0_17 = arith.constant 0 : index
    %16 = vector.load %arg13[%15, %c0_16, %c0_17] : memref<8x8x512xf32, #tpu.memory_space<vmem>>, vector<1x8x512xf32>
    %17 = vector.shape_cast %16 : vector<1x8x512xf32> to vector<8x512xf32>
    %18 = arith.truncf %12 : vector<8x128xf32> to vector<8x128xbf16>
    %c0_18 = arith.constant 0 : index
    %c0_19 = arith.constant 0 : index
    %c0_20 = arith.constant 0 : index
    %19 = vector.load %arg4[%c0_18, %c0_19, %c0_20] : memref<2x128x512xbf16, #tpu.memory_space<vmem>>, vector<1x128x512xbf16>
    %20 = vector.shape_cast %19 : vector<1x128x512xbf16> to vector<128x512xbf16>
    %cst_21 = arith.constant dense<0.000000e+00> : vector<8x512xf32>
    %21 = tpu.matmul %18, %20, %cst_21 {dimension_numbers = #tpu.dot_dimension_numbers<[1], [0], [0], [1], [0, 0, 1, 1], [], []>} : vector<8x128xbf16>, vector<128x512xbf16>, vector<8x512xf32> -> vector<8x512xf32>
    %22 = arith.addf %17, %21 : vector<8x512xf32>
    %23 = vector.extract_strided_slice %22 {offsets = [0, 0], sizes = [8, 384], strides = [1, 1]} : vector<8x512xf32> to vector<8x384xf32>
    %24 = arith.negf %23 : vector<8x384xf32>
    %25 = math.exp %24 : vector<8x384xf32>
    %cst_22 = arith.constant 1.000000e+00 : f32
    %26 = vector.broadcast %cst_22 : f32 to vector<8x384xf32>
    %27 = arith.addf %26, %25 : vector<8x384xf32>
    %28 = arith.divf %26, %27 : vector<8x384xf32>
    %29 = vector.extract_strided_slice %28 {offsets = [0, 0], sizes = [8, 128], strides = [1, 1]} : vector<8x384xf32> to vector<8x128xf32>
    %30 = vector.extract_strided_slice %28 {offsets = [0, 128], sizes = [8, 128], strides = [1, 1]} : vector<8x384xf32> to vector<8x128xf32>
    %31 = vector.extract_strided_slice %28 {offsets = [0, 256], sizes = [8, 128], strides = [1, 1]} : vector<8x384xf32> to vector<8x128xf32>
    %32 = vector.extract_strided_slice %22 {offsets = [0, 384], sizes = [8, 128], strides = [1, 1]} : vector<8x512xf32> to vector<8x128xf32>
    %33 = math.tanh %32 : vector<8x128xf32>
    %34 = arith.mulf %30, %14 : vector<8x128xf32>
    %35 = arith.mulf %29, %33 : vector<8x128xf32>
    %36 = arith.addf %34, %35 : vector<8x128xf32>
    %37 = math.tanh %36 : vector<8x128xf32>
    %38 = arith.mulf %31, %37 : vector<8x128xf32>
    %39 = arith.index_cast %c0_i32 : i32 to index
    %c0_23 = arith.constant 0 : index
    %c0_24 = arith.constant 0 : index
    %40 = vector.load %arg14[%39, %c0_23, %c0_24] : memref<8x8x128xf32, #tpu.memory_space<vmem>>, vector<1x8x128xf32>
    %41 = vector.shape_cast %40 : vector<1x8x128xf32> to vector<8x128xf32>
    %42 = vector.shape_cast %38 : vector<8x128xf32> to vector<1x8x128xf32>
    tpu.vector_store %arg14[%39, %c0_23, %c0_24], %42 {strides = array<i32>} : memref<8x8x128xf32, #tpu.memory_space<vmem>>, vector<1x8x128xf32>,
    %c1_i32 = arith.constant 1 : i32
    %43 = arith.index_cast %c1_i32 : i32 to index
    %c0_25 = arith.constant 0 : index
    %c0_26 = arith.constant 0 : index
    %44 = vector.load %arg13[%43, %c0_25, %c0_26] : memref<8x8x512xf32, #tpu.memory_space<vmem>>, vector<1x8x512xf32>
    %45 = vector.shape_cast %44 : vector<1x8x512xf32> to vector<8x512xf32>
    %46 = arith.truncf %38 : vector<8x128xf32> to vector<8x128xbf16>
    %c0_27 = arith.constant 0 : index
    %c0_28 = arith.constant 0 : index
    %c0_29 = arith.constant 0 : index
    %47 = vector.load %arg4[%c0_27, %c0_28, %c0_29] : memref<2x128x512xbf16, #tpu.memory_space<vmem>>, vector<1x128x512xbf16>
    %48 = vector.shape_cast %47 : vector<1x128x512xbf16> to vector<128x512xbf16>
    %cst_30 = arith.constant dense<0.000000e+00> : vector<8x512xf32>
    %49 = tpu.matmul %46, %48, %cst_30 {dimension_numbers = #tpu.dot_dimension_numbers<[1], [0], [0], [1], [0, 0, 1, 1], [], []>} : vector<8x128xbf16>, vector<128x512xbf16>, vector<8x512xf32> -> vector<8x512xf32>
    %50 = arith.addf %45, %49 : vector<8x512xf32>
    %51 = vector.extract_strided_slice %50 {offsets = [0, 0], sizes = [8, 384], strides = [1, 1]} : vector<8x512xf32> to vector<8x384xf32>
    %52 = arith.negf %51 : vector<8x384xf32>
    %53 = math.exp %52 : vector<8x384xf32>
    %cst_31 = arith.constant 1.000000e+00 : f32
    %54 = vector.broadcast %cst_31 : f32 to vector<8x384xf32>
    %55 = arith.addf %54, %53 : vector<8x384xf32>
    %56 = arith.divf %54, %55 : vector<8x384xf32>
    %57 = vector.extract_strided_slice %56 {offsets = [0, 0], sizes = [8, 128], strides = [1, 1]} : vector<8x384xf32> to vector<8x128xf32>
    %58 = vector.extract_strided_slice %56 {offsets = [0, 128], sizes = [8, 128], strides = [1, 1]} : vector<8x384xf32> to vector<8x128xf32>
    %59 = vector.extract_strided_slice %56 {offsets = [0, 256], sizes = [8, 128], strides = [1, 1]} : vector<8x384xf32> to vector<8x128xf32>
    %60 = vector.extract_strided_slice %50 {offsets = [0, 384], sizes = [8, 128], strides = [1, 1]} : vector<8x512xf32> to vector<8x128xf32>
    %61 = math.tanh %60 : vector<8x128xf32>
    %62 = arith.mulf %58, %36 : vector<8x128xf32>
    %63 = arith.mulf %57, %61 : vector<8x128xf32>
    %64 = arith.addf %62, %63 : vector<8x128xf32>
    %65 = math.tanh %64 : vector<8x128xf32>
    %66 = arith.mulf %59, %65 : vector<8x128xf32>
    %67 = arith.index_cast %c1_i32 : i32 to index
    %c0_32 = arith.constant 0 : index
    %c0_33 = arith.constant 0 : index
    %68 = vector.load %arg14[%67, %c0_32, %c0_33] : memref<8x8x128xf32, #tpu.memory_space<vmem>>, vector<1x8x128xf32>
    %69 = vector.shape_cast %68 : vector<1x8x128xf32> to vector<8x128xf32>
    %70 = vector.shape_cast %66 : vector<8x128xf32> to vector<1x8x128xf32>
    tpu.vector_store %arg14[%67, %c0_32, %c0_33], %70 {strides = array<i32>} : memref<8x8x128xf32, #tpu.memory_space<vmem>>, vector<1x8x128xf32>,
    %c2_i32 = arith.constant 2 : i32
    %71 = arith.index_cast %c2_i32 : i32 to index
    %c0_34 = arith.constant 0 : index
    %c0_35 = arith.constant 0 : index
    %72 = vector.load %arg13[%71, %c0_34, %c0_35] : memref<8x8x512xf32, #tpu.memory_space<vmem>>, vector<1x8x512xf32>
    %73 = vector.shape_cast %72 : vector<1x8x512xf32> to vector<8x512xf32>
    %74 = arith.truncf %66 : vector<8x128xf32> to vector<8x128xbf16>
    %c0_36 = arith.constant 0 : index
    %c0_37 = arith.constant 0 : index
    %c0_38 = arith.constant 0 : index
    %75 = vector.load %arg4[%c0_36, %c0_37, %c0_38] : memref<2x128x512xbf16, #tpu.memory_space<vmem>>, vector<1x128x512xbf16>
    %76 = vector.shape_cast %75 : vector<1x128x512xbf16> to vector<128x512xbf16>
    %cst_39 = arith.constant dense<0.000000e+00> : vector<8x512xf32>
    %77 = tpu.matmul %74, %76, %cst_39 {dimension_numbers = #tpu.dot_dimension_numbers<[1], [0], [0], [1], [0, 0, 1, 1], [], []>} : vector<8x128xbf16>, vector<128x512xbf16>, vector<8x512xf32> -> vector<8x512xf32>
    %78 = arith.addf %73, %77 : vector<8x512xf32>
    %79 = vector.extract_strided_slice %78 {offsets = [0, 0], sizes = [8, 384], strides = [1, 1]} : vector<8x512xf32> to vector<8x384xf32>
    %80 = arith.negf %79 : vector<8x384xf32>
    %81 = math.exp %80 : vector<8x384xf32>
    %cst_40 = arith.constant 1.000000e+00 : f32
    %82 = vector.broadcast %cst_40 : f32 to vector<8x384xf32>
    %83 = arith.addf %82, %81 : vector<8x384xf32>
    %84 = arith.divf %82, %83 : vector<8x384xf32>
    %85 = vector.extract_strided_slice %84 {offsets = [0, 0], sizes = [8, 128], strides = [1, 1]} : vector<8x384xf32> to vector<8x128xf32>
    %86 = vector.extract_strided_slice %84 {offsets = [0, 128], sizes = [8, 128], strides = [1, 1]} : vector<8x384xf32> to vector<8x128xf32>
    %87 = vector.extract_strided_slice %84 {offsets = [0, 256], sizes = [8, 128], strides = [1, 1]} : vector<8x384xf32> to vector<8x128xf32>
    %88 = vector.extract_strided_slice %78 {offsets = [0, 384], sizes = [8, 128], strides = [1, 1]} : vector<8x512xf32> to vector<8x128xf32>
    %89 = math.tanh %88 : vector<8x128xf32>
    %90 = arith.mulf %86, %64 : vector<8x128xf32>
    %91 = arith.mulf %85, %89 : vector<8x128xf32>
    %92 = arith.addf %90, %91 : vector<8x128xf32>
    %93 = math.tanh %92 : vector<8x128xf32>
    %94 = arith.mulf %87, %93 : vector<8x128xf32>
    %95 = arith.index_cast %c2_i32 : i32 to index
    %c0_41 = arith.constant 0 : index
    %c0_42 = arith.constant 0 : index
    %96 = vector.load %arg14[%95, %c0_41, %c0_42] : memref<8x8x128xf32, #tpu.memory_space<vmem>>, vector<1x8x128xf32>
    %97 = vector.shape_cast %96 : vector<1x8x128xf32> to vector<8x128xf32>
    %98 = vector.shape_cast %94 : vector<8x128xf32> to vector<1x8x128xf32>
    tpu.vector_store %arg14[%95, %c0_41, %c0_42], %98 {strides = array<i32>} : memref<8x8x128xf32, #tpu.memory_space<vmem>>, vector<1x8x128xf32>,
    %c3_i32 = arith.constant 3 : i32
    %99 = arith.index_cast %c3_i32 : i32 to index
    %c0_43 = arith.constant 0 : index
    %c0_44 = arith.constant 0 : index
    %100 = vector.load %arg13[%99, %c0_43, %c0_44] : memref<8x8x512xf32, #tpu.memory_space<vmem>>, vector<1x8x512xf32>
    %101 = vector.shape_cast %100 : vector<1x8x512xf32> to vector<8x512xf32>
    %102 = arith.truncf %94 : vector<8x128xf32> to vector<8x128xbf16>
    %c0_45 = arith.constant 0 : index
    %c0_46 = arith.constant 0 : index
    %c0_47 = arith.constant 0 : index
    %103 = vector.load %arg4[%c0_45, %c0_46, %c0_47] : memref<2x128x512xbf16, #tpu.memory_space<vmem>>, vector<1x128x512xbf16>
    %104 = vector.shape_cast %103 : vector<1x128x512xbf16> to vector<128x512xbf16>
    %cst_48 = arith.constant dense<0.000000e+00> : vector<8x512xf32>
    %105 = tpu.matmul %102, %104, %cst_48 {dimension_numbers = #tpu.dot_dimension_numbers<[1], [0], [0], [1], [0, 0, 1, 1], [], []>} : vector<8x128xbf16>, vector<128x512xbf16>, vector<8x512xf32> -> vector<8x512xf32>
    %106 = arith.addf %101, %105 : vector<8x512xf32>
    %107 = vector.extract_strided_slice %106 {offsets = [0, 0], sizes = [8, 384], strides = [1, 1]} : vector<8x512xf32> to vector<8x384xf32>
    %108 = arith.negf %107 : vector<8x384xf32>
    %109 = math.exp %108 : vector<8x384xf32>
    %cst_49 = arith.constant 1.000000e+00 : f32
    %110 = vector.broadcast %cst_49 : f32 to vector<8x384xf32>
    %111 = arith.addf %110, %109 : vector<8x384xf32>
    %112 = arith.divf %110, %111 : vector<8x384xf32>
    %113 = vector.extract_strided_slice %112 {offsets = [0, 0], sizes = [8, 128], strides = [1, 1]} : vector<8x384xf32> to vector<8x128xf32>
    %114 = vector.extract_strided_slice %112 {offsets = [0, 128], sizes = [8, 128], strides = [1, 1]} : vector<8x384xf32> to vector<8x128xf32>
    %115 = vector.extract_strided_slice %112 {offsets = [0, 256], sizes = [8, 128], strides = [1, 1]} : vector<8x384xf32> to vector<8x128xf32>
    %116 = vector.extract_strided_slice %106 {offsets = [0, 384], sizes = [8, 128], strides = [1, 1]} : vector<8x512xf32> to vector<8x128xf32>
    %117 = math.tanh %116 : vector<8x128xf32>
    %118 = arith.mulf %114, %92 : vector<8x128xf32>
    %119 = arith.mulf %113, %117 : vector<8x128xf32>
    %120 = arith.addf %118, %119 : vector<8x128xf32>
    %121 = math.tanh %120 : vector<8x128xf32>
    %122 = arith.mulf %115, %121 : vector<8x128xf32>
    %123 = arith.index_cast %c3_i32 : i32 to index
    %c0_50 = arith.constant 0 : index
    %c0_51 = arith.constant 0 : index
    %124 = vector.load %arg14[%123, %c0_50, %c0_51] : memref<8x8x128xf32, #tpu.memory_space<vmem>>, vector<1x8x128xf32>
    %125 = vector.shape_cast %124 : vector<1x8x128xf32> to vector<8x128xf32>
    %126 = vector.shape_cast %122 : vector<8x128xf32> to vector<1x8x128xf32>
    tpu.vector_store %arg14[%123, %c0_50, %c0_51], %126 {strides = array<i32>} : memref<8x8x128xf32, #tpu.memory_space<vmem>>, vector<1x8x128xf32>,
    %c4_i32 = arith.constant 4 : i32
    %127 = arith.index_cast %c4_i32 : i32 to index
    %c0_52 = arith.constant 0 : index
    %c0_53 = arith.constant 0 : index
    %128 = vector.load %arg13[%127, %c0_52, %c0_53] : memref<8x8x512xf32, #tpu.memory_space<vmem>>, vector<1x8x512xf32>
    %129 = vector.shape_cast %128 : vector<1x8x512xf32> to vector<8x512xf32>
    %130 = arith.truncf %122 : vector<8x128xf32> to vector<8x128xbf16>
    %c0_54 = arith.constant 0 : index
    %c0_55 = arith.constant 0 : index
    %c0_56 = arith.constant 0 : index
    %131 = vector.load %arg4[%c0_54, %c0_55, %c0_56] : memref<2x128x512xbf16, #tpu.memory_space<vmem>>, vector<1x128x512xbf16>
    %132 = vector.shape_cast %131 : vector<1x128x512xbf16> to vector<128x512xbf16>
    %cst_57 = arith.constant dense<0.000000e+00> : vector<8x512xf32>
    %133 = tpu.matmul %130, %132, %cst_57 {dimension_numbers = #tpu.dot_dimension_numbers<[1], [0], [0], [1], [0, 0, 1, 1], [], []>} : vector<8x128xbf16>, vector<128x512xbf16>, vector<8x512xf32> -> vector<8x512xf32>
    %134 = arith.addf %129, %133 : vector<8x512xf32>
    %135 = vector.extract_strided_slice %134 {offsets = [0, 0], sizes = [8, 384], strides = [1, 1]} : vector<8x512xf32> to vector<8x384xf32>
    %136 = arith.negf %135 : vector<8x384xf32>
    %137 = math.exp %136 : vector<8x384xf32>
    %cst_58 = arith.constant 1.000000e+00 : f32
    %138 = vector.broadcast %cst_58 : f32 to vector<8x384xf32>
    %139 = arith.addf %138, %137 : vector<8x384xf32>
    %140 = arith.divf %138, %139 : vector<8x384xf32>
    %141 = vector.extract_strided_slice %140 {offsets = [0, 0], sizes = [8, 128], strides = [1, 1]} : vector<8x384xf32> to vector<8x128xf32>
    %142 = vector.extract_strided_slice %140 {offsets = [0, 128], sizes = [8, 128], strides = [1, 1]} : vector<8x384xf32> to vector<8x128xf32>
    %143 = vector.extract_strided_slice %140 {offsets = [0, 256], sizes = [8, 128], strides = [1, 1]} : vector<8x384xf32> to vector<8x128xf32>
    %144 = vector.extract_strided_slice %134 {offsets = [0, 384], sizes = [8, 128], strides = [1, 1]} : vector<8x512xf32> to vector<8x128xf32>
    %145 = math.tanh %144 : vector<8x128xf32>
    %146 = arith.mulf %142, %120 : vector<8x128xf32>
    %147 = arith.mulf %141, %145 : vector<8x128xf32>
    %148 = arith.addf %146, %147 : vector<8x128xf32>
    %149 = math.tanh %148 : vector<8x128xf32>
    %150 = arith.mulf %143, %149 : vector<8x128xf32>
    %151 = arith.index_cast %c4_i32 : i32 to index
    %c0_59 = arith.constant 0 : index
    %c0_60 = arith.constant 0 : index
    %152 = vector.load %arg14[%151, %c0_59, %c0_60] : memref<8x8x128xf32, #tpu.memory_space<vmem>>, vector<1x8x128xf32>
    %153 = vector.shape_cast %152 : vector<1x8x128xf32> to vector<8x128xf32>
    %154 = vector.shape_cast %150 : vector<8x128xf32> to vector<1x8x128xf32>
    tpu.vector_store %arg14[%151, %c0_59, %c0_60], %154 {strides = array<i32>} : memref<8x8x128xf32, #tpu.memory_space<vmem>>, vector<1x8x128xf32>,
    %c5_i32 = arith.constant 5 : i32
    %155 = arith.index_cast %c5_i32 : i32 to index
    %c0_61 = arith.constant 0 : index
    %c0_62 = arith.constant 0 : index
    %156 = vector.load %arg13[%155, %c0_61, %c0_62] : memref<8x8x512xf32, #tpu.memory_space<vmem>>, vector<1x8x512xf32>
    %157 = vector.shape_cast %156 : vector<1x8x512xf32> to vector<8x512xf32>
    %158 = arith.truncf %150 : vector<8x128xf32> to vector<8x128xbf16>
    %c0_63 = arith.constant 0 : index
    %c0_64 = arith.constant 0 : index
    %c0_65 = arith.constant 0 : index
    %159 = vector.load %arg4[%c0_63, %c0_64, %c0_65] : memref<2x128x512xbf16, #tpu.memory_space<vmem>>, vector<1x128x512xbf16>
    %160 = vector.shape_cast %159 : vector<1x128x512xbf16> to vector<128x512xbf16>
    %cst_66 = arith.constant dense<0.000000e+00> : vector<8x512xf32>
    %161 = tpu.matmul %158, %160, %cst_66 {dimension_numbers = #tpu.dot_dimension_numbers<[1], [0], [0], [1], [0, 0, 1, 1], [], []>} : vector<8x128xbf16>, vector<128x512xbf16>, vector<8x512xf32> -> vector<8x512xf32>
    %162 = arith.addf %157, %161 : vector<8x512xf32>
    %163 = vector.extract_strided_slice %162 {offsets = [0, 0], sizes = [8, 384], strides = [1, 1]} : vector<8x512xf32> to vector<8x384xf32>
    %164 = arith.negf %163 : vector<8x384xf32>
    %165 = math.exp %164 : vector<8x384xf32>
    %cst_67 = arith.constant 1.000000e+00 : f32
    %166 = vector.broadcast %cst_67 : f32 to vector<8x384xf32>
    %167 = arith.addf %166, %165 : vector<8x384xf32>
    %168 = arith.divf %166, %167 : vector<8x384xf32>
    %169 = vector.extract_strided_slice %168 {offsets = [0, 0], sizes = [8, 128], strides = [1, 1]} : vector<8x384xf32> to vector<8x128xf32>
    %170 = vector.extract_strided_slice %168 {offsets = [0, 128], sizes = [8, 128], strides = [1, 1]} : vector<8x384xf32> to vector<8x128xf32>
    %171 = vector.extract_strided_slice %168 {offsets = [0, 256], sizes = [8, 128], strides = [1, 1]} : vector<8x384xf32> to vector<8x128xf32>
    %172 = vector.extract_strided_slice %162 {offsets = [0, 384], sizes = [8, 128], strides = [1, 1]} : vector<8x512xf32> to vector<8x128xf32>
    %173 = math.tanh %172 : vector<8x128xf32>
    %174 = arith.mulf %170, %148 : vector<8x128xf32>
    %175 = arith.mulf %169, %173 : vector<8x128xf32>
    %176 = arith.addf %174, %175 : vector<8x128xf32>
    %177 = math.tanh %176 : vector<8x128xf32>
    %178 = arith.mulf %171, %177 : vector<8x128xf32>
    %179 = arith.index_cast %c5_i32 : i32 to index
    %c0_68 = arith.constant 0 : index
    %c0_69 = arith.constant 0 : index
    %180 = vector.load %arg14[%179, %c0_68, %c0_69] : memref<8x8x128xf32, #tpu.memory_space<vmem>>, vector<1x8x128xf32>
    %181 = vector.shape_cast %180 : vector<1x8x128xf32> to vector<8x128xf32>
    %182 = vector.shape_cast %178 : vector<8x128xf32> to vector<1x8x128xf32>
    tpu.vector_store %arg14[%179, %c0_68, %c0_69], %182 {strides = array<i32>} : memref<8x8x128xf32, #tpu.memory_space<vmem>>, vector<1x8x128xf32>,
    %c6_i32 = arith.constant 6 : i32
    %183 = arith.index_cast %c6_i32 : i32 to index
    %c0_70 = arith.constant 0 : index
    %c0_71 = arith.constant 0 : index
    %184 = vector.load %arg13[%183, %c0_70, %c0_71] : memref<8x8x512xf32, #tpu.memory_space<vmem>>, vector<1x8x512xf32>
    %185 = vector.shape_cast %184 : vector<1x8x512xf32> to vector<8x512xf32>
    %186 = arith.truncf %178 : vector<8x128xf32> to vector<8x128xbf16>
    %c0_72 = arith.constant 0 : index
    %c0_73 = arith.constant 0 : index
    %c0_74 = arith.constant 0 : index
    %187 = vector.load %arg4[%c0_72, %c0_73, %c0_74] : memref<2x128x512xbf16, #tpu.memory_space<vmem>>, vector<1x128x512xbf16>
    %188 = vector.shape_cast %187 : vector<1x128x512xbf16> to vector<128x512xbf16>
    %cst_75 = arith.constant dense<0.000000e+00> : vector<8x512xf32>
    %189 = tpu.matmul %186, %188, %cst_75 {dimension_numbers = #tpu.dot_dimension_numbers<[1], [0], [0], [1], [0, 0, 1, 1], [], []>} : vector<8x128xbf16>, vector<128x512xbf16>, vector<8x512xf32> -> vector<8x512xf32>
    %190 = arith.addf %185, %189 : vector<8x512xf32>
    %191 = vector.extract_strided_slice %190 {offsets = [0, 0], sizes = [8, 384], strides = [1, 1]} : vector<8x512xf32> to vector<8x384xf32>
    %192 = arith.negf %191 : vector<8x384xf32>
    %193 = math.exp %192 : vector<8x384xf32>
    %cst_76 = arith.constant 1.000000e+00 : f32
    %194 = vector.broadcast %cst_76 : f32 to vector<8x384xf32>
    %195 = arith.addf %194, %193 : vector<8x384xf32>
    %196 = arith.divf %194, %195 : vector<8x384xf32>
    %197 = vector.extract_strided_slice %196 {offsets = [0, 0], sizes = [8, 128], strides = [1, 1]} : vector<8x384xf32> to vector<8x128xf32>
    %198 = vector.extract_strided_slice %196 {offsets = [0, 128], sizes = [8, 128], strides = [1, 1]} : vector<8x384xf32> to vector<8x128xf32>
    %199 = vector.extract_strided_slice %196 {offsets = [0, 256], sizes = [8, 128], strides = [1, 1]} : vector<8x384xf32> to vector<8x128xf32>
    %200 = vector.extract_strided_slice %190 {offsets = [0, 384], sizes = [8, 128], strides = [1, 1]} : vector<8x512xf32> to vector<8x128xf32>
    %201 = math.tanh %200 : vector<8x128xf32>
    %202 = arith.mulf %198, %176 : vector<8x128xf32>
    %203 = arith.mulf %197, %201 : vector<8x128xf32>
    %204 = arith.addf %202, %203 : vector<8x128xf32>
    %205 = math.tanh %204 : vector<8x128xf32>
    %206 = arith.mulf %199, %205 : vector<8x128xf32>
    %207 = arith.index_cast %c6_i32 : i32 to index
    %c0_77 = arith.constant 0 : index
    %c0_78 = arith.constant 0 : index
    %208 = vector.load %arg14[%207, %c0_77, %c0_78] : memref<8x8x128xf32, #tpu.memory_space<vmem>>, vector<1x8x128xf32>
    %209 = vector.shape_cast %208 : vector<1x8x128xf32> to vector<8x128xf32>
    %210 = vector.shape_cast %206 : vector<8x128xf32> to vector<1x8x128xf32>
    tpu.vector_store %arg14[%207, %c0_77, %c0_78], %210 {strides = array<i32>} : memref<8x8x128xf32, #tpu.memory_space<vmem>>, vector<1x8x128xf32>,
    %c7_i32 = arith.constant 7 : i32
    %211 = arith.index_cast %c7_i32 : i32 to index
    %c0_79 = arith.constant 0 : index
    %c0_80 = arith.constant 0 : index
    %212 = vector.load %arg13[%211, %c0_79, %c0_80] : memref<8x8x512xf32, #tpu.memory_space<vmem>>, vector<1x8x512xf32>
    %213 = vector.shape_cast %212 : vector<1x8x512xf32> to vector<8x512xf32>
    %214 = arith.truncf %206 : vector<8x128xf32> to vector<8x128xbf16>
    %c0_81 = arith.constant 0 : index
    %c0_82 = arith.constant 0 : index
    %c0_83 = arith.constant 0 : index
    %215 = vector.load %arg4[%c0_81, %c0_82, %c0_83] : memref<2x128x512xbf16, #tpu.memory_space<vmem>>, vector<1x128x512xbf16>
    %216 = vector.shape_cast %215 : vector<1x128x512xbf16> to vector<128x512xbf16>
    %cst_84 = arith.constant dense<0.000000e+00> : vector<8x512xf32>
    %217 = tpu.matmul %214, %216, %cst_84 {dimension_numbers = #tpu.dot_dimension_numbers<[1], [0], [0], [1], [0, 0, 1, 1], [], []>} : vector<8x128xbf16>, vector<128x512xbf16>, vector<8x512xf32> -> vector<8x512xf32>
    %218 = arith.addf %213, %217 : vector<8x512xf32>
    %219 = vector.extract_strided_slice %218 {offsets = [0, 0], sizes = [8, 384], strides = [1, 1]} : vector<8x512xf32> to vector<8x384xf32>
    %220 = arith.negf %219 : vector<8x384xf32>
    %221 = math.exp %220 : vector<8x384xf32>
    %cst_85 = arith.constant 1.000000e+00 : f32
    %222 = vector.broadcast %cst_85 : f32 to vector<8x384xf32>
    %223 = arith.addf %222, %221 : vector<8x384xf32>
    %224 = arith.divf %222, %223 : vector<8x384xf32>
    %225 = vector.extract_strided_slice %224 {offsets = [0, 0], sizes = [8, 128], strides = [1, 1]} : vector<8x384xf32> to vector<8x128xf32>
    %226 = vector.extract_strided_slice %224 {offsets = [0, 128], sizes = [8, 128], strides = [1, 1]} : vector<8x384xf32> to vector<8x128xf32>
    %227 = vector.extract_strided_slice %224 {offsets = [0, 256], sizes = [8, 128], strides = [1, 1]} : vector<8x384xf32> to vector<8x128xf32>
    %228 = vector.extract_strided_slice %218 {offsets = [0, 384], sizes = [8, 128], strides = [1, 1]} : vector<8x512xf32> to vector<8x128xf32>
    %229 = math.tanh %228 : vector<8x128xf32>
    %230 = arith.mulf %226, %204 : vector<8x128xf32>
    %231 = arith.mulf %225, %229 : vector<8x128xf32>
    %232 = arith.addf %230, %231 : vector<8x128xf32>
    %233 = math.tanh %232 : vector<8x128xf32>
    %234 = arith.mulf %227, %233 : vector<8x128xf32>
    %235 = arith.index_cast %c7_i32 : i32 to index
    %c0_86 = arith.constant 0 : index
    %c0_87 = arith.constant 0 : index
    %236 = vector.load %arg14[%235, %c0_86, %c0_87] : memref<8x8x128xf32, #tpu.memory_space<vmem>>, vector<1x8x128xf32>
    %237 = vector.shape_cast %236 : vector<1x8x128xf32> to vector<8x128xf32>
    %238 = vector.shape_cast %234 : vector<8x128xf32> to vector<1x8x128xf32>
    tpu.vector_store %arg14[%235, %c0_86, %c0_87], %238 {strides = array<i32>} : memref<8x8x128xf32, #tpu.memory_space<vmem>>, vector<1x8x128xf32>,
    %c8_i32 = arith.constant 8 : i32
    %c0_88 = arith.constant 0 : index
    %c0_89 = arith.constant 0 : index
    %c0_90 = arith.constant 0 : index
    %239 = vector.load %arg11[%c0_88, %c0_89, %c0_90] : memref<2x8x128xf32, #tpu.memory_space<vmem>>, vector<1x8x128xf32>
    %240 = vector.shape_cast %239 : vector<1x8x128xf32> to vector<8x128xf32>
    %241 = vector.shape_cast %234 : vector<8x128xf32> to vector<1x8x128xf32>
    tpu.vector_store %arg11[%c0_88, %c0_89, %c0_90], %241 {strides = array<i32>} : memref<2x8x128xf32, #tpu.memory_space<vmem>>, vector<1x8x128xf32>,
    %c0_91 = arith.constant 0 : index
    %c0_92 = arith.constant 0 : index
    %c0_93 = arith.constant 0 : index
    %242 = vector.load %arg12[%c0_91, %c0_92, %c0_93] : memref<2x8x128xf32, #tpu.memory_space<vmem>>, vector<1x8x128xf32>
    %243 = vector.shape_cast %242 : vector<1x8x128xf32> to vector<8x128xf32>
    %244 = vector.shape_cast %232 : vector<8x128xf32> to vector<1x8x128xf32>
    tpu.vector_store %arg12[%c0_91, %c0_92, %c0_93], %244 {strides = array<i32>} : memref<2x8x128xf32, #tpu.memory_space<vmem>>, vector<1x8x128xf32>,
    %c0_94 = arith.constant 0 : index
    %c0_95 = arith.constant 0 : index
    %c0_96 = arith.constant 0 : index
    %245 = vector.load %arg14[%c0_94, %c0_95, %c0_96] : memref<8x8x128xf32, #tpu.memory_space<vmem>>, vector<8x8x128xf32>
    %246 = vector.shape_cast %245 : vector<8x8x128xf32> to vector<64x128xf32>
    %c0_97 = arith.constant 0 : index
    %c0_98 = arith.constant 0 : index
    %c0_99 = arith.constant 0 : index
    %247 = vector.load %arg3[%c0_97, %c0_98, %c0_99] : memref<1x128x512xbf16, #tpu.memory_space<vmem>>, vector<1x128x512xbf16>
    %248 = vector.shape_cast %247 : vector<1x128x512xbf16> to vector<128x512xbf16>
    %249 = arith.truncf %246 : vector<64x128xf32> to vector<64x128xbf16>
    %cst_100 = arith.constant dense<0.000000e+00> : vector<64x512xf32>
    %250 = tpu.matmul %249, %248, %cst_100 {dimension_numbers = #tpu.dot_dimension_numbers<[1], [0], [0], [1], [0, 0, 1, 1], [], []>} : vector<64x128xbf16>, vector<128x512xbf16>, vector<64x512xf32> -> vector<64x512xf32>
    %c1 = arith.constant 1 : index
    %c0_101 = arith.constant 0 : index
    %c0_102 = arith.constant 0 : index
    %251 = vector.load %arg5[%c1, %c0_101, %c0_102] : memref<2x1x512xf32, #tpu.memory_space<vmem>>, vector<1x1x512xf32>
    %252 = vector.shape_cast %251 : vector<1x1x512xf32> to vector<1x512xf32>
    %253 = vector.broadcast %252 : vector<1x512xf32> to vector<64x512xf32>
    %254 = arith.addf %250, %253 : vector<64x512xf32>
    %255 = vector.shape_cast %254 : vector<64x512xf32> to vector<8x8x512xf32>
    %c0_103 = arith.constant 0 : index
    %c0_104 = arith.constant 0 : index
    %c0_105 = arith.constant 0 : index
    %256 = vector.load %arg13[%c0_103, %c0_104, %c0_105] : memref<8x8x512xf32, #tpu.memory_space<vmem>>, vector<8x8x512xf32>
    tpu.vector_store %arg13[%c0_103, %c0_104, %c0_105], %255 {strides = array<i32>} : memref<8x8x512xf32, #tpu.memory_space<vmem>>, vector<8x8x512xf32>,
    %c1_106 = arith.constant 1 : index
    %c0_107 = arith.constant 0 : index
    %c0_108 = arith.constant 0 : index
    %257 = vector.load %arg6[%c1_106, %c0_107, %c0_108] : memref<2x8x128xf32, #tpu.memory_space<vmem>>, vector<1x8x128xf32>
    %258 = vector.shape_cast %257 : vector<1x8x128xf32> to vector<8x128xf32>
    %c1_109 = arith.constant 1 : index
    %c0_110 = arith.constant 0 : index
    %c0_111 = arith.constant 0 : index
    %259 = vector.load %arg7[%c1_109, %c0_110, %c0_111] : memref<2x8x128xf32, #tpu.memory_space<vmem>>, vector<1x8x128xf32>
    %260 = vector.shape_cast %259 : vector<1x8x128xf32> to vector<8x128xf32>
    %c0_i32_112 = arith.constant 0 : i32
    %261 = arith.index_cast %c0_i32_112 : i32 to index
    %c0_113 = arith.constant 0 : index
    %c0_114 = arith.constant 0 : index
    %262 = vector.load %arg13[%261, %c0_113, %c0_114] : memref<8x8x512xf32, #tpu.memory_space<vmem>>, vector<1x8x512xf32>
    %263 = vector.shape_cast %262 : vector<1x8x512xf32> to vector<8x512xf32>
    %264 = arith.truncf %258 : vector<8x128xf32> to vector<8x128xbf16>
    %c1_115 = arith.constant 1 : index
    %c0_116 = arith.constant 0 : index
    %c0_117 = arith.constant 0 : index
    %265 = vector.load %arg4[%c1_115, %c0_116, %c0_117] : memref<2x128x512xbf16, #tpu.memory_space<vmem>>, vector<1x128x512xbf16>
    %266 = vector.shape_cast %265 : vector<1x128x512xbf16> to vector<128x512xbf16>
    %cst_118 = arith.constant dense<0.000000e+00> : vector<8x512xf32>
    %267 = tpu.matmul %264, %266, %cst_118 {dimension_numbers = #tpu.dot_dimension_numbers<[1], [0], [0], [1], [0, 0, 1, 1], [], []>} : vector<8x128xbf16>, vector<128x512xbf16>, vector<8x512xf32> -> vector<8x512xf32>
    %268 = arith.addf %263, %267 : vector<8x512xf32>
    %269 = vector.extract_strided_slice %268 {offsets = [0, 0], sizes = [8, 384], strides = [1, 1]} : vector<8x512xf32> to vector<8x384xf32>
    %270 = arith.negf %269 : vector<8x384xf32>
    %271 = math.exp %270 : vector<8x384xf32>
    %cst_119 = arith.constant 1.000000e+00 : f32
    %272 = vector.broadcast %cst_119 : f32 to vector<8x384xf32>
    %273 = arith.addf %272, %271 : vector<8x384xf32>
    %274 = arith.divf %272, %273 : vector<8x384xf32>
    %275 = vector.extract_strided_slice %274 {offsets = [0, 0], sizes = [8, 128], strides = [1, 1]} : vector<8x384xf32> to vector<8x128xf32>
    %276 = vector.extract_strided_slice %274 {offsets = [0, 128], sizes = [8, 128], strides = [1, 1]} : vector<8x384xf32> to vector<8x128xf32>
    %277 = vector.extract_strided_slice %274 {offsets = [0, 256], sizes = [8, 128], strides = [1, 1]} : vector<8x384xf32> to vector<8x128xf32>
    %278 = vector.extract_strided_slice %268 {offsets = [0, 384], sizes = [8, 128], strides = [1, 1]} : vector<8x512xf32> to vector<8x128xf32>
    %279 = math.tanh %278 : vector<8x128xf32>
    %280 = arith.mulf %276, %260 : vector<8x128xf32>
    %281 = arith.mulf %275, %279 : vector<8x128xf32>
    %282 = arith.addf %280, %281 : vector<8x128xf32>
    %283 = math.tanh %282 : vector<8x128xf32>
    %284 = arith.mulf %277, %283 : vector<8x128xf32>
    %285 = arith.index_cast %c0_i32_112 : i32 to index
    %c0_120 = arith.constant 0 : index
    %c0_121 = arith.constant 0 : index
    %286 = vector.load %arg14[%285, %c0_120, %c0_121] : memref<8x8x128xf32, #tpu.memory_space<vmem>>, vector<1x8x128xf32>
    %287 = vector.shape_cast %286 : vector<1x8x128xf32> to vector<8x128xf32>
    %288 = vector.shape_cast %284 : vector<8x128xf32> to vector<1x8x128xf32>
    tpu.vector_store %arg14[%285, %c0_120, %c0_121], %288 {strides = array<i32>} : memref<8x8x128xf32, #tpu.memory_space<vmem>>, vector<1x8x128xf32>,
    %c1_i32_122 = arith.constant 1 : i32
    %289 = arith.index_cast %c1_i32_122 : i32 to index
    %c0_123 = arith.constant 0 : index
    %c0_124 = arith.constant 0 : index
    %290 = vector.load %arg13[%289, %c0_123, %c0_124] : memref<8x8x512xf32, #tpu.memory_space<vmem>>, vector<1x8x512xf32>
    %291 = vector.shape_cast %290 : vector<1x8x512xf32> to vector<8x512xf32>
    %292 = arith.truncf %284 : vector<8x128xf32> to vector<8x128xbf16>
    %c1_125 = arith.constant 1 : index
    %c0_126 = arith.constant 0 : index
    %c0_127 = arith.constant 0 : index
    %293 = vector.load %arg4[%c1_125, %c0_126, %c0_127] : memref<2x128x512xbf16, #tpu.memory_space<vmem>>, vector<1x128x512xbf16>
    %294 = vector.shape_cast %293 : vector<1x128x512xbf16> to vector<128x512xbf16>
    %cst_128 = arith.constant dense<0.000000e+00> : vector<8x512xf32>
    %295 = tpu.matmul %292, %294, %cst_128 {dimension_numbers = #tpu.dot_dimension_numbers<[1], [0], [0], [1], [0, 0, 1, 1], [], []>} : vector<8x128xbf16>, vector<128x512xbf16>, vector<8x512xf32> -> vector<8x512xf32>
    %296 = arith.addf %291, %295 : vector<8x512xf32>
    %297 = vector.extract_strided_slice %296 {offsets = [0, 0], sizes = [8, 384], strides = [1, 1]} : vector<8x512xf32> to vector<8x384xf32>
    %298 = arith.negf %297 : vector<8x384xf32>
    %299 = math.exp %298 : vector<8x384xf32>
    %cst_129 = arith.constant 1.000000e+00 : f32
    %300 = vector.broadcast %cst_129 : f32 to vector<8x384xf32>
    %301 = arith.addf %300, %299 : vector<8x384xf32>
    %302 = arith.divf %300, %301 : vector<8x384xf32>
    %303 = vector.extract_strided_slice %302 {offsets = [0, 0], sizes = [8, 128], strides = [1, 1]} : vector<8x384xf32> to vector<8x128xf32>
    %304 = vector.extract_strided_slice %302 {offsets = [0, 128], sizes = [8, 128], strides = [1, 1]} : vector<8x384xf32> to vector<8x128xf32>
    %305 = vector.extract_strided_slice %302 {offsets = [0, 256], sizes = [8, 128], strides = [1, 1]} : vector<8x384xf32> to vector<8x128xf32>
    %306 = vector.extract_strided_slice %296 {offsets = [0, 384], sizes = [8, 128], strides = [1, 1]} : vector<8x512xf32> to vector<8x128xf32>
    %307 = math.tanh %306 : vector<8x128xf32>
    %308 = arith.mulf %304, %282 : vector<8x128xf32>
    %309 = arith.mulf %303, %307 : vector<8x128xf32>
    %310 = arith.addf %308, %309 : vector<8x128xf32>
    %311 = math.tanh %310 : vector<8x128xf32>
    %312 = arith.mulf %305, %311 : vector<8x128xf32>
    %313 = arith.index_cast %c1_i32_122 : i32 to index
    %c0_130 = arith.constant 0 : index
    %c0_131 = arith.constant 0 : index
    %314 = vector.load %arg14[%313, %c0_130, %c0_131] : memref<8x8x128xf32, #tpu.memory_space<vmem>>, vector<1x8x128xf32>
    %315 = vector.shape_cast %314 : vector<1x8x128xf32> to vector<8x128xf32>
    %316 = vector.shape_cast %312 : vector<8x128xf32> to vector<1x8x128xf32>
    tpu.vector_store %arg14[%313, %c0_130, %c0_131], %316 {strides = array<i32>} : memref<8x8x128xf32, #tpu.memory_space<vmem>>, vector<1x8x128xf32>,
    %c2_i32_132 = arith.constant 2 : i32
    %317 = arith.index_cast %c2_i32_132 : i32 to index
    %c0_133 = arith.constant 0 : index
    %c0_134 = arith.constant 0 : index
    %318 = vector.load %arg13[%317, %c0_133, %c0_134] : memref<8x8x512xf32, #tpu.memory_space<vmem>>, vector<1x8x512xf32>
    %319 = vector.shape_cast %318 : vector<1x8x512xf32> to vector<8x512xf32>
    %320 = arith.truncf %312 : vector<8x128xf32> to vector<8x128xbf16>
    %c1_135 = arith.constant 1 : index
    %c0_136 = arith.constant 0 : index
    %c0_137 = arith.constant 0 : index
    %321 = vector.load %arg4[%c1_135, %c0_136, %c0_137] : memref<2x128x512xbf16, #tpu.memory_space<vmem>>, vector<1x128x512xbf16>
    %322 = vector.shape_cast %321 : vector<1x128x512xbf16> to vector<128x512xbf16>
    %cst_138 = arith.constant dense<0.000000e+00> : vector<8x512xf32>
    %323 = tpu.matmul %320, %322, %cst_138 {dimension_numbers = #tpu.dot_dimension_numbers<[1], [0], [0], [1], [0, 0, 1, 1], [], []>} : vector<8x128xbf16>, vector<128x512xbf16>, vector<8x512xf32> -> vector<8x512xf32>
    %324 = arith.addf %319, %323 : vector<8x512xf32>
    %325 = vector.extract_strided_slice %324 {offsets = [0, 0], sizes = [8, 384], strides = [1, 1]} : vector<8x512xf32> to vector<8x384xf32>
    %326 = arith.negf %325 : vector<8x384xf32>
    %327 = math.exp %326 : vector<8x384xf32>
    %cst_139 = arith.constant 1.000000e+00 : f32
    %328 = vector.broadcast %cst_139 : f32 to vector<8x384xf32>
    %329 = arith.addf %328, %327 : vector<8x384xf32>
    %330 = arith.divf %328, %329 : vector<8x384xf32>
    %331 = vector.extract_strided_slice %330 {offsets = [0, 0], sizes = [8, 128], strides = [1, 1]} : vector<8x384xf32> to vector<8x128xf32>
    %332 = vector.extract_strided_slice %330 {offsets = [0, 128], sizes = [8, 128], strides = [1, 1]} : vector<8x384xf32> to vector<8x128xf32>
    %333 = vector.extract_strided_slice %330 {offsets = [0, 256], sizes = [8, 128], strides = [1, 1]} : vector<8x384xf32> to vector<8x128xf32>
    %334 = vector.extract_strided_slice %324 {offsets = [0, 384], sizes = [8, 128], strides = [1, 1]} : vector<8x512xf32> to vector<8x128xf32>
    %335 = math.tanh %334 : vector<8x128xf32>
    %336 = arith.mulf %332, %310 : vector<8x128xf32>
    %337 = arith.mulf %331, %335 : vector<8x128xf32>
    %338 = arith.addf %336, %337 : vector<8x128xf32>
    %339 = math.tanh %338 : vector<8x128xf32>
    %340 = arith.mulf %333, %339 : vector<8x128xf32>
    %341 = arith.index_cast %c2_i32_132 : i32 to index
    %c0_140 = arith.constant 0 : index
    %c0_141 = arith.constant 0 : index
    %342 = vector.load %arg14[%341, %c0_140, %c0_141] : memref<8x8x128xf32, #tpu.memory_space<vmem>>, vector<1x8x128xf32>
    %343 = vector.shape_cast %342 : vector<1x8x128xf32> to vector<8x128xf32>
    %344 = vector.shape_cast %340 : vector<8x128xf32> to vector<1x8x128xf32>
    tpu.vector_store %arg14[%341, %c0_140, %c0_141], %344 {strides = array<i32>} : memref<8x8x128xf32, #tpu.memory_space<vmem>>, vector<1x8x128xf32>,
    %c3_i32_142 = arith.constant 3 : i32
    %345 = arith.index_cast %c3_i32_142 : i32 to index
    %c0_143 = arith.constant 0 : index
    %c0_144 = arith.constant 0 : index
    %346 = vector.load %arg13[%345, %c0_143, %c0_144] : memref<8x8x512xf32, #tpu.memory_space<vmem>>, vector<1x8x512xf32>
    %347 = vector.shape_cast %346 : vector<1x8x512xf32> to vector<8x512xf32>
    %348 = arith.truncf %340 : vector<8x128xf32> to vector<8x128xbf16>
    %c1_145 = arith.constant 1 : index
    %c0_146 = arith.constant 0 : index
    %c0_147 = arith.constant 0 : index
    %349 = vector.load %arg4[%c1_145, %c0_146, %c0_147] : memref<2x128x512xbf16, #tpu.memory_space<vmem>>, vector<1x128x512xbf16>
    %350 = vector.shape_cast %349 : vector<1x128x512xbf16> to vector<128x512xbf16>
    %cst_148 = arith.constant dense<0.000000e+00> : vector<8x512xf32>
    %351 = tpu.matmul %348, %350, %cst_148 {dimension_numbers = #tpu.dot_dimension_numbers<[1], [0], [0], [1], [0, 0, 1, 1], [], []>} : vector<8x128xbf16>, vector<128x512xbf16>, vector<8x512xf32> -> vector<8x512xf32>
    %352 = arith.addf %347, %351 : vector<8x512xf32>
    %353 = vector.extract_strided_slice %352 {offsets = [0, 0], sizes = [8, 384], strides = [1, 1]} : vector<8x512xf32> to vector<8x384xf32>
    %354 = arith.negf %353 : vector<8x384xf32>
    %355 = math.exp %354 : vector<8x384xf32>
    %cst_149 = arith.constant 1.000000e+00 : f32
    %356 = vector.broadcast %cst_149 : f32 to vector<8x384xf32>
    %357 = arith.addf %356, %355 : vector<8x384xf32>
    %358 = arith.divf %356, %357 : vector<8x384xf32>
    %359 = vector.extract_strided_slice %358 {offsets = [0, 0], sizes = [8, 128], strides = [1, 1]} : vector<8x384xf32> to vector<8x128xf32>
    %360 = vector.extract_strided_slice %358 {offsets = [0, 128], sizes = [8, 128], strides = [1, 1]} : vector<8x384xf32> to vector<8x128xf32>
    %361 = vector.extract_strided_slice %358 {offsets = [0, 256], sizes = [8, 128], strides = [1, 1]} : vector<8x384xf32> to vector<8x128xf32>
    %362 = vector.extract_strided_slice %352 {offsets = [0, 384], sizes = [8, 128], strides = [1, 1]} : vector<8x512xf32> to vector<8x128xf32>
    %363 = math.tanh %362 : vector<8x128xf32>
    %364 = arith.mulf %360, %338 : vector<8x128xf32>
    %365 = arith.mulf %359, %363 : vector<8x128xf32>
    %366 = arith.addf %364, %365 : vector<8x128xf32>
    %367 = math.tanh %366 : vector<8x128xf32>
    %368 = arith.mulf %361, %367 : vector<8x128xf32>
    %369 = arith.index_cast %c3_i32_142 : i32 to index
    %c0_150 = arith.constant 0 : index
    %c0_151 = arith.constant 0 : index
    %370 = vector.load %arg14[%369, %c0_150, %c0_151] : memref<8x8x128xf32, #tpu.memory_space<vmem>>, vector<1x8x128xf32>
    %371 = vector.shape_cast %370 : vector<1x8x128xf32> to vector<8x128xf32>
    %372 = vector.shape_cast %368 : vector<8x128xf32> to vector<1x8x128xf32>
    tpu.vector_store %arg14[%369, %c0_150, %c0_151], %372 {strides = array<i32>} : memref<8x8x128xf32, #tpu.memory_space<vmem>>, vector<1x8x128xf32>,
    %c4_i32_152 = arith.constant 4 : i32
    %373 = arith.index_cast %c4_i32_152 : i32 to index
    %c0_153 = arith.constant 0 : index
    %c0_154 = arith.constant 0 : index
    %374 = vector.load %arg13[%373, %c0_153, %c0_154] : memref<8x8x512xf32, #tpu.memory_space<vmem>>, vector<1x8x512xf32>
    %375 = vector.shape_cast %374 : vector<1x8x512xf32> to vector<8x512xf32>
    %376 = arith.truncf %368 : vector<8x128xf32> to vector<8x128xbf16>
    %c1_155 = arith.constant 1 : index
    %c0_156 = arith.constant 0 : index
    %c0_157 = arith.constant 0 : index
    %377 = vector.load %arg4[%c1_155, %c0_156, %c0_157] : memref<2x128x512xbf16, #tpu.memory_space<vmem>>, vector<1x128x512xbf16>
    %378 = vector.shape_cast %377 : vector<1x128x512xbf16> to vector<128x512xbf16>
    %cst_158 = arith.constant dense<0.000000e+00> : vector<8x512xf32>
    %379 = tpu.matmul %376, %378, %cst_158 {dimension_numbers = #tpu.dot_dimension_numbers<[1], [0], [0], [1], [0, 0, 1, 1], [], []>} : vector<8x128xbf16>, vector<128x512xbf16>, vector<8x512xf32> -> vector<8x512xf32>
    %380 = arith.addf %375, %379 : vector<8x512xf32>
    %381 = vector.extract_strided_slice %380 {offsets = [0, 0], sizes = [8, 384], strides = [1, 1]} : vector<8x512xf32> to vector<8x384xf32>
    %382 = arith.negf %381 : vector<8x384xf32>
    %383 = math.exp %382 : vector<8x384xf32>
    %cst_159 = arith.constant 1.000000e+00 : f32
    %384 = vector.broadcast %cst_159 : f32 to vector<8x384xf32>
    %385 = arith.addf %384, %383 : vector<8x384xf32>
    %386 = arith.divf %384, %385 : vector<8x384xf32>
    %387 = vector.extract_strided_slice %386 {offsets = [0, 0], sizes = [8, 128], strides = [1, 1]} : vector<8x384xf32> to vector<8x128xf32>
    %388 = vector.extract_strided_slice %386 {offsets = [0, 128], sizes = [8, 128], strides = [1, 1]} : vector<8x384xf32> to vector<8x128xf32>
    %389 = vector.extract_strided_slice %386 {offsets = [0, 256], sizes = [8, 128], strides = [1, 1]} : vector<8x384xf32> to vector<8x128xf32>
    %390 = vector.extract_strided_slice %380 {offsets = [0, 384], sizes = [8, 128], strides = [1, 1]} : vector<8x512xf32> to vector<8x128xf32>
    %391 = math.tanh %390 : vector<8x128xf32>
    %392 = arith.mulf %388, %366 : vector<8x128xf32>
    %393 = arith.mulf %387, %391 : vector<8x128xf32>
    %394 = arith.addf %392, %393 : vector<8x128xf32>
    %395 = math.tanh %394 : vector<8x128xf32>
    %396 = arith.mulf %389, %395 : vector<8x128xf32>
    %397 = arith.index_cast %c4_i32_152 : i32 to index
    %c0_160 = arith.constant 0 : index
    %c0_161 = arith.constant 0 : index
    %398 = vector.load %arg14[%397, %c0_160, %c0_161] : memref<8x8x128xf32, #tpu.memory_space<vmem>>, vector<1x8x128xf32>
    %399 = vector.shape_cast %398 : vector<1x8x128xf32> to vector<8x128xf32>
    %400 = vector.shape_cast %396 : vector<8x128xf32> to vector<1x8x128xf32>
    tpu.vector_store %arg14[%397, %c0_160, %c0_161], %400 {strides = array<i32>} : memref<8x8x128xf32, #tpu.memory_space<vmem>>, vector<1x8x128xf32>,
    %c5_i32_162 = arith.constant 5 : i32
    %401 = arith.index_cast %c5_i32_162 : i32 to index
    %c0_163 = arith.constant 0 : index
    %c0_164 = arith.constant 0 : index
    %402 = vector.load %arg13[%401, %c0_163, %c0_164] : memref<8x8x512xf32, #tpu.memory_space<vmem>>, vector<1x8x512xf32>
    %403 = vector.shape_cast %402 : vector<1x8x512xf32> to vector<8x512xf32>
    %404 = arith.truncf %396 : vector<8x128xf32> to vector<8x128xbf16>
    %c1_165 = arith.constant 1 : index
    %c0_166 = arith.constant 0 : index
    %c0_167 = arith.constant 0 : index
    %405 = vector.load %arg4[%c1_165, %c0_166, %c0_167] : memref<2x128x512xbf16, #tpu.memory_space<vmem>>, vector<1x128x512xbf16>
    %406 = vector.shape_cast %405 : vector<1x128x512xbf16> to vector<128x512xbf16>
    %cst_168 = arith.constant dense<0.000000e+00> : vector<8x512xf32>
    %407 = tpu.matmul %404, %406, %cst_168 {dimension_numbers = #tpu.dot_dimension_numbers<[1], [0], [0], [1], [0, 0, 1, 1], [], []>} : vector<8x128xbf16>, vector<128x512xbf16>, vector<8x512xf32> -> vector<8x512xf32>
    %408 = arith.addf %403, %407 : vector<8x512xf32>
    %409 = vector.extract_strided_slice %408 {offsets = [0, 0], sizes = [8, 384], strides = [1, 1]} : vector<8x512xf32> to vector<8x384xf32>
    %410 = arith.negf %409 : vector<8x384xf32>
    %411 = math.exp %410 : vector<8x384xf32>
    %cst_169 = arith.constant 1.000000e+00 : f32
    %412 = vector.broadcast %cst_169 : f32 to vector<8x384xf32>
    %413 = arith.addf %412, %411 : vector<8x384xf32>
    %414 = arith.divf %412, %413 : vector<8x384xf32>
    %415 = vector.extract_strided_slice %414 {offsets = [0, 0], sizes = [8, 128], strides = [1, 1]} : vector<8x384xf32> to vector<8x128xf32>
    %416 = vector.extract_strided_slice %414 {offsets = [0, 128], sizes = [8, 128], strides = [1, 1]} : vector<8x384xf32> to vector<8x128xf32>
    %417 = vector.extract_strided_slice %414 {offsets = [0, 256], sizes = [8, 128], strides = [1, 1]} : vector<8x384xf32> to vector<8x128xf32>
    %418 = vector.extract_strided_slice %408 {offsets = [0, 384], sizes = [8, 128], strides = [1, 1]} : vector<8x512xf32> to vector<8x128xf32>
    %419 = math.tanh %418 : vector<8x128xf32>
    %420 = arith.mulf %416, %394 : vector<8x128xf32>
    %421 = arith.mulf %415, %419 : vector<8x128xf32>
    %422 = arith.addf %420, %421 : vector<8x128xf32>
    %423 = math.tanh %422 : vector<8x128xf32>
    %424 = arith.mulf %417, %423 : vector<8x128xf32>
    %425 = arith.index_cast %c5_i32_162 : i32 to index
    %c0_170 = arith.constant 0 : index
    %c0_171 = arith.constant 0 : index
    %426 = vector.load %arg14[%425, %c0_170, %c0_171] : memref<8x8x128xf32, #tpu.memory_space<vmem>>, vector<1x8x128xf32>
    %427 = vector.shape_cast %426 : vector<1x8x128xf32> to vector<8x128xf32>
    %428 = vector.shape_cast %424 : vector<8x128xf32> to vector<1x8x128xf32>
    tpu.vector_store %arg14[%425, %c0_170, %c0_171], %428 {strides = array<i32>} : memref<8x8x128xf32, #tpu.memory_space<vmem>>, vector<1x8x128xf32>,
    %c6_i32_172 = arith.constant 6 : i32
    %429 = arith.index_cast %c6_i32_172 : i32 to index
    %c0_173 = arith.constant 0 : index
    %c0_174 = arith.constant 0 : index
    %430 = vector.load %arg13[%429, %c0_173, %c0_174] : memref<8x8x512xf32, #tpu.memory_space<vmem>>, vector<1x8x512xf32>
    %431 = vector.shape_cast %430 : vector<1x8x512xf32> to vector<8x512xf32>
    %432 = arith.truncf %424 : vector<8x128xf32> to vector<8x128xbf16>
    %c1_175 = arith.constant 1 : index
    %c0_176 = arith.constant 0 : index
    %c0_177 = arith.constant 0 : index
    %433 = vector.load %arg4[%c1_175, %c0_176, %c0_177] : memref<2x128x512xbf16, #tpu.memory_space<vmem>>, vector<1x128x512xbf16>
    %434 = vector.shape_cast %433 : vector<1x128x512xbf16> to vector<128x512xbf16>
    %cst_178 = arith.constant dense<0.000000e+00> : vector<8x512xf32>
    %435 = tpu.matmul %432, %434, %cst_178 {dimension_numbers = #tpu.dot_dimension_numbers<[1], [0], [0], [1], [0, 0, 1, 1], [], []>} : vector<8x128xbf16>, vector<128x512xbf16>, vector<8x512xf32> -> vector<8x512xf32>
    %436 = arith.addf %431, %435 : vector<8x512xf32>
    %437 = vector.extract_strided_slice %436 {offsets = [0, 0], sizes = [8, 384], strides = [1, 1]} : vector<8x512xf32> to vector<8x384xf32>
    %438 = arith.negf %437 : vector<8x384xf32>
    %439 = math.exp %438 : vector<8x384xf32>
    %cst_179 = arith.constant 1.000000e+00 : f32
    %440 = vector.broadcast %cst_179 : f32 to vector<8x384xf32>
    %441 = arith.addf %440, %439 : vector<8x384xf32>
    %442 = arith.divf %440, %441 : vector<8x384xf32>
    %443 = vector.extract_strided_slice %442 {offsets = [0, 0], sizes = [8, 128], strides = [1, 1]} : vector<8x384xf32> to vector<8x128xf32>
    %444 = vector.extract_strided_slice %442 {offsets = [0, 128], sizes = [8, 128], strides = [1, 1]} : vector<8x384xf32> to vector<8x128xf32>
    %445 = vector.extract_strided_slice %442 {offsets = [0, 256], sizes = [8, 128], strides = [1, 1]} : vector<8x384xf32> to vector<8x128xf32>
    %446 = vector.extract_strided_slice %436 {offsets = [0, 384], sizes = [8, 128], strides = [1, 1]} : vector<8x512xf32> to vector<8x128xf32>
    %447 = math.tanh %446 : vector<8x128xf32>
    %448 = arith.mulf %444, %422 : vector<8x128xf32>
    %449 = arith.mulf %443, %447 : vector<8x128xf32>
    %450 = arith.addf %448, %449 : vector<8x128xf32>
    %451 = math.tanh %450 : vector<8x128xf32>
    %452 = arith.mulf %445, %451 : vector<8x128xf32>
    %453 = arith.index_cast %c6_i32_172 : i32 to index
    %c0_180 = arith.constant 0 : index
    %c0_181 = arith.constant 0 : index
    %454 = vector.load %arg14[%453, %c0_180, %c0_181] : memref<8x8x128xf32, #tpu.memory_space<vmem>>, vector<1x8x128xf32>
    %455 = vector.shape_cast %454 : vector<1x8x128xf32> to vector<8x128xf32>
    %456 = vector.shape_cast %452 : vector<8x128xf32> to vector<1x8x128xf32>
    tpu.vector_store %arg14[%453, %c0_180, %c0_181], %456 {strides = array<i32>} : memref<8x8x128xf32, #tpu.memory_space<vmem>>, vector<1x8x128xf32>,
    %c7_i32_182 = arith.constant 7 : i32
    %457 = arith.index_cast %c7_i32_182 : i32 to index
    %c0_183 = arith.constant 0 : index
    %c0_184 = arith.constant 0 : index
    %458 = vector.load %arg13[%457, %c0_183, %c0_184] : memref<8x8x512xf32, #tpu.memory_space<vmem>>, vector<1x8x512xf32>
    %459 = vector.shape_cast %458 : vector<1x8x512xf32> to vector<8x512xf32>
    %460 = arith.truncf %452 : vector<8x128xf32> to vector<8x128xbf16>
    %c1_185 = arith.constant 1 : index
    %c0_186 = arith.constant 0 : index
    %c0_187 = arith.constant 0 : index
    %461 = vector.load %arg4[%c1_185, %c0_186, %c0_187] : memref<2x128x512xbf16, #tpu.memory_space<vmem>>, vector<1x128x512xbf16>
    %462 = vector.shape_cast %461 : vector<1x128x512xbf16> to vector<128x512xbf16>
    %cst_188 = arith.constant dense<0.000000e+00> : vector<8x512xf32>
    %463 = tpu.matmul %460, %462, %cst_188 {dimension_numbers = #tpu.dot_dimension_numbers<[1], [0], [0], [1], [0, 0, 1, 1], [], []>} : vector<8x128xbf16>, vector<128x512xbf16>, vector<8x512xf32> -> vector<8x512xf32>
    %464 = arith.addf %459, %463 : vector<8x512xf32>
    %465 = vector.extract_strided_slice %464 {offsets = [0, 0], sizes = [8, 384], strides = [1, 1]} : vector<8x512xf32> to vector<8x384xf32>
    %466 = arith.negf %465 : vector<8x384xf32>
    %467 = math.exp %466 : vector<8x384xf32>
    %cst_189 = arith.constant 1.000000e+00 : f32
    %468 = vector.broadcast %cst_189 : f32 to vector<8x384xf32>
    %469 = arith.addf %468, %467 : vector<8x384xf32>
    %470 = arith.divf %468, %469 : vector<8x384xf32>
    %471 = vector.extract_strided_slice %470 {offsets = [0, 0], sizes = [8, 128], strides = [1, 1]} : vector<8x384xf32> to vector<8x128xf32>
    %472 = vector.extract_strided_slice %470 {offsets = [0, 128], sizes = [8, 128], strides = [1, 1]} : vector<8x384xf32> to vector<8x128xf32>
    %473 = vector.extract_strided_slice %470 {offsets = [0, 256], sizes = [8, 128], strides = [1, 1]} : vector<8x384xf32> to vector<8x128xf32>
    %474 = vector.extract_strided_slice %464 {offsets = [0, 384], sizes = [8, 128], strides = [1, 1]} : vector<8x512xf32> to vector<8x128xf32>
    %475 = math.tanh %474 : vector<8x128xf32>
    %476 = arith.mulf %472, %450 : vector<8x128xf32>
    %477 = arith.mulf %471, %475 : vector<8x128xf32>
    %478 = arith.addf %476, %477 : vector<8x128xf32>
    %479 = math.tanh %478 : vector<8x128xf32>
    %480 = arith.mulf %473, %479 : vector<8x128xf32>
    %481 = arith.index_cast %c7_i32_182 : i32 to index
    %c0_190 = arith.constant 0 : index
    %c0_191 = arith.constant 0 : index
    %482 = vector.load %arg14[%481, %c0_190, %c0_191] : memref<8x8x128xf32, #tpu.memory_space<vmem>>, vector<1x8x128xf32>
    %483 = vector.shape_cast %482 : vector<1x8x128xf32> to vector<8x128xf32>
    %484 = vector.shape_cast %480 : vector<8x128xf32> to vector<1x8x128xf32>
    tpu.vector_store %arg14[%481, %c0_190, %c0_191], %484 {strides = array<i32>} : memref<8x8x128xf32, #tpu.memory_space<vmem>>, vector<1x8x128xf32>,
    %c8_i32_192 = arith.constant 8 : i32
    %c1_193 = arith.constant 1 : index
    %c0_194 = arith.constant 0 : index
    %c0_195 = arith.constant 0 : index
    %485 = vector.load %arg11[%c1_193, %c0_194, %c0_195] : memref<2x8x128xf32, #tpu.memory_space<vmem>>, vector<1x8x128xf32>
    %486 = vector.shape_cast %485 : vector<1x8x128xf32> to vector<8x128xf32>
    %487 = vector.shape_cast %480 : vector<8x128xf32> to vector<1x8x128xf32>
    tpu.vector_store %arg11[%c1_193, %c0_194, %c0_195], %487 {strides = array<i32>} : memref<2x8x128xf32, #tpu.memory_space<vmem>>, vector<1x8x128xf32>,
    %c1_196 = arith.constant 1 : index
    %c0_197 = arith.constant 0 : index
    %c0_198 = arith.constant 0 : index
    %488 = vector.load %arg12[%c1_196, %c0_197, %c0_198] : memref<2x8x128xf32, #tpu.memory_space<vmem>>, vector<1x8x128xf32>
    %489 = vector.shape_cast %488 : vector<1x8x128xf32> to vector<8x128xf32>
    %490 = vector.shape_cast %478 : vector<8x128xf32> to vector<1x8x128xf32>
    tpu.vector_store %arg12[%c1_196, %c0_197, %c0_198], %490 {strides = array<i32>} : memref<2x8x128xf32, #tpu.memory_space<vmem>>, vector<1x8x128xf32>,
    %c0_199 = arith.constant 0 : index
    %c0_200 = arith.constant 0 : index
    %c0_201 = arith.constant 0 : index
    %491 = vector.load %arg14[%c0_199, %c0_200, %c0_201] : memref<8x8x128xf32, #tpu.memory_space<vmem>>, vector<1x8x128xf32>
    %492 = vector.shape_cast %491 : vector<1x8x128xf32> to vector<8x128xf32>
    %c0_202 = arith.constant 0 : index
    %c0_203 = arith.constant 0 : index
    %493 = vector.load %arg15[%c0_202, %c0_203] : memref<8x1024xf32, #tpu.memory_space<vmem>>, vector<8x128xf32>
    tpu.vector_store %arg15[%c0_202, %c0_203], %492 {strides = array<i32>} : memref<8x1024xf32, #tpu.memory_space<vmem>>, vector<8x128xf32>,
    %c1_204 = arith.constant 1 : index
    %c0_205 = arith.constant 0 : index
    %c0_206 = arith.constant 0 : index
    %494 = vector.load %arg14[%c1_204, %c0_205, %c0_206] : memref<8x8x128xf32, #tpu.memory_space<vmem>>, vector<1x8x128xf32>
    %495 = vector.shape_cast %494 : vector<1x8x128xf32> to vector<8x128xf32>
    %c0_207 = arith.constant 0 : index
    %c128 = arith.constant 128 : index
    %496 = vector.load %arg15[%c0_207, %c128] : memref<8x1024xf32, #tpu.memory_space<vmem>>, vector<8x128xf32>
    tpu.vector_store %arg15[%c0_207, %c128], %495 {strides = array<i32>} : memref<8x1024xf32, #tpu.memory_space<vmem>>, vector<8x128xf32>,
    %c2 = arith.constant 2 : index
    %c0_208 = arith.constant 0 : index
    %c0_209 = arith.constant 0 : index
    %497 = vector.load %arg14[%c2, %c0_208, %c0_209] : memref<8x8x128xf32, #tpu.memory_space<vmem>>, vector<1x8x128xf32>
    %498 = vector.shape_cast %497 : vector<1x8x128xf32> to vector<8x128xf32>
    %c0_210 = arith.constant 0 : index
    %c256 = arith.constant 256 : index
    %499 = vector.load %arg15[%c0_210, %c256] : memref<8x1024xf32, #tpu.memory_space<vmem>>, vector<8x128xf32>
    tpu.vector_store %arg15[%c0_210, %c256], %498 {strides = array<i32>} : memref<8x1024xf32, #tpu.memory_space<vmem>>, vector<8x128xf32>,
    %c3 = arith.constant 3 : index
    %c0_211 = arith.constant 0 : index
    %c0_212 = arith.constant 0 : index
    %500 = vector.load %arg14[%c3, %c0_211, %c0_212] : memref<8x8x128xf32, #tpu.memory_space<vmem>>, vector<1x8x128xf32>
    %501 = vector.shape_cast %500 : vector<1x8x128xf32> to vector<8x128xf32>
    %c0_213 = arith.constant 0 : index
    %c384 = arith.constant 384 : index
    %502 = vector.load %arg15[%c0_213, %c384] : memref<8x1024xf32, #tpu.memory_space<vmem>>, vector<8x128xf32>
    tpu.vector_store %arg15[%c0_213, %c384], %501 {strides = array<i32>} : memref<8x1024xf32, #tpu.memory_space<vmem>>, vector<8x128xf32>,
    %c4 = arith.constant 4 : index
    %c0_214 = arith.constant 0 : index
    %c0_215 = arith.constant 0 : index
    %503 = vector.load %arg14[%c4, %c0_214, %c0_215] : memref<8x8x128xf32, #tpu.memory_space<vmem>>, vector<1x8x128xf32>
    %504 = vector.shape_cast %503 : vector<1x8x128xf32> to vector<8x128xf32>
    %c0_216 = arith.constant 0 : index
    %c512 = arith.constant 512 : index
    %505 = vector.load %arg15[%c0_216, %c512] : memref<8x1024xf32, #tpu.memory_space<vmem>>, vector<8x128xf32>
    tpu.vector_store %arg15[%c0_216, %c512], %504 {strides = array<i32>} : memref<8x1024xf32, #tpu.memory_space<vmem>>, vector<8x128xf32>,
    %c5 = arith.constant 5 : index
    %c0_217 = arith.constant 0 : index
    %c0_218 = arith.constant 0 : index
    %506 = vector.load %arg14[%c5, %c0_217, %c0_218] : memref<8x8x128xf32, #tpu.memory_space<vmem>>, vector<1x8x128xf32>
    %507 = vector.shape_cast %506 : vector<1x8x128xf32> to vector<8x128xf32>
    %c0_219 = arith.constant 0 : index
    %c640 = arith.constant 640 : index
    %508 = vector.load %arg15[%c0_219, %c640] : memref<8x1024xf32, #tpu.memory_space<vmem>>, vector<8x128xf32>
    tpu.vector_store %arg15[%c0_219, %c640], %507 {strides = array<i32>} : memref<8x1024xf32, #tpu.memory_space<vmem>>, vector<8x128xf32>,
    %c6 = arith.constant 6 : index
    %c0_220 = arith.constant 0 : index
    %c0_221 = arith.constant 0 : index
    %509 = vector.load %arg14[%c6, %c0_220, %c0_221] : memref<8x8x128xf32, #tpu.memory_space<vmem>>, vector<1x8x128xf32>
    %510 = vector.shape_cast %509 : vector<1x8x128xf32> to vector<8x128xf32>
    %c0_222 = arith.constant 0 : index
    %c768 = arith.constant 768 : index
    %511 = vector.load %arg15[%c0_222, %c768] : memref<8x1024xf32, #tpu.memory_space<vmem>>, vector<8x128xf32>
    tpu.vector_store %arg15[%c0_222, %c768], %510 {strides = array<i32>} : memref<8x1024xf32, #tpu.memory_space<vmem>>, vector<8x128xf32>,
    %c7 = arith.constant 7 : index
    %c0_223 = arith.constant 0 : index
    %c0_224 = arith.constant 0 : index
    %512 = vector.load %arg14[%c7, %c0_223, %c0_224] : memref<8x8x128xf32, #tpu.memory_space<vmem>>, vector<1x8x128xf32>
    %513 = vector.shape_cast %512 : vector<1x8x128xf32> to vector<8x128xf32>
    %c0_225 = arith.constant 0 : index
    %c896 = arith.constant 896 : index
    %514 = vector.load %arg15[%c0_225, %c896] : memref<8x1024xf32, #tpu.memory_space<vmem>>, vector<8x128xf32>
    tpu.vector_store %arg15[%c0_225, %c896], %513 {strides = array<i32>} : memref<8x1024xf32, #tpu.memory_space<vmem>>, vector<8x128xf32>,
    %c0_226 = arith.constant 0 : index
    %c0_227 = arith.constant 0 : index
    %515 = vector.load %arg15[%c0_226, %c0_227] : memref<8x1024xf32, #tpu.memory_space<vmem>>, vector<8x1024xf32>
    %516 = arith.truncf %515 : vector<8x1024xf32> to vector<8x1024xbf16>
    %c0_228 = arith.constant 0 : index
    %c0_229 = arith.constant 0 : index
    %517 = vector.load %arg8[%c0_228, %c0_229] : memref<1024x128xbf16, #tpu.memory_space<vmem>>, vector<1024x128xbf16>
    %cst_230 = arith.constant dense<0.000000e+00> : vector<8x128xf32>
    %518 = tpu.matmul %516, %517, %cst_230 {dimension_numbers = #tpu.dot_dimension_numbers<[1], [0], [0], [1], [0, 0, 1, 1], [], []>} : vector<8x1024xbf16>, vector<1024x128xbf16>, vector<8x128xf32> -> vector<8x128xf32>
    %c0_231 = arith.constant 0 : index
    %c0_232 = arith.constant 0 : index
    %519 = vector.load %arg9[%c0_231, %c0_232] : memref<1x128xf32, #tpu.memory_space<vmem>>, vector<1x128xf32>
    %520 = vector.broadcast %519 : vector<1x128xf32> to vector<8x128xf32>
    %521 = arith.addf %518, %520 : vector<8x128xf32>
    %c0_233 = arith.constant 0 : index
    %c0_234 = arith.constant 0 : index
    %522 = vector.load %arg10[%c0_233, %c0_234] : memref<8x128xf32, #tpu.memory_space<vmem>>, vector<8x128xf32>
    tpu.vector_store %arg10[%c0_233, %c0_234], %521 {strides = array<i32>} : memref<8x128xf32, #tpu.memory_space<vmem>>, vector<8x128xf32>,
    return
  }
  func.func @transform_0(%arg0: i32) -> (i32, i32, i32) {
    %c0_i32 = arith.constant 0 : i32
    %c0_i32_0 = arith.constant 0 : i32
    %c0_i32_1 = arith.constant 0 : i32
    return %c0_i32, %arg0, %c0_i32_0 : i32, i32, i32
  }
  func.func @transform_1(%arg0: i32) -> (i32, i32) {
    %c0_i32 = arith.constant 0 : i32
    %c0_i32_0 = arith.constant 0 : i32
    %c0_i32_1 = arith.constant 0 : i32
    return %c0_i32, %c0_i32_0 : i32, i32
  }
  func.func @transform_2(%arg0: i32) -> (i32, i32, i32) {
    %c0_i32 = arith.constant 0 : i32
    %c0_i32_0 = arith.constant 0 : i32
    %c0_i32_1 = arith.constant 0 : i32
    %c0_i32_2 = arith.constant 0 : i32
    return %c0_i32, %c0_i32_0, %c0_i32_1 : i32, i32, i32
  }
  func.func @transform_3(%arg0: i32) -> (i32, i32, i32) {
    %c0_i32 = arith.constant 0 : i32
    %c0_i32_0 = arith.constant 0 : i32
    %c0_i32_1 = arith.constant 0 : i32
    %c0_i32_2 = arith.constant 0 : i32
    return %c0_i32, %c0_i32_0, %c0_i32_1 : i32, i32, i32
  }
  func.func @transform_4(%arg0: i32) -> (i32, i32, i32) {
    %c0_i32 = arith.constant 0 : i32
    %c0_i32_0 = arith.constant 0 : i32
    %c0_i32_1 = arith.constant 0 : i32
    %c0_i32_2 = arith.constant 0 : i32
    return %c0_i32, %c0_i32_0, %c0_i32_1 : i32, i32, i32
  }
  func.func @transform_5(%arg0: i32) -> (i32, i32, i32) {
    %c0_i32 = arith.constant 0 : i32
    %c0_i32_0 = arith.constant 0 : i32
    %c0_i32_1 = arith.constant 0 : i32
    return %c0_i32, %arg0, %c0_i32_0 : i32, i32, i32
  }
  func.func @transform_6(%arg0: i32) -> (i32, i32, i32) {
    %c0_i32 = arith.constant 0 : i32
    %c0_i32_0 = arith.constant 0 : i32
    %c0_i32_1 = arith.constant 0 : i32
    return %c0_i32, %arg0, %c0_i32_0 : i32, i32, i32
  }
  func.func @transform_7(%arg0: i32) -> (i32, i32) {
    %c0_i32 = arith.constant 0 : i32
    %c0_i32_0 = arith.constant 0 : i32
    %c0_i32_1 = arith.constant 0 : i32
    return %c0_i32, %c0_i32_0 : i32, i32
  }
  func.func @transform_8(%arg0: i32) -> (i32, i32) {
    %c0_i32 = arith.constant 0 : i32
    %c0_i32_0 = arith.constant 0 : i32
    %c0_i32_1 = arith.constant 0 : i32
    return %c0_i32, %c0_i32_0 : i32, i32
  }
  func.func @transform_9(%arg0: i32) -> (i32, i32) {
    %c0_i32 = arith.constant 0 : i32
    %c0_i32_0 = arith.constant 0 : i32
    return %arg0, %c0_i32 : i32, i32
  }
  func.func @transform_10(%arg0: i32) -> (i32, i32, i32) {
    %c0_i32 = arith.constant 0 : i32
    %c0_i32_0 = arith.constant 0 : i32
    %c0_i32_1 = arith.constant 0 : i32
    return %c0_i32, %arg0, %c0_i32_0 : i32, i32, i32
  }
  func.func @transform_11(%arg0: i32) -> (i32, i32, i32) {
    %c0_i32 = arith.constant 0 : i32
    %c0_i32_0 = arith.constant 0 : i32
    %c0_i32_1 = arith.constant 0 : i32
    return %c0_i32, %arg0, %c0_i32_0 : i32, i32, i32
  }
}

</mosaic_0001>

<llo_original>
// kernel: tpu_custom_call.1
$region0: #{tpu_custom_call.1}
  #allocation0 [shape = 'u32[]', space=smem, size = 0x4, offset = 0x4, fixed_abs, tag = 'smem constant byte address 0x4 - core index']
  #allocation1 [shape = 'u32[144,128]{1,0:T(1,128)}', space=vmem, size = 0x12000, scoped, tag = 'internal scratch']
  #allocation2 [shape = 'f32[8,8,512]{2,1,0:T(8,128)}', space=vmem, size = 0x20000, scoped, tag = 'scratch operand']
  #allocation3 [shape = 'f32[8,8,128]{2,1,0:T(8,128)}', space=vmem, size = 0x8000, scoped, tag = 'scratch operand']
  #allocation4 [shape = 'f32[8,1024]{1,0:T(8,128)}', space=vmem, size = 0x8000, scoped, tag = 'scratch operand']
  %s0 = inlined_call_operand.hbm [shape: f32[8,8,128], index: 0, kind: input, shape index: {}]
  %s1 = inlined_call_operand.hbm [shape: bf16[128,512], index: 1, kind: input, shape index: {}]
  %s2 = inlined_call_operand.hbm [shape: bf16[1,128,512], index: 2, kind: input, shape index: {}]
  %s3 = inlined_call_operand.hbm [shape: bf16[2,128,512], index: 3, kind: input, shape index: {}]
  %s4 = inlined_call_operand.hbm [shape: f32[2,1,512], index: 4, kind: input, shape index: {}]
  %s5 = inlined_call_operand.vmem [shape: f32[2,8,128], index: 5, kind: input, shape index: {}]
  %s6 = inlined_call_operand.hbm [shape: f32[2,8,128], index: 6, kind: input, shape index: {}]
  %s7 = inlined_call_operand.hbm [shape: bf16[1024,128], index: 7, kind: input, shape index: {}]
  %s8 = inlined_call_operand.vmem [shape: f32[1,128], index: 8, kind: input, shape index: {}]
  %s9 = inlined_call_operand.hbm [shape: f32[8,128], index: 9, kind: output, shape index: {0}]
  %s10 = inlined_call_operand.hbm [shape: f32[2,8,128], index: 10, kind: output, shape index: {1}]
  %s11 = inlined_call_operand.hbm [shape: f32[2,8,128], index: 11, kind: output, shape index: {2}]
  %12 = xla_tuple %s9, %s10, %s11
  %s13 = sld [smem:[#allocation0]]
  $region90: #{tpu_custom_call.1} parent=0
    _
  %s15 = ssub.s32 1, %s13
  %s16 = scalar_select 0, %s15, %s13
  $region1: #{tpu_custom_call.1} parent=0
    #allocation5 [shape = 'u8[32768]{0}', space=vmem, size = 0x8000, scoped, tag = 'input window, operand 0, single buffered']
    #allocation6 [shape = 's32[1]{0}', space=sflag, size = 0x4, scoped, tag = 'scoped memory for tpu_custom_call.1']
    #allocation7 [shape = 's32[1]{0}', space=sflag, size = 0x4, scoped, tag = 'scoped memory for tpu_custom_call.1']
    #allocation8 [shape = 'u8[131072]{0}', space=vmem, size = 0x20000, scoped, tag = 'input window, operand 1, single buffered']
    #allocation9 [shape = 's32[1]{0}', space=sflag, size = 0x4, scoped, tag = 'scoped memory for tpu_custom_call.1']
    #allocation10 [shape = 'u8[131072]{0}', space=vmem, size = 0x20000, scoped, tag = 'input window, operand 2, single buffered']
    #allocation11 [shape = 'u8[262144]{0}', space=vmem, size = 0x40000, scoped, tag = 'input window, operand 3, single buffered']
    #allocation12 [shape = 's32[1]{0}', space=sflag, size = 0x4, scoped, tag = 'scoped memory for tpu_custom_call.1']
    #allocation13 [shape = 'u8[4096]{0}', space=vmem, size = 0x1000, scoped, tag = 'input window, operand 4, single buffered']
    #allocation14 [shape = 'u8[8192]{0}', space=vmem, size = 0x2000, scoped, tag = 'input window, operand 6, single buffered']
    #allocation15 [shape = 's32[1]{0}', space=sflag, size = 0x4, scoped, tag = 'scoped memory for tpu_custom_call.1']
    #allocation16 [shape = 'u8[262144]{0}', space=vmem, size = 0x40000, scoped, tag = 'input window, operand 7, single buffered']
    #allocation17 [shape = 'u8[4096]{0}', space=vmem, size = 0x1000, scoped, tag = 'output window, operand 0, single buffered']
    #allocation18 [shape = 'u8[8192]{0}', space=vmem, size = 0x2000, scoped, tag = 'output window, operand 1, single buffered']
    #allocation19 [shape = 's32[1]{0}', space=sflag, size = 0x4, scoped, tag = 'scoped memory for tpu_custom_call.1']
    #allocation20 [shape = 'u8[8192]{0}', space=vmem, size = 0x2000, scoped, tag = 'output window, operand 2, single buffered']
    %17 = vsyncpa [#allocation6], 0
    %18 = vsyncpa [#allocation9], 0
    %19 = vsyncpa [#allocation12], 0
    %20 = vsyncpa [#allocation15], 0
    %21 = vsyncpa [#allocation7], 0
    %22 = vsyncpa [#allocation19], 0
    // Predicated region
    $region2: #{tpu_custom_call.1} parent=1 // pred_check
      _
    $region3: #{tpu_custom_call.1} parent=1 // pred_check_branch
      %24 = sbr.rel (0) target = $region5
    $region4: #{tpu_custom_call.1} parent=1 // pred_region
      %s26 = ssub.s32 1024, 1024
      %27 = vsyncadd [#allocation6], %s26
      %s28 = sshll.u32 [#allocation5], 4
      %s29 = int_to_ptr.vmem [resolvable:$true] %s28
      %34 = dma.hbm_to_vmem [thread:$0]  %s0, 1024, %s29, [#allocation6], 128, 128, 8
    $region5: #{tpu_custom_call.1} parent=1 // pred_fallthru
      _
    // Predicated region
    $region6: #{tpu_custom_call.1} parent=1 // pred_check
      _
    $region7: #{tpu_custom_call.1} parent=1 // pred_check_branch
      %36 = sbr.rel (0) target = $region9
    $region8: #{tpu_custom_call.1} parent=1 // pred_region
      %s38 = ssub.s32 4096, 4096
      %39 = vsyncadd [#allocation9], %s38
      %s40 = sshll.u32 [#allocation8], 4
      %s41 = int_to_ptr.vmem [resolvable:$true] %s40
      %46 = dma.hbm_to_vmem [thread:$0]  %s1, 4096, %s41, [#allocation9], 256, 256, 16
    $region9: #{tpu_custom_call.1} parent=1 // pred_fallthru
      _
    // Predicated region
    $region10: #{tpu_custom_call.1} parent=1 // pred_check
      _
    $region11: #{tpu_custom_call.1} parent=1 // pred_check_branch
      %48 = sbr.rel (0) target = $region13
    $region12: #{tpu_custom_call.1} parent=1 // pred_region
      %s50 = ssub.s32 4096, 4096
      %51 = vsyncadd [#allocation9], %s50
      %s52 = sshll.u32 [#allocation10], 4
      %s53 = int_to_ptr.vmem [resolvable:$true] %s52
      %58 = dma.hbm_to_vmem [thread:$0]  %s2, 4096, %s53, [#allocation9], 256, 256, 16
    $region13: #{tpu_custom_call.1} parent=1 // pred_fallthru
      _
    // Predicated region
    $region14: #{tpu_custom_call.1} parent=1 // pred_check
      _
    $region15: #{tpu_custom_call.1} parent=1 // pred_check_branch
      %60 = sbr.rel (0) target = $region17
    $region16: #{tpu_custom_call.1} parent=1 // pred_region
      %s62 = ssub.s32 8192, 8192
      %63 = vsyncadd [#allocation12], %s62
      %s64 = sshll.u32 [#allocation11], 4
      %s65 = int_to_ptr.vmem [resolvable:$true] %s64
      %70 = dma.hbm_to_vmem [thread:$0]  %s3, 8192, %s65, [#allocation12], 256, 256, 16
    $region17: #{tpu_custom_call.1} parent=1 // pred_fallthru
      _
    // Predicated region
    $region18: #{tpu_custom_call.1} parent=1 // pred_check
      _
    $region19: #{tpu_custom_call.1} parent=1 // pred_check_branch
      %72 = sbr.rel (0) target = $region21
    $region20: #{tpu_custom_call.1} parent=1 // pred_region
      %s74 = ssub.s32 128, 128
      %75 = vsyncadd [#allocation12], %s74
      %s76 = sshll.u32 [#allocation13], 4
      %s77 = int_to_ptr.vmem [resolvable:$true] %s76
      %82 = dma.hbm_to_vmem [thread:$0]  %s4, 128, %s77, [#allocation12], 64, 64, 4
    $region21: #{tpu_custom_call.1} parent=1 // pred_fallthru
      _
    // Predicated region
    $region22: #{tpu_custom_call.1} parent=1 // pred_check
      _
    $region23: #{tpu_custom_call.1} parent=1 // pred_check_branch
      %84 = sbr.rel (0) target = $region25
    $region24: #{tpu_custom_call.1} parent=1 // pred_region
      _
    $region25: #{tpu_custom_call.1} parent=1 // pred_fallthru
      _
    // Predicated region
    $region26: #{tpu_custom_call.1} parent=1 // pred_check
      _
    $region27: #{tpu_custom_call.1} parent=1 // pred_check_branch
      %86 = sbr.rel (0) target = $region29
    $region28: #{tpu_custom_call.1} parent=1 // pred_region
      %s88 = ssub.s32 256, 256
      %89 = vsyncadd [#allocation15], %s88
      %s90 = sshll.u32 [#allocation14], 4
      %s91 = int_to_ptr.vmem [resolvable:$true] %s90
      %96 = dma.hbm_to_vmem [thread:$0]  %s6, 256, %s91, [#allocation15], 128, 128, 8
    $region29: #{tpu_custom_call.1} parent=1 // pred_fallthru
      _
    // Predicated region
    $region30: #{tpu_custom_call.1} parent=1 // pred_check
      _
    $region31: #{tpu_custom_call.1} parent=1 // pred_check_branch
      %98 = sbr.rel (0) target = $region33
    $region32: #{tpu_custom_call.1} parent=1 // pred_region
      %s100 = ssub.s32 8192, 8192
      %101 = vsyncadd [#allocation15], %s100
      %s102 = sshll.u32 [#allocation16], 4
      %s103 = int_to_ptr.vmem [resolvable:$true] %s102
      %108 = dma.hbm_to_vmem [thread:$0]  %s7, 8192, %s103, [#allocation15], 64, 64, 4
    $region33: #{tpu_custom_call.1} parent=1 // pred_fallthru
      _
    // Predicated region
    $region34: #{tpu_custom_call.1} parent=1 // pred_check
      _
    $region35: #{tpu_custom_call.1} parent=1 // pred_check_branch
      %110 = sbr.rel (0) target = $region37
    $region36: #{tpu_custom_call.1} parent=1 // pred_region
      _
    $region37: #{tpu_custom_call.1} parent=1 // pred_fallthru
      _
    // Predicated region
    $region38: #{tpu_custom_call.1} parent=1 // pred_check
      _
    $region39: #{tpu_custom_call.1} parent=1 // pred_check_branch
      %112 = sbr.rel (0) target = $region41
    $region40: #{tpu_custom_call.1} parent=1 // pred_region
      %113 = dma.done [#allocation6], 1024
    $region41: #{tpu_custom_call.1} parent=1 // pred_fallthru
      _
    // Predicated region
    $region42: #{tpu_custom_call.1} parent=1 // pred_check
      _
    $region43: #{tpu_custom_call.1} parent=1 // pred_check_branch
      %115 = sbr.rel (0) target = $region45
    $region44: #{tpu_custom_call.1} parent=1 // pred_region
      %116 = dma.done [#allocation9], 4096
    $region45: #{tpu_custom_call.1} parent=1 // pred_fallthru
      _
    // Predicated region
    $region46: #{tpu_custom_call.1} parent=1 // pred_check
      _
    $region47: #{tpu_custom_call.1} parent=1 // pred_check_branch
      %118 = sbr.rel (0) target = $region49
    $region48: #{tpu_custom_call.1} parent=1 // pred_region
      %119 = dma.done [#allocation9], 4096
    $region49: #{tpu_custom_call.1} parent=1 // pred_fallthru
      _
    // Predicated region
    $region50: #{tpu_custom_call.1} parent=1 // pred_check
      _
    $region51: #{tpu_custom_call.1} parent=1 // pred_check_branch
      %121 = sbr.rel (0) target = $region53
    $region52: #{tpu_custom_call.1} parent=1 // pred_region
      %122 = dma.done [#allocation12], 8192
    $region53: #{tpu_custom_call.1} parent=1 // pred_fallthru
      _
    // Predicated region
    $region54: #{tpu_custom_call.1} parent=1 // pred_check
      _
    $region55: #{tpu_custom_call.1} parent=1 // pred_check_branch
      %124 = sbr.rel (0) target = $region57
    $region56: #{tpu_custom_call.1} parent=1 // pred_region
      %125 = dma.done [#allocation12], 128
    $region57: #{tpu_custom_call.1} parent=1 // pred_fallthru
      _
    // Predicated region
    $region58: #{tpu_custom_call.1} parent=1 // pred_check
      _
    $region59: #{tpu_custom_call.1} parent=1 // pred_check_branch
      %127 = sbr.rel (0) target = $region61
    $region60: #{tpu_custom_call.1} parent=1 // pred_region
      %128 = dma.done [#allocation15], 256
    $region61: #{tpu_custom_call.1} parent=1 // pred_fallthru
      _
    // Predicated region
    $region62: #{tpu_custom_call.1} parent=1 // pred_check
      _
    $region63: #{tpu_custom_call.1} parent=1 // pred_check_branch
      %130 = sbr.rel (0) target = $region65
    $region64: #{tpu_custom_call.1} parent=1 // pred_region
      %131 = dma.done [#allocation15], 8192
    $region65: #{tpu_custom_call.1} parent=1 // pred_fallthru
      _
    %v133 = vld [vmem:[#allocation5] sm:$0xff]
    %v134 = vld [vmem:[#allocation5 + $0x8] sm:$0xff]
    %v135 = vld [vmem:[#allocation5 + $0x10] sm:$0xff]
    %v136 = vld [vmem:[#allocation5 + $0x18] sm:$0xff]
    %v137 = vld [vmem:[#allocation5 + $0x20] sm:$0xff]
    %v138 = vld [vmem:[#allocation5 + $0x28] sm:$0xff]
    %v139 = vld [vmem:[#allocation5 + $0x30] sm:$0xff]
    %v140 = vld [vmem:[#allocation5 + $0x38] sm:$0xff]
    %v141 = vld [vmem:[#allocation8] sm:$0xff]
    %v142 = vld [vmem:[#allocation8 + $0x8] sm:$0xff]
    %v143 = vld [vmem:[#allocation8 + $0x10] sm:$0xff]
    %v144 = vld [vmem:[#allocation8 + $0x18] sm:$0xff]
    %v145 = vld [vmem:[#allocation8 + $0x20] sm:$0xff]
    %v146 = vld [vmem:[#allocation8 + $0x28] sm:$0xff]
    %v147 = vld [vmem:[#allocation8 + $0x30] sm:$0xff]
    %v148 = vld [vmem:[#allocation8 + $0x38] sm:$0xff]
    %v149 = vld [vmem:[#allocation8 + $0x40] sm:$0xff]
    %v150 = vld [vmem:[#allocation8 + $0x48] sm:$0xff]
    %v151 = vld [vmem:[#allocation8 + $0x50] sm:$0xff]
    %v152 = vld [vmem:[#allocation8 + $0x58] sm:$0xff]
    %v153 = vld [vmem:[#allocation8 + $0x60] sm:$0xff]
    %v154 = vld [vmem:[#allocation8 + $0x68] sm:$0xff]
    %v155 = vld [vmem:[#allocation8 + $0x70] sm:$0xff]
    %v156 = vld [vmem:[#allocation8 + $0x78] sm:$0xff]
    %v157 = vld [vmem:[#allocation8 + $0x80] sm:$0xff]
    %v158 = vld [vmem:[#allocation8 + $0x88] sm:$0xff]
    %v159 = vld [vmem:[#allocation8 + $0x90] sm:$0xff]
    %v160 = vld [vmem:[#allocation8 + $0x98] sm:$0xff]
    %v161 = vld [vmem:[#allocation8 + $0xa0] sm:$0xff]
    %v162 = vld [vmem:[#allocation8 + $0xa8] sm:$0xff]
    %v163 = vld [vmem:[#allocation8 + $0xb0] sm:$0xff]
    %v164 = vld [vmem:[#allocation8 + $0xb8] sm:$0xff]
    %v165 = vld [vmem:[#allocation8 + $0xc0] sm:$0xff]
    %v166 = vld [vmem:[#allocation8 + $0xc8] sm:$0xff]
    %v167 = vld [vmem:[#allocation8 + $0xd0] sm:$0xff]
    %v168 = vld [vmem:[#allocation8 + $0xd8] sm:$0xff]
    %v169 = vld [vmem:[#allocation8 + $0xe0] sm:$0xff]
    %v170 = vld [vmem:[#allocation8 + $0xe8] sm:$0xff]
    %v171 = vld [vmem:[#allocation8 + $0xf0] sm:$0xff]
    %v172 = vld [vmem:[#allocation8 + $0xf8] sm:$0xff]
    %v173 = vpack.c.bf16 %v134, %v133
    %v174 = vpack.c.bf16 %v136, %v135
    %v175 = vpack.c.bf16 %v138, %v137
    %v176 = vpack.c.bf16 %v140, %v139
    %v177 = vld [vmem:[#allocation13] sm:$0xf]
    %v179 = vlaneseq
    %v180 = vshrl.u32 %v179, 7
    %v181 = vsub.s32 0, %v180
    %v182 = vrot.slane %v177, %v181
    %v183 = vlaneseq
    %v184 = vshrl.u32 %v183, 7
    %v185 = vsub.s32 1, %v184
    %v186 = vrot.slane %v177, %v185
    %v187 = vlaneseq
    %v188 = vshrl.u32 %v187, 7
    %v189 = vsub.s32 2, %v188
    %v190 = vrot.slane %v177, %v189
    %v191 = vlaneseq
    %v192 = vshrl.u32 %v191, 7
    %v193 = vsub.s32 3, %v192
    %v194 = vrot.slane %v177, %v193
    %v231 = vunpack.c.l.b16 %v141
    %v232 = vunpack.c.h.b16 %v141
    %v233 = vunpack.c.l.b16 %v142
    %v234 = vunpack.c.h.b16 %v142
    %v235 = vunpack.c.l.b16 %v143
    %v236 = vunpack.c.h.b16 %v143
    %v237 = vunpack.c.l.b16 %v144
    %v238 = vunpack.c.h.b16 %v144
    %v239 = vunpack.c.l.b16 %v145
    %v240 = vunpack.c.h.b16 %v145
    %v241 = vunpack.c.l.b16 %v146
    %v242 = vunpack.c.h.b16 %v146
    %v243 = vunpack.c.l.b16 %v147
    %v244 = vunpack.c.h.b16 %v147
    %v245 = vunpack.c.l.b16 %v148
    %v246 = vunpack.c.h.b16 %v148
    %v247 = vunpack.c.l.b16 %v149
    %v248 = vunpack.c.h.b16 %v149
    %v249 = vunpack.c.l.b16 %v150
    %v250 = vunpack.c.h.b16 %v150
    %v251 = vunpack.c.l.b16 %v151
    %v252 = vunpack.c.h.b16 %v151
    %v253 = vunpack.c.l.b16 %v152
    %v254 = vunpack.c.h.b16 %v152
    %v255 = vunpack.c.l.b16 %v153
    %v256 = vunpack.c.h.b16 %v153
    %v257 = vunpack.c.l.b16 %v154
    %v258 = vunpack.c.h.b16 %v154
    %v259 = vunpack.c.l.b16 %v155
    %v260 = vunpack.c.h.b16 %v155
    %v261 = vunpack.c.l.b16 %v156
    %v262 = vunpack.c.h.b16 %v156
    %v263 = vunpack.c.l.b16 %v157
    %v264 = vunpack.c.h.b16 %v157
    %v265 = vunpack.c.l.b16 %v158
    %v266 = vunpack.c.h.b16 %v158
    %v267 = vunpack.c.l.b16 %v159
    %v268 = vunpack.c.h.b16 %v159
    %v269 = vunpack.c.l.b16 %v160
    %v270 = vunpack.c.h.b16 %v160
    %v271 = vunpack.c.l.b16 %v161
    %v272 = vunpack.c.h.b16 %v161
    %v273 = vunpack.c.l.b16 %v162
    %v274 = vunpack.c.h.b16 %v162
    %v275 = vunpack.c.l.b16 %v163
    %v276 = vunpack.c.h.b16 %v163
    %v277 = vunpack.c.l.b16 %v164
    %v278 = vunpack.c.h.b16 %v164
    %v279 = vunpack.c.l.b16 %v165
    %v280 = vunpack.c.h.b16 %v165
    %v281 = vunpack.c.l.b16 %v166
    %v282 = vunpack.c.h.b16 %v166
    %v283 = vunpack.c.l.b16 %v167
    %v284 = vunpack.c.h.b16 %v167
    %v285 = vunpack.c.l.b16 %v168
    %v286 = vunpack.c.h.b16 %v168
    %v287 = vunpack.c.l.b16 %v169
    %v288 = vunpack.c.h.b16 %v169
    %v289 = vunpack.c.l.b16 %v170
    %v290 = vunpack.c.h.b16 %v170
    %v291 = vunpack.c.l.b16 %v171
    %v292 = vunpack.c.h.b16 %v171
    %v293 = vunpack.c.l.b16 %v172
    %v294 = vunpack.c.h.b16 %v172
    %v295 = vpack.c.b16 %v235, %v231
    %v296 = vpack.c.b16 %v236, %v232
    %v297 = vpack.c.b16 %v237, %v233
    %v298 = vpack.c.b16 %v238, %v234
    %v299 = vpack.c.b16 %v243, %v239
    %v300 = vpack.c.b16 %v244, %v240
    %v301 = vpack.c.b16 %v245, %v241
    %v302 = vpack.c.b16 %v246, %v242
    %v303 = vpack.c.b16 %v251, %v247
    %v304 = vpack.c.b16 %v252, %v248
    %v305 = vpack.c.b16 %v253, %v249
    %v306 = vpack.c.b16 %v254, %v250
    %v307 = vpack.c.b16 %v259, %v255
    %v308 = vpack.c.b16 %v260, %v256
    %v309 = vpack.c.b16 %v261, %v257
    %v310 = vpack.c.b16 %v262, %v258
    %v311 = vpack.c.b16 %v267, %v263
    %v312 = vpack.c.b16 %v268, %v264
    %v313 = vpack.c.b16 %v269, %v265
    %v314 = vpack.c.b16 %v270, %v266
    %v315 = vpack.c.b16 %v275, %v271
    %v316 = vpack.c.b16 %v276, %v272
    %v317 = vpack.c.b16 %v277, %v273
    %v318 = vpack.c.b16 %v278, %v274
    %v319 = vpack.c.b16 %v283, %v279
    %v320 = vpack.c.b16 %v284, %v280
    %v321 = vpack.c.b16 %v285, %v281
    %v322 = vpack.c.b16 %v286, %v282
    %v323 = vpack.c.b16 %v291, %v287
    %v324 = vpack.c.b16 %v292, %v288
    %v325 = vpack.c.b16 %v293, %v289
    %v326 = vpack.c.b16 %v294, %v290
    %359 = vmatprep.subr.bf16.mxu0 %v296
    %360 = vmatpush1.bf16.msra.mxu0 %v295
    %361 = vmatprep.subr.bf16.mxu0 %v300
    %362 = vmatpush1.bf16.msra.mxu0 %v299
    %363 = vmatprep.subr.bf16.mxu0 %v304
    %364 = vmatpush1.bf16.msra.mxu0 %v303
    %365 = vmatprep.subr.bf16.mxu0 %v308
    %366 = vmatpush1.bf16.msra.mxu0 %v307
    %367 = vmatprep.subr.bf16.mxu0 %v312
    %368 = vmatpush1.bf16.msra.mxu0 %v311
    %369 = vmatprep.subr.bf16.mxu0 %v316
    %370 = vmatpush1.bf16.msra.mxu0 %v315
    %371 = vmatprep.subr.bf16.mxu0 %v320
    %372 = vmatpush1.bf16.msra.mxu0 %v319
    %373 = vmatprep.subr.bf16.mxu0 %v324
    %374 = vmatpush1.bf16.msra.mxu0 %v323
    %375 = vmatprep.subr.bf16.mxu0 0
    %376 = vmatpush1.bf16.msra.mxu0 0
    %377 = vmatprep.subr.bf16.mxu0 0
    %378 = vmatpush1.bf16.msra.mxu0 0
    %379 = vmatprep.subr.bf16.mxu0 0
    %380 = vmatpush1.bf16.msra.mxu0 0
    %381 = vmatprep.subr.bf16.mxu0 0
    %382 = vmatpush1.bf16.msra.mxu0 0
    %383 = vmatprep.subr.bf16.mxu0 0
    %384 = vmatpush1.bf16.msra.mxu0 0
    %385 = vmatprep.subr.bf16.mxu0 0
    %386 = vmatpush1.bf16.msra.mxu0 0
    %387 = vmatprep.subr.bf16.mxu0 0
    %388 = vmatpush1.bf16.msra.mxu0 0
    %389 = vmatprep.subr.bf16.mxu0 0
    %390 = vmatpush1.bf16.msra.mxu0 0
    %391 = vmatprep.mubr.bf16.mxu0 0
    %392 = vmatmul.mubr.bf16.gmra.mrb[0].mxu0 %v173
    %v393 = vpop.f32.mrb[0].mxu0
    %v394 = vadd.f32 %v182, %v393
    %v395 = vpop.f32.mrb[0].mxu0
    %v396 = vadd.f32 %v186, %v395
    %v397 = vpop.f32.mrb[0].mxu0
    %v398 = vadd.f32 %v182, %v397
    %v399 = vpop.f32.mrb[0].mxu0
    %v400 = vadd.f32 %v186, %v399
    %401 = vmatprep.mubr.bf16.mxu0 0
    %402 = vmatmul.mubr.bf16.gmra.mrb[0].mxu0 %v174
    %v403 = vpop.f32.mrb[0].mxu0
    %v404 = vadd.f32 %v182, %v403
    %v405 = vpop.f32.mrb[0].mxu0
    %v406 = vadd.f32 %v186, %v405
    %v407 = vpop.f32.mrb[0].mxu0
    %v408 = vadd.f32 %v182, %v407
    %v409 = vpop.f32.mrb[0].mxu0
    %v410 = vadd.f32 %v186, %v409
    %411 = vmatprep.mubr.bf16.mxu0 0
    %412 = vmatmul.mubr.bf16.gmra.mrb[0].mxu0 %v175
    %v413 = vpop.f32.mrb[0].mxu0
    %v414 = vadd.f32 %v182, %v413
    %v415 = vpop.f32.mrb[0].mxu0
    %v416 = vadd.f32 %v186, %v415
    %v417 = vpop.f32.mrb[0].mxu0
    %v418 = vadd.f32 %v182, %v417
    %v419 = vpop.f32.mrb[0].mxu0
    %v420 = vadd.f32 %v186, %v419
    %421 = vmatprep.mubr.bf16.mxu0 0
    %422 = vmatmul.mubr.bf16.gmra.mrb[0].mxu0 %v176
    %v423 = vpop.f32.mrb[0].mxu0
    %v424 = vadd.f32 %v182, %v423
    %v425 = vpop.f32.mrb[0].mxu0
    %v426 = vadd.f32 %v186, %v425
    %v427 = vpop.f32.mrb[0].mxu0
    %v428 = vadd.f32 %v182, %v427
    %v429 = vpop.f32.mrb[0].mxu0
    %v430 = vadd.f32 %v186, %v429
    %431 = vdwg.mxu0
    %432 = vmatprep.subr.bf16.mxu0 %v298
    %433 = vmatpush1.bf16.msra.mxu0 %v297
    %434 = vmatprep.subr.bf16.mxu0 %v302
    %435 = vmatpush1.bf16.msra.mxu0 %v301
    %436 = vmatprep.subr.bf16.mxu0 %v306
    %437 = vmatpush1.bf16.msra.mxu0 %v305
    %438 = vmatprep.subr.bf16.mxu0 %v310
    %439 = vmatpush1.bf16.msra.mxu0 %v309
    %440 = vmatprep.subr.bf16.mxu0 %v314
    %441 = vmatpush1.bf16.msra.mxu0 %v313
    %442 = vmatprep.subr.bf16.mxu0 %v318
    %443 = vmatpush1.bf16.msra.mxu0 %v317
    %444 = vmatprep.subr.bf16.mxu0 %v322
    %445 = vmatpush1.bf16.msra.mxu0 %v321
    %446 = vmatprep.subr.bf16.mxu0 %v326
    %447 = vmatpush1.bf16.msra.mxu0 %v325
    %448 = vmatprep.subr.bf16.mxu0 0
    %449 = vmatpush1.bf16.msra.mxu0 0
    %450 = vmatprep.subr.bf16.mxu0 0
    %451 = vmatpush1.bf16.msra.mxu0 0
    %452 = vmatprep.subr.bf16.mxu0 0
    %453 = vmatpush1.bf16.msra.mxu0 0
    %454 = vmatprep.subr.bf16.mxu0 0
    %455 = vmatpush1.bf16.msra.mxu0 0
    %456 = vmatprep.subr.bf16.mxu0 0
    %457 = vmatpush1.bf16.msra.mxu0 0
    %458 = vmatprep.subr.bf16.mxu0 0
    %459 = vmatpush1.bf16.msra.mxu0 0
    %460 = vmatprep.subr.bf16.mxu0 0
    %461 = vmatpush1.bf16.msra.mxu0 0
    %462 = vmatprep.subr.bf16.mxu0 0
    %463 = vmatpush1.bf16.msra.mxu0 0
    %464 = vmatprep.mubr.bf16.mxu0 0
    %465 = vmatmul.mubr.bf16.gmra.mrb[0].mxu0 %v173
    %v466 = vpop.f32.mrb[0].mxu0
    %v467 = vadd.f32 %v190, %v466
    %v468 = vpop.f32.mrb[0].mxu0
    %v469 = vadd.f32 %v194, %v468
    %v470 = vpop.f32.mrb[0].mxu0
    %v471 = vadd.f32 %v190, %v470
    %v472 = vpop.f32.mrb[0].mxu0
    %v473 = vadd.f32 %v194, %v472
    %474 = vmatprep.mubr.bf16.mxu0 0
    %475 = vmatmul.mubr.bf16.gmra.mrb[0].mxu0 %v174
    %v476 = vpop.f32.mrb[0].mxu0
    %v477 = vadd.f32 %v190, %v476
    %v478 = vpop.f32.mrb[0].mxu0
    %v479 = vadd.f32 %v194, %v478
    %v480 = vpop.f32.mrb[0].mxu0
    %v481 = vadd.f32 %v190, %v480
    %v482 = vpop.f32.mrb[0].mxu0
    %v483 = vadd.f32 %v194, %v482
    %484 = vmatprep.mubr.bf16.mxu0 0
    %485 = vmatmul.mubr.bf16.gmra.mrb[0].mxu0 %v175
    %v486 = vpop.f32.mrb[0].mxu0
    %v487 = vadd.f32 %v190, %v486
    %v488 = vpop.f32.mrb[0].mxu0
    %v489 = vadd.f32 %v194, %v488
    %v490 = vpop.f32.mrb[0].mxu0
    %v491 = vadd.f32 %v190, %v490
    %v492 = vpop.f32.mrb[0].mxu0
    %v493 = vadd.f32 %v194, %v492
    %494 = vmatprep.mubr.bf16.mxu0 0
    %495 = vmatmul.mubr.bf16.gmra.mrb[0].mxu0 %v176
    %v496 = vpop.f32.mrb[0].mxu0
    %v497 = vadd.f32 %v190, %v496
    %v498 = vpop.f32.mrb[0].mxu0
    %v499 = vadd.f32 %v194, %v498
    %v500 = vpop.f32.mrb[0].mxu0
    %v501 = vadd.f32 %v190, %v500
    %v502 = vpop.f32.mrb[0].mxu0
    %v503 = vadd.f32 %v194, %v502
    %504 = vdwg.mxu0
    %505 = vst [vmem:[#allocation2] sm:$0xff] %v394
    %506 = vst [vmem:[#allocation2 + $0x8] sm:$0xff] %v396
    %507 = vst [vmem:[#allocation2 + $0x10] sm:$0xff] %v467
    %508 = vst [vmem:[#allocation2 + $0x18] sm:$0xff] %v469
    %509 = vst [vmem:[#allocation2 + $0x20] sm:$0xff] %v398
    %510 = vst [vmem:[#allocation2 + $0x28] sm:$0xff] %v400
    %511 = vst [vmem:[#allocation2 + $0x30] sm:$0xff] %v471
    %512 = vst [vmem:[#allocation2 + $0x38] sm:$0xff] %v473
    %513 = vst [vmem:[#allocation2 + $0x40] sm:$0xff] %v404
    %514 = vst [vmem:[#allocation2 + $0x48] sm:$0xff] %v406
    %515 = vst [vmem:[#allocation2 + $0x50] sm:$0xff] %v477
    %516 = vst [vmem:[#allocation2 + $0x58] sm:$0xff] %v479
    %517 = vst [vmem:[#allocation2 + $0x60] sm:$0xff] %v408
    %518 = vst [vmem:[#allocation2 + $0x68] sm:$0xff] %v410
    %519 = vst [vmem:[#allocation2 + $0x70] sm:$0xff] %v481
    %520 = vst [vmem:[#allocation2 + $0x78] sm:$0xff] %v483
    %521 = vst [vmem:[#allocation2 + $0x80] sm:$0xff] %v414
    %522 = vst [vmem:[#allocation2 + $0x88] sm:$0xff] %v416
    %523 = vst [vmem:[#allocation2 + $0x90] sm:$0xff] %v487
    %524 = vst [vmem:[#allocation2 + $0x98] sm:$0xff] %v489
    %525 = vst [vmem:[#allocation2 + $0xa0] sm:$0xff] %v418
    %526 = vst [vmem:[#allocation2 + $0xa8] sm:$0xff] %v420
    %527 = vst [vmem:[#allocation2 + $0xb0] sm:$0xff] %v491
    %528 = vst [vmem:[#allocation2 + $0xb8] sm:$0xff] %v493
    %529 = vst [vmem:[#allocation2 + $0xc0] sm:$0xff] %v424
    %530 = vst [vmem:[#allocation2 + $0xc8] sm:$0xff] %v426
    %531 = vst [vmem:[#allocation2 + $0xd0] sm:$0xff] %v497
    %532 = vst [vmem:[#allocation2 + $0xd8] sm:$0xff] %v499
    %533 = vst [vmem:[#allocation2 + $0xe0] sm:$0xff] %v428
    %534 = vst [vmem:[#allocation2 + $0xe8] sm:$0xff] %v430
    %535 = vst [vmem:[#allocation2 + $0xf0] sm:$0xff] %v501
    %536 = vst [vmem:[#allocation2 + $0xf8] sm:$0xff] %v503
    %v537 = vld [vmem:[%s5] sm:$0xff]
    %v538 = vld [vmem:[#allocation14] sm:$0xff]
    %v539 = vld [vmem:[#allocation2] sm:$0xff]
    %v540 = vld [vmem:[#allocation2 + $0x8] sm:$0xff]
    %v541 = vld [vmem:[#allocation2 + $0x10] sm:$0xff]
    %v542 = vld [vmem:[#allocation2 + $0x18] sm:$0xff]
    %v543 = vpack.c.bf16 %v537, %v537
    %v544 = vld [vmem:[#allocation11] sm:$0xff]
    %v545 = vld [vmem:[#allocation11 + $0x8] sm:$0xff]
    %v546 = vld [vmem:[#allocation11 + $0x10] sm:$0xff]
    %v547 = vld [vmem:[#allocation11 + $0x18] sm:$0xff]
    %v548 = vld [vmem:[#allocation11 + $0x20] sm:$0xff]
    %v549 = vld [vmem:[#allocation11 + $0x28] sm:$0xff]
    %v550 = vld [vmem:[#allocation11 + $0x30] sm:$0xff]
    %v551 = vld [vmem:[#allocation11 + $0x38] sm:$0xff]
    %v552 = vld [vmem:[#allocation11 + $0x40] sm:$0xff]
    %v553 = vld [vmem:[#allocation11 + $0x48] sm:$0xff]
    %v554 = vld [vmem:[#allocation11 + $0x50] sm:$0xff]
    %v555 = vld [vmem:[#allocation11 + $0x58] sm:$0xff]
    %v556 = vld [vmem:[#allocation11 + $0x60] sm:$0xff]
    %v557 = vld [vmem:[#allocation11 + $0x68] sm:$0xff]
    %v558 = vld [vmem:[#allocation11 + $0x70] sm:$0xff]
    %v559 = vld [vmem:[#allocation11 + $0x78] sm:$0xff]
    %v560 = vld [vmem:[#allocation11 + $0x80] sm:$0xff]
    %v561 = vld [vmem:[#allocation11 + $0x88] sm:$0xff]
    %v562 = vld [vmem:[#allocation11 + $0x90] sm:$0xff]
    %v563 = vld [vmem:[#allocation11 + $0x98] sm:$0xff]
    %v564 = vld [vmem:[#allocation11 + $0xa0] sm:$0xff]
    %v565 = vld [vmem:[#allocation11 + $0xa8] sm:$0xff]
    %v566 = vld [vmem:[#allocation11 + $0xb0] sm:$0xff]
    %v567 = vld [vmem:[#allocation11 + $0xb8] sm:$0xff]
    %v568 = vld [vmem:[#allocation11 + $0xc0] sm:$0xff]
    %v569 = vld [vmem:[#allocation11 + $0xc8] sm:$0xff]
    %v570 = vld [vmem:[#allocation11 + $0xd0] sm:$0xff]
    %v571 = vld [vmem:[#allocation11 + $0xd8] sm:$0xff]
    %v572 = vld [vmem:[#allocation11 + $0xe0] sm:$0xff]
    %v573 = vld [vmem:[#allocation11 + $0xe8] sm:$0xff]
    %v574 = vld [vmem:[#allocation11 + $0xf0] sm:$0xff]
    %v575 = vld [vmem:[#allocation11 + $0xf8] sm:$0xff]
    %v608 = vunpack.c.l.b16 %v544
    %v609 = vunpack.c.h.b16 %v544
    %v610 = vunpack.c.l.b16 %v545
    %v611 = vunpack.c.h.b16 %v545
    %v612 = vunpack.c.l.b16 %v546
    %v613 = vunpack.c.h.b16 %v546
    %v614 = vunpack.c.l.b16 %v547
    %v615 = vunpack.c.h.b16 %v547
    %v616 = vunpack.c.l.b16 %v548
    %v617 = vunpack.c.h.b16 %v548
    %v618 = vunpack.c.l.b16 %v549
    %v619 = vunpack.c.h.b16 %v549
    %v620 = vunpack.c.l.b16 %v550
    %v621 = vunpack.c.h.b16 %v550
    %v622 = vunpack.c.l.b16 %v551
    %v623 = vunpack.c.h.b16 %v551
    %v624 = vunpack.c.l.b16 %v552
    %v625 = vunpack.c.h.b16 %v552
    %v626 = vunpack.c.l.b16 %v553
    %v627 = vunpack.c.h.b16 %v553
    %v628 = vunpack.c.l.b16 %v554
    %v629 = vunpack.c.h.b16 %v554
    %v630 = vunpack.c.l.b16 %v555
    %v631 = vunpack.c.h.b16 %v555
    %v632 = vunpack.c.l.b16 %v556
    %v633 = vunpack.c.h.b16 %v556
    %v634 = vunpack.c.l.b16 %v557
    %v635 = vunpack.c.h.b16 %v557
    %v636 = vunpack.c.l.b16 %v558
    %v637 = vunpack.c.h.b16 %v558
    %v638 = vunpack.c.l.b16 %v559
    %v639 = vunpack.c.h.b16 %v559
    %v640 = vunpack.c.l.b16 %v560
    %v641 = vunpack.c.h.b16 %v560
    %v642 = vunpack.c.l.b16 %v561
    %v643 = vunpack.c.h.b16 %v561
    %v644 = vunpack.c.l.b16 %v562
    %v645 = vunpack.c.h.b16 %v562
    %v646 = vunpack.c.l.b16 %v563
    %v647 = vunpack.c.h.b16 %v563
    %v648 = vunpack.c.l.b16 %v564
    %v649 = vunpack.c.h.b16 %v564
    %v650 = vunpack.c.l.b16 %v565
    %v651 = vunpack.c.h.b16 %v565
    %v652 = vunpack.c.l.b16 %v566
    %v653 = vunpack.c.h.b16 %v566
    %v654 = vunpack.c.l.b16 %v567
    %v655 = vunpack.c.h.b16 %v567
    %v656 = vunpack.c.l.b16 %v568
    %v657 = vunpack.c.h.b16 %v568
    %v658 = vunpack.c.l.b16 %v569
    %v659 = vunpack.c.h.b16 %v569
    %v660 = vunpack.c.l.b16 %v570
    %v661 = vunpack.c.h.b16 %v570
    %v662 = vunpack.c.l.b16 %v571
    %v663 = vunpack.c.h.b16 %v571
    %v664 = vunpack.c.l.b16 %v572
    %v665 = vunpack.c.h.b16 %v572
    %v666 = vunpack.c.l.b16 %v573
    %v667 = vunpack.c.h.b16 %v573
    %v668 = vunpack.c.l.b16 %v574
    %v669 = vunpack.c.h.b16 %v574
    %v670 = vunpack.c.l.b16 %v575
    %v671 = vunpack.c.h.b16 %v575
    %v672 = vpack.c.b16 %v612, %v608
    %v673 = vpack.c.b16 %v613, %v609
    %v674 = vpack.c.b16 %v614, %v610
    %v675 = vpack.c.b16 %v615, %v611
    %v676 = vpack.c.b16 %v620, %v616
    %v677 = vpack.c.b16 %v621, %v617
    %v678 = vpack.c.b16 %v622, %v618
    %v679 = vpack.c.b16 %v623, %v619
    %v680 = vpack.c.b16 %v628, %v624
    %v681 = vpack.c.b16 %v629, %v625
    %v682 = vpack.c.b16 %v630, %v626
    %v683 = vpack.c.b16 %v631, %v627
    %v684 = vpack.c.b16 %v636, %v632
    %v685 = vpack.c.b16 %v637, %v633
    %v686 = vpack.c.b16 %v638, %v634
    %v687 = vpack.c.b16 %v639, %v635
    %v688 = vpack.c.b16 %v644, %v640
    %v689 = vpack.c.b16 %v645, %v641
    %v690 = vpack.c.b16 %v646, %v642
    %v691 = vpack.c.b16 %v647, %v643
    %v692 = vpack.c.b16 %v652, %v648
    %v693 = vpack.c.b16 %v653, %v649
    %v694 = vpack.c.b16 %v654, %v650
    %v695 = vpack.c.b16 %v655, %v651
    %v696 = vpack.c.b16 %v660, %v656
    %v697 = vpack.c.b16 %v661, %v657
    %v698 = vpack.c.b16 %v662, %v658
    %v699 = vpack.c.b16 %v663, %v659
    %v700 = vpack.c.b16 %v668, %v664
    %v701 = vpack.c.b16 %v669, %v665
    %v702 = vpack.c.b16 %v670, %v666
    %v703 = vpack.c.b16 %v671, %v667
    %736 = vmatprep.subr.bf16.mxu0 %v673
    %737 = vmatpush1.bf16.msra.mxu0 %v672
    %738 = vmatprep.subr.bf16.mxu0 %v677
    %739 = vmatpush1.bf16.msra.mxu0 %v676
    %740 = vmatprep.subr.bf16.mxu0 %v681
    %741 = vmatpush1.bf16.msra.mxu0 %v680
    %742 = vmatprep.subr.bf16.mxu0 %v685
    %743 = vmatpush1.bf16.msra.mxu0 %v684
    %744 = vmatprep.subr.bf16.mxu0 %v689
    %745 = vmatpush1.bf16.msra.mxu0 %v688
    %746 = vmatprep.subr.bf16.mxu0 %v693
    %747 = vmatpush1.bf16.msra.mxu0 %v692
    %748 = vmatprep.subr.bf16.mxu0 %v697
    %749 = vmatpush1.bf16.msra.mxu0 %v696
    %750 = vmatprep.subr.bf16.mxu0 %v701
    %751 = vmatpush1.bf16.msra.mxu0 %v700
    %752 = vmatprep.subr.bf16.mxu0 0
    %753 = vmatpush1.bf16.msra.mxu0 0
    %754 = vmatprep.subr.bf16.mxu0 0
    %755 = vmatpush1.bf16.msra.mxu0 0
    %756 = vmatprep.subr.bf16.mxu0 0
    %757 = vmatpush1.bf16.msra.mxu0 0
    %758 = vmatprep.subr.bf16.mxu0 0
    %759 = vmatpush1.bf16.msra.mxu0 0
    %760 = vmatprep.subr.bf16.mxu0 0
    %761 = vmatpush1.bf16.msra.mxu0 0
    %762 = vmatprep.subr.bf16.mxu0 0
    %763 = vmatpush1.bf16.msra.mxu0 0
    %764 = vmatprep.subr.bf16.mxu0 0
    %765 = vmatpush1.bf16.msra.mxu0 0
    %766 = vmatprep.subr.bf16.mxu0 0
    %767 = vmatpush1.bf16.msra.mxu0 0
    %768 = vmatprep.mubr.bf16.mxu0 0
    %769 = vmatmul.mubr.bf16.gmra.mrb[0].mxu0 %v543
    %v770 = vpop.f32.mrb[0].mxu0
    %v771 = vadd.f32 0.0, %v770
    %v772 = vpop.f32.mrb[0].mxu0
    %v773 = vadd.f32 0.0, %v772
    %v774 = vpop.f32.mrb[0].mxu0
    %v775 = vpop.f32.mrb[0].mxu0
    %776 = vdwg.mxu0
    %777 = vmatprep.subr.bf16.mxu0 %v675
    %778 = vmatpush1.bf16.msra.mxu0 %v674
    %779 = vmatprep.subr.bf16.mxu0 %v679
    %780 = vmatpush1.bf16.msra.mxu0 %v678
    %781 = vmatprep.subr.bf16.mxu0 %v683
    %782 = vmatpush1.bf16.msra.mxu0 %v682
    %783 = vmatprep.subr.bf16.mxu0 %v687
    %784 = vmatpush1.bf16.msra.mxu0 %v686
    %785 = vmatprep.subr.bf16.mxu0 %v691
    %786 = vmatpush1.bf16.msra.mxu0 %v690
    %787 = vmatprep.subr.bf16.mxu0 %v695
    %788 = vmatpush1.bf16.msra.mxu0 %v694
    %789 = vmatprep.subr.bf16.mxu0 %v699
    %790 = vmatpush1.bf16.msra.mxu0 %v698
    %791 = vmatprep.subr.bf16.mxu0 %v703
    %792 = vmatpush1.bf16.msra.mxu0 %v702
    %793 = vmatprep.subr.bf16.mxu0 0
    %794 = vmatpush1.bf16.msra.mxu0 0
    %795 = vmatprep.subr.bf16.mxu0 0
    %796 = vmatpush1.bf16.msra.mxu0 0
    %797 = vmatprep.subr.bf16.mxu0 0
    %798 = vmatpush1.bf16.msra.mxu0 0
    %799 = vmatprep.subr.bf16.mxu0 0
    %800 = vmatpush1.bf16.msra.mxu0 0
    %801 = vmatprep.subr.bf16.mxu0 0
    %802 = vmatpush1.bf16.msra.mxu0 0
    %803 = vmatprep.subr.bf16.mxu0 0
    %804 = vmatpush1.bf16.msra.mxu0 0
    %805 = vmatprep.subr.bf16.mxu0 0
    %806 = vmatpush1.bf16.msra.mxu0 0
    %807 = vmatprep.subr.bf16.mxu0 0
    %808 = vmatpush1.bf16.msra.mxu0 0
    %809 = vmatprep.mubr.bf16.mxu0 0
    %810 = vmatmul.mubr.bf16.gmra.mrb[0].mxu0 %v543
    %v811 = vpop.f32.mrb[0].mxu0
    %v812 = vadd.f32 0.0, %v811
    %v813 = vpop.f32.mrb[0].mxu0
    %v814 = vadd.f32 0.0, %v813
    %v815 = vpop.f32.mrb[0].mxu0
    %v816 = vpop.f32.mrb[0].mxu0
    %817 = vdwg.mxu0
    %v818 = vadd.f32 %v539, %v771
    %v819 = vadd.f32 %v540, %v773
    %v820 = vadd.f32 %v541, %v812
    %v821 = vadd.f32 %v542, %v814
    %v822 = vxor.u32 %v818, 2147483648
    %v823 = vxor.u32 %v819, 2147483648
    %v824 = vxor.u32 %v820, 2147483648
    %v825 = vmul.f32 %v822, 1.442695
    %v826 = vpow.pop %v825
    %v827 = vmul.f32 %v823, 1.442695
    %v828 = vpow.pop %v827
    %v829 = vmul.f32 %v824, 1.442695
    %v830 = vpow.pop %v829
    %v831 = vadd.f32 %v826, 1.0
    %v832 = vadd.f32 %v828, 1.0
    %v833 = vadd.f32 %v830, 1.0
    %v834 = vrcp.pop %v831
    %v835 = vmul.f32 1.0, %v834
    %v836 = vrcp.pop %v832
    %v837 = vmul.f32 1.0, %v836
    %v838 = vrcp.pop %v833
    %v839 = vmul.f32 1.0, %v838
    %v840 = vtanh.pop %v821
    %v841 = vmul.f32 %v837, %v538
    %v842 = vmul.f32 %v835, %v840
    %v843 = vadd.f32 %v841, %v842
    %v844 = vtanh.pop %v843
    %v845 = vmul.f32 %v839, %v844
    %846 = vst [vmem:[#allocation3] sm:$0xff] %v845
    %s847 = scalar_lea.vmem [#allocation2], 32
    %v848 = vld [vmem:[%s847] sm:$0xff]
    %v849 = vld [vmem:[%s847 + $0x8] sm:$0xff]
    %v850 = vld [vmem:[%s847 + $0x10] sm:$0xff]
    %v851 = vld [vmem:[%s847 + $0x18] sm:$0xff]
    %v852 = vpack.c.bf16 %v845, %v845
    %v853 = vld [vmem:[#allocation11] sm:$0xff]
    %v854 = vld [vmem:[#allocation11 + $0x8] sm:$0xff]
    %v855 = vld [vmem:[#allocation11 + $0x10] sm:$0xff]
    %v856 = vld [vmem:[#allocation11 + $0x18] sm:$0xff]
    %v857 = vld [vmem:[#allocation11 + $0x20] sm:$0xff]
    %v858 = vld [vmem:[#allocation11 + $0x28] sm:$0xff]
    %v859 = vld [vmem:[#allocation11 + $0x30] sm:$0xff]
    %v860 = vld [vmem:[#allocation11 + $0x38] sm:$0xff]
    %v861 = vld [vmem:[#allocation11 + $0x40] sm:$0xff]
    %v862 = vld [vmem:[#allocation11 + $0x48] sm:$0xff]
    %v863 = vld [vmem:[#allocation11 + $0x50] sm:$0xff]
    %v864 = vld [vmem:[#allocation11 + $0x58] sm:$0xff]
    %v865 = vld [vmem:[#allocation11 + $0x60] sm:$0xff]
    %v866 = vld [vmem:[#allocation11 + $0x68] sm:$0xff]
    %v867 = vld [vmem:[#allocation11 + $0x70] sm:$0xff]
    %v868 = vld [vmem:[#allocation11 + $0x78] sm:$0xff]
    %v869 = vld [vmem:[#allocation11 + $0x80] sm:$0xff]
    %v870 = vld [vmem:[#allocation11 + $0x88] sm:$0xff]
    %v871 = vld [vmem:[#allocation11 + $0x90] sm:$0xff]
    %v872 = vld [vmem:[#allocation11 + $0x98] sm:$0xff]
    %v873 = vld [vmem:[#allocation11 + $0xa0] sm:$0xff]
    %v874 = vld [vmem:[#allocation11 + $0xa8] sm:$0xff]
    %v875 = vld [vmem:[#allocation11 + $0xb0] sm:$0xff]
    %v876 = vld [vmem:[#allocation11 + $0xb8] sm:$0xff]
    %v877 = vld [vmem:[#allocation11 + $0xc0] sm:$0xff]
    %v878 = vld [vmem:[#allocation11 + $0xc8] sm:$0xff]
    %v879 = vld [vmem:[#allocation11 + $0xd0] sm:$0xff]
    %v880 = vld [vmem:[#allocation11 + $0xd8] sm:$0xff]
    %v881 = vld [vmem:[#allocation11 + $0xe0] sm:$0xff]
    %v882 = vld [vmem:[#allocation11 + $0xe8] sm:$0xff]
    %v883 = vld [vmem:[#allocation11 + $0xf0] sm:$0xff]
    %v884 = vld [vmem:[#allocation11 + $0xf8] sm:$0xff]
    %v917 = vunpack.c.l.b16 %v853
    %v918 = vunpack.c.h.b16 %v853
    %v919 = vunpack.c.l.b16 %v854
    %v920 = vunpack.c.h.b16 %v854
    %v921 = vunpack.c.l.b16 %v855
    %v922 = vunpack.c.h.b16 %v855
    %v923 = vunpack.c.l.b16 %v856
    %v924 = vunpack.c.h.b16 %v856
    %v925 = vunpack.c.l.b16 %v857
    %v926 = vunpack.c.h.b16 %v857
    %v927 = vunpack.c.l.b16 %v858
    %v928 = vunpack.c.h.b16 %v858
    %v929 = vunpack.c.l.b16 %v859
    %v930 = vunpack.c.h.b16 %v859
    %v931 = vunpack.c.l.b16 %v860
    %v932 = vunpack.c.h.b16 %v860
    %v933 = vunpack.c.l.b16 %v861
    %v934 = vunpack.c.h.b16 %v861
    %v935 = vunpack.c.l.b16 %v862
    %v936 = vunpack.c.h.b16 %v862
    %v937 = vunpack.c.l.b16 %v863
    %v938 = vunpack.c.h.b16 %v863
    %v939 = vunpack.c.l.b16 %v864
    %v940 = vunpack.c.h.b16 %v864
    %v941 = vunpack.c.l.b16 %v865
    %v942 = vunpack.c.h.b16 %v865
    %v943 = vunpack.c.l.b16 %v866
    %v944 = vunpack.c.h.b16 %v866
    %v945 = vunpack.c.l.b16 %v867
    %v946 = vunpack.c.h.b16 %v867
    %v947 = vunpack.c.l.b16 %v868
    %v948 = vunpack.c.h.b16 %v868
    %v949 = vunpack.c.l.b16 %v869
    %v950 = vunpack.c.h.b16 %v869
    %v951 = vunpack.c.l.b16 %v870
    %v952 = vunpack.c.h.b16 %v870
    %v953 = vunpack.c.l.b16 %v871
    %v954 = vunpack.c.h.b16 %v871
    %v955 = vunpack.c.l.b16 %v872
    %v956 = vunpack.c.h.b16 %v872
    %v957 = vunpack.c.l.b16 %v873
    %v958 = vunpack.c.h.b16 %v873
    %v959 = vunpack.c.l.b16 %v874
    %v960 = vunpack.c.h.b16 %v874
    %v961 = vunpack.c.l.b16 %v875
    %v962 = vunpack.c.h.b16 %v875
    %v963 = vunpack.c.l.b16 %v876
    %v964 = vunpack.c.h.b16 %v876
    %v965 = vunpack.c.l.b16 %v877
    %v966 = vunpack.c.h.b16 %v877
    %v967 = vunpack.c.l.b16 %v878
    %v968 = vunpack.c.h.b16 %v878
    %v969 = vunpack.c.l.b16 %v879
    %v970 = vunpack.c.h.b16 %v879
    %v971 = vunpack.c.l.b16 %v880
    %v972 = vunpack.c.h.b16 %v880
    %v973 = vunpack.c.l.b16 %v881
    %v974 = vunpack.c.h.b16 %v881
    %v975 = vunpack.c.l.b16 %v882
    %v976 = vunpack.c.h.b16 %v882
    %v977 = vunpack.c.l.b16 %v883
    %v978 = vunpack.c.h.b16 %v883
    %v979 = vunpack.c.l.b16 %v884
    %v980 = vunpack.c.h.b16 %v884
    %v981 = vpack.c.b16 %v921, %v917
    %v982 = vpack.c.b16 %v922, %v918
    %v983 = vpack.c.b16 %v923, %v919
    %v984 = vpack.c.b16 %v924, %v920
    %v985 = vpack.c.b16 %v929, %v925
    %v986 = vpack.c.b16 %v930, %v926
    %v987 = vpack.c.b16 %v931, %v927
    %v988 = vpack.c.b16 %v932, %v928
    %v989 = vpack.c.b16 %v937, %v933
    %v990 = vpack.c.b16 %v938, %v934
    %v991 = vpack.c.b16 %v939, %v935
    %v992 = vpack.c.b16 %v940, %v936
    %v993 = vpack.c.b16 %v945, %v941
    %v994 = vpack.c.b16 %v946, %v942
    %v995 = vpack.c.b16 %v947, %v943
    %v996 = vpack.c.b16 %v948, %v944
    %v997 = vpack.c.b16 %v953, %v949
    %v998 = vpack.c.b16 %v954, %v950
    %v999 = vpack.c.b16 %v955, %v951
    %v1000 = vpack.c.b16 %v956, %v952
    %v1001 = vpack.c.b16 %v961, %v957
    %v1002 = vpack.c.b16 %v962, %v958
    %v1003 = vpack.c.b16 %v963, %v959
    %v1004 = vpack.c.b16 %v964, %v960
    %v1005 = vpack.c.b16 %v969, %v965
    %v1006 = vpack.c.b16 %v970, %v966
    %v1007 = vpack.c.b16 %v971, %v967
    %v1008 = vpack.c.b16 %v972, %v968
    %v1009 = vpack.c.b16 %v977, %v973
    %v1010 = vpack.c.b16 %v978, %v974
    %v1011 = vpack.c.b16 %v979, %v975
    %v1012 = vpack.c.b16 %v980, %v976
    %1045 = vmatprep.subr.bf16.mxu0 %v982
    %1046 = vmatpush1.bf16.msra.mxu0 %v981
    %1047 = vmatprep.subr.bf16.mxu0 %v986
    %1048 = vmatpush1.bf16.msra.mxu0 %v985
    %1049 = vmatprep.subr.bf16.mxu0 %v990
    %1050 = vmatpush1.bf16.msra.mxu0 %v989
    %1051 = vmatprep.subr.bf16.mxu0 %v994
    %1052 = vmatpush1.bf16.msra.mxu0 %v993
    %1053 = vmatprep.subr.bf16.mxu0 %v998
    %1054 = vmatpush1.bf16.msra.mxu0 %v997
    %1055 = vmatprep.subr.bf16.mxu0 %v1002
    %1056 = vmatpush1.bf16.msra.mxu0 %v1001
    %1057 = vmatprep.subr.bf16.mxu0 %v1006
    %1058 = vmatpush1.bf16.msra.mxu0 %v1005
    %1059 = vmatprep.subr.bf16.mxu0 %v1010
    %1060 = vmatpush1.bf16.msra.mxu0 %v1009
    %1061 = vmatprep.subr.bf16.mxu0 0
    %1062 = vmatpush1.bf16.msra.mxu0 0
    %1063 = vmatprep.subr.bf16.mxu0 0
    %1064 = vmatpush1.bf16.msra.mxu0 0
    %1065 = vmatprep.subr.bf16.mxu0 0
    %1066 = vmatpush1.bf16.msra.mxu0 0
    %1067 = vmatprep.subr.bf16.mxu0 0
    %1068 = vmatpush1.bf16.msra.mxu0 0
    %1069 = vmatprep.subr.bf16.mxu0 0
    %1070 = vmatpush1.bf16.msra.mxu0 0
    %1071 = vmatprep.subr.bf16.mxu0 0
    %1072 = vmatpush1.bf16.msra.mxu0 0
    %1073 = vmatprep.subr.bf16.mxu0 0
    %1074 = vmatpush1.bf16.msra.mxu0 0
    %1075 = vmatprep.subr.bf16.mxu0 0
    %1076 = vmatpush1.bf16.msra.mxu0 0
    %1077 = vmatprep.mubr.bf16.mxu0 0
    %1078 = vmatmul.mubr.bf16.gmra.mrb[0].mxu0 %v852
    %v1079 = vpop.f32.mrb[0].mxu0
    %v1080 = vadd.f32 0.0, %v1079
    %v1081 = vpop.f32.mrb[0].mxu0
    %v1082 = vadd.f32 0.0, %v1081
    %v1083 = vpop.f32.mrb[0].mxu0
    %v1084 = vpop.f32.mrb[0].mxu0
    %1085 = vdwg.mxu0
    %1086 = vmatprep.subr.bf16.mxu0 %v984
    %1087 = vmatpush1.bf16.msra.mxu0 %v983
    %1088 = vmatprep.subr.bf16.mxu0 %v988
    %1089 = vmatpush1.bf16.msra.mxu0 %v987
    %1090 = vmatprep.subr.bf16.mxu0 %v992
    %1091 = vmatpush1.bf16.msra.mxu0 %v991
    %1092 = vmatprep.subr.bf16.mxu0 %v996
    %1093 = vmatpush1.bf16.msra.mxu0 %v995
    %1094 = vmatprep.subr.bf16.mxu0 %v1000
    %1095 = vmatpush1.bf16.msra.mxu0 %v999
    %1096 = vmatprep.subr.bf16.mxu0 %v1004
    %1097 = vmatpush1.bf16.msra.mxu0 %v1003
    %1098 = vmatprep.subr.bf16.mxu0 %v1008
    %1099 = vmatpush1.bf16.msra.mxu0 %v1007
    %1100 = vmatprep.subr.bf16.mxu0 %v1012
    %1101 = vmatpush1.bf16.msra.mxu0 %v1011
    %1102 = vmatprep.subr.bf16.mxu0 0
    %1103 = vmatpush1.bf16.msra.mxu0 0
    %1104 = vmatprep.subr.bf16.mxu0 0
    %1105 = vmatpush1.bf16.msra.mxu0 0
    %1106 = vmatprep.subr.bf16.mxu0 0
    %1107 = vmatpush1.bf16.msra.mxu0 0
    %1108 = vmatprep.subr.bf16.mxu0 0
    %1109 = vmatpush1.bf16.msra.mxu0 0
    %1110 = vmatprep.subr.bf16.mxu0 0
    %1111 = vmatpush1.bf16.msra.mxu0 0
    %1112 = vmatprep.subr.bf16.mxu0 0
    %1113 = vmatpush1.bf16.msra.mxu0 0
    %1114 = vmatprep.subr.bf16.mxu0 0
    %1115 = vmatpush1.bf16.msra.mxu0 0
    %1116 = vmatprep.subr.bf16.mxu0 0
    %1117 = vmatpush1.bf16.msra.mxu0 0
    %1118 = vmatprep.mubr.bf16.mxu0 0
    %1119 = vmatmul.mubr.bf16.gmra.mrb[0].mxu0 %v852
    %v1120 = vpop.f32.mrb[0].mxu0
    %v1121 = vadd.f32 0.0, %v1120
    %v1122 = vpop.f32.mrb[0].mxu0
    %v1123 = vadd.f32 0.0, %v1122
    %v1124 = vpop.f32.mrb[0].mxu0
    %v1125 = vpop.f32.mrb[0].mxu0
    %1126 = vdwg.mxu0
    %v1127 = vadd.f32 %v848, %v1080
    %v1128 = vadd.f32 %v849, %v1082
    %v1129 = vadd.f32 %v850, %v1121
    %v1130 = vadd.f32 %v851, %v1123
    %v1131 = vxor.u32 %v1127, 2147483648
    %v1132 = vxor.u32 %v1128, 2147483648
    %v1133 = vxor.u32 %v1129, 2147483648
    %v1134 = vmul.f32 %v1131, 1.442695
    %v1135 = vpow.pop %v1134
    %v1136 = vmul.f32 %v1132, 1.442695
    %v1137 = vpow.pop %v1136
    %v1138 = vmul.f32 %v1133, 1.442695
    %v1139 = vpow.pop %v1138
    %v1140 = vadd.f32 %v1135, 1.0
    %v1141 = vadd.f32 %v1137, 1.0
    %v1142 = vadd.f32 %v1139, 1.0
    %v1143 = vrcp.pop %v1140
    %v1144 = vmul.f32 1.0, %v1143
    %v1145 = vrcp.pop %v1141
    %v1146 = vmul.f32 1.0, %v1145
    %v1147 = vrcp.pop %v1142
    %v1148 = vmul.f32 1.0, %v1147
    %v1149 = vtanh.pop %v1130
    %v1150 = vmul.f32 %v1146, %v843
    %v1151 = vmul.f32 %v1144, %v1149
    %v1152 = vadd.f32 %v1150, %v1151
    %v1153 = vtanh.pop %v1152
    %v1154 = vmul.f32 %v1148, %v1153
    %s1155 = scalar_lea.vmem [#allocation3], 8
    %1156 = vst [vmem:[%s1155] sm:$0xff] %v1154
    %s1157 = scalar_lea.vmem [#allocation2], 64
    %v1158 = vld [vmem:[%s1157] sm:$0xff]
    %v1159 = vld [vmem:[%s1157 + $0x8] sm:$0xff]
    %v1160 = vld [vmem:[%s1157 + $0x10] sm:$0xff]
    %v1161 = vld [vmem:[%s1157 + $0x18] sm:$0xff]
    %v1162 = vpack.c.bf16 %v1154, %v1154
    %v1163 = vld [vmem:[#allocation11] sm:$0xff]
    %v1164 = vld [vmem:[#allocation11 + $0x8] sm:$0xff]
    %v1165 = vld [vmem:[#allocation11 + $0x10] sm:$0xff]
    %v1166 = vld [vmem:[#allocation11 + $0x18] sm:$0xff]
    %v1167 = vld [vmem:[#allocation11 + $0x20] sm:$0xff]
    %v1168 = vld [vmem:[#allocation11 + $0x28] sm:$0xff]
    %v1169 = vld [vmem:[#allocation11 + $0x30] sm:$0xff]
    %v1170 = vld [vmem:[#allocation11 + $0x38] sm:$0xff]
    %v1171 = vld [vmem:[#allocation11 + $0x40] sm:$0xff]
    %v1172 = vld [vmem:[#allocation11 + $0x48] sm:$0xff]
    %v1173 = vld [vmem:[#allocation11 + $0x50] sm:$0xff]
    %v1174 = vld [vmem:[#allocation11 + $0x58] sm:$0xff]
    %v1175 = vld [vmem:[#allocation11 + $0x60] sm:$0xff]
    %v1176 = vld [vmem:[#allocation11 + $0x68] sm:$0xff]
    %v1177 = vld [vmem:[#allocation11 + $0x70] sm:$0xff]
    %v1178 = vld [vmem:[#allocation11 + $0x78] sm:$0xff]
    %v1179 = vld [vmem:[#allocation11 + $0x80] sm:$0xff]
    %v1180 = vld [vmem:[#allocation11 + $0x88] sm:$0xff]
    %v1181 = vld [vmem:[#allocation11 + $0x90] sm:$0xff]
    %v1182 = vld [vmem:[#allocation11 + $0x98] sm:$0xff]
    %v1183 = vld [vmem:[#allocation11 + $0xa0] sm:$0xff]
    %v1184 = vld [vmem:[#allocation11 + $0xa8] sm:$0xff]
    %v1185 = vld [vmem:[#allocation11 + $0xb0] sm:$0xff]
    %v1186 = vld [vmem:[#allocation11 + $0xb8] sm:$0xff]
    %v1187 = vld [vmem:[#allocation11 + $0xc0] sm:$0xff]
    %v1188 = vld [vmem:[#allocation11 + $0xc8] sm:$0xff]
    %v1189 = vld [vmem:[#allocation11 + $0xd0] sm:$0xff]
    %v1190 = vld [vmem:[#allocation11 + $0xd8] sm:$0xff]
    %v1191 = vld [vmem:[#allocation11 + $0xe0] sm:$0xff]
    %v1192 = vld [vmem:[#allocation11 + $0xe8] sm:$0xff]
    %v1193 = vld [vmem:[#allocation11 + $0xf0] sm:$0xff]
    %v1194 = vld [vmem:[#allocation11 + $0xf8] sm:$0xff]
    %v1227 = vunpack.c.l.b16 %v1163
    %v1228 = vunpack.c.h.b16 %v1163
    %v1229 = vunpack.c.l.b16 %v1164
    %v1230 = vunpack.c.h.b16 %v1164
    %v1231 = vunpack.c.l.b16 %v1165
    %v1232 = vunpack.c.h.b16 %v1165
    %v1233 = vunpack.c.l.b16 %v1166
    %v1234 = vunpack.c.h.b16 %v1166
    %v1235 = vunpack.c.l.b16 %v1167
    %v1236 = vunpack.c.h.b16 %v1167
    %v1237 = vunpack.c.l.b16 %v1168
    %v1238 = vunpack.c.h.b16 %v1168
    %v1239 = vunpack.c.l.b16 %v1169
    %v1240 = vunpack.c.h.b16 %v1169
    %v1241 = vunpack.c.l.b16 %v1170
    %v1242 = vunpack.c.h.b16 %v1170
    %v1243 = vunpack.c.l.b16 %v1171
    %v1244 = vunpack.c.h.b16 %v1171
    %v1245 = vunpack.c.l.b16 %v1172
    %v1246 = vunpack.c.h.b16 %v1172
    %v1247 = vunpack.c.l.b16 %v1173
    %v1248 = vunpack.c.h.b16 %v1173
    %v1249 = vunpack.c.l.b16 %v1174
    %v1250 = vunpack.c.h.b16 %v1174
    %v1251 = vunpack.c.l.b16 %v1175
    %v1252 = vunpack.c.h.b16 %v1175
    %v1253 = vunpack.c.l.b16 %v1176
    %v1254 = vunpack.c.h.b16 %v1176
    %v1255 = vunpack.c.l.b16 %v1177
    %v1256 = vunpack.c.h.b16 %v1177
    %v1257 = vunpack.c.l.b16 %v1178
    %v1258 = vunpack.c.h.b16 %v1178
    %v1259 = vunpack.c.l.b16 %v1179
    %v1260 = vunpack.c.h.b16 %v1179
    %v1261 = vunpack.c.l.b16 %v1180
    %v1262 = vunpack.c.h.b16 %v1180
    %v1263 = vunpack.c.l.b16 %v1181
    %v1264 = vunpack.c.h.b16 %v1181
    %v1265 = vunpack.c.l.b16 %v1182
    %v1266 = vunpack.c.h.b16 %v1182
    %v1267 = vunpack.c.l.b16 %v1183
    %v1268 = vunpack.c.h.b16 %v1183
    %v1269 = vunpack.c.l.b16 %v1184
    %v1270 = vunpack.c.h.b16 %v1184
    %v1271 = vunpack.c.l.b16 %v1185
    %v1272 = vunpack.c.h.b16 %v1185
    %v1273 = vunpack.c.l.b16 %v1186
    %v1274 = vunpack.c.h.b16 %v1186
    %v1275 = vunpack.c.l.b16 %v1187
    %v1276 = vunpack.c.h.b16 %v1187
    %v1277 = vunpack.c.l.b16 %v1188
    %v1278 = vunpack.c.h.b16 %v1188
    %v1279 = vunpack.c.l.b16 %v1189
    %v1280 = vunpack.c.h.b16 %v1189
    %v1281 = vunpack.c.l.b16 %v1190
    %v1282 = vunpack.c.h.b16 %v1190
    %v1283 = vunpack.c.l.b16 %v1191
    %v1284 = vunpack.c.h.b16 %v1191
    %v1285 = vunpack.c.l.b16 %v1192
    %v1286 = vunpack.c.h.b16 %v1192
    %v1287 = vunpack.c.l.b16 %v1193
    %v1288 = vunpack.c.h.b16 %v1193
    %v1289 = vunpack.c.l.b16 %v1194
    %v1290 = vunpack.c.h.b16 %v1194
    %v1291 = vpack.c.b16 %v1231, %v1227
    %v1292 = vpack.c.b16 %v1232, %v1228
    %v1293 = vpack.c.b16 %v1233, %v1229
    %v1294 = vpack.c.b16 %v1234, %v1230
    %v1295 = vpack.c.b16 %v1239, %v1235
    %v1296 = vpack.c.b16 %v1240, %v1236
    %v1297 = vpack.c.b16 %v1241, %v1237
    %v1298 = vpack.c.b16 %v1242, %v1238
    %v1299 = vpack.c.b16 %v1247, %v1243
    %v1300 = vpack.c.b16 %v1248, %v1244
    %v1301 = vpack.c.b16 %v1249, %v1245
    %v1302 = vpack.c.b16 %v1250, %v1246
    %v1303 = vpack.c.b16 %v1255, %v1251
    %v1304 = vpack.c.b16 %v1256, %v1252
    %v1305 = vpack.c.b16 %v1257, %v1253
    %v1306 = vpack.c.b16 %v1258, %v1254
    %v1307 = vpack.c.b16 %v1263, %v1259
    %v1308 = vpack.c.b16 %v1264, %v1260
    %v1309 = vpack.c.b16 %v1265, %v1261
    %v1310 = vpack.c.b16 %v1266, %v1262
    %v1311 = vpack.c.b16 %v1271, %v1267
    %v1312 = vpack.c.b16 %v1272, %v1268
    %v1313 = vpack.c.b16 %v1273, %v1269
    %v1314 = vpack.c.b16 %v1274, %v1270
    %v1315 = vpack.c.b16 %v1279, %v1275
    %v1316 = vpack.c.b16 %v1280, %v1276
    %v1317 = vpack.c.b16 %v1281, %v1277
    %v1318 = vpack.c.b16 %v1282, %v1278
    %v1319 = vpack.c.b16 %v1287, %v1283
    %v1320 = vpack.c.b16 %v1288, %v1284
    %v1321 = vpack.c.b16 %v1289, %v1285
    %v1322 = vpack.c.b16 %v1290, %v1286
    %1355 = vmatprep.subr.bf16.mxu0 %v1292
    %1356 = vmatpush1.bf16.msra.mxu0 %v1291
    %1357 = vmatprep.subr.bf16.mxu0 %v1296
    %1358 = vmatpush1.bf16.msra.mxu0 %v1295
    %1359 = vmatprep.subr.bf16.mxu0 %v1300
    %1360 = vmatpush1.bf16.msra.mxu0 %v1299
    %1361 = vmatprep.subr.bf16.mxu0 %v1304
    %1362 = vmatpush1.bf16.msra.mxu0 %v1303
    %1363 = vmatprep.subr.bf16.mxu0 %v1308
    %1364 = vmatpush1.bf16.msra.mxu0 %v1307
    %1365 = vmatprep.subr.bf16.mxu0 %v1312
    %1366 = vmatpush1.bf16.msra.mxu0 %v1311
    %1367 = vmatprep.subr.bf16.mxu0 %v1316
    %1368 = vmatpush1.bf16.msra.mxu0 %v1315
    %1369 = vmatprep.subr.bf16.mxu0 %v1320
    %1370 = vmatpush1.bf16.msra.mxu0 %v1319
    %1371 = vmatprep.subr.bf16.mxu0 0
    %1372 = vmatpush1.bf16.msra.mxu0 0
    %1373 = vmatprep.subr.bf16.mxu0 0
    %1374 = vmatpush1.bf16.msra.mxu0 0
    %1375 = vmatprep.subr.bf16.mxu0 0
    %1376 = vmatpush1.bf16.msra.mxu0 0
    %1377 = vmatprep.subr.bf16.mxu0 0
    %1378 = vmatpush1.bf16.msra.mxu0 0
    %1379 = vmatprep.subr.bf16.mxu0 0
    %1380 = vmatpush1.bf16.msra.mxu0 0
    %1381 = vmatprep.subr.bf16.mxu0 0
    %1382 = vmatpush1.bf16.msra.mxu0 0
    %1383 = vmatprep.subr.bf16.mxu0 0
    %1384 = vmatpush1.bf16.msra.mxu0 0
    %1385 = vmatprep.subr.bf16.mxu0 0
    %1386 = vmatpush1.bf16.msra.mxu0 0
    %1387 = vmatprep.mubr.bf16.mxu0 0
    %1388 = vmatmul.mubr.bf16.gmra.mrb[0].mxu0 %v1162
    %v1389 = vpop.f32.mrb[0].mxu0
    %v1390 = vadd.f32 0.0, %v1389
    %v1391 = vpop.f32.mrb[0].mxu0
    %v1392 = vadd.f32 0.0, %v1391
    %v1393 = vpop.f32.mrb[0].mxu0
    %v1394 = vpop.f32.mrb[0].mxu0
    %1395 = vdwg.mxu0
    %1396 = vmatprep.subr.bf16.mxu0 %v1294
    %1397 = vmatpush1.bf16.msra.mxu0 %v1293
    %1398 = vmatprep.subr.bf16.mxu0 %v1298
    %1399 = vmatpush1.bf16.msra.mxu0 %v1297
    %1400 = vmatprep.subr.bf16.mxu0 %v1302
    %1401 = vmatpush1.bf16.msra.mxu0 %v1301
    %1402 = vmatprep.subr.bf16.mxu0 %v1306
    %1403 = vmatpush1.bf16.msra.mxu0 %v1305
    %1404 = vmatprep.subr.bf16.mxu0 %v1310
    %1405 = vmatpush1.bf16.msra.mxu0 %v1309
    %1406 = vmatprep.subr.bf16.mxu0 %v1314
    %1407 = vmatpush1.bf16.msra.mxu0 %v1313
    %1408 = vmatprep.subr.bf16.mxu0 %v1318
    %1409 = vmatpush1.bf16.msra.mxu0 %v1317
    %1410 = vmatprep.subr.bf16.mxu0 %v1322
    %1411 = vmatpush1.bf16.msra.mxu0 %v1321
    %1412 = vmatprep.subr.bf16.mxu0 0
    %1413 = vmatpush1.bf16.msra.mxu0 0
    %1414 = vmatprep.subr.bf16.mxu0 0
    %1415 = vmatpush1.bf16.msra.mxu0 0
    %1416 = vmatprep.subr.bf16.mxu0 0
    %1417 = vmatpush1.bf16.msra.mxu0 0
    %1418 = vmatprep.subr.bf16.mxu0 0
    %1419 = vmatpush1.bf16.msra.mxu0 0
    %1420 = vmatprep.subr.bf16.mxu0 0
    %1421 = vmatpush1.bf16.msra.mxu0 0
    %1422 = vmatprep.subr.bf16.mxu0 0
    %1423 = vmatpush1.bf16.msra.mxu0 0
    %1424 = vmatprep.subr.bf16.mxu0 0
    %1425 = vmatpush1.bf16.msra.mxu0 0
    %1426 = vmatprep.subr.bf16.mxu0 0
    %1427 = vmatpush1.bf16.msra.mxu0 0
    %1428 = vmatprep.mubr.bf16.mxu0 0
    %1429 = vmatmul.mubr.bf16.gmra.mrb[0].mxu0 %v1162
    %v1430 = vpop.f32.mrb[0].mxu0
    %v1431 = vadd.f32 0.0, %v1430
    %v1432 = vpop.f32.mrb[0].mxu0
    %v1433 = vadd.f32 0.0, %v1432
    %v1434 = vpop.f32.mrb[0].mxu0
    %v1435 = vpop.f32.mrb[0].mxu0
    %1436 = vdwg.mxu0
    %v1437 = vadd.f32 %v1158, %v1390
    %v1438 = vadd.f32 %v1159, %v1392
    %v1439 = vadd.f32 %v1160, %v1431
    %v1440 = vadd.f32 %v1161, %v1433
    %v1441 = vxor.u32 %v1437, 2147483648
    %v1442 = vxor.u32 %v1438, 2147483648
    %v1443 = vxor.u32 %v1439, 2147483648
    %v1444 = vmul.f32 %v1441, 1.442695
    %v1445 = vpow.pop %v1444
    %v1446 = vmul.f32 %v1442, 1.442695
    %v1447 = vpow.pop %v1446
    %v1448 = vmul.f32 %v1443, 1.442695
    %v1449 = vpow.pop %v1448
    %v1450 = vadd.f32 %v1445, 1.0
    %v1451 = vadd.f32 %v1447, 1.0
    %v1452 = vadd.f32 %v1449, 1.0
    %v1453 = vrcp.pop %v1450
    %v1454 = vmul.f32 1.0, %v1453
    %v1455 = vrcp.pop %v1451
    %v1456 = vmul.f32 1.0, %v1455
    %v1457 = vrcp.pop %v1452
    %v1458 = vmul.f32 1.0, %v1457
    %v1459 = vtanh.pop %v1440
    %v1460 = vmul.f32 %v1456, %v1152
    %v1461 = vmul.f32 %v1454, %v1459
    %v1462 = vadd.f32 %v1460, %v1461
    %v1463 = vtanh.pop %v1462
    %v1464 = vmul.f32 %v1458, %v1463
    %s1465 = scalar_lea.vmem [#allocation3], 16
    %1466 = vst [vmem:[%s1465] sm:$0xff] %v1464
    %s1467 = scalar_lea.vmem [#allocation2], 96
    %v1468 = vld [vmem:[%s1467] sm:$0xff]
    %v1469 = vld [vmem:[%s1467 + $0x8] sm:$0xff]
    %v1470 = vld [vmem:[%s1467 + $0x10] sm:$0xff]
    %v1471 = vld [vmem:[%s1467 + $0x18] sm:$0xff]
    %v1472 = vpack.c.bf16 %v1464, %v1464
    %v1473 = vld [vmem:[#allocation11] sm:$0xff]
    %v1474 = vld [vmem:[#allocation11 + $0x8] sm:$0xff]
    %v1475 = vld [vmem:[#allocation11 + $0x10] sm:$0xff]
    %v1476 = vld [vmem:[#allocation11 + $0x18] sm:$0xff]
    %v1477 = vld [vmem:[#allocation11 + $0x20] sm:$0xff]
    %v1478 = vld [vmem:[#allocation11 + $0x28] sm:$0xff]
    %v1479 = vld [vmem:[#allocation11 + $0x30] sm:$0xff]
    %v1480 = vld [vmem:[#allocation11 + $0x38] sm:$0xff]
    %v1481 = vld [vmem:[#allocation11 + $0x40] sm:$0xff]
    %v1482 = vld [vmem:[#allocation11 + $0x48] sm:$0xff]
    %v1483 = vld [vmem:[#allocation11 + $0x50] sm:$0xff]
    %v1484 = vld [vmem:[#allocation11 + $0x58] sm:$0xff]
    %v1485 = vld [vmem:[#allocation11 + $0x60] sm:$0xff]
    %v1486 = vld [vmem:[#allocation11 + $0x68] sm:$0xff]
    %v1487 = vld [vmem:[#allocation11 + $0x70] sm:$0xff]
    %v1488 = vld [vmem:[#allocation11 + $0x78] sm:$0xff]
    %v1489 = vld [vmem:[#allocation11 + $0x80] sm:$0xff]
    %v1490 = vld [vmem:[#allocation11 + $0x88] sm:$0xff]
    %v1491 = vld [vmem:[#allocation11 + $0x90] sm:$0xff]
    %v1492 = vld [vmem:[#allocation11 + $0x98] sm:$0xff]
    %v1493 = vld [vmem:[#allocation11 + $0xa0] sm:$0xff]
    %v1494 = vld [vmem:[#allocation11 + $0xa8] sm:$0xff]
    %v1495 = vld [vmem:[#allocation11 + $0xb0] sm:$0xff]
    %v1496 = vld [vmem:[#allocation11 + $0xb8] sm:$0xff]
    %v1497 = vld [vmem:[#allocation11 + $0xc0] sm:$0xff]
    %v1498 = vld [vmem:[#allocation11 + $0xc8] sm:$0xff]
    %v1499 = vld [vmem:[#allocation11 + $0xd0] sm:$0xff]
    %v1500 = vld [vmem:[#allocation11 + $0xd8] sm:$0xff]
    %v1501 = vld [vmem:[#allocation11 + $0xe0] sm:$0xff]
    %v1502 = vld [vmem:[#allocation11 + $0xe8] sm:$0xff]
    %v1503 = vld [vmem:[#allocation11 + $0xf0] sm:$0xff]
    %v1504 = vld [vmem:[#allocation11 + $0xf8] sm:$0xff]
    %v1537 = vunpack.c.l.b16 %v1473
    %v1538 = vunpack.c.h.b16 %v1473
    %v1539 = vunpack.c.l.b16 %v1474
    %v1540 = vunpack.c.h.b16 %v1474
    %v1541 = vunpack.c.l.b16 %v1475
    %v1542 = vunpack.c.h.b16 %v1475
    %v1543 = vunpack.c.l.b16 %v1476
    %v1544 = vunpack.c.h.b16 %v1476
    %v1545 = vunpack.c.l.b16 %v1477
    %v1546 = vunpack.c.h.b16 %v1477
    %v1547 = vunpack.c.l.b16 %v1478
    %v1548 = vunpack.c.h.b16 %v1478
    %v1549 = vunpack.c.l.b16 %v1479
    %v1550 = vunpack.c.h.b16 %v1479
    %v1551 = vunpack.c.l.b16 %v1480
    %v1552 = vunpack.c.h.b16 %v1480
    %v1553 = vunpack.c.l.b16 %v1481
    %v1554 = vunpack.c.h.b16 %v1481
    %v1555 = vunpack.c.l.b16 %v1482
    %v1556 = vunpack.c.h.b16 %v1482
    %v1557 = vunpack.c.l.b16 %v1483
    %v1558 = vunpack.c.h.b16 %v1483
    %v1559 = vunpack.c.l.b16 %v1484
    %v1560 = vunpack.c.h.b16 %v1484
    %v1561 = vunpack.c.l.b16 %v1485
    %v1562 = vunpack.c.h.b16 %v1485
    %v1563 = vunpack.c.l.b16 %v1486
    %v1564 = vunpack.c.h.b16 %v1486
    %v1565 = vunpack.c.l.b16 %v1487
    %v1566 = vunpack.c.h.b16 %v1487
    %v1567 = vunpack.c.l.b16 %v1488
    %v1568 = vunpack.c.h.b16 %v1488
    %v1569 = vunpack.c.l.b16 %v1489
    %v1570 = vunpack.c.h.b16 %v1489
    %v1571 = vunpack.c.l.b16 %v1490
    %v1572 = vunpack.c.h.b16 %v1490
    %v1573 = vunpack.c.l.b16 %v1491
    %v1574 = vunpack.c.h.b16 %v1491
    %v1575 = vunpack.c.l.b16 %v1492
    %v1576 = vunpack.c.h.b16 %v1492
    %v1577 = vunpack.c.l.b16 %v1493
    %v1578 = vunpack.c.h.b16 %v1493
    %v1579 = vunpack.c.l.b16 %v1494
    %v1580 = vunpack.c.h.b16 %v1494
    %v1581 = vunpack.c.l.b16 %v1495
    %v1582 = vunpack.c.h.b16 %v1495
    %v1583 = vunpack.c.l.b16 %v1496
    %v1584 = vunpack.c.h.b16 %v1496
    %v1585 = vunpack.c.l.b16 %v1497
    %v1586 = vunpack.c.h.b16 %v1497
    %v1587 = vunpack.c.l.b16 %v1498
    %v1588 = vunpack.c.h.b16 %v1498
    %v1589 = vunpack.c.l.b16 %v1499
    %v1590 = vunpack.c.h.b16 %v1499
    %v1591 = vunpack.c.l.b16 %v1500
    %v1592 = vunpack.c.h.b16 %v1500
    %v1593 = vunpack.c.l.b16 %v1501
    %v1594 = vunpack.c.h.b16 %v1501
    %v1595 = vunpack.c.l.b16 %v1502
    %v1596 = vunpack.c.h.b16 %v1502
    %v1597 = vunpack.c.l.b16 %v1503
    %v1598 = vunpack.c.h.b16 %v1503
    %v1599 = vunpack.c.l.b16 %v1504
    %v1600 = vunpack.c.h.b16 %v1504
    %v1601 = vpack.c.b16 %v1541, %v1537
    %v1602 = vpack.c.b16 %v1542, %v1538
    %v1603 = vpack.c.b16 %v1543, %v1539
    %v1604 = vpack.c.b16 %v1544, %v1540
    %v1605 = vpack.c.b16 %v1549, %v1545
    %v1606 = vpack.c.b16 %v1550, %v1546
    %v1607 = vpack.c.b16 %v1551, %v1547
    %v1608 = vpack.c.b16 %v1552, %v1548
    %v1609 = vpack.c.b16 %v1557, %v1553
    %v1610 = vpack.c.b16 %v1558, %v1554
    %v1611 = vpack.c.b16 %v1559, %v1555
    %v1612 = vpack.c.b16 %v1560, %v1556
    %v1613 = vpack.c.b16 %v1565, %v1561
    %v1614 = vpack.c.b16 %v1566, %v1562
    %v1615 = vpack.c.b16 %v1567, %v1563
    %v1616 = vpack.c.b16 %v1568, %v1564
    %v1617 = vpack.c.b16 %v1573, %v1569
    %v1618 = vpack.c.b16 %v1574, %v1570
    %v1619 = vpack.c.b16 %v1575, %v1571
    %v1620 = vpack.c.b16 %v1576, %v1572
    %v1621 = vpack.c.b16 %v1581, %v1577
    %v1622 = vpack.c.b16 %v1582, %v1578
    %v1623 = vpack.c.b16 %v1583, %v1579
    %v1624 = vpack.c.b16 %v1584, %v1580
    %v1625 = vpack.c.b16 %v1589, %v1585
    %v1626 = vpack.c.b16 %v1590, %v1586
    %v1627 = vpack.c.b16 %v1591, %v1587
    %v1628 = vpack.c.b16 %v1592, %v1588
    %v1629 = vpack.c.b16 %v1597, %v1593
    %v1630 = vpack.c.b16 %v1598, %v1594
    %v1631 = vpack.c.b16 %v1599, %v1595
    %v1632 = vpack.c.b16 %v1600, %v1596
    %1665 = vmatprep.subr.bf16.mxu0 %v1602
    %1666 = vmatpush1.bf16.msra.mxu0 %v1601
    %1667 = vmatprep.subr.bf16.mxu0 %v1606
    %1668 = vmatpush1.bf16.msra.mxu0 %v1605
    %1669 = vmatprep.subr.bf16.mxu0 %v1610
    %1670 = vmatpush1.bf16.msra.mxu0 %v1609
    %1671 = vmatprep.subr.bf16.mxu0 %v1614
    %1672 = vmatpush1.bf16.msra.mxu0 %v1613
    %1673 = vmatprep.subr.bf16.mxu0 %v1618
    %1674 = vmatpush1.bf16.msra.mxu0 %v1617
    %1675 = vmatprep.subr.bf16.mxu0 %v1622
    %1676 = vmatpush1.bf16.msra.mxu0 %v1621
    %1677 = vmatprep.subr.bf16.mxu0 %v1626
    %1678 = vmatpush1.bf16.msra.mxu0 %v1625
    %1679 = vmatprep.subr.bf16.mxu0 %v1630
    %1680 = vmatpush1.bf16.msra.mxu0 %v1629
    %1681 = vmatprep.subr.bf16.mxu0 0
    %1682 = vmatpush1.bf16.msra.mxu0 0
    %1683 = vmatprep.subr.bf16.mxu0 0
    %1684 = vmatpush1.bf16.msra.mxu0 0
    %1685 = vmatprep.subr.bf16.mxu0 0
    %1686 = vmatpush1.bf16.msra.mxu0 0
    %1687 = vmatprep.subr.bf16.mxu0 0
    %1688 = vmatpush1.bf16.msra.mxu0 0
    %1689 = vmatprep.subr.bf16.mxu0 0
    %1690 = vmatpush1.bf16.msra.mxu0 0
    %1691 = vmatprep.subr.bf16.mxu0 0
    %1692 = vmatpush1.bf16.msra.mxu0 0
    %1693 = vmatprep.subr.bf16.mxu0 0
    %1694 = vmatpush1.bf16.msra.mxu0 0
    %1695 = vmatprep.subr.bf16.mxu0 0
    %1696 = vmatpush1.bf16.msra.mxu0 0
    %1697 = vmatprep.mubr.bf16.mxu0 0
    %1698 = vmatmul.mubr.bf16.gmra.mrb[0].mxu0 %v1472
    %v1699 = vpop.f32.mrb[0].mxu0
    %v1700 = vadd.f32 0.0, %v1699
    %v1701 = vpop.f32.mrb[0].mxu0
    %v1702 = vadd.f32 0.0, %v1701
    %v1703 = vpop.f32.mrb[0].mxu0
    %v1704 = vpop.f32.mrb[0].mxu0
    %1705 = vdwg.mxu0
    %1706 = vmatprep.subr.bf16.mxu0 %v1604
    %1707 = vmatpush1.bf16.msra.mxu0 %v1603
    %1708 = vmatprep.subr.bf16.mxu0 %v1608
    %1709 = vmatpush1.bf16.msra.mxu0 %v1607
    %1710 = vmatprep.subr.bf16.mxu0 %v1612
    %1711 = vmatpush1.bf16.msra.mxu0 %v1611
    %1712 = vmatprep.subr.bf16.mxu0 %v1616
    %1713 = vmatpush1.bf16.msra.mxu0 %v1615
    %1714 = vmatprep.subr.bf16.mxu0 %v1620
    %1715 = vmatpush1.bf16.msra.mxu0 %v1619
    %1716 = vmatprep.subr.bf16.mxu0 %v1624
    %1717 = vmatpush1.bf16.msra.mxu0 %v1623
    %1718 = vmatprep.subr.bf16.mxu0 %v1628
    %1719 = vmatpush1.bf16.msra.mxu0 %v1627
    %1720 = vmatprep.subr.bf16.mxu0 %v1632
    %1721 = vmatpush1.bf16.msra.mxu0 %v1631
    %1722 = vmatprep.subr.bf16.mxu0 0
    %1723 = vmatpush1.bf16.msra.mxu0 0
    %1724 = vmatprep.subr.bf16.mxu0 0
    %1725 = vmatpush1.bf16.msra.mxu0 0
    %1726 = vmatprep.subr.bf16.mxu0 0
    %1727 = vmatpush1.bf16.msra.mxu0 0
    %1728 = vmatprep.subr.bf16.mxu0 0
    %1729 = vmatpush1.bf16.msra.mxu0 0
    %1730 = vmatprep.subr.bf16.mxu0 0
    %1731 = vmatpush1.bf16.msra.mxu0 0
    %1732 = vmatprep.subr.bf16.mxu0 0
    %1733 = vmatpush1.bf16.msra.mxu0 0
    %1734 = vmatprep.subr.bf16.mxu0 0
    %1735 = vmatpush1.bf16.msra.mxu0 0
    %1736 = vmatprep.subr.bf16.mxu0 0
    %1737 = vmatpush1.bf16.msra.mxu0 0
    %1738 = vmatprep.mubr.bf16.mxu0 0
    %1739 = vmatmul.mubr.bf16.gmra.mrb[0].mxu0 %v1472
    %v1740 = vpop.f32.mrb[0].mxu0
    %v1741 = vadd.f32 0.0, %v1740
    %v1742 = vpop.f32.mrb[0].mxu0
    %v1743 = vadd.f32 0.0, %v1742
    %v1744 = vpop.f32.mrb[0].mxu0
    %v1745 = vpop.f32.mrb[0].mxu0
    %1746 = vdwg.mxu0
    %v1747 = vadd.f32 %v1468, %v1700
    %v1748 = vadd.f32 %v1469, %v1702
    %v1749 = vadd.f32 %v1470, %v1741
    %v1750 = vadd.f32 %v1471, %v1743
    %v1751 = vxor.u32 %v1747, 2147483648
    %v1752 = vxor.u32 %v1748, 2147483648
    %v1753 = vxor.u32 %v1749, 2147483648
    %v1754 = vmul.f32 %v1751, 1.442695
    %v1755 = vpow.pop %v1754
    %v1756 = vmul.f32 %v1752, 1.442695
    %v1757 = vpow.pop %v1756
    %v1758 = vmul.f32 %v1753, 1.442695
    %v1759 = vpow.pop %v1758
    %v1760 = vadd.f32 %v1755, 1.0
    %v1761 = vadd.f32 %v1757, 1.0
    %v1762 = vadd.f32 %v1759, 1.0
    %v1763 = vrcp.pop %v1760
    %v1764 = vmul.f32 1.0, %v1763
    %v1765 = vrcp.pop %v1761
    %v1766 = vmul.f32 1.0, %v1765
    %v1767 = vrcp.pop %v1762
    %v1768 = vmul.f32 1.0, %v1767
    %v1769 = vtanh.pop %v1750
    %v1770 = vmul.f32 %v1766, %v1462
    %v1771 = vmul.f32 %v1764, %v1769
    %v1772 = vadd.f32 %v1770, %v1771
    %v1773 = vtanh.pop %v1772
    %v1774 = vmul.f32 %v1768, %v1773
    %s1775 = scalar_lea.vmem [#allocation3], 24
    %1776 = vst [vmem:[%s1775] sm:$0xff] %v1774
    %s1777 = scalar_lea.vmem [#allocation2], 128
    %v1778 = vld [vmem:[%s1777] sm:$0xff]
    %v1779 = vld [vmem:[%s1777 + $0x8] sm:$0xff]
    %v1780 = vld [vmem:[%s1777 + $0x10] sm:$0xff]
    %v1781 = vld [vmem:[%s1777 + $0x18] sm:$0xff]
    %v1782 = vpack.c.bf16 %v1774, %v1774
    %v1783 = vld [vmem:[#allocation11] sm:$0xff]
    %v1784 = vld [vmem:[#allocation11 + $0x8] sm:$0xff]
    %v1785 = vld [vmem:[#allocation11 + $0x10] sm:$0xff]
    %v1786 = vld [vmem:[#allocation11 + $0x18] sm:$0xff]
    %v1787 = vld [vmem:[#allocation11 + $0x20] sm:$0xff]
    %v1788 = vld [vmem:[#allocation11 + $0x28] sm:$0xff]
    %v1789 = vld [vmem:[#allocation11 + $0x30] sm:$0xff]
    %v1790 = vld [vmem:[#allocation11 + $0x38] sm:$0xff]
    %v1791 = vld [vmem:[#allocation11 + $0x40] sm:$0xff]
    %v1792 = vld [vmem:[#allocation11 + $0x48] sm:$0xff]
    %v1793 = vld [vmem:[#allocation11 + $0x50] sm:$0xff]
    %v1794 = vld [vmem:[#allocation11 + $0x58] sm:$0xff]
    %v1795 = vld [vmem:[#allocation11 + $0x60] sm:$0xff]
    %v1796 = vld [vmem:[#allocation11 + $0x68] sm:$0xff]
    %v1797 = vld [vmem:[#allocation11 + $0x70] sm:$0xff]
    %v1798 = vld [vmem:[#allocation11 + $0x78] sm:$0xff]
    %v1799 = vld [vmem:[#allocation11 + $0x80] sm:$0xff]
    %v1800 = vld [vmem:[#allocation11 + $0x88] sm:$0xff]
    %v1801 = vld [vmem:[#allocation11 + $0x90] sm:$0xff]
    %v1802 = vld [vmem:[#allocation11 + $0x98] sm:$0xff]
    %v1803 = vld [vmem:[#allocation11 + $0xa0] sm:$0xff]
    %v1804 = vld [vmem:[#allocation11 + $0xa8] sm:$0xff]
    %v1805 = vld [vmem:[#allocation11 + $0xb0] sm:$0xff]
    %v1806 = vld [vmem:[#allocation11 + $0xb8] sm:$0xff]
    %v1807 = vld [vmem:[#allocation11 + $0xc0] sm:$0xff]
    %v1808 = vld [vmem:[#allocation11 + $0xc8] sm:$0xff]
    %v1809 = vld [vmem:[#allocation11 + $0xd0] sm:$0xff]
    %v1810 = vld [vmem:[#allocation11 + $0xd8] sm:$0xff]
    %v1811 = vld [vmem:[#allocation11 + $0xe0] sm:$0xff]
    %v1812 = vld [vmem:[#allocation11 + $0xe8] sm:$0xff]
    %v1813 = vld [vmem:[#allocation11 + $0xf0] sm:$0xff]
    %v1814 = vld [vmem:[#allocation11 + $0xf8] sm:$0xff]
    %v1847 = vunpack.c.l.b16 %v1783
    %v1848 = vunpack.c.h.b16 %v1783
    %v1849 = vunpack.c.l.b16 %v1784
    %v1850 = vunpack.c.h.b16 %v1784
    %v1851 = vunpack.c.l.b16 %v1785
    %v1852 = vunpack.c.h.b16 %v1785
    %v1853 = vunpack.c.l.b16 %v1786
    %v1854 = vunpack.c.h.b16 %v1786
    %v1855 = vunpack.c.l.b16 %v1787
    %v1856 = vunpack.c.h.b16 %v1787
    %v1857 = vunpack.c.l.b16 %v1788
    %v1858 = vunpack.c.h.b16 %v1788
    %v1859 = vunpack.c.l.b16 %v1789
    %v1860 = vunpack.c.h.b16 %v1789
    %v1861 = vunpack.c.l.b16 %v1790
    %v1862 = vunpack.c.h.b16 %v1790
    %v1863 = vunpack.c.l.b16 %v1791
    %v1864 = vunpack.c.h.b16 %v1791
    %v1865 = vunpack.c.l.b16 %v1792
    %v1866 = vunpack.c.h.b16 %v1792
    %v1867 = vunpack.c.l.b16 %v1793
    %v1868 = vunpack.c.h.b16 %v1793
    %v1869 = vunpack.c.l.b16 %v1794
    %v1870 = vunpack.c.h.b16 %v1794
    %v1871 = vunpack.c.l.b16 %v1795
    %v1872 = vunpack.c.h.b16 %v1795
    %v1873 = vunpack.c.l.b16 %v1796
    %v1874 = vunpack.c.h.b16 %v1796
    %v1875 = vunpack.c.l.b16 %v1797
    %v1876 = vunpack.c.h.b16 %v1797
    %v1877 = vunpack.c.l.b16 %v1798
    %v1878 = vunpack.c.h.b16 %v1798
    %v1879 = vunpack.c.l.b16 %v1799
    %v1880 = vunpack.c.h.b16 %v1799
    %v1881 = vunpack.c.l.b16 %v1800
    %v1882 = vunpack.c.h.b16 %v1800
    %v1883 = vunpack.c.l.b16 %v1801
    %v1884 = vunpack.c.h.b16 %v1801
    %v1885 = vunpack.c.l.b16 %v1802
    %v1886 = vunpack.c.h.b16 %v1802
    %v1887 = vunpack.c.l.b16 %v1803
    %v1888 = vunpack.c.h.b16 %v1803
    %v1889 = vunpack.c.l.b16 %v1804
    %v1890 = vunpack.c.h.b16 %v1804
    %v1891 = vunpack.c.l.b16 %v1805
    %v1892 = vunpack.c.h.b16 %v1805
    %v1893 = vunpack.c.l.b16 %v1806
    %v1894 = vunpack.c.h.b16 %v1806
    %v1895 = vunpack.c.l.b16 %v1807
    %v1896 = vunpack.c.h.b16 %v1807
    %v1897 = vunpack.c.l.b16 %v1808
    %v1898 = vunpack.c.h.b16 %v1808
    %v1899 = vunpack.c.l.b16 %v1809
    %v1900 = vunpack.c.h.b16 %v1809
    %v1901 = vunpack.c.l.b16 %v1810
    %v1902 = vunpack.c.h.b16 %v1810
    %v1903 = vunpack.c.l.b16 %v1811
    %v1904 = vunpack.c.h.b16 %v1811
    %v1905 = vunpack.c.l.b16 %v1812
    %v1906 = vunpack.c.h.b16 %v1812
    %v1907 = vunpack.c.l.b16 %v1813
    %v1908 = vunpack.c.h.b16 %v1813
    %v1909 = vunpack.c.l.b16 %v1814
    %v1910 = vunpack.c.h.b16 %v1814
    %v1911 = vpack.c.b16 %v1851, %v1847
    %v1912 = vpack.c.b16 %v1852, %v1848
    %v1913 = vpack.c.b16 %v1853, %v1849
    %v1914 = vpack.c.b16 %v1854, %v1850
    %v1915 = vpack.c.b16 %v1859, %v1855
    %v1916 = vpack.c.b16 %v1860, %v1856
    %v1917 = vpack.c.b16 %v1861, %v1857
    %v1918 = vpack.c.b16 %v1862, %v1858
    %v1919 = vpack.c.b16 %v1867, %v1863
    %v1920 = vpack.c.b16 %v1868, %v1864
    %v1921 = vpack.c.b16 %v1869, %v1865
    %v1922 = vpack.c.b16 %v1870, %v1866
    %v1923 = vpack.c.b16 %v1875, %v1871
    %v1924 = vpack.c.b16 %v1876, %v1872
    %v1925 = vpack.c.b16 %v1877, %v1873
    %v1926 = vpack.c.b16 %v1878, %v1874
    %v1927 = vpack.c.b16 %v1883, %v1879
    %v1928 = vpack.c.b16 %v1884, %v1880
    %v1929 = vpack.c.b16 %v1885, %v1881
    %v1930 = vpack.c.b16 %v1886, %v1882
    %v1931 = vpack.c.b16 %v1891, %v1887
    %v1932 = vpack.c.b16 %v1892, %v1888
    %v1933 = vpack.c.b16 %v1893, %v1889
    %v1934 = vpack.c.b16 %v1894, %v1890
    %v1935 = vpack.c.b16 %v1899, %v1895
    %v1936 = vpack.c.b16 %v1900, %v1896
    %v1937 = vpack.c.b16 %v1901, %v1897
    %v1938 = vpack.c.b16 %v1902, %v1898
    %v1939 = vpack.c.b16 %v1907, %v1903
    %v1940 = vpack.c.b16 %v1908, %v1904
    %v1941 = vpack.c.b16 %v1909, %v1905
    %v1942 = vpack.c.b16 %v1910, %v1906
    %1975 = vmatprep.subr.bf16.mxu0 %v1912
    %1976 = vmatpush1.bf16.msra.mxu0 %v1911
    %1977 = vmatprep.subr.bf16.mxu0 %v1916
    %1978 = vmatpush1.bf16.msra.mxu0 %v1915
    %1979 = vmatprep.subr.bf16.mxu0 %v1920
    %1980 = vmatpush1.bf16.msra.mxu0 %v1919
    %1981 = vmatprep.subr.bf16.mxu0 %v1924
    %1982 = vmatpush1.bf16.msra.mxu0 %v1923
    %1983 = vmatprep.subr.bf16.mxu0 %v1928
    %1984 = vmatpush1.bf16.msra.mxu0 %v1927
    %1985 = vmatprep.subr.bf16.mxu0 %v1932
    %1986 = vmatpush1.bf16.msra.mxu0 %v1931
    %1987 = vmatprep.subr.bf16.mxu0 %v1936
    %1988 = vmatpush1.bf16.msra.mxu0 %v1935
    %1989 = vmatprep.subr.bf16.mxu0 %v1940
    %1990 = vmatpush1.bf16.msra.mxu0 %v1939
    %1991 = vmatprep.subr.bf16.mxu0 0
    %1992 = vmatpush1.bf16.msra.mxu0 0
    %1993 = vmatprep.subr.bf16.mxu0 0
    %1994 = vmatpush1.bf16.msra.mxu0 0
    %1995 = vmatprep.subr.bf16.mxu0 0
    %1996 = vmatpush1.bf16.msra.mxu0 0
    %1997 = vmatprep.subr.bf16.mxu0 0
    %1998 = vmatpush1.bf16.msra.mxu0 0
    %1999 = vmatprep.subr.bf16.mxu0 0
    %2000 = vmatpush1.bf16.msra.mxu0 0
    %2001 = vmatprep.subr.bf16.mxu0 0
    %2002 = vmatpush1.bf16.msra.mxu0 0
    %2003 = vmatprep.subr.bf16.mxu0 0
    %2004 = vmatpush1.bf16.msra.mxu0 0
    %2005 = vmatprep.subr.bf16.mxu0 0
    %2006 = vmatpush1.bf16.msra.mxu0 0
    %2007 = vmatprep.mubr.bf16.mxu0 0
    %2008 = vmatmul.mubr.bf16.gmra.mrb[0].mxu0 %v1782
    %v2009 = vpop.f32.mrb[0].mxu0
    %v2010 = vadd.f32 0.0, %v2009
    %v2011 = vpop.f32.mrb[0].mxu0
    %v2012 = vadd.f32 0.0, %v2011
    %v2013 = vpop.f32.mrb[0].mxu0
    %v2014 = vpop.f32.mrb[0].mxu0
    %2015 = vdwg.mxu0
    %2016 = vmatprep.subr.bf16.mxu0 %v1914
    %2017 = vmatpush1.bf16.msra.mxu0 %v1913
    %2018 = vmatprep.subr.bf16.mxu0 %v1918
    %2019 = vmatpush1.bf16.msra.mxu0 %v1917
    %2020 = vmatprep.subr.bf16.mxu0 %v1922
    %2021 = vmatpush1.bf16.msra.mxu0 %v1921
    %2022 = vmatprep.subr.bf16.mxu0 %v1926
    %2023 = vmatpush1.bf16.msra.mxu0 %v1925
    %2024 = vmatprep.subr.bf16.mxu0 %v1930
    %2025 = vmatpush1.bf16.msra.mxu0 %v1929
    %2026 = vmatprep.subr.bf16.mxu0 %v1934
    %2027 = vmatpush1.bf16.msra.mxu0 %v1933
    %2028 = vmatprep.subr.bf16.mxu0 %v1938
    %2029 = vmatpush1.bf16.msra.mxu0 %v1937
    %2030 = vmatprep.subr.bf16.mxu0 %v1942
    %2031 = vmatpush1.bf16.msra.mxu0 %v1941
    %2032 = vmatprep.subr.bf16.mxu0 0
    %2033 = vmatpush1.bf16.msra.mxu0 0
    %2034 = vmatprep.subr.bf16.mxu0 0
    %2035 = vmatpush1.bf16.msra.mxu0 0
    %2036 = vmatprep.subr.bf16.mxu0 0
    %2037 = vmatpush1.bf16.msra.mxu0 0
    %2038 = vmatprep.subr.bf16.mxu0 0
    %2039 = vmatpush1.bf16.msra.mxu0 0
    %2040 = vmatprep.subr.bf16.mxu0 0
    %2041 = vmatpush1.bf16.msra.mxu0 0
    %2042 = vmatprep.subr.bf16.mxu0 0
    %2043 = vmatpush1.bf16.msra.mxu0 0
    %2044 = vmatprep.subr.bf16.mxu0 0
    %2045 = vmatpush1.bf16.msra.mxu0 0
    %2046 = vmatprep.subr.bf16.mxu0 0
    %2047 = vmatpush1.bf16.msra.mxu0 0
    %2048 = vmatprep.mubr.bf16.mxu0 0
    %2049 = vmatmul.mubr.bf16.gmra.mrb[0].mxu0 %v1782
    %v2050 = vpop.f32.mrb[0].mxu0
    %v2051 = vadd.f32 0.0, %v2050
    %v2052 = vpop.f32.mrb[0].mxu0
    %v2053 = vadd.f32 0.0, %v2052
    %v2054 = vpop.f32.mrb[0].mxu0
    %v2055 = vpop.f32.mrb[0].mxu0
    %2056 = vdwg.mxu0
    %v2057 = vadd.f32 %v1778, %v2010
    %v2058 = vadd.f32 %v1779, %v2012
    %v2059 = vadd.f32 %v1780, %v2051
    %v2060 = vadd.f32 %v1781, %v2053
    %v2061 = vxor.u32 %v2057, 2147483648
    %v2062 = vxor.u32 %v2058, 2147483648
    %v2063 = vxor.u32 %v2059, 2147483648
    %v2064 = vmul.f32 %v2061, 1.442695
    %v2065 = vpow.pop %v2064
    %v2066 = vmul.f32 %v2062, 1.442695
    %v2067 = vpow.pop %v2066
    %v2068 = vmul.f32 %v2063, 1.442695
    %v2069 = vpow.pop %v2068
    %v2070 = vadd.f32 %v2065, 1.0
    %v2071 = vadd.f32 %v2067, 1.0
    %v2072 = vadd.f32 %v2069, 1.0
    %v2073 = vrcp.pop %v2070
    %v2074 = vmul.f32 1.0, %v2073
    %v2075 = vrcp.pop %v2071
    %v2076 = vmul.f32 1.0, %v2075
    %v2077 = vrcp.pop %v2072
    %v2078 = vmul.f32 1.0, %v2077
    %v2079 = vtanh.pop %v2060
    %v2080 = vmul.f32 %v2076, %v1772
    %v2081 = vmul.f32 %v2074, %v2079
    %v2082 = vadd.f32 %v2080, %v2081
    %v2083 = vtanh.pop %v2082
    %v2084 = vmul.f32 %v2078, %v2083
    %s2085 = scalar_lea.vmem [#allocation3], 32
    %2086 = vst [vmem:[%s2085] sm:$0xff] %v2084
    %s2087 = scalar_lea.vmem [#allocation2], 160
    %v2088 = vld [vmem:[%s2087] sm:$0xff]
    %v2089 = vld [vmem:[%s2087 + $0x8] sm:$0xff]
    %v2090 = vld [vmem:[%s2087 + $0x10] sm:$0xff]
    %v2091 = vld [vmem:[%s2087 + $0x18] sm:$0xff]
    %v2092 = vpack.c.bf16 %v2084, %v2084
    %v2093 = vld [vmem:[#allocation11] sm:$0xff]
    %v2094 = vld [vmem:[#allocation11 + $0x8] sm:$0xff]
    %v2095 = vld [vmem:[#allocation11 + $0x10] sm:$0xff]
    %v2096 = vld [vmem:[#allocation11 + $0x18] sm:$0xff]
    %v2097 = vld [vmem:[#allocation11 + $0x20] sm:$0xff]
    %v2098 = vld [vmem:[#allocation11 + $0x28] sm:$0xff]
    %v2099 = vld [vmem:[#allocation11 + $0x30] sm:$0xff]
    %v2100 = vld [vmem:[#allocation11 + $0x38] sm:$0xff]
    %v2101 = vld [vmem:[#allocation11 + $0x40] sm:$0xff]
    %v2102 = vld [vmem:[#allocation11 + $0x48] sm:$0xff]
    %v2103 = vld [vmem:[#allocation11 + $0x50] sm:$0xff]
    %v2104 = vld [vmem:[#allocation11 + $0x58] sm:$0xff]
    %v2105 = vld [vmem:[#allocation11 + $0x60] sm:$0xff]
    %v2106 = vld [vmem:[#allocation11 + $0x68] sm:$0xff]
    %v2107 = vld [vmem:[#allocation11 + $0x70] sm:$0xff]
    %v2108 = vld [vmem:[#allocation11 + $0x78] sm:$0xff]
    %v2109 = vld [vmem:[#allocation11 + $0x80] sm:$0xff]
    %v2110 = vld [vmem:[#allocation11 + $0x88] sm:$0xff]
    %v2111 = vld [vmem:[#allocation11 + $0x90] sm:$0xff]
    %v2112 = vld [vmem:[#allocation11 + $0x98] sm:$0xff]
    %v2113 = vld [vmem:[#allocation11 + $0xa0] sm:$0xff]
    %v2114 = vld [vmem:[#allocation11 + $0xa8] sm:$0xff]
    %v2115 = vld [vmem:[#allocation11 + $0xb0] sm:$0xff]
    %v2116 = vld [vmem:[#allocation11 + $0xb8] sm:$0xff]
    %v2117 = vld [vmem:[#allocation11 + $0xc0] sm:$0xff]
    %v2118 = vld [vmem:[#allocation11 + $0xc8] sm:$0xff]
    %v2119 = vld [vmem:[#allocation11 + $0xd0] sm:$0xff]
    %v2120 = vld [vmem:[#allocation11 + $0xd8] sm:$0xff]
    %v2121 = vld [vmem:[#allocation11 + $0xe0] sm:$0xff]
    %v2122 = vld [vmem:[#allocation11 + $0xe8] sm:$0xff]
    %v2123 = vld [vmem:[#allocation11 + $0xf0] sm:$0xff]
    %v2124 = vld [vmem:[#allocation11 + $0xf8] sm:$0xff]
    %v2157 = vunpack.c.l.b16 %v2093
    %v2158 = vunpack.c.h.b16 %v2093
    %v2159 = vunpack.c.l.b16 %v2094
    %v2160 = vunpack.c.h.b16 %v2094
    %v2161 = vunpack.c.l.b16 %v2095
    %v2162 = vunpack.c.h.b16 %v2095
    %v2163 = vunpack.c.l.b16 %v2096
    %v2164 = vunpack.c.h.b16 %v2096
    %v2165 = vunpack.c.l.b16 %v2097
    %v2166 = vunpack.c.h.b16 %v2097
    %v2167 = vunpack.c.l.b16 %v2098
    %v2168 = vunpack.c.h.b16 %v2098
    %v2169 = vunpack.c.l.b16 %v2099
    %v2170 = vunpack.c.h.b16 %v2099
    %v2171 = vunpack.c.l.b16 %v2100
    %v2172 = vunpack.c.h.b16 %v2100
    %v2173 = vunpack.c.l.b16 %v2101
    %v2174 = vunpack.c.h.b16 %v2101
    %v2175 = vunpack.c.l.b16 %v2102
    %v2176 = vunpack.c.h.b16 %v2102
    %v2177 = vunpack.c.l.b16 %v2103
    %v2178 = vunpack.c.h.b16 %v2103
    %v2179 = vunpack.c.l.b16 %v2104
    %v2180 = vunpack.c.h.b16 %v2104
    %v2181 = vunpack.c.l.b16 %v2105
    %v2182 = vunpack.c.h.b16 %v2105
    %v2183 = vunpack.c.l.b16 %v2106
    %v2184 = vunpack.c.h.b16 %v2106
    %v2185 = vunpack.c.l.b16 %v2107
    %v2186 = vunpack.c.h.b16 %v2107
    %v2187 = vunpack.c.l.b16 %v2108
    %v2188 = vunpack.c.h.b16 %v2108
    %v2189 = vunpack.c.l.b16 %v2109
    %v2190 = vunpack.c.h.b16 %v2109
    %v2191 = vunpack.c.l.b16 %v2110
    %v2192 = vunpack.c.h.b16 %v2110
    %v2193 = vunpack.c.l.b16 %v2111
    %v2194 = vunpack.c.h.b16 %v2111
    %v2195 = vunpack.c.l.b16 %v2112
    %v2196 = vunpack.c.h.b16 %v2112
    %v2197 = vunpack.c.l.b16 %v2113
    %v2198 = vunpack.c.h.b16 %v2113
    %v2199 = vunpack.c.l.b16 %v2114
    %v2200 = vunpack.c.h.b16 %v2114
    %v2201 = vunpack.c.l.b16 %v2115
    %v2202 = vunpack.c.h.b16 %v2115
    %v2203 = vunpack.c.l.b16 %v2116
    %v2204 = vunpack.c.h.b16 %v2116
    %v2205 = vunpack.c.l.b16 %v2117
    %v2206 = vunpack.c.h.b16 %v2117
    %v2207 = vunpack.c.l.b16 %v2118
    %v2208 = vunpack.c.h.b16 %v2118
    %v2209 = vunpack.c.l.b16 %v2119
    %v2210 = vunpack.c.h.b16 %v2119
    %v2211 = vunpack.c.l.b16 %v2120
    %v2212 = vunpack.c.h.b16 %v2120
    %v2213 = vunpack.c.l.b16 %v2121
    %v2214 = vunpack.c.h.b16 %v2121
    %v2215 = vunpack.c.l.b16 %v2122
    %v2216 = vunpack.c.h.b16 %v2122
    %v2217 = vunpack.c.l.b16 %v2123
    %v2218 = vunpack.c.h.b16 %v2123
    %v2219 = vunpack.c.l.b16 %v2124
    %v2220 = vunpack.c.h.b16 %v2124
    %v2221 = vpack.c.b16 %v2161, %v2157
    %v2222 = vpack.c.b16 %v2162, %v2158
    %v2223 = vpack.c.b16 %v2163, %v2159
    %v2224 = vpack.c.b16 %v2164, %v2160
    %v2225 = vpack.c.b16 %v2169, %v2165
    %v2226 = vpack.c.b16 %v2170, %v2166
    %v2227 = vpack.c.b16 %v2171, %v2167
    %v2228 = vpack.c.b16 %v2172, %v2168
    %v2229 = vpack.c.b16 %v2177, %v2173
    %v2230 = vpack.c.b16 %v2178, %v2174
    %v2231 = vpack.c.b16 %v2179, %v2175
    %v2232 = vpack.c.b16 %v2180, %v2176
    %v2233 = vpack.c.b16 %v2185, %v2181
    %v2234 = vpack.c.b16 %v2186, %v2182
    %v2235 = vpack.c.b16 %v2187, %v2183
    %v2236 = vpack.c.b16 %v2188, %v2184
    %v2237 = vpack.c.b16 %v2193, %v2189
    %v2238 = vpack.c.b16 %v2194, %v2190
    %v2239 = vpack.c.b16 %v2195, %v2191
    %v2240 = vpack.c.b16 %v2196, %v2192
    %v2241 = vpack.c.b16 %v2201, %v2197
    %v2242 = vpack.c.b16 %v2202, %v2198
    %v2243 = vpack.c.b16 %v2203, %v2199
    %v2244 = vpack.c.b16 %v2204, %v2200
    %v2245 = vpack.c.b16 %v2209, %v2205
    %v2246 = vpack.c.b16 %v2210, %v2206
    %v2247 = vpack.c.b16 %v2211, %v2207
    %v2248 = vpack.c.b16 %v2212, %v2208
    %v2249 = vpack.c.b16 %v2217, %v2213
    %v2250 = vpack.c.b16 %v2218, %v2214
    %v2251 = vpack.c.b16 %v2219, %v2215
    %v2252 = vpack.c.b16 %v2220, %v2216
    %2285 = vmatprep.subr.bf16.mxu0 %v2222
    %2286 = vmatpush1.bf16.msra.mxu0 %v2221
    %2287 = vmatprep.subr.bf16.mxu0 %v2226
    %2288 = vmatpush1.bf16.msra.mxu0 %v2225
    %2289 = vmatprep.subr.bf16.mxu0 %v2230
    %2290 = vmatpush1.bf16.msra.mxu0 %v2229
    %2291 = vmatprep.subr.bf16.mxu0 %v2234
    %2292 = vmatpush1.bf16.msra.mxu0 %v2233
    %2293 = vmatprep.subr.bf16.mxu0 %v2238
    %2294 = vmatpush1.bf16.msra.mxu0 %v2237
    %2295 = vmatprep.subr.bf16.mxu0 %v2242
    %2296 = vmatpush1.bf16.msra.mxu0 %v2241
    %2297 = vmatprep.subr.bf16.mxu0 %v2246
    %2298 = vmatpush1.bf16.msra.mxu0 %v2245
    %2299 = vmatprep.subr.bf16.mxu0 %v2250
    %2300 = vmatpush1.bf16.msra.mxu0 %v2249
    %2301 = vmatprep.subr.bf16.mxu0 0
    %2302 = vmatpush1.bf16.msra.mxu0 0
    %2303 = vmatprep.subr.bf16.mxu0 0
    %2304 = vmatpush1.bf16.msra.mxu0 0
    %2305 = vmatprep.subr.bf16.mxu0 0
    %2306 = vmatpush1.bf16.msra.mxu0 0
    %2307 = vmatprep.subr.bf16.mxu0 0
    %2308 = vmatpush1.bf16.msra.mxu0 0
    %2309 = vmatprep.subr.bf16.mxu0 0
    %2310 = vmatpush1.bf16.msra.mxu0 0
    %2311 = vmatprep.subr.bf16.mxu0 0
    %2312 = vmatpush1.bf16.msra.mxu0 0
    %2313 = vmatprep.subr.bf16.mxu0 0
    %2314 = vmatpush1.bf16.msra.mxu0 0
    %2315 = vmatprep.subr.bf16.mxu0 0
    %2316 = vmatpush1.bf16.msra.mxu0 0
    %2317 = vmatprep.mubr.bf16.mxu0 0
    %2318 = vmatmul.mubr.bf16.gmra.mrb[0].mxu0 %v2092
    %v2319 = vpop.f32.mrb[0].mxu0
    %v2320 = vadd.f32 0.0, %v2319
    %v2321 = vpop.f32.mrb[0].mxu0
    %v2322 = vadd.f32 0.0, %v2321
    %v2323 = vpop.f32.mrb[0].mxu0
    %v2324 = vpop.f32.mrb[0].mxu0
    %2325 = vdwg.mxu0
    %2326 = vmatprep.subr.bf16.mxu0 %v2224
    %2327 = vmatpush1.bf16.msra.mxu0 %v2223
    %2328 = vmatprep.subr.bf16.mxu0 %v2228
    %2329 = vmatpush1.bf16.msra.mxu0 %v2227
    %2330 = vmatprep.subr.bf16.mxu0 %v2232
    %2331 = vmatpush1.bf16.msra.mxu0 %v2231
    %2332 = vmatprep.subr.bf16.mxu0 %v2236
    %2333 = vmatpush1.bf16.msra.mxu0 %v2235
    %2334 = vmatprep.subr.bf16.mxu0 %v2240
    %2335 = vmatpush1.bf16.msra.mxu0 %v2239
    %2336 = vmatprep.subr.bf16.mxu0 %v2244
    %2337 = vmatpush1.bf16.msra.mxu0 %v2243
    %2338 = vmatprep.subr.bf16.mxu0 %v2248
    %2339 = vmatpush1.bf16.msra.mxu0 %v2247
    %2340 = vmatprep.subr.bf16.mxu0 %v2252
    %2341 = vmatpush1.bf16.msra.mxu0 %v2251
    %2342 = vmatprep.subr.bf16.mxu0 0
    %2343 = vmatpush1.bf16.msra.mxu0 0
    %2344 = vmatprep.subr.bf16.mxu0 0
    %2345 = vmatpush1.bf16.msra.mxu0 0
    %2346 = vmatprep.subr.bf16.mxu0 0
    %2347 = vmatpush1.bf16.msra.mxu0 0
    %2348 = vmatprep.subr.bf16.mxu0 0
    %2349 = vmatpush1.bf16.msra.mxu0 0
    %2350 = vmatprep.subr.bf16.mxu0 0
    %2351 = vmatpush1.bf16.msra.mxu0 0
    %2352 = vmatprep.subr.bf16.mxu0 0
    %2353 = vmatpush1.bf16.msra.mxu0 0
    %2354 = vmatprep.subr.bf16.mxu0 0
    %2355 = vmatpush1.bf16.msra.mxu0 0
    %2356 = vmatprep.subr.bf16.mxu0 0
    %2357 = vmatpush1.bf16.msra.mxu0 0
    %2358 = vmatprep.mubr.bf16.mxu0 0
    %2359 = vmatmul.mubr.bf16.gmra.mrb[0].mxu0 %v2092
    %v2360 = vpop.f32.mrb[0].mxu0
    %v2361 = vadd.f32 0.0, %v2360
    %v2362 = vpop.f32.mrb[0].mxu0
    %v2363 = vadd.f32 0.0, %v2362
    %v2364 = vpop.f32.mrb[0].mxu0
    %v2365 = vpop.f32.mrb[0].mxu0
    %2366 = vdwg.mxu0
    %v2367 = vadd.f32 %v2088, %v2320
    %v2368 = vadd.f32 %v2089, %v2322
    %v2369 = vadd.f32 %v2090, %v2361
    %v2370 = vadd.f32 %v2091, %v2363
    %v2371 = vxor.u32 %v2367, 2147483648
    %v2372 = vxor.u32 %v2368, 2147483648
    %v2373 = vxor.u32 %v2369, 2147483648
    %v2374 = vmul.f32 %v2371, 1.442695
    %v2375 = vpow.pop %v2374
    %v2376 = vmul.f32 %v2372, 1.442695
    %v2377 = vpow.pop %v2376
    %v2378 = vmul.f32 %v2373, 1.442695
    %v2379 = vpow.pop %v2378
    %v2380 = vadd.f32 %v2375, 1.0
    %v2381 = vadd.f32 %v2377, 1.0
    %v2382 = vadd.f32 %v2379, 1.0
    %v2383 = vrcp.pop %v2380
    %v2384 = vmul.f32 1.0, %v2383
    %v2385 = vrcp.pop %v2381
    %v2386 = vmul.f32 1.0, %v2385
    %v2387 = vrcp.pop %v2382
    %v2388 = vmul.f32 1.0, %v2387
    %v2389 = vtanh.pop %v2370
    %v2390 = vmul.f32 %v2386, %v2082
    %v2391 = vmul.f32 %v2384, %v2389
    %v2392 = vadd.f32 %v2390, %v2391
    %v2393 = vtanh.pop %v2392
    %v2394 = vmul.f32 %v2388, %v2393
    %s2395 = scalar_lea.vmem [#allocation3], 40
    %2396 = vst [vmem:[%s2395] sm:$0xff] %v2394
    %s2397 = scalar_lea.vmem [#allocation2], 192
    %v2398 = vld [vmem:[%s2397] sm:$0xff]
    %v2399 = vld [vmem:[%s2397 + $0x8] sm:$0xff]
    %v2400 = vld [vmem:[%s2397 + $0x10] sm:$0xff]
    %v2401 = vld [vmem:[%s2397 + $0x18] sm:$0xff]
    %v2402 = vpack.c.bf16 %v2394, %v2394
    %v2403 = vld [vmem:[#allocation11] sm:$0xff]
    %v2404 = vld [vmem:[#allocation11 + $0x8] sm:$0xff]
    %v2405 = vld [vmem:[#allocation11 + $0x10] sm:$0xff]
    %v2406 = vld [vmem:[#allocation11 + $0x18] sm:$0xff]
    %v2407 = vld [vmem:[#allocation11 + $0x20] sm:$0xff]
    %v2408 = vld [vmem:[#allocation11 + $0x28] sm:$0xff]
    %v2409 = vld [vmem:[#allocation11 + $0x30] sm:$0xff]
    %v2410 = vld [vmem:[#allocation11 + $0x38] sm:$0xff]
    %v2411 = vld [vmem:[#allocation11 + $0x40] sm:$0xff]
    %v2412 = vld [vmem:[#allocation11 + $0x48] sm:$0xff]
    %v2413 = vld [vmem:[#allocation11 + $0x50] sm:$0xff]
    %v2414 = vld [vmem:[#allocation11 + $0x58] sm:$0xff]
    %v2415 = vld [vmem:[#allocation11 + $0x60] sm:$0xff]
    %v2416 = vld [vmem:[#allocation11 + $0x68] sm:$0xff]
    %v2417 = vld [vmem:[#allocation11 + $0x70] sm:$0xff]
    %v2418 = vld [vmem:[#allocation11 + $0x78] sm:$0xff]
    %v2419 = vld [vmem:[#allocation11 + $0x80] sm:$0xff]
    %v2420 = vld [vmem:[#allocation11 + $0x88] sm:$0xff]
    %v2421 = vld [vmem:[#allocation11 + $0x90] sm:$0xff]
    %v2422 = vld [vmem:[#allocation11 + $0x98] sm:$0xff]
    %v2423 = vld [vmem:[#allocation11 + $0xa0] sm:$0xff]
    %v2424 = vld [vmem:[#allocation11 + $0xa8] sm:$0xff]
    %v2425 = vld [vmem:[#allocation11 + $0xb0] sm:$0xff]
    %v2426 = vld [vmem:[#allocation11 + $0xb8] sm:$0xff]
    %v2427 = vld [vmem:[#allocation11 + $0xc0] sm:$0xff]
    %v2428 = vld [vmem:[#allocation11 + $0xc8] sm:$0xff]
    %v2429 = vld [vmem:[#allocation11 + $0xd0] sm:$0xff]
    %v2430 = vld [vmem:[#allocation11 + $0xd8] sm:$0xff]
    %v2431 = vld [vmem:[#allocation11 + $0xe0] sm:$0xff]
    %v2432 = vld [vmem:[#allocation11 + $0xe8] sm:$0xff]
    %v2433 = vld [vmem:[#allocation11 + $0xf0] sm:$0xff]
    %v2434 = vld [vmem:[#allocation11 + $0xf8] sm:$0xff]
    %v2467 = vunpack.c.l.b16 %v2403
    %v2468 = vunpack.c.h.b16 %v2403
    %v2469 = vunpack.c.l.b16 %v2404
    %v2470 = vunpack.c.h.b16 %v2404
    %v2471 = vunpack.c.l.b16 %v2405
    %v2472 = vunpack.c.h.b16 %v2405
    %v2473 = vunpack.c.l.b16 %v2406
    %v2474 = vunpack.c.h.b16 %v2406
    %v2475 = vunpack.c.l.b16 %v2407
    %v2476 = vunpack.c.h.b16 %v2407
    %v2477 = vunpack.c.l.b16 %v2408
    %v2478 = vunpack.c.h.b16 %v2408
    %v2479 = vunpack.c.l.b16 %v2409
    %v2480 = vunpack.c.h.b16 %v2409
    %v2481 = vunpack.c.l.b16 %v2410
    %v2482 = vunpack.c.h.b16 %v2410
    %v2483 = vunpack.c.l.b16 %v2411
    %v2484 = vunpack.c.h.b16 %v2411
    %v2485 = vunpack.c.l.b16 %v2412
    %v2486 = vunpack.c.h.b16 %v2412
    %v2487 = vunpack.c.l.b16 %v2413
    %v2488 = vunpack.c.h.b16 %v2413
    %v2489 = vunpack.c.l.b16 %v2414
    %v2490 = vunpack.c.h.b16 %v2414
    %v2491 = vunpack.c.l.b16 %v2415
    %v2492 = vunpack.c.h.b16 %v2415
    %v2493 = vunpack.c.l.b16 %v2416
    %v2494 = vunpack.c.h.b16 %v2416
    %v2495 = vunpack.c.l.b16 %v2417
    %v2496 = vunpack.c.h.b16 %v2417
    %v2497 = vunpack.c.l.b16 %v2418
    %v2498 = vunpack.c.h.b16 %v2418
    %v2499 = vunpack.c.l.b16 %v2419
    %v2500 = vunpack.c.h.b16 %v2419
    %v2501 = vunpack.c.l.b16 %v2420
    %v2502 = vunpack.c.h.b16 %v2420
    %v2503 = vunpack.c.l.b16 %v2421
    %v2504 = vunpack.c.h.b16 %v2421
    %v2505 = vunpack.c.l.b16 %v2422
    %v2506 = vunpack.c.h.b16 %v2422
    %v2507 = vunpack.c.l.b16 %v2423
    %v2508 = vunpack.c.h.b16 %v2423
    %v2509 = vunpack.c.l.b16 %v2424
    %v2510 = vunpack.c.h.b16 %v2424
    %v2511 = vunpack.c.l.b16 %v2425
    %v2512 = vunpack.c.h.b16 %v2425
    %v2513 = vunpack.c.l.b16 %v2426
    %v2514 = vunpack.c.h.b16 %v2426
    %v2515 = vunpack.c.l.b16 %v2427
    %v2516 = vunpack.c.h.b16 %v2427
    %v2517 = vunpack.c.l.b16 %v2428
    %v2518 = vunpack.c.h.b16 %v2428
    %v2519 = vunpack.c.l.b16 %v2429
    %v2520 = vunpack.c.h.b16 %v2429
    %v2521 = vunpack.c.l.b16 %v2430
    %v2522 = vunpack.c.h.b16 %v2430
    %v2523 = vunpack.c.l.b16 %v2431
    %v2524 = vunpack.c.h.b16 %v2431
    %v2525 = vunpack.c.l.b16 %v2432
    %v2526 = vunpack.c.h.b16 %v2432
    %v2527 = vunpack.c.l.b16 %v2433
    %v2528 = vunpack.c.h.b16 %v2433
    %v2529 = vunpack.c.l.b16 %v2434
    %v2530 = vunpack.c.h.b16 %v2434
    %v2531 = vpack.c.b16 %v2471, %v2467
    %v2532 = vpack.c.b16 %v2472, %v2468
    %v2533 = vpack.c.b16 %v2473, %v2469
    %v2534 = vpack.c.b16 %v2474, %v2470
    %v2535 = vpack.c.b16 %v2479, %v2475
    %v2536 = vpack.c.b16 %v2480, %v2476
    %v2537 = vpack.c.b16 %v2481, %v2477
    %v2538 = vpack.c.b16 %v2482, %v2478
    %v2539 = vpack.c.b16 %v2487, %v2483
    %v2540 = vpack.c.b16 %v2488, %v2484
    %v2541 = vpack.c.b16 %v2489, %v2485
    %v2542 = vpack.c.b16 %v2490, %v2486
    %v2543 = vpack.c.b16 %v2495, %v2491
    %v2544 = vpack.c.b16 %v2496, %v2492
    %v2545 = vpack.c.b16 %v2497, %v2493
    %v2546 = vpack.c.b16 %v2498, %v2494
    %v2547 = vpack.c.b16 %v2503, %v2499
    %v2548 = vpack.c.b16 %v2504, %v2500
    %v2549 = vpack.c.b16 %v2505, %v2501
    %v2550 = vpack.c.b16 %v2506, %v2502
    %v2551 = vpack.c.b16 %v2511, %v2507
    %v2552 = vpack.c.b16 %v2512, %v2508
    %v2553 = vpack.c.b16 %v2513, %v2509
    %v2554 = vpack.c.b16 %v2514, %v2510
    %v2555 = vpack.c.b16 %v2519, %v2515
    %v2556 = vpack.c.b16 %v2520, %v2516
    %v2557 = vpack.c.b16 %v2521, %v2517
    %v2558 = vpack.c.b16 %v2522, %v2518
    %v2559 = vpack.c.b16 %v2527, %v2523
    %v2560 = vpack.c.b16 %v2528, %v2524
    %v2561 = vpack.c.b16 %v2529, %v2525
    %v2562 = vpack.c.b16 %v2530, %v2526
    %2595 = vmatprep.subr.bf16.mxu0 %v2532
    %2596 = vmatpush1.bf16.msra.mxu0 %v2531
    %2597 = vmatprep.subr.bf16.mxu0 %v2536
    %2598 = vmatpush1.bf16.msra.mxu0 %v2535
    %2599 = vmatprep.subr.bf16.mxu0 %v2540
    %2600 = vmatpush1.bf16.msra.mxu0 %v2539
    %2601 = vmatprep.subr.bf16.mxu0 %v2544
    %2602 = vmatpush1.bf16.msra.mxu0 %v2543
    %2603 = vmatprep.subr.bf16.mxu0 %v2548
    %2604 = vmatpush1.bf16.msra.mxu0 %v2547
    %2605 = vmatprep.subr.bf16.mxu0 %v2552
    %2606 = vmatpush1.bf16.msra.mxu0 %v2551
    %2607 = vmatprep.subr.bf16.mxu0 %v2556
    %2608 = vmatpush1.bf16.msra.mxu0 %v2555
    %2609 = vmatprep.subr.bf16.mxu0 %v2560
    %2610 = vmatpush1.bf16.msra.mxu0 %v2559
    %2611 = vmatprep.subr.bf16.mxu0 0
    %2612 = vmatpush1.bf16.msra.mxu0 0
    %2613 = vmatprep.subr.bf16.mxu0 0
    %2614 = vmatpush1.bf16.msra.mxu0 0
    %2615 = vmatprep.subr.bf16.mxu0 0
    %2616 = vmatpush1.bf16.msra.mxu0 0
    %2617 = vmatprep.subr.bf16.mxu0 0
    %2618 = vmatpush1.bf16.msra.mxu0 0
    %2619 = vmatprep.subr.bf16.mxu0 0
    %2620 = vmatpush1.bf16.msra.mxu0 0
    %2621 = vmatprep.subr.bf16.mxu0 0
    %2622 = vmatpush1.bf16.msra.mxu0 0
    %2623 = vmatprep.subr.bf16.mxu0 0
    %2624 = vmatpush1.bf16.msra.mxu0 0
    %2625 = vmatprep.subr.bf16.mxu0 0
    %2626 = vmatpush1.bf16.msra.mxu0 0
    %2627 = vmatprep.mubr.bf16.mxu0 0
    %2628 = vmatmul.mubr.bf16.gmra.mrb[0].mxu0 %v2402
    %v2629 = vpop.f32.mrb[0].mxu0
    %v2630 = vadd.f32 0.0, %v2629
    %v2631 = vpop.f32.mrb[0].mxu0
    %v2632 = vadd.f32 0.0, %v2631
    %v2633 = vpop.f32.mrb[0].mxu0
    %v2634 = vpop.f32.mrb[0].mxu0
    %2635 = vdwg.mxu0
    %2636 = vmatprep.subr.bf16.mxu0 %v2534
    %2637 = vmatpush1.bf16.msra.mxu0 %v2533
    %2638 = vmatprep.subr.bf16.mxu0 %v2538
    %2639 = vmatpush1.bf16.msra.mxu0 %v2537
    %2640 = vmatprep.subr.bf16.mxu0 %v2542
    %2641 = vmatpush1.bf16.msra.mxu0 %v2541
    %2642 = vmatprep.subr.bf16.mxu0 %v2546
    %2643 = vmatpush1.bf16.msra.mxu0 %v2545
    %2644 = vmatprep.subr.bf16.mxu0 %v2550
    %2645 = vmatpush1.bf16.msra.mxu0 %v2549
    %2646 = vmatprep.subr.bf16.mxu0 %v2554
    %2647 = vmatpush1.bf16.msra.mxu0 %v2553
    %2648 = vmatprep.subr.bf16.mxu0 %v2558
    %2649 = vmatpush1.bf16.msra.mxu0 %v2557
    %2650 = vmatprep.subr.bf16.mxu0 %v2562
    %2651 = vmatpush1.bf16.msra.mxu0 %v2561
    %2652 = vmatprep.subr.bf16.mxu0 0
    %2653 = vmatpush1.bf16.msra.mxu0 0
    %2654 = vmatprep.subr.bf16.mxu0 0
    %2655 = vmatpush1.bf16.msra.mxu0 0
    %2656 = vmatprep.subr.bf16.mxu0 0
    %2657 = vmatpush1.bf16.msra.mxu0 0
    %2658 = vmatprep.subr.bf16.mxu0 0
    %2659 = vmatpush1.bf16.msra.mxu0 0
    %2660 = vmatprep.subr.bf16.mxu0 0
    %2661 = vmatpush1.bf16.msra.mxu0 0
    %2662 = vmatprep.subr.bf16.mxu0 0
    %2663 = vmatpush1.bf16.msra.mxu0 0
    %2664 = vmatprep.subr.bf16.mxu0 0
    %2665 = vmatpush1.bf16.msra.mxu0 0
    %2666 = vmatprep.subr.bf16.mxu0 0
    %2667 = vmatpush1.bf16.msra.mxu0 0
    %2668 = vmatprep.mubr.bf16.mxu0 0
    %2669 = vmatmul.mubr.bf16.gmra.mrb[0].mxu0 %v2402
    %v2670 = vpop.f32.mrb[0].mxu0
    %v2671 = vadd.f32 0.0, %v2670
    %v2672 = vpop.f32.mrb[0].mxu0
    %v2673 = vadd.f32 0.0, %v2672
    %v2674 = vpop.f32.mrb[0].mxu0
    %v2675 = vpop.f32.mrb[0].mxu0
    %2676 = vdwg.mxu0
    %v2677 = vadd.f32 %v2398, %v2630
    %v2678 = vadd.f32 %v2399, %v2632
    %v2679 = vadd.f32 %v2400, %v2671
    %v2680 = vadd.f32 %v2401, %v2673
    %v2681 = vxor.u32 %v2677, 2147483648
    %v2682 = vxor.u32 %v2678, 2147483648
    %v2683 = vxor.u32 %v2679, 2147483648
    %v2684 = vmul.f32 %v2681, 1.442695
    %v2685 = vpow.pop %v2684
    %v2686 = vmul.f32 %v2682, 1.442695
    %v2687 = vpow.pop %v2686
    %v2688 = vmul.f32 %v2683, 1.442695
    %v2689 = vpow.pop %v2688
    %v2690 = vadd.f32 %v2685, 1.0
    %v2691 = vadd.f32 %v2687, 1.0
    %v2692 = vadd.f32 %v2689, 1.0
    %v2693 = vrcp.pop %v2690
    %v2694 = vmul.f32 1.0, %v2693
    %v2695 = vrcp.pop %v2691
    %v2696 = vmul.f32 1.0, %v2695
    %v2697 = vrcp.pop %v2692
    %v2698 = vmul.f32 1.0, %v2697
    %v2699 = vtanh.pop %v2680
    %v2700 = vmul.f32 %v2696, %v2392
    %v2701 = vmul.f32 %v2694, %v2699
    %v2702 = vadd.f32 %v2700, %v2701
    %v2703 = vtanh.pop %v2702
    %v2704 = vmul.f32 %v2698, %v2703
    %s2705 = scalar_lea.vmem [#allocation3], 48
    %2706 = vst [vmem:[%s2705] sm:$0xff] %v2704
    %s2707 = scalar_lea.vmem [#allocation2], 224
    %v2708 = vld [vmem:[%s2707] sm:$0xff]
    %v2709 = vld [vmem:[%s2707 + $0x8] sm:$0xff]
    %v2710 = vld [vmem:[%s2707 + $0x10] sm:$0xff]
    %v2711 = vld [vmem:[%s2707 + $0x18] sm:$0xff]
    %v2712 = vpack.c.bf16 %v2704, %v2704
    %v2713 = vld [vmem:[#allocation11] sm:$0xff]
    %v2714 = vld [vmem:[#allocation11 + $0x8] sm:$0xff]
    %v2715 = vld [vmem:[#allocation11 + $0x10] sm:$0xff]
    %v2716 = vld [vmem:[#allocation11 + $0x18] sm:$0xff]
    %v2717 = vld [vmem:[#allocation11 + $0x20] sm:$0xff]
    %v2718 = vld [vmem:[#allocation11 + $0x28] sm:$0xff]
    %v2719 = vld [vmem:[#allocation11 + $0x30] sm:$0xff]
    %v2720 = vld [vmem:[#allocation11 + $0x38] sm:$0xff]
    %v2721 = vld [vmem:[#allocation11 + $0x40] sm:$0xff]
    %v2722 = vld [vmem:[#allocation11 + $0x48] sm:$0xff]
    %v2723 = vld [vmem:[#allocation11 + $0x50] sm:$0xff]
    %v2724 = vld [vmem:[#allocation11 + $0x58] sm:$0xff]
    %v2725 = vld [vmem:[#allocation11 + $0x60] sm:$0xff]
    %v2726 = vld [vmem:[#allocation11 + $0x68] sm:$0xff]
    %v2727 = vld [vmem:[#allocation11 + $0x70] sm:$0xff]
    %v2728 = vld [vmem:[#allocation11 + $0x78] sm:$0xff]
    %v2729 = vld [vmem:[#allocation11 + $0x80] sm:$0xff]
    %v2730 = vld [vmem:[#allocation11 + $0x88] sm:$0xff]
    %v2731 = vld [vmem:[#allocation11 + $0x90] sm:$0xff]
    %v2732 = vld [vmem:[#allocation11 + $0x98] sm:$0xff]
    %v2733 = vld [vmem:[#allocation11 + $0xa0] sm:$0xff]
    %v2734 = vld [vmem:[#allocation11 + $0xa8] sm:$0xff]
    %v2735 = vld [vmem:[#allocation11 + $0xb0] sm:$0xff]
    %v2736 = vld [vmem:[#allocation11 + $0xb8] sm:$0xff]
    %v2737 = vld [vmem:[#allocation11 + $0xc0] sm:$0xff]
    %v2738 = vld [vmem:[#allocation11 + $0xc8] sm:$0xff]
    %v2739 = vld [vmem:[#allocation11 + $0xd0] sm:$0xff]
    %v2740 = vld [vmem:[#allocation11 + $0xd8] sm:$0xff]
    %v2741 = vld [vmem:[#allocation11 + $0xe0] sm:$0xff]
    %v2742 = vld [vmem:[#allocation11 + $0xe8] sm:$0xff]
    %v2743 = vld [vmem:[#allocation11 + $0xf0] sm:$0xff]
    %v2744 = vld [vmem:[#allocation11 + $0xf8] sm:$0xff]
    %v2777 = vunpack.c.l.b16 %v2713
    %v2778 = vunpack.c.h.b16 %v2713
    %v2779 = vunpack.c.l.b16 %v2714
    %v2780 = vunpack.c.h.b16 %v2714
    %v2781 = vunpack.c.l.b16 %v2715
    %v2782 = vunpack.c.h.b16 %v2715
    %v2783 = vunpack.c.l.b16 %v2716
    %v2784 = vunpack.c.h.b16 %v2716
    %v2785 = vunpack.c.l.b16 %v2717
    %v2786 = vunpack.c.h.b16 %v2717
    %v2787 = vunpack.c.l.b16 %v2718
    %v2788 = vunpack.c.h.b16 %v2718
    %v2789 = vunpack.c.l.b16 %v2719
    %v2790 = vunpack.c.h.b16 %v2719
    %v2791 = vunpack.c.l.b16 %v2720
    %v2792 = vunpack.c.h.b16 %v2720
    %v2793 = vunpack.c.l.b16 %v2721
    %v2794 = vunpack.c.h.b16 %v2721
    %v2795 = vunpack.c.l.b16 %v2722
    %v2796 = vunpack.c.h.b16 %v2722
    %v2797 = vunpack.c.l.b16 %v2723
    %v2798 = vunpack.c.h.b16 %v2723
    %v2799 = vunpack.c.l.b16 %v2724
    %v2800 = vunpack.c.h.b16 %v2724
    %v2801 = vunpack.c.l.b16 %v2725
    %v2802 = vunpack.c.h.b16 %v2725
    %v2803 = vunpack.c.l.b16 %v2726
    %v2804 = vunpack.c.h.b16 %v2726
    %v2805 = vunpack.c.l.b16 %v2727
    %v2806 = vunpack.c.h.b16 %v2727
    %v2807 = vunpack.c.l.b16 %v2728
    %v2808 = vunpack.c.h.b16 %v2728
    %v2809 = vunpack.c.l.b16 %v2729
    %v2810 = vunpack.c.h.b16 %v2729
    %v2811 = vunpack.c.l.b16 %v2730
    %v2812 = vunpack.c.h.b16 %v2730
    %v2813 = vunpack.c.l.b16 %v2731
    %v2814 = vunpack.c.h.b16 %v2731
    %v2815 = vunpack.c.l.b16 %v2732
    %v2816 = vunpack.c.h.b16 %v2732
    %v2817 = vunpack.c.l.b16 %v2733
    %v2818 = vunpack.c.h.b16 %v2733
    %v2819 = vunpack.c.l.b16 %v2734
    %v2820 = vunpack.c.h.b16 %v2734
    %v2821 = vunpack.c.l.b16 %v2735
    %v2822 = vunpack.c.h.b16 %v2735
    %v2823 = vunpack.c.l.b16 %v2736
    %v2824 = vunpack.c.h.b16 %v2736
    %v2825 = vunpack.c.l.b16 %v2737
    %v2826 = vunpack.c.h.b16 %v2737
    %v2827 = vunpack.c.l.b16 %v2738
    %v2828 = vunpack.c.h.b16 %v2738
    %v2829 = vunpack.c.l.b16 %v2739
    %v2830 = vunpack.c.h.b16 %v2739
    %v2831 = vunpack.c.l.b16 %v2740
    %v2832 = vunpack.c.h.b16 %v2740
    %v2833 = vunpack.c.l.b16 %v2741
    %v2834 = vunpack.c.h.b16 %v2741
    %v2835 = vunpack.c.l.b16 %v2742
    %v2836 = vunpack.c.h.b16 %v2742
    %v2837 = vunpack.c.l.b16 %v2743
    %v2838 = vunpack.c.h.b16 %v2743
    %v2839 = vunpack.c.l.b16 %v2744
    %v2840 = vunpack.c.h.b16 %v2744
    %v2841 = vpack.c.b16 %v2781, %v2777
    %v2842 = vpack.c.b16 %v2782, %v2778
    %v2843 = vpack.c.b16 %v2783, %v2779
    %v2844 = vpack.c.b16 %v2784, %v2780
    %v2845 = vpack.c.b16 %v2789, %v2785
    %v2846 = vpack.c.b16 %v2790, %v2786
    %v2847 = vpack.c.b16 %v2791, %v2787
    %v2848 = vpack.c.b16 %v2792, %v2788
    %v2849 = vpack.c.b16 %v2797, %v2793
    %v2850 = vpack.c.b16 %v2798, %v2794
    %v2851 = vpack.c.b16 %v2799, %v2795
    %v2852 = vpack.c.b16 %v2800, %v2796
    %v2853 = vpack.c.b16 %v2805, %v2801
    %v2854 = vpack.c.b16 %v2806, %v2802
    %v2855 = vpack.c.b16 %v2807, %v2803
    %v2856 = vpack.c.b16 %v2808, %v2804
    %v2857 = vpack.c.b16 %v2813, %v2809
    %v2858 = vpack.c.b16 %v2814, %v2810
    %v2859 = vpack.c.b16 %v2815, %v2811
    %v2860 = vpack.c.b16 %v2816, %v2812
    %v2861 = vpack.c.b16 %v2821, %v2817
    %v2862 = vpack.c.b16 %v2822, %v2818
    %v2863 = vpack.c.b16 %v2823, %v2819
    %v2864 = vpack.c.b16 %v2824, %v2820
    %v2865 = vpack.c.b16 %v2829, %v2825
    %v2866 = vpack.c.b16 %v2830, %v2826
    %v2867 = vpack.c.b16 %v2831, %v2827
    %v2868 = vpack.c.b16 %v2832, %v2828
    %v2869 = vpack.c.b16 %v2837, %v2833
    %v2870 = vpack.c.b16 %v2838, %v2834
    %v2871 = vpack.c.b16 %v2839, %v2835
    %v2872 = vpack.c.b16 %v2840, %v2836
    %2905 = vmatprep.subr.bf16.mxu0 %v2842
    %2906 = vmatpush1.bf16.msra.mxu0 %v2841
    %2907 = vmatprep.subr.bf16.mxu0 %v2846
    %2908 = vmatpush1.bf16.msra.mxu0 %v2845
    %2909 = vmatprep.subr.bf16.mxu0 %v2850
    %2910 = vmatpush1.bf16.msra.mxu0 %v2849
    %2911 = vmatprep.subr.bf16.mxu0 %v2854
    %2912 = vmatpush1.bf16.msra.mxu0 %v2853
    %2913 = vmatprep.subr.bf16.mxu0 %v2858
    %2914 = vmatpush1.bf16.msra.mxu0 %v2857
    %2915 = vmatprep.subr.bf16.mxu0 %v2862
    %2916 = vmatpush1.bf16.msra.mxu0 %v2861
    %2917 = vmatprep.subr.bf16.mxu0 %v2866
    %2918 = vmatpush1.bf16.msra.mxu0 %v2865
    %2919 = vmatprep.subr.bf16.mxu0 %v2870
    %2920 = vmatpush1.bf16.msra.mxu0 %v2869
    %2921 = vmatprep.subr.bf16.mxu0 0
    %2922 = vmatpush1.bf16.msra.mxu0 0
    %2923 = vmatprep.subr.bf16.mxu0 0
    %2924 = vmatpush1.bf16.msra.mxu0 0
    %2925 = vmatprep.subr.bf16.mxu0 0
    %2926 = vmatpush1.bf16.msra.mxu0 0
    %2927 = vmatprep.subr.bf16.mxu0 0
    %2928 = vmatpush1.bf16.msra.mxu0 0
    %2929 = vmatprep.subr.bf16.mxu0 0
    %2930 = vmatpush1.bf16.msra.mxu0 0
    %2931 = vmatprep.subr.bf16.mxu0 0
    %2932 = vmatpush1.bf16.msra.mxu0 0
    %2933 = vmatprep.subr.bf16.mxu0 0
    %2934 = vmatpush1.bf16.msra.mxu0 0
    %2935 = vmatprep.subr.bf16.mxu0 0
    %2936 = vmatpush1.bf16.msra.mxu0 0
    %2937 = vmatprep.mubr.bf16.mxu0 0
    %2938 = vmatmul.mubr.bf16.gmra.mrb[0].mxu0 %v2712
    %v2939 = vpop.f32.mrb[0].mxu0
    %v2940 = vadd.f32 0.0, %v2939
    %v2941 = vpop.f32.mrb[0].mxu0
    %v2942 = vadd.f32 0.0, %v2941
    %v2943 = vpop.f32.mrb[0].mxu0
    %v2944 = vpop.f32.mrb[0].mxu0
    %2945 = vdwg.mxu0
    %2946 = vmatprep.subr.bf16.mxu0 %v2844
    %2947 = vmatpush1.bf16.msra.mxu0 %v2843
    %2948 = vmatprep.subr.bf16.mxu0 %v2848
    %2949 = vmatpush1.bf16.msra.mxu0 %v2847
    %2950 = vmatprep.subr.bf16.mxu0 %v2852
    %2951 = vmatpush1.bf16.msra.mxu0 %v2851
    %2952 = vmatprep.subr.bf16.mxu0 %v2856
    %2953 = vmatpush1.bf16.msra.mxu0 %v2855
    %2954 = vmatprep.subr.bf16.mxu0 %v2860
    %2955 = vmatpush1.bf16.msra.mxu0 %v2859
    %2956 = vmatprep.subr.bf16.mxu0 %v2864
    %2957 = vmatpush1.bf16.msra.mxu0 %v2863
    %2958 = vmatprep.subr.bf16.mxu0 %v2868
    %2959 = vmatpush1.bf16.msra.mxu0 %v2867
    %2960 = vmatprep.subr.bf16.mxu0 %v2872
    %2961 = vmatpush1.bf16.msra.mxu0 %v2871
    %2962 = vmatprep.subr.bf16.mxu0 0
    %2963 = vmatpush1.bf16.msra.mxu0 0
    %2964 = vmatprep.subr.bf16.mxu0 0
    %2965 = vmatpush1.bf16.msra.mxu0 0
    %2966 = vmatprep.subr.bf16.mxu0 0
    %2967 = vmatpush1.bf16.msra.mxu0 0
    %2968 = vmatprep.subr.bf16.mxu0 0
    %2969 = vmatpush1.bf16.msra.mxu0 0
    %2970 = vmatprep.subr.bf16.mxu0 0
    %2971 = vmatpush1.bf16.msra.mxu0 0
    %2972 = vmatprep.subr.bf16.mxu0 0
    %2973 = vmatpush1.bf16.msra.mxu0 0
    %2974 = vmatprep.subr.bf16.mxu0 0
    %2975 = vmatpush1.bf16.msra.mxu0 0
    %2976 = vmatprep.subr.bf16.mxu0 0
    %2977 = vmatpush1.bf16.msra.mxu0 0
    %2978 = vmatprep.mubr.bf16.mxu0 0
    %2979 = vmatmul.mubr.bf16.gmra.mrb[0].mxu0 %v2712
    %v2980 = vpop.f32.mrb[0].mxu0
    %v2981 = vadd.f32 0.0, %v2980
    %v2982 = vpop.f32.mrb[0].mxu0
    %v2983 = vadd.f32 0.0, %v2982
    %v2984 = vpop.f32.mrb[0].mxu0
    %v2985 = vpop.f32.mrb[0].mxu0
    %2986 = vdwg.mxu0
    %v2987 = vadd.f32 %v2708, %v2940
    %v2988 = vadd.f32 %v2709, %v2942
    %v2989 = vadd.f32 %v2710, %v2981
    %v2990 = vadd.f32 %v2711, %v2983
    %v2991 = vxor.u32 %v2987, 2147483648
    %v2992 = vxor.u32 %v2988, 2147483648
    %v2993 = vxor.u32 %v2989, 2147483648
    %v2994 = vmul.f32 %v2991, 1.442695
    %v2995 = vpow.pop %v2994
    %v2996 = vmul.f32 %v2992, 1.442695
    %v2997 = vpow.pop %v2996
    %v2998 = vmul.f32 %v2993, 1.442695
    %v2999 = vpow.pop %v2998
    %v3000 = vadd.f32 %v2995, 1.0
    %v3001 = vadd.f32 %v2997, 1.0
    %v3002 = vadd.f32 %v2999, 1.0
    %v3003 = vrcp.pop %v3000
    %v3004 = vmul.f32 1.0, %v3003
    %v3005 = vrcp.pop %v3001
    %v3006 = vmul.f32 1.0, %v3005
    %v3007 = vrcp.pop %v3002
    %v3008 = vmul.f32 1.0, %v3007
    %v3009 = vtanh.pop %v2990
    %v3010 = vmul.f32 %v3006, %v2702
    %v3011 = vmul.f32 %v3004, %v3009
    %v3012 = vadd.f32 %v3010, %v3011
    %v3013 = vtanh.pop %v3012
    %v3014 = vmul.f32 %v3008, %v3013
    %s3015 = scalar_lea.vmem [#allocation3], 56
    %3016 = vst [vmem:[%s3015] sm:$0xff] %v3014
    %3017 = vst [vmem:[#allocation18] sm:$0xff] %v3014
    %3018 = vst [vmem:[#allocation20] sm:$0xff] %v3012
    %v3019 = vld [vmem:[#allocation3] sm:$0xff]
    %v3020 = vld [vmem:[#allocation3 + $0x8] sm:$0xff]
    %v3021 = vld [vmem:[#allocation3 + $0x10] sm:$0xff]
    %v3022 = vld [vmem:[#allocation3 + $0x18] sm:$0xff]
    %v3023 = vld [vmem:[#allocation3 + $0x20] sm:$0xff]
    %v3024 = vld [vmem:[#allocation3 + $0x28] sm:$0xff]
    %v3025 = vld [vmem:[#allocation3 + $0x30] sm:$0xff]
    %v3026 = vld [vmem:[#allocation3 + $0x38] sm:$0xff]
    %v3027 = vld [vmem:[#allocation10] sm:$0xff]
    %v3028 = vld [vmem:[#allocation10 + $0x8] sm:$0xff]
    %v3029 = vld [vmem:[#allocation10 + $0x10] sm:$0xff]
    %v3030 = vld [vmem:[#allocation10 + $0x18] sm:$0xff]
    %v3031 = vld [vmem:[#allocation10 + $0x20] sm:$0xff]
    %v3032 = vld [vmem:[#allocation10 + $0x28] sm:$0xff]
    %v3033 = vld [vmem:[#allocation10 + $0x30] sm:$0xff]
    %v3034 = vld [vmem:[#allocation10 + $0x38] sm:$0xff]
    %v3035 = vld [vmem:[#allocation10 + $0x40] sm:$0xff]
    %v3036 = vld [vmem:[#allocation10 + $0x48] sm:$0xff]
    %v3037 = vld [vmem:[#allocation10 + $0x50] sm:$0xff]
    %v3038 = vld [vmem:[#allocation10 + $0x58] sm:$0xff]
    %v3039 = vld [vmem:[#allocation10 + $0x60] sm:$0xff]
    %v3040 = vld [vmem:[#allocation10 + $0x68] sm:$0xff]
    %v3041 = vld [vmem:[#allocation10 + $0x70] sm:$0xff]
    %v3042 = vld [vmem:[#allocation10 + $0x78] sm:$0xff]
    %v3043 = vld [vmem:[#allocation10 + $0x80] sm:$0xff]
    %v3044 = vld [vmem:[#allocation10 + $0x88] sm:$0xff]
    %v3045 = vld [vmem:[#allocation10 + $0x90] sm:$0xff]
    %v3046 = vld [vmem:[#allocation10 + $0x98] sm:$0xff]
    %v3047 = vld [vmem:[#allocation10 + $0xa0] sm:$0xff]
    %v3048 = vld [vmem:[#allocation10 + $0xa8] sm:$0xff]
    %v3049 = vld [vmem:[#allocation10 + $0xb0] sm:$0xff]
    %v3050 = vld [vmem:[#allocation10 + $0xb8] sm:$0xff]
    %v3051 = vld [vmem:[#allocation10 + $0xc0] sm:$0xff]
    %v3052 = vld [vmem:[#allocation10 + $0xc8] sm:$0xff]
    %v3053 = vld [vmem:[#allocation10 + $0xd0] sm:$0xff]
    %v3054 = vld [vmem:[#allocation10 + $0xd8] sm:$0xff]
    %v3055 = vld [vmem:[#allocation10 + $0xe0] sm:$0xff]
    %v3056 = vld [vmem:[#allocation10 + $0xe8] sm:$0xff]
    %v3057 = vld [vmem:[#allocation10 + $0xf0] sm:$0xff]
    %v3058 = vld [vmem:[#allocation10 + $0xf8] sm:$0xff]
    %v3059 = vpack.c.bf16 %v3020, %v3019
    %v3060 = vpack.c.bf16 %v3022, %v3021
    %v3061 = vpack.c.bf16 %v3024, %v3023
    %v3062 = vpack.c.bf16 %v3026, %v3025
    %s3063 = scalar_lea.vmem [#allocation13], 4
    %v3064 = vld [vmem:[%s3063] sm:$0xf]
    %v3066 = vlaneseq
    %v3067 = vshrl.u32 %v3066, 7
    %v3068 = vsub.s32 0, %v3067
    %v3069 = vrot.slane %v3064, %v3068
    %v3070 = vlaneseq
    %v3071 = vshrl.u32 %v3070, 7
    %v3072 = vsub.s32 1, %v3071
    %v3073 = vrot.slane %v3064, %v3072
    %v3074 = vlaneseq
    %v3075 = vshrl.u32 %v3074, 7
    %v3076 = vsub.s32 2, %v3075
    %v3077 = vrot.slane %v3064, %v3076
    %v3078 = vlaneseq
    %v3079 = vshrl.u32 %v3078, 7
    %v3080 = vsub.s32 3, %v3079
    %v3081 = vrot.slane %v3064, %v3080
    %v3118 = vunpack.c.l.b16 %v3027
    %v3119 = vunpack.c.h.b16 %v3027
    %v3120 = vunpack.c.l.b16 %v3028
    %v3121 = vunpack.c.h.b16 %v3028
    %v3122 = vunpack.c.l.b16 %v3029
    %v3123 = vunpack.c.h.b16 %v3029
    %v3124 = vunpack.c.l.b16 %v3030
    %v3125 = vunpack.c.h.b16 %v3030
    %v3126 = vunpack.c.l.b16 %v3031
    %v3127 = vunpack.c.h.b16 %v3031
    %v3128 = vunpack.c.l.b16 %v3032
    %v3129 = vunpack.c.h.b16 %v3032
    %v3130 = vunpack.c.l.b16 %v3033
    %v3131 = vunpack.c.h.b16 %v3033
    %v3132 = vunpack.c.l.b16 %v3034
    %v3133 = vunpack.c.h.b16 %v3034
    %v3134 = vunpack.c.l.b16 %v3035
    %v3135 = vunpack.c.h.b16 %v3035
    %v3136 = vunpack.c.l.b16 %v3036
    %v3137 = vunpack.c.h.b16 %v3036
    %v3138 = vunpack.c.l.b16 %v3037
    %v3139 = vunpack.c.h.b16 %v3037
    %v3140 = vunpack.c.l.b16 %v3038
    %v3141 = vunpack.c.h.b16 %v3038
    %v3142 = vunpack.c.l.b16 %v3039
    %v3143 = vunpack.c.h.b16 %v3039
    %v3144 = vunpack.c.l.b16 %v3040
    %v3145 = vunpack.c.h.b16 %v3040
    %v3146 = vunpack.c.l.b16 %v3041
    %v3147 = vunpack.c.h.b16 %v3041
    %v3148 = vunpack.c.l.b16 %v3042
    %v3149 = vunpack.c.h.b16 %v3042
    %v3150 = vunpack.c.l.b16 %v3043
    %v3151 = vunpack.c.h.b16 %v3043
    %v3152 = vunpack.c.l.b16 %v3044
    %v3153 = vunpack.c.h.b16 %v3044
    %v3154 = vunpack.c.l.b16 %v3045
    %v3155 = vunpack.c.h.b16 %v3045
    %v3156 = vunpack.c.l.b16 %v3046
    %v3157 = vunpack.c.h.b16 %v3046
    %v3158 = vunpack.c.l.b16 %v3047
    %v3159 = vunpack.c.h.b16 %v3047
    %v3160 = vunpack.c.l.b16 %v3048
    %v3161 = vunpack.c.h.b16 %v3048
    %v3162 = vunpack.c.l.b16 %v3049
    %v3163 = vunpack.c.h.b16 %v3049
    %v3164 = vunpack.c.l.b16 %v3050
    %v3165 = vunpack.c.h.b16 %v3050
    %v3166 = vunpack.c.l.b16 %v3051
    %v3167 = vunpack.c.h.b16 %v3051
    %v3168 = vunpack.c.l.b16 %v3052
    %v3169 = vunpack.c.h.b16 %v3052
    %v3170 = vunpack.c.l.b16 %v3053
    %v3171 = vunpack.c.h.b16 %v3053
    %v3172 = vunpack.c.l.b16 %v3054
    %v3173 = vunpack.c.h.b16 %v3054
    %v3174 = vunpack.c.l.b16 %v3055
    %v3175 = vunpack.c.h.b16 %v3055
    %v3176 = vunpack.c.l.b16 %v3056
    %v3177 = vunpack.c.h.b16 %v3056
    %v3178 = vunpack.c.l.b16 %v3057
    %v3179 = vunpack.c.h.b16 %v3057
    %v3180 = vunpack.c.l.b16 %v3058
    %v3181 = vunpack.c.h.b16 %v3058
    %v3182 = vpack.c.b16 %v3122, %v3118
    %v3183 = vpack.c.b16 %v3123, %v3119
    %v3184 = vpack.c.b16 %v3124, %v3120
    %v3185 = vpack.c.b16 %v3125, %v3121
    %v3186 = vpack.c.b16 %v3130, %v3126
    %v3187 = vpack.c.b16 %v3131, %v3127
    %v3188 = vpack.c.b16 %v3132, %v3128
    %v3189 = vpack.c.b16 %v3133, %v3129
    %v3190 = vpack.c.b16 %v3138, %v3134
    %v3191 = vpack.c.b16 %v3139, %v3135
    %v3192 = vpack.c.b16 %v3140, %v3136
    %v3193 = vpack.c.b16 %v3141, %v3137
    %v3194 = vpack.c.b16 %v3146, %v3142
    %v3195 = vpack.c.b16 %v3147, %v3143
    %v3196 = vpack.c.b16 %v3148, %v3144
    %v3197 = vpack.c.b16 %v3149, %v3145
    %v3198 = vpack.c.b16 %v3154, %v3150
    %v3199 = vpack.c.b16 %v3155, %v3151
    %v3200 = vpack.c.b16 %v3156, %v3152
    %v3201 = vpack.c.b16 %v3157, %v3153
    %v3202 = vpack.c.b16 %v3162, %v3158
    %v3203 = vpack.c.b16 %v3163, %v3159
    %v3204 = vpack.c.b16 %v3164, %v3160
    %v3205 = vpack.c.b16 %v3165, %v3161
    %v3206 = vpack.c.b16 %v3170, %v3166
    %v3207 = vpack.c.b16 %v3171, %v3167
    %v3208 = vpack.c.b16 %v3172, %v3168
    %v3209 = vpack.c.b16 %v3173, %v3169
    %v3210 = vpack.c.b16 %v3178, %v3174
    %v3211 = vpack.c.b16 %v3179, %v3175
    %v3212 = vpack.c.b16 %v3180, %v3176
    %v3213 = vpack.c.b16 %v3181, %v3177
    %3246 = vmatprep.subr.bf16.mxu0 %v3183
    %3247 = vmatpush1.bf16.msra.mxu0 %v3182
    %3248 = vmatprep.subr.bf16.mxu0 %v3187
    %3249 = vmatpush1.bf16.msra.mxu0 %v3186
    %3250 = vmatprep.subr.bf16.mxu0 %v3191
    %3251 = vmatpush1.bf16.msra.mxu0 %v3190
    %3252 = vmatprep.subr.bf16.mxu0 %v3195
    %3253 = vmatpush1.bf16.msra.mxu0 %v3194
    %3254 = vmatprep.subr.bf16.mxu0 %v3199
    %3255 = vmatpush1.bf16.msra.mxu0 %v3198
    %3256 = vmatprep.subr.bf16.mxu0 %v3203
    %3257 = vmatpush1.bf16.msra.mxu0 %v3202
    %3258 = vmatprep.subr.bf16.mxu0 %v3207
    %3259 = vmatpush1.bf16.msra.mxu0 %v3206
    %3260 = vmatprep.subr.bf16.mxu0 %v3211
    %3261 = vmatpush1.bf16.msra.mxu0 %v3210
    %3262 = vmatprep.subr.bf16.mxu0 0
    %3263 = vmatpush1.bf16.msra.mxu0 0
    %3264 = vmatprep.subr.bf16.mxu0 0
    %3265 = vmatpush1.bf16.msra.mxu0 0
    %3266 = vmatprep.subr.bf16.mxu0 0
    %3267 = vmatpush1.bf16.msra.mxu0 0
    %3268 = vmatprep.subr.bf16.mxu0 0
    %3269 = vmatpush1.bf16.msra.mxu0 0
    %3270 = vmatprep.subr.bf16.mxu0 0
    %3271 = vmatpush1.bf16.msra.mxu0 0
    %3272 = vmatprep.subr.bf16.mxu0 0
    %3273 = vmatpush1.bf16.msra.mxu0 0
    %3274 = vmatprep.subr.bf16.mxu0 0
    %3275 = vmatpush1.bf16.msra.mxu0 0
    %3276 = vmatprep.subr.bf16.mxu0 0
    %3277 = vmatpush1.bf16.msra.mxu0 0
    %3278 = vmatprep.mubr.bf16.mxu0 0
    %3279 = vmatmul.mubr.bf16.gmra.mrb[0].mxu0 %v3059
    %v3280 = vpop.f32.mrb[0].mxu0
    %v3281 = vadd.f32 %v3069, %v3280
    %v3282 = vpop.f32.mrb[0].mxu0
    %v3283 = vadd.f32 %v3073, %v3282
    %v3284 = vpop.f32.mrb[0].mxu0
    %v3285 = vadd.f32 %v3069, %v3284
    %v3286 = vpop.f32.mrb[0].mxu0
    %v3287 = vadd.f32 %v3073, %v3286
    %3288 = vmatprep.mubr.bf16.mxu0 0
    %3289 = vmatmul.mubr.bf16.gmra.mrb[0].mxu0 %v3060
    %v3290 = vpop.f32.mrb[0].mxu0
    %v3291 = vadd.f32 %v3069, %v3290
    %v3292 = vpop.f32.mrb[0].mxu0
    %v3293 = vadd.f32 %v3073, %v3292
    %v3294 = vpop.f32.mrb[0].mxu0
    %v3295 = vadd.f32 %v3069, %v3294
    %v3296 = vpop.f32.mrb[0].mxu0
    %v3297 = vadd.f32 %v3073, %v3296
    %3298 = vmatprep.mubr.bf16.mxu0 0
    %3299 = vmatmul.mubr.bf16.gmra.mrb[0].mxu0 %v3061
    %v3300 = vpop.f32.mrb[0].mxu0
    %v3301 = vadd.f32 %v3069, %v3300
    %v3302 = vpop.f32.mrb[0].mxu0
    %v3303 = vadd.f32 %v3073, %v3302
    %v3304 = vpop.f32.mrb[0].mxu0
    %v3305 = vadd.f32 %v3069, %v3304
    %v3306 = vpop.f32.mrb[0].mxu0
    %v3307 = vadd.f32 %v3073, %v3306
    %3308 = vmatprep.mubr.bf16.mxu0 0
    %3309 = vmatmul.mubr.bf16.gmra.mrb[0].mxu0 %v3062
    %v3310 = vpop.f32.mrb[0].mxu0
    %v3311 = vadd.f32 %v3069, %v3310
    %v3312 = vpop.f32.mrb[0].mxu0
    %v3313 = vadd.f32 %v3073, %v3312
    %v3314 = vpop.f32.mrb[0].mxu0
    %v3315 = vadd.f32 %v3069, %v3314
    %v3316 = vpop.f32.mrb[0].mxu0
    %v3317 = vadd.f32 %v3073, %v3316
    %3318 = vdwg.mxu0
    %3319 = vmatprep.subr.bf16.mxu0 %v3185
    %3320 = vmatpush1.bf16.msra.mxu0 %v3184
    %3321 = vmatprep.subr.bf16.mxu0 %v3189
    %3322 = vmatpush1.bf16.msra.mxu0 %v3188
    %3323 = vmatprep.subr.bf16.mxu0 %v3193
    %3324 = vmatpush1.bf16.msra.mxu0 %v3192
    %3325 = vmatprep.subr.bf16.mxu0 %v3197
    %3326 = vmatpush1.bf16.msra.mxu0 %v3196
    %3327 = vmatprep.subr.bf16.mxu0 %v3201
    %3328 = vmatpush1.bf16.msra.mxu0 %v3200
    %3329 = vmatprep.subr.bf16.mxu0 %v3205
    %3330 = vmatpush1.bf16.msra.mxu0 %v3204
    %3331 = vmatprep.subr.bf16.mxu0 %v3209
    %3332 = vmatpush1.bf16.msra.mxu0 %v3208
    %3333 = vmatprep.subr.bf16.mxu0 %v3213
    %3334 = vmatpush1.bf16.msra.mxu0 %v3212
    %3335 = vmatprep.subr.bf16.mxu0 0
    %3336 = vmatpush1.bf16.msra.mxu0 0
    %3337 = vmatprep.subr.bf16.mxu0 0
    %3338 = vmatpush1.bf16.msra.mxu0 0
    %3339 = vmatprep.subr.bf16.mxu0 0
    %3340 = vmatpush1.bf16.msra.mxu0 0
    %3341 = vmatprep.subr.bf16.mxu0 0
    %3342 = vmatpush1.bf16.msra.mxu0 0
    %3343 = vmatprep.subr.bf16.mxu0 0
    %3344 = vmatpush1.bf16.msra.mxu0 0
    %3345 = vmatprep.subr.bf16.mxu0 0
    %3346 = vmatpush1.bf16.msra.mxu0 0
    %3347 = vmatprep.subr.bf16.mxu0 0
    %3348 = vmatpush1.bf16.msra.mxu0 0
    %3349 = vmatprep.subr.bf16.mxu0 0
    %3350 = vmatpush1.bf16.msra.mxu0 0
    %3351 = vmatprep.mubr.bf16.mxu0 0
    %3352 = vmatmul.mubr.bf16.gmra.mrb[0].mxu0 %v3059
    %v3353 = vpop.f32.mrb[0].mxu0
    %v3354 = vadd.f32 %v3077, %v3353
    %v3355 = vpop.f32.mrb[0].mxu0
    %v3356 = vadd.f32 %v3081, %v3355
    %v3357 = vpop.f32.mrb[0].mxu0
    %v3358 = vadd.f32 %v3077, %v3357
    %v3359 = vpop.f32.mrb[0].mxu0
    %v3360 = vadd.f32 %v3081, %v3359
    %3361 = vmatprep.mubr.bf16.mxu0 0
    %3362 = vmatmul.mubr.bf16.gmra.mrb[0].mxu0 %v3060
    %v3363 = vpop.f32.mrb[0].mxu0
    %v3364 = vadd.f32 %v3077, %v3363
    %v3365 = vpop.f32.mrb[0].mxu0
    %v3366 = vadd.f32 %v3081, %v3365
    %v3367 = vpop.f32.mrb[0].mxu0
    %v3368 = vadd.f32 %v3077, %v3367
    %v3369 = vpop.f32.mrb[0].mxu0
    %v3370 = vadd.f32 %v3081, %v3369
    %3371 = vmatprep.mubr.bf16.mxu0 0
    %3372 = vmatmul.mubr.bf16.gmra.mrb[0].mxu0 %v3061
    %v3373 = vpop.f32.mrb[0].mxu0
    %v3374 = vadd.f32 %v3077, %v3373
    %v3375 = vpop.f32.mrb[0].mxu0
    %v3376 = vadd.f32 %v3081, %v3375
    %v3377 = vpop.f32.mrb[0].mxu0
    %v3378 = vadd.f32 %v3077, %v3377
    %v3379 = vpop.f32.mrb[0].mxu0
    %v3380 = vadd.f32 %v3081, %v3379
    %3381 = vmatprep.mubr.bf16.mxu0 0
    %3382 = vmatmul.mubr.bf16.gmra.mrb[0].mxu0 %v3062
    %v3383 = vpop.f32.mrb[0].mxu0
    %v3384 = vadd.f32 %v3077, %v3383
    %v3385 = vpop.f32.mrb[0].mxu0
    %v3386 = vadd.f32 %v3081, %v3385
    %v3387 = vpop.f32.mrb[0].mxu0
    %v3388 = vadd.f32 %v3077, %v3387
    %v3389 = vpop.f32.mrb[0].mxu0
    %v3390 = vadd.f32 %v3081, %v3389
    %3391 = vdwg.mxu0
    %3392 = vst [vmem:[#allocation2] sm:$0xff] %v3281
    %3393 = vst [vmem:[#allocation2 + $0x8] sm:$0xff] %v3283
    %3394 = vst [vmem:[#allocation2 + $0x10] sm:$0xff] %v3354
    %3395 = vst [vmem:[#allocation2 + $0x18] sm:$0xff] %v3356
    %3396 = vst [vmem:[#allocation2 + $0x20] sm:$0xff] %v3285
    %3397 = vst [vmem:[#allocation2 + $0x28] sm:$0xff] %v3287
    %3398 = vst [vmem:[#allocation2 + $0x30] sm:$0xff] %v3358
    %3399 = vst [vmem:[#allocation2 + $0x38] sm:$0xff] %v3360
    %3400 = vst [vmem:[#allocation2 + $0x40] sm:$0xff] %v3291
    %3401 = vst [vmem:[#allocation2 + $0x48] sm:$0xff] %v3293
    %3402 = vst [vmem:[#allocation2 + $0x50] sm:$0xff] %v3364
    %3403 = vst [vmem:[#allocation2 + $0x58] sm:$0xff] %v3366
    %3404 = vst [vmem:[#allocation2 + $0x60] sm:$0xff] %v3295
    %3405 = vst [vmem:[#allocation2 + $0x68] sm:$0xff] %v3297
    %3406 = vst [vmem:[#allocation2 + $0x70] sm:$0xff] %v3368
    %3407 = vst [vmem:[#allocation2 + $0x78] sm:$0xff] %v3370
    %3408 = vst [vmem:[#allocation2 + $0x80] sm:$0xff] %v3301
    %3409 = vst [vmem:[#allocation2 + $0x88] sm:$0xff] %v3303
    %3410 = vst [vmem:[#allocation2 + $0x90] sm:$0xff] %v3374
    %3411 = vst [vmem:[#allocation2 + $0x98] sm:$0xff] %v3376
    %3412 = vst [vmem:[#allocation2 + $0xa0] sm:$0xff] %v3305
    %3413 = vst [vmem:[#allocation2 + $0xa8] sm:$0xff] %v3307
    %3414 = vst [vmem:[#allocation2 + $0xb0] sm:$0xff] %v3378
    %3415 = vst [vmem:[#allocation2 + $0xb8] sm:$0xff] %v3380
    %3416 = vst [vmem:[#allocation2 + $0xc0] sm:$0xff] %v3311
    %3417 = vst [vmem:[#allocation2 + $0xc8] sm:$0xff] %v3313
    %3418 = vst [vmem:[#allocation2 + $0xd0] sm:$0xff] %v3384
    %3419 = vst [vmem:[#allocation2 + $0xd8] sm:$0xff] %v3386
    %3420 = vst [vmem:[#allocation2 + $0xe0] sm:$0xff] %v3315
    %3421 = vst [vmem:[#allocation2 + $0xe8] sm:$0xff] %v3317
    %3422 = vst [vmem:[#allocation2 + $0xf0] sm:$0xff] %v3388
    %3423 = vst [vmem:[#allocation2 + $0xf8] sm:$0xff] %v3390
    %s3424 = scalar_lea.vmem %s5, 8
    %v3425 = vld [vmem:[%s3424] sm:$0xff]
    %s3426 = scalar_lea.vmem [#allocation14], 8
    %v3427 = vld [vmem:[%s3426] sm:$0xff]
    %v3428 = vld [vmem:[#allocation2] sm:$0xff]
    %v3429 = vld [vmem:[#allocation2 + $0x8] sm:$0xff]
    %v3430 = vld [vmem:[#allocation2 + $0x10] sm:$0xff]
    %v3431 = vld [vmem:[#allocation2 + $0x18] sm:$0xff]
    %v3432 = vpack.c.bf16 %v3425, %v3425
    %s3433 = scalar_lea.vmem [#allocation11], 256
    %v3434 = vld [vmem:[%s3433] sm:$0xff]
    %v3435 = vld [vmem:[%s3433 + $0x8] sm:$0xff]
    %v3436 = vld [vmem:[%s3433 + $0x10] sm:$0xff]
    %v3437 = vld [vmem:[%s3433 + $0x18] sm:$0xff]
    %v3438 = vld [vmem:[%s3433 + $0x20] sm:$0xff]
    %v3439 = vld [vmem:[%s3433 + $0x28] sm:$0xff]
    %v3440 = vld [vmem:[%s3433 + $0x30] sm:$0xff]
    %v3441 = vld [vmem:[%s3433 + $0x38] sm:$0xff]
    %v3442 = vld [vmem:[%s3433 + $0x40] sm:$0xff]
    %v3443 = vld [vmem:[%s3433 + $0x48] sm:$0xff]
    %v3444 = vld [vmem:[%s3433 + $0x50] sm:$0xff]
    %v3445 = vld [vmem:[%s3433 + $0x58] sm:$0xff]
    %v3446 = vld [vmem:[%s3433 + $0x60] sm:$0xff]
    %v3447 = vld [vmem:[%s3433 + $0x68] sm:$0xff]
    %v3448 = vld [vmem:[%s3433 + $0x70] sm:$0xff]
    %v3449 = vld [vmem:[%s3433 + $0x78] sm:$0xff]
    %v3450 = vld [vmem:[%s3433 + $0x80] sm:$0xff]
    %v3451 = vld [vmem:[%s3433 + $0x88] sm:$0xff]
    %v3452 = vld [vmem:[%s3433 + $0x90] sm:$0xff]
    %v3453 = vld [vmem:[%s3433 + $0x98] sm:$0xff]
    %v3454 = vld [vmem:[%s3433 + $0xa0] sm:$0xff]
    %v3455 = vld [vmem:[%s3433 + $0xa8] sm:$0xff]
    %v3456 = vld [vmem:[%s3433 + $0xb0] sm:$0xff]
    %v3457 = vld [vmem:[%s3433 + $0xb8] sm:$0xff]
    %v3458 = vld [vmem:[%s3433 + $0xc0] sm:$0xff]
    %v3459 = vld [vmem:[%s3433 + $0xc8] sm:$0xff]
    %v3460 = vld [vmem:[%s3433 + $0xd0] sm:$0xff]
    %v3461 = vld [vmem:[%s3433 + $0xd8] sm:$0xff]
    %v3462 = vld [vmem:[%s3433 + $0xe0] sm:$0xff]
    %v3463 = vld [vmem:[%s3433 + $0xe8] sm:$0xff]
    %v3464 = vld [vmem:[%s3433 + $0xf0] sm:$0xff]
    %v3465 = vld [vmem:[%s3433 + $0xf8] sm:$0xff]
    %v3498 = vunpack.c.l.b16 %v3434
    %v3499 = vunpack.c.h.b16 %v3434
    %v3500 = vunpack.c.l.b16 %v3435
    %v3501 = vunpack.c.h.b16 %v3435
    %v3502 = vunpack.c.l.b16 %v3436
    %v3503 = vunpack.c.h.b16 %v3436
    %v3504 = vunpack.c.l.b16 %v3437
    %v3505 = vunpack.c.h.b16 %v3437
    %v3506 = vunpack.c.l.b16 %v3438
    %v3507 = vunpack.c.h.b16 %v3438
    %v3508 = vunpack.c.l.b16 %v3439
    %v3509 = vunpack.c.h.b16 %v3439
    %v3510 = vunpack.c.l.b16 %v3440
    %v3511 = vunpack.c.h.b16 %v3440
    %v3512 = vunpack.c.l.b16 %v3441
    %v3513 = vunpack.c.h.b16 %v3441
    %v3514 = vunpack.c.l.b16 %v3442
    %v3515 = vunpack.c.h.b16 %v3442
    %v3516 = vunpack.c.l.b16 %v3443
    %v3517 = vunpack.c.h.b16 %v3443
    %v3518 = vunpack.c.l.b16 %v3444
    %v3519 = vunpack.c.h.b16 %v3444
    %v3520 = vunpack.c.l.b16 %v3445
    %v3521 = vunpack.c.h.b16 %v3445
    %v3522 = vunpack.c.l.b16 %v3446
    %v3523 = vunpack.c.h.b16 %v3446
    %v3524 = vunpack.c.l.b16 %v3447
    %v3525 = vunpack.c.h.b16 %v3447
    %v3526 = vunpack.c.l.b16 %v3448
    %v3527 = vunpack.c.h.b16 %v3448
    %v3528 = vunpack.c.l.b16 %v3449
    %v3529 = vunpack.c.h.b16 %v3449
    %v3530 = vunpack.c.l.b16 %v3450
    %v3531 = vunpack.c.h.b16 %v3450
    %v3532 = vunpack.c.l.b16 %v3451
    %v3533 = vunpack.c.h.b16 %v3451
    %v3534 = vunpack.c.l.b16 %v3452
    %v3535 = vunpack.c.h.b16 %v3452
    %v3536 = vunpack.c.l.b16 %v3453
    %v3537 = vunpack.c.h.b16 %v3453
    %v3538 = vunpack.c.l.b16 %v3454
    %v3539 = vunpack.c.h.b16 %v3454
    %v3540 = vunpack.c.l.b16 %v3455
    %v3541 = vunpack.c.h.b16 %v3455
    %v3542 = vunpack.c.l.b16 %v3456
    %v3543 = vunpack.c.h.b16 %v3456
    %v3544 = vunpack.c.l.b16 %v3457
    %v3545 = vunpack.c.h.b16 %v3457
    %v3546 = vunpack.c.l.b16 %v3458
    %v3547 = vunpack.c.h.b16 %v3458
    %v3548 = vunpack.c.l.b16 %v3459
    %v3549 = vunpack.c.h.b16 %v3459
    %v3550 = vunpack.c.l.b16 %v3460
    %v3551 = vunpack.c.h.b16 %v3460
    %v3552 = vunpack.c.l.b16 %v3461
    %v3553 = vunpack.c.h.b16 %v3461
    %v3554 = vunpack.c.l.b16 %v3462
    %v3555 = vunpack.c.h.b16 %v3462
    %v3556 = vunpack.c.l.b16 %v3463
    %v3557 = vunpack.c.h.b16 %v3463
    %v3558 = vunpack.c.l.b16 %v3464
    %v3559 = vunpack.c.h.b16 %v3464
    %v3560 = vunpack.c.l.b16 %v3465
    %v3561 = vunpack.c.h.b16 %v3465
    %v3562 = vpack.c.b16 %v3502, %v3498
    %v3563 = vpack.c.b16 %v3503, %v3499
    %v3564 = vpack.c.b16 %v3504, %v3500
    %v3565 = vpack.c.b16 %v3505, %v3501
    %v3566 = vpack.c.b16 %v3510, %v3506
    %v3567 = vpack.c.b16 %v3511, %v3507
    %v3568 = vpack.c.b16 %v3512, %v3508
    %v3569 = vpack.c.b16 %v3513, %v3509
    %v3570 = vpack.c.b16 %v3518, %v3514
    %v3571 = vpack.c.b16 %v3519, %v3515
    %v3572 = vpack.c.b16 %v3520, %v3516
    %v3573 = vpack.c.b16 %v3521, %v3517
    %v3574 = vpack.c.b16 %v3526, %v3522
    %v3575 = vpack.c.b16 %v3527, %v3523
    %v3576 = vpack.c.b16 %v3528, %v3524
    %v3577 = vpack.c.b16 %v3529, %v3525
    %v3578 = vpack.c.b16 %v3534, %v3530
    %v3579 = vpack.c.b16 %v3535, %v3531
    %v3580 = vpack.c.b16 %v3536, %v3532
    %v3581 = vpack.c.b16 %v3537, %v3533
    %v3582 = vpack.c.b16 %v3542, %v3538
    %v3583 = vpack.c.b16 %v3543, %v3539
    %v3584 = vpack.c.b16 %v3544, %v3540
    %v3585 = vpack.c.b16 %v3545, %v3541
    %v3586 = vpack.c.b16 %v3550, %v3546
    %v3587 = vpack.c.b16 %v3551, %v3547
    %v3588 = vpack.c.b16 %v3552, %v3548
    %v3589 = vpack.c.b16 %v3553, %v3549
    %v3590 = vpack.c.b16 %v3558, %v3554
    %v3591 = vpack.c.b16 %v3559, %v3555
    %v3592 = vpack.c.b16 %v3560, %v3556
    %v3593 = vpack.c.b16 %v3561, %v3557
    %3626 = vmatprep.subr.bf16.mxu0 %v3563
    %3627 = vmatpush1.bf16.msra.mxu0 %v3562
    %3628 = vmatprep.subr.bf16.mxu0 %v3567
    %3629 = vmatpush1.bf16.msra.mxu0 %v3566
    %3630 = vmatprep.subr.bf16.mxu0 %v3571
    %3631 = vmatpush1.bf16.msra.mxu0 %v3570
    %3632 = vmatprep.subr.bf16.mxu0 %v3575
    %3633 = vmatpush1.bf16.msra.mxu0 %v3574
    %3634 = vmatprep.subr.bf16.mxu0 %v3579
    %3635 = vmatpush1.bf16.msra.mxu0 %v3578
    %3636 = vmatprep.subr.bf16.mxu0 %v3583
    %3637 = vmatpush1.bf16.msra.mxu0 %v3582
    %3638 = vmatprep.subr.bf16.mxu0 %v3587
    %3639 = vmatpush1.bf16.msra.mxu0 %v3586
    %3640 = vmatprep.subr.bf16.mxu0 %v3591
    %3641 = vmatpush1.bf16.msra.mxu0 %v3590
    %3642 = vmatprep.subr.bf16.mxu0 0
    %3643 = vmatpush1.bf16.msra.mxu0 0
    %3644 = vmatprep.subr.bf16.mxu0 0
    %3645 = vmatpush1.bf16.msra.mxu0 0
    %3646 = vmatprep.subr.bf16.mxu0 0
    %3647 = vmatpush1.bf16.msra.mxu0 0
    %3648 = vmatprep.subr.bf16.mxu0 0
    %3649 = vmatpush1.bf16.msra.mxu0 0
    %3650 = vmatprep.subr.bf16.mxu0 0
    %3651 = vmatpush1.bf16.msra.mxu0 0
    %3652 = vmatprep.subr.bf16.mxu0 0
    %3653 = vmatpush1.bf16.msra.mxu0 0
    %3654 = vmatprep.subr.bf16.mxu0 0
    %3655 = vmatpush1.bf16.msra.mxu0 0
    %3656 = vmatprep.subr.bf16.mxu0 0
    %3657 = vmatpush1.bf16.msra.mxu0 0
    %3658 = vmatprep.mubr.bf16.mxu0 0
    %3659 = vmatmul.mubr.bf16.gmra.mrb[0].mxu0 %v3432
    %v3660 = vpop.f32.mrb[0].mxu0
    %v3661 = vadd.f32 0.0, %v3660
    %v3662 = vpop.f32.mrb[0].mxu0
    %v3663 = vadd.f32 0.0, %v3662
    %v3664 = vpop.f32.mrb[0].mxu0
    %v3665 = vpop.f32.mrb[0].mxu0
    %3666 = vdwg.mxu0
    %3667 = vmatprep.subr.bf16.mxu0 %v3565
    %3668 = vmatpush1.bf16.msra.mxu0 %v3564
    %3669 = vmatprep.subr.bf16.mxu0 %v3569
    %3670 = vmatpush1.bf16.msra.mxu0 %v3568
    %3671 = vmatprep.subr.bf16.mxu0 %v3573
    %3672 = vmatpush1.bf16.msra.mxu0 %v3572
    %3673 = vmatprep.subr.bf16.mxu0 %v3577
    %3674 = vmatpush1.bf16.msra.mxu0 %v3576
    %3675 = vmatprep.subr.bf16.mxu0 %v3581
    %3676 = vmatpush1.bf16.msra.mxu0 %v3580
    %3677 = vmatprep.subr.bf16.mxu0 %v3585
    %3678 = vmatpush1.bf16.msra.mxu0 %v3584
    %3679 = vmatprep.subr.bf16.mxu0 %v3589
    %3680 = vmatpush1.bf16.msra.mxu0 %v3588
    %3681 = vmatprep.subr.bf16.mxu0 %v3593
    %3682 = vmatpush1.bf16.msra.mxu0 %v3592
    %3683 = vmatprep.subr.bf16.mxu0 0
    %3684 = vmatpush1.bf16.msra.mxu0 0
    %3685 = vmatprep.subr.bf16.mxu0 0
    %3686 = vmatpush1.bf16.msra.mxu0 0
    %3687 = vmatprep.subr.bf16.mxu0 0
    %3688 = vmatpush1.bf16.msra.mxu0 0
    %3689 = vmatprep.subr.bf16.mxu0 0
    %3690 = vmatpush1.bf16.msra.mxu0 0
    %3691 = vmatprep.subr.bf16.mxu0 0
    %3692 = vmatpush1.bf16.msra.mxu0 0
    %3693 = vmatprep.subr.bf16.mxu0 0
    %3694 = vmatpush1.bf16.msra.mxu0 0
    %3695 = vmatprep.subr.bf16.mxu0 0
    %3696 = vmatpush1.bf16.msra.mxu0 0
    %3697 = vmatprep.subr.bf16.mxu0 0
    %3698 = vmatpush1.bf16.msra.mxu0 0
    %3699 = vmatprep.mubr.bf16.mxu0 0
    %3700 = vmatmul.mubr.bf16.gmra.mrb[0].mxu0 %v3432
    %v3701 = vpop.f32.mrb[0].mxu0
    %v3702 = vadd.f32 0.0, %v3701
    %v3703 = vpop.f32.mrb[0].mxu0
    %v3704 = vadd.f32 0.0, %v3703
    %v3705 = vpop.f32.mrb[0].mxu0
    %v3706 = vpop.f32.mrb[0].mxu0
    %3707 = vdwg.mxu0
    %v3708 = vadd.f32 %v3428, %v3661
    %v3709 = vadd.f32 %v3429, %v3663
    %v3710 = vadd.f32 %v3430, %v3702
    %v3711 = vadd.f32 %v3431, %v3704
    %v3712 = vxor.u32 %v3708, 2147483648
    %v3713 = vxor.u32 %v3709, 2147483648
    %v3714 = vxor.u32 %v3710, 2147483648
    %v3715 = vmul.f32 %v3712, 1.442695
    %v3716 = vpow.pop %v3715
    %v3717 = vmul.f32 %v3713, 1.442695
    %v3718 = vpow.pop %v3717
    %v3719 = vmul.f32 %v3714, 1.442695
    %v3720 = vpow.pop %v3719
    %v3721 = vadd.f32 %v3716, 1.0
    %v3722 = vadd.f32 %v3718, 1.0
    %v3723 = vadd.f32 %v3720, 1.0
    %v3724 = vrcp.pop %v3721
    %v3725 = vmul.f32 1.0, %v3724
    %v3726 = vrcp.pop %v3722
    %v3727 = vmul.f32 1.0, %v3726
    %v3728 = vrcp.pop %v3723
    %v3729 = vmul.f32 1.0, %v3728
    %v3730 = vtanh.pop %v3711
    %v3731 = vmul.f32 %v3727, %v3427
    %v3732 = vmul.f32 %v3725, %v3730
    %v3733 = vadd.f32 %v3731, %v3732
    %v3734 = vtanh.pop %v3733
    %v3735 = vmul.f32 %v3729, %v3734
    %3736 = vst [vmem:[#allocation3] sm:$0xff] %v3735
    %v3737 = vld [vmem:[%s847] sm:$0xff]
    %v3738 = vld [vmem:[%s847 + $0x8] sm:$0xff]
    %v3739 = vld [vmem:[%s847 + $0x10] sm:$0xff]
    %v3740 = vld [vmem:[%s847 + $0x18] sm:$0xff]
    %v3741 = vpack.c.bf16 %v3735, %v3735
    %v3742 = vld [vmem:[%s3433] sm:$0xff]
    %v3743 = vld [vmem:[%s3433 + $0x8] sm:$0xff]
    %v3744 = vld [vmem:[%s3433 + $0x10] sm:$0xff]
    %v3745 = vld [vmem:[%s3433 + $0x18] sm:$0xff]
    %v3746 = vld [vmem:[%s3433 + $0x20] sm:$0xff]
    %v3747 = vld [vmem:[%s3433 + $0x28] sm:$0xff]
    %v3748 = vld [vmem:[%s3433 + $0x30] sm:$0xff]
    %v3749 = vld [vmem:[%s3433 + $0x38] sm:$0xff]
    %v3750 = vld [vmem:[%s3433 + $0x40] sm:$0xff]
    %v3751 = vld [vmem:[%s3433 + $0x48] sm:$0xff]
    %v3752 = vld [vmem:[%s3433 + $0x50] sm:$0xff]
    %v3753 = vld [vmem:[%s3433 + $0x58] sm:$0xff]
    %v3754 = vld [vmem:[%s3433 + $0x60] sm:$0xff]
    %v3755 = vld [vmem:[%s3433 + $0x68] sm:$0xff]
    %v3756 = vld [vmem:[%s3433 + $0x70] sm:$0xff]
    %v3757 = vld [vmem:[%s3433 + $0x78] sm:$0xff]
    %v3758 = vld [vmem:[%s3433 + $0x80] sm:$0xff]
    %v3759 = vld [vmem:[%s3433 + $0x88] sm:$0xff]
    %v3760 = vld [vmem:[%s3433 + $0x90] sm:$0xff]
    %v3761 = vld [vmem:[%s3433 + $0x98] sm:$0xff]
    %v3762 = vld [vmem:[%s3433 + $0xa0] sm:$0xff]
    %v3763 = vld [vmem:[%s3433 + $0xa8] sm:$0xff]
    %v3764 = vld [vmem:[%s3433 + $0xb0] sm:$0xff]
    %v3765 = vld [vmem:[%s3433 + $0xb8] sm:$0xff]
    %v3766 = vld [vmem:[%s3433 + $0xc0] sm:$0xff]
    %v3767 = vld [vmem:[%s3433 + $0xc8] sm:$0xff]
    %v3768 = vld [vmem:[%s3433 + $0xd0] sm:$0xff]
    %v3769 = vld [vmem:[%s3433 + $0xd8] sm:$0xff]
    %v3770 = vld [vmem:[%s3433 + $0xe0] sm:$0xff]
    %v3771 = vld [vmem:[%s3433 + $0xe8] sm:$0xff]
    %v3772 = vld [vmem:[%s3433 + $0xf0] sm:$0xff]
    %v3773 = vld [vmem:[%s3433 + $0xf8] sm:$0xff]
    %v3806 = vunpack.c.l.b16 %v3742
    %v3807 = vunpack.c.h.b16 %v3742
    %v3808 = vunpack.c.l.b16 %v3743
    %v3809 = vunpack.c.h.b16 %v3743
    %v3810 = vunpack.c.l.b16 %v3744
    %v3811 = vunpack.c.h.b16 %v3744
    %v3812 = vunpack.c.l.b16 %v3745
    %v3813 = vunpack.c.h.b16 %v3745
    %v3814 = vunpack.c.l.b16 %v3746
    %v3815 = vunpack.c.h.b16 %v3746
    %v3816 = vunpack.c.l.b16 %v3747
    %v3817 = vunpack.c.h.b16 %v3747
    %v3818 = vunpack.c.l.b16 %v3748
    %v3819 = vunpack.c.h.b16 %v3748
    %v3820 = vunpack.c.l.b16 %v3749
    %v3821 = vunpack.c.h.b16 %v3749
    %v3822 = vunpack.c.l.b16 %v3750
    %v3823 = vunpack.c.h.b16 %v3750
    %v3824 = vunpack.c.l.b16 %v3751
    %v3825 = vunpack.c.h.b16 %v3751
    %v3826 = vunpack.c.l.b16 %v3752
    %v3827 = vunpack.c.h.b16 %v3752
    %v3828 = vunpack.c.l.b16 %v3753
    %v3829 = vunpack.c.h.b16 %v3753
    %v3830 = vunpack.c.l.b16 %v3754
    %v3831 = vunpack.c.h.b16 %v3754
    %v3832 = vunpack.c.l.b16 %v3755
    %v3833 = vunpack.c.h.b16 %v3755
    %v3834 = vunpack.c.l.b16 %v3756
    %v3835 = vunpack.c.h.b16 %v3756
    %v3836 = vunpack.c.l.b16 %v3757
    %v3837 = vunpack.c.h.b16 %v3757
    %v3838 = vunpack.c.l.b16 %v3758
    %v3839 = vunpack.c.h.b16 %v3758
    %v3840 = vunpack.c.l.b16 %v3759
    %v3841 = vunpack.c.h.b16 %v3759
    %v3842 = vunpack.c.l.b16 %v3760
    %v3843 = vunpack.c.h.b16 %v3760
    %v3844 = vunpack.c.l.b16 %v3761
    %v3845 = vunpack.c.h.b16 %v3761
    %v3846 = vunpack.c.l.b16 %v3762
    %v3847 = vunpack.c.h.b16 %v3762
    %v3848 = vunpack.c.l.b16 %v3763
    %v3849 = vunpack.c.h.b16 %v3763
    %v3850 = vunpack.c.l.b16 %v3764
    %v3851 = vunpack.c.h.b16 %v3764
    %v3852 = vunpack.c.l.b16 %v3765
    %v3853 = vunpack.c.h.b16 %v3765
    %v3854 = vunpack.c.l.b16 %v3766
    %v3855 = vunpack.c.h.b16 %v3766
    %v3856 = vunpack.c.l.b16 %v3767
    %v3857 = vunpack.c.h.b16 %v3767
    %v3858 = vunpack.c.l.b16 %v3768
    %v3859 = vunpack.c.h.b16 %v3768
    %v3860 = vunpack.c.l.b16 %v3769
    %v3861 = vunpack.c.h.b16 %v3769
    %v3862 = vunpack.c.l.b16 %v3770
    %v3863 = vunpack.c.h.b16 %v3770
    %v3864 = vunpack.c.l.b16 %v3771
    %v3865 = vunpack.c.h.b16 %v3771
    %v3866 = vunpack.c.l.b16 %v3772
    %v3867 = vunpack.c.h.b16 %v3772
    %v3868 = vunpack.c.l.b16 %v3773
    %v3869 = vunpack.c.h.b16 %v3773
    %v3870 = vpack.c.b16 %v3810, %v3806
    %v3871 = vpack.c.b16 %v3811, %v3807
    %v3872 = vpack.c.b16 %v3812, %v3808
    %v3873 = vpack.c.b16 %v3813, %v3809
    %v3874 = vpack.c.b16 %v3818, %v3814
    %v3875 = vpack.c.b16 %v3819, %v3815
    %v3876 = vpack.c.b16 %v3820, %v3816
    %v3877 = vpack.c.b16 %v3821, %v3817
    %v3878 = vpack.c.b16 %v3826, %v3822
    %v3879 = vpack.c.b16 %v3827, %v3823
    %v3880 = vpack.c.b16 %v3828, %v3824
    %v3881 = vpack.c.b16 %v3829, %v3825
    %v3882 = vpack.c.b16 %v3834, %v3830
    %v3883 = vpack.c.b16 %v3835, %v3831
    %v3884 = vpack.c.b16 %v3836, %v3832
    %v3885 = vpack.c.b16 %v3837, %v3833
    %v3886 = vpack.c.b16 %v3842, %v3838
    %v3887 = vpack.c.b16 %v3843, %v3839
    %v3888 = vpack.c.b16 %v3844, %v3840
    %v3889 = vpack.c.b16 %v3845, %v3841
    %v3890 = vpack.c.b16 %v3850, %v3846
    %v3891 = vpack.c.b16 %v3851, %v3847
    %v3892 = vpack.c.b16 %v3852, %v3848
    %v3893 = vpack.c.b16 %v3853, %v3849
    %v3894 = vpack.c.b16 %v3858, %v3854
    %v3895 = vpack.c.b16 %v3859, %v3855
    %v3896 = vpack.c.b16 %v3860, %v3856
    %v3897 = vpack.c.b16 %v3861, %v3857
    %v3898 = vpack.c.b16 %v3866, %v3862
    %v3899 = vpack.c.b16 %v3867, %v3863
    %v3900 = vpack.c.b16 %v3868, %v3864
    %v3901 = vpack.c.b16 %v3869, %v3865
    %3934 = vmatprep.subr.bf16.mxu0 %v3871
    %3935 = vmatpush1.bf16.msra.mxu0 %v3870
    %3936 = vmatprep.subr.bf16.mxu0 %v3875
    %3937 = vmatpush1.bf16.msra.mxu0 %v3874
    %3938 = vmatprep.subr.bf16.mxu0 %v3879
    %3939 = vmatpush1.bf16.msra.mxu0 %v3878
    %3940 = vmatprep.subr.bf16.mxu0 %v3883
    %3941 = vmatpush1.bf16.msra.mxu0 %v3882
    %3942 = vmatprep.subr.bf16.mxu0 %v3887
    %3943 = vmatpush1.bf16.msra.mxu0 %v3886
    %3944 = vmatprep.subr.bf16.mxu0 %v3891
    %3945 = vmatpush1.bf16.msra.mxu0 %v3890
    %3946 = vmatprep.subr.bf16.mxu0 %v3895
    %3947 = vmatpush1.bf16.msra.mxu0 %v3894
    %3948 = vmatprep.subr.bf16.mxu0 %v3899
    %3949 = vmatpush1.bf16.msra.mxu0 %v3898
    %3950 = vmatprep.subr.bf16.mxu0 0
    %3951 = vmatpush1.bf16.msra.mxu0 0
    %3952 = vmatprep.subr.bf16.mxu0 0
    %3953 = vmatpush1.bf16.msra.mxu0 0
    %3954 = vmatprep.subr.bf16.mxu0 0
    %3955 = vmatpush1.bf16.msra.mxu0 0
    %3956 = vmatprep.subr.bf16.mxu0 0
    %3957 = vmatpush1.bf16.msra.mxu0 0
    %3958 = vmatprep.subr.bf16.mxu0 0
    %3959 = vmatpush1.bf16.msra.mxu0 0
    %3960 = vmatprep.subr.bf16.mxu0 0
    %3961 = vmatpush1.bf16.msra.mxu0 0
    %3962 = vmatprep.subr.bf16.mxu0 0
    %3963 = vmatpush1.bf16.msra.mxu0 0
    %3964 = vmatprep.subr.bf16.mxu0 0
    %3965 = vmatpush1.bf16.msra.mxu0 0
    %3966 = vmatprep.mubr.bf16.mxu0 0
    %3967 = vmatmul.mubr.bf16.gmra.mrb[0].mxu0 %v3741
    %v3968 = vpop.f32.mrb[0].mxu0
    %v3969 = vadd.f32 0.0, %v3968
    %v3970 = vpop.f32.mrb[0].mxu0
    %v3971 = vadd.f32 0.0, %v3970
    %v3972 = vpop.f32.mrb[0].mxu0
    %v3973 = vpop.f32.mrb[0].mxu0
    %3974 = vdwg.mxu0
    %3975 = vmatprep.subr.bf16.mxu0 %v3873
    %3976 = vmatpush1.bf16.msra.mxu0 %v3872
    %3977 = vmatprep.subr.bf16.mxu0 %v3877
    %3978 = vmatpush1.bf16.msra.mxu0 %v3876
    %3979 = vmatprep.subr.bf16.mxu0 %v3881
    %3980 = vmatpush1.bf16.msra.mxu0 %v3880
    %3981 = vmatprep.subr.bf16.mxu0 %v3885
    %3982 = vmatpush1.bf16.msra.mxu0 %v3884
    %3983 = vmatprep.subr.bf16.mxu0 %v3889
    %3984 = vmatpush1.bf16.msra.mxu0 %v3888
    %3985 = vmatprep.subr.bf16.mxu0 %v3893
    %3986 = vmatpush1.bf16.msra.mxu0 %v3892
    %3987 = vmatprep.subr.bf16.mxu0 %v3897
    %3988 = vmatpush1.bf16.msra.mxu0 %v3896
    %3989 = vmatprep.subr.bf16.mxu0 %v3901
    %3990 = vmatpush1.bf16.msra.mxu0 %v3900
    %3991 = vmatprep.subr.bf16.mxu0 0
    %3992 = vmatpush1.bf16.msra.mxu0 0
    %3993 = vmatprep.subr.bf16.mxu0 0
    %3994 = vmatpush1.bf16.msra.mxu0 0
    %3995 = vmatprep.subr.bf16.mxu0 0
    %3996 = vmatpush1.bf16.msra.mxu0 0
    %3997 = vmatprep.subr.bf16.mxu0 0
    %3998 = vmatpush1.bf16.msra.mxu0 0
    %3999 = vmatprep.subr.bf16.mxu0 0
    %4000 = vmatpush1.bf16.msra.mxu0 0
    %4001 = vmatprep.subr.bf16.mxu0 0
    %4002 = vmatpush1.bf16.msra.mxu0 0
    %4003 = vmatprep.subr.bf16.mxu0 0
    %4004 = vmatpush1.bf16.msra.mxu0 0
    %4005 = vmatprep.subr.bf16.mxu0 0
    %4006 = vmatpush1.bf16.msra.mxu0 0
    %4007 = vmatprep.mubr.bf16.mxu0 0
    %4008 = vmatmul.mubr.bf16.gmra.mrb[0].mxu0 %v3741
    %v4009 = vpop.f32.mrb[0].mxu0
    %v4010 = vadd.f32 0.0, %v4009
    %v4011 = vpop.f32.mrb[0].mxu0
    %v4012 = vadd.f32 0.0, %v4011
    %v4013 = vpop.f32.mrb[0].mxu0
    %v4014 = vpop.f32.mrb[0].mxu0
    %4015 = vdwg.mxu0
    %v4016 = vadd.f32 %v3737, %v3969
    %v4017 = vadd.f32 %v3738, %v3971
    %v4018 = vadd.f32 %v3739, %v4010
    %v4019 = vadd.f32 %v3740, %v4012
    %v4020 = vxor.u32 %v4016, 2147483648
    %v4021 = vxor.u32 %v4017, 2147483648
    %v4022 = vxor.u32 %v4018, 2147483648
    %v4023 = vmul.f32 %v4020, 1.442695
    %v4024 = vpow.pop %v4023
    %v4025 = vmul.f32 %v4021, 1.442695
    %v4026 = vpow.pop %v4025
    %v4027 = vmul.f32 %v4022, 1.442695
    %v4028 = vpow.pop %v4027
    %v4029 = vadd.f32 %v4024, 1.0
    %v4030 = vadd.f32 %v4026, 1.0
    %v4031 = vadd.f32 %v4028, 1.0
    %v4032 = vrcp.pop %v4029
    %v4033 = vmul.f32 1.0, %v4032
    %v4034 = vrcp.pop %v4030
    %v4035 = vmul.f32 1.0, %v4034
    %v4036 = vrcp.pop %v4031
    %v4037 = vmul.f32 1.0, %v4036
    %v4038 = vtanh.pop %v4019
    %v4039 = vmul.f32 %v4035, %v3733
    %v4040 = vmul.f32 %v4033, %v4038
    %v4041 = vadd.f32 %v4039, %v4040
    %v4042 = vtanh.pop %v4041
    %v4043 = vmul.f32 %v4037, %v4042
    %4044 = vst [vmem:[%s1155] sm:$0xff] %v4043
    %v4045 = vld [vmem:[%s1157] sm:$0xff]
    %v4046 = vld [vmem:[%s1157 + $0x8] sm:$0xff]
    %v4047 = vld [vmem:[%s1157 + $0x10] sm:$0xff]
    %v4048 = vld [vmem:[%s1157 + $0x18] sm:$0xff]
    %v4049 = vpack.c.bf16 %v4043, %v4043
    %v4050 = vld [vmem:[%s3433] sm:$0xff]
    %v4051 = vld [vmem:[%s3433 + $0x8] sm:$0xff]
    %v4052 = vld [vmem:[%s3433 + $0x10] sm:$0xff]
    %v4053 = vld [vmem:[%s3433 + $0x18] sm:$0xff]
    %v4054 = vld [vmem:[%s3433 + $0x20] sm:$0xff]
    %v4055 = vld [vmem:[%s3433 + $0x28] sm:$0xff]
    %v4056 = vld [vmem:[%s3433 + $0x30] sm:$0xff]
    %v4057 = vld [vmem:[%s3433 + $0x38] sm:$0xff]
    %v4058 = vld [vmem:[%s3433 + $0x40] sm:$0xff]
    %v4059 = vld [vmem:[%s3433 + $0x48] sm:$0xff]
    %v4060 = vld [vmem:[%s3433 + $0x50] sm:$0xff]
    %v4061 = vld [vmem:[%s3433 + $0x58] sm:$0xff]
    %v4062 = vld [vmem:[%s3433 + $0x60] sm:$0xff]
    %v4063 = vld [vmem:[%s3433 + $0x68] sm:$0xff]
    %v4064 = vld [vmem:[%s3433 + $0x70] sm:$0xff]
    %v4065 = vld [vmem:[%s3433 + $0x78] sm:$0xff]
    %v4066 = vld [vmem:[%s3433 + $0x80] sm:$0xff]
    %v4067 = vld [vmem:[%s3433 + $0x88] sm:$0xff]
    %v4068 = vld [vmem:[%s3433 + $0x90] sm:$0xff]
    %v4069 = vld [vmem:[%s3433 + $0x98] sm:$0xff]
    %v4070 = vld [vmem:[%s3433 + $0xa0] sm:$0xff]
    %v4071 = vld [vmem:[%s3433 + $0xa8] sm:$0xff]
    %v4072 = vld [vmem:[%s3433 + $0xb0] sm:$0xff]
    %v4073 = vld [vmem:[%s3433 + $0xb8] sm:$0xff]
    %v4074 = vld [vmem:[%s3433 + $0xc0] sm:$0xff]
    %v4075 = vld [vmem:[%s3433 + $0xc8] sm:$0xff]
    %v4076 = vld [vmem:[%s3433 + $0xd0] sm:$0xff]
    %v4077 = vld [vmem:[%s3433 + $0xd8] sm:$0xff]
    %v4078 = vld [vmem:[%s3433 + $0xe0] sm:$0xff]
    %v4079 = vld [vmem:[%s3433 + $0xe8] sm:$0xff]
    %v4080 = vld [vmem:[%s3433 + $0xf0] sm:$0xff]
    %v4081 = vld [vmem:[%s3433 + $0xf8] sm:$0xff]
    %v4114 = vunpack.c.l.b16 %v4050
    %v4115 = vunpack.c.h.b16 %v4050
    %v4116 = vunpack.c.l.b16 %v4051
    %v4117 = vunpack.c.h.b16 %v4051
    %v4118 = vunpack.c.l.b16 %v4052
    %v4119 = vunpack.c.h.b16 %v4052
    %v4120 = vunpack.c.l.b16 %v4053
    %v4121 = vunpack.c.h.b16 %v4053
    %v4122 = vunpack.c.l.b16 %v4054
    %v4123 = vunpack.c.h.b16 %v4054
    %v4124 = vunpack.c.l.b16 %v4055
    %v4125 = vunpack.c.h.b16 %v4055
    %v4126 = vunpack.c.l.b16 %v4056
    %v4127 = vunpack.c.h.b16 %v4056
    %v4128 = vunpack.c.l.b16 %v4057
    %v4129 = vunpack.c.h.b16 %v4057
    %v4130 = vunpack.c.l.b16 %v4058
    %v4131 = vunpack.c.h.b16 %v4058
    %v4132 = vunpack.c.l.b16 %v4059
    %v4133 = vunpack.c.h.b16 %v4059
    %v4134 = vunpack.c.l.b16 %v4060
    %v4135 = vunpack.c.h.b16 %v4060
    %v4136 = vunpack.c.l.b16 %v4061
    %v4137 = vunpack.c.h.b16 %v4061
    %v4138 = vunpack.c.l.b16 %v4062
    %v4139 = vunpack.c.h.b16 %v4062
    %v4140 = vunpack.c.l.b16 %v4063
    %v4141 = vunpack.c.h.b16 %v4063
    %v4142 = vunpack.c.l.b16 %v4064
    %v4143 = vunpack.c.h.b16 %v4064
    %v4144 = vunpack.c.l.b16 %v4065
    %v4145 = vunpack.c.h.b16 %v4065
    %v4146 = vunpack.c.l.b16 %v4066
    %v4147 = vunpack.c.h.b16 %v4066
    %v4148 = vunpack.c.l.b16 %v4067
    %v4149 = vunpack.c.h.b16 %v4067
    %v4150 = vunpack.c.l.b16 %v4068
    %v4151 = vunpack.c.h.b16 %v4068
    %v4152 = vunpack.c.l.b16 %v4069
    %v4153 = vunpack.c.h.b16 %v4069
    %v4154 = vunpack.c.l.b16 %v4070
    %v4155 = vunpack.c.h.b16 %v4070
    %v4156 = vunpack.c.l.b16 %v4071
    %v4157 = vunpack.c.h.b16 %v4071
    %v4158 = vunpack.c.l.b16 %v4072
    %v4159 = vunpack.c.h.b16 %v4072
    %v4160 = vunpack.c.l.b16 %v4073
    %v4161 = vunpack.c.h.b16 %v4073
    %v4162 = vunpack.c.l.b16 %v4074
    %v4163 = vunpack.c.h.b16 %v4074
    %v4164 = vunpack.c.l.b16 %v4075
    %v4165 = vunpack.c.h.b16 %v4075
    %v4166 = vunpack.c.l.b16 %v4076
    %v4167 = vunpack.c.h.b16 %v4076
    %v4168 = vunpack.c.l.b16 %v4077
    %v4169 = vunpack.c.h.b16 %v4077
    %v4170 = vunpack.c.l.b16 %v4078
    %v4171 = vunpack.c.h.b16 %v4078
    %v4172 = vunpack.c.l.b16 %v4079
    %v4173 = vunpack.c.h.b16 %v4079
    %v4174 = vunpack.c.l.b16 %v4080
    %v4175 = vunpack.c.h.b16 %v4080
    %v4176 = vunpack.c.l.b16 %v4081
    %v4177 = vunpack.c.h.b16 %v4081
    %v4178 = vpack.c.b16 %v4118, %v4114
    %v4179 = vpack.c.b16 %v4119, %v4115
    %v4180 = vpack.c.b16 %v4120, %v4116
    %v4181 = vpack.c.b16 %v4121, %v4117
    %v4182 = vpack.c.b16 %v4126, %v4122
    %v4183 = vpack.c.b16 %v4127, %v4123
    %v4184 = vpack.c.b16 %v4128, %v4124
    %v4185 = vpack.c.b16 %v4129, %v4125
    %v4186 = vpack.c.b16 %v4134, %v4130
    %v4187 = vpack.c.b16 %v4135, %v4131
    %v4188 = vpack.c.b16 %v4136, %v4132
    %v4189 = vpack.c.b16 %v4137, %v4133
    %v4190 = vpack.c.b16 %v4142, %v4138
    %v4191 = vpack.c.b16 %v4143, %v4139
    %v4192 = vpack.c.b16 %v4144, %v4140
    %v4193 = vpack.c.b16 %v4145, %v4141
    %v4194 = vpack.c.b16 %v4150, %v4146
    %v4195 = vpack.c.b16 %v4151, %v4147
    %v4196 = vpack.c.b16 %v4152, %v4148
    %v4197 = vpack.c.b16 %v4153, %v4149
    %v4198 = vpack.c.b16 %v4158, %v4154
    %v4199 = vpack.c.b16 %v4159, %v4155
    %v4200 = vpack.c.b16 %v4160, %v4156
    %v4201 = vpack.c.b16 %v4161, %v4157
    %v4202 = vpack.c.b16 %v4166, %v4162
    %v4203 = vpack.c.b16 %v4167, %v4163
    %v4204 = vpack.c.b16 %v4168, %v4164
    %v4205 = vpack.c.b16 %v4169, %v4165
    %v4206 = vpack.c.b16 %v4174, %v4170
    %v4207 = vpack.c.b16 %v4175, %v4171
    %v4208 = vpack.c.b16 %v4176, %v4172
    %v4209 = vpack.c.b16 %v4177, %v4173
    %4242 = vmatprep.subr.bf16.mxu0 %v4179
    %4243 = vmatpush1.bf16.msra.mxu0 %v4178
    %4244 = vmatprep.subr.bf16.mxu0 %v4183
    %4245 = vmatpush1.bf16.msra.mxu0 %v4182
    %4246 = vmatprep.subr.bf16.mxu0 %v4187
    %4247 = vmatpush1.bf16.msra.mxu0 %v4186
    %4248 = vmatprep.subr.bf16.mxu0 %v4191
    %4249 = vmatpush1.bf16.msra.mxu0 %v4190
    %4250 = vmatprep.subr.bf16.mxu0 %v4195
    %4251 = vmatpush1.bf16.msra.mxu0 %v4194
    %4252 = vmatprep.subr.bf16.mxu0 %v4199
    %4253 = vmatpush1.bf16.msra.mxu0 %v4198
    %4254 = vmatprep.subr.bf16.mxu0 %v4203
    %4255 = vmatpush1.bf16.msra.mxu0 %v4202
    %4256 = vmatprep.subr.bf16.mxu0 %v4207
    %4257 = vmatpush1.bf16.msra.mxu0 %v4206
    %4258 = vmatprep.subr.bf16.mxu0 0
    %4259 = vmatpush1.bf16.msra.mxu0 0
    %4260 = vmatprep.subr.bf16.mxu0 0
    %4261 = vmatpush1.bf16.msra.mxu0 0
    %4262 = vmatprep.subr.bf16.mxu0 0
    %4263 = vmatpush1.bf16.msra.mxu0 0
    %4264 = vmatprep.subr.bf16.mxu0 0
    %4265 = vmatpush1.bf16.msra.mxu0 0
    %4266 = vmatprep.subr.bf16.mxu0 0
    %4267 = vmatpush1.bf16.msra.mxu0 0
    %4268 = vmatprep.subr.bf16.mxu0 0
    %4269 = vmatpush1.bf16.msra.mxu0 0
    %4270 = vmatprep.subr.bf16.mxu0 0
    %4271 = vmatpush1.bf16.msra.mxu0 0
    %4272 = vmatprep.subr.bf16.mxu0 0
    %4273 = vmatpush1.bf16.msra.mxu0 0
    %4274 = vmatprep.mubr.bf16.mxu0 0
    %4275 = vmatmul.mubr.bf16.gmra.mrb[0].mxu0 %v4049
    %v4276 = vpop.f32.mrb[0].mxu0
    %v4277 = vadd.f32 0.0, %v4276
    %v4278 = vpop.f32.mrb[0].mxu0
    %v4279 = vadd.f32 0.0, %v4278
    %v4280 = vpop.f32.mrb[0].mxu0
    %v4281 = vpop.f32.mrb[0].mxu0
    %4282 = vdwg.mxu0
    %4283 = vmatprep.subr.bf16.mxu0 %v4181
    %4284 = vmatpush1.bf16.msra.mxu0 %v4180
    %4285 = vmatprep.subr.bf16.mxu0 %v4185
    %4286 = vmatpush1.bf16.msra.mxu0 %v4184
    %4287 = vmatprep.subr.bf16.mxu0 %v4189
    %4288 = vmatpush1.bf16.msra.mxu0 %v4188
    %4289 = vmatprep.subr.bf16.mxu0 %v4193
    %4290 = vmatpush1.bf16.msra.mxu0 %v4192
    %4291 = vmatprep.subr.bf16.mxu0 %v4197
    %4292 = vmatpush1.bf16.msra.mxu0 %v4196
    %4293 = vmatprep.subr.bf16.mxu0 %v4201
    %4294 = vmatpush1.bf16.msra.mxu0 %v4200
    %4295 = vmatprep.subr.bf16.mxu0 %v4205
    %4296 = vmatpush1.bf16.msra.mxu0 %v4204
    %4297 = vmatprep.subr.bf16.mxu0 %v4209
    %4298 = vmatpush1.bf16.msra.mxu0 %v4208
    %4299 = vmatprep.subr.bf16.mxu0 0
    %4300 = vmatpush1.bf16.msra.mxu0 0
    %4301 = vmatprep.subr.bf16.mxu0 0
    %4302 = vmatpush1.bf16.msra.mxu0 0
    %4303 = vmatprep.subr.bf16.mxu0 0
    %4304 = vmatpush1.bf16.msra.mxu0 0
    %4305 = vmatprep.subr.bf16.mxu0 0
    %4306 = vmatpush1.bf16.msra.mxu0 0
    %4307 = vmatprep.subr.bf16.mxu0 0
    %4308 = vmatpush1.bf16.msra.mxu0 0
    %4309 = vmatprep.subr.bf16.mxu0 0
    %4310 = vmatpush1.bf16.msra.mxu0 0
    %4311 = vmatprep.subr.bf16.mxu0 0
    %4312 = vmatpush1.bf16.msra.mxu0 0
    %4313 = vmatprep.subr.bf16.mxu0 0
    %4314 = vmatpush1.bf16.msra.mxu0 0
    %4315 = vmatprep.mubr.bf16.mxu0 0
    %4316 = vmatmul.mubr.bf16.gmra.mrb[0].mxu0 %v4049
    %v4317 = vpop.f32.mrb[0].mxu0
    %v4318 = vadd.f32 0.0, %v4317
    %v4319 = vpop.f32.mrb[0].mxu0
    %v4320 = vadd.f32 0.0, %v4319
    %v4321 = vpop.f32.mrb[0].mxu0
    %v4322 = vpop.f32.mrb[0].mxu0
    %4323 = vdwg.mxu0
    %v4324 = vadd.f32 %v4045, %v4277
    %v4325 = vadd.f32 %v4046, %v4279
    %v4326 = vadd.f32 %v4047, %v4318
    %v4327 = vadd.f32 %v4048, %v4320
    %v4328 = vxor.u32 %v4324, 2147483648
    %v4329 = vxor.u32 %v4325, 2147483648
    %v4330 = vxor.u32 %v4326, 2147483648
    %v4331 = vmul.f32 %v4328, 1.442695
    %v4332 = vpow.pop %v4331
    %v4333 = vmul.f32 %v4329, 1.442695
    %v4334 = vpow.pop %v4333
    %v4335 = vmul.f32 %v4330, 1.442695
    %v4336 = vpow.pop %v4335
    %v4337 = vadd.f32 %v4332, 1.0
    %v4338 = vadd.f32 %v4334, 1.0
    %v4339 = vadd.f32 %v4336, 1.0
    %v4340 = vrcp.pop %v4337
    %v4341 = vmul.f32 1.0, %v4340
    %v4342 = vrcp.pop %v4338
    %v4343 = vmul.f32 1.0, %v4342
    %v4344 = vrcp.pop %v4339
    %v4345 = vmul.f32 1.0, %v4344
    %v4346 = vtanh.pop %v4327
    %v4347 = vmul.f32 %v4343, %v4041
    %v4348 = vmul.f32 %v4341, %v4346
    %v4349 = vadd.f32 %v4347, %v4348
    %v4350 = vtanh.pop %v4349
    %v4351 = vmul.f32 %v4345, %v4350
    %4352 = vst [vmem:[%s1465] sm:$0xff] %v4351
    %v4353 = vld [vmem:[%s1467] sm:$0xff]
    %v4354 = vld [vmem:[%s1467 + $0x8] sm:$0xff]
    %v4355 = vld [vmem:[%s1467 + $0x10] sm:$0xff]
    %v4356 = vld [vmem:[%s1467 + $0x18] sm:$0xff]
    %v4357 = vpack.c.bf16 %v4351, %v4351
    %v4358 = vld [vmem:[%s3433] sm:$0xff]
    %v4359 = vld [vmem:[%s3433 + $0x8] sm:$0xff]
    %v4360 = vld [vmem:[%s3433 + $0x10] sm:$0xff]
    %v4361 = vld [vmem:[%s3433 + $0x18] sm:$0xff]
    %v4362 = vld [vmem:[%s3433 + $0x20] sm:$0xff]
    %v4363 = vld [vmem:[%s3433 + $0x28] sm:$0xff]
    %v4364 = vld [vmem:[%s3433 + $0x30] sm:$0xff]
    %v4365 = vld [vmem:[%s3433 + $0x38] sm:$0xff]
    %v4366 = vld [vmem:[%s3433 + $0x40] sm:$0xff]
    %v4367 = vld [vmem:[%s3433 + $0x48] sm:$0xff]
    %v4368 = vld [vmem:[%s3433 + $0x50] sm:$0xff]
    %v4369 = vld [vmem:[%s3433 + $0x58] sm:$0xff]
    %v4370 = vld [vmem:[%s3433 + $0x60] sm:$0xff]
    %v4371 = vld [vmem:[%s3433 + $0x68] sm:$0xff]
    %v4372 = vld [vmem:[%s3433 + $0x70] sm:$0xff]
    %v4373 = vld [vmem:[%s3433 + $0x78] sm:$0xff]
    %v4374 = vld [vmem:[%s3433 + $0x80] sm:$0xff]
    %v4375 = vld [vmem:[%s3433 + $0x88] sm:$0xff]
    %v4376 = vld [vmem:[%s3433 + $0x90] sm:$0xff]
    %v4377 = vld [vmem:[%s3433 + $0x98] sm:$0xff]
    %v4378 = vld [vmem:[%s3433 + $0xa0] sm:$0xff]
    %v4379 = vld [vmem:[%s3433 + $0xa8] sm:$0xff]
    %v4380 = vld [vmem:[%s3433 + $0xb0] sm:$0xff]
    %v4381 = vld [vmem:[%s3433 + $0xb8] sm:$0xff]
    %v4382 = vld [vmem:[%s3433 + $0xc0] sm:$0xff]
    %v4383 = vld [vmem:[%s3433 + $0xc8] sm:$0xff]
    %v4384 = vld [vmem:[%s3433 + $0xd0] sm:$0xff]
    %v4385 = vld [vmem:[%s3433 + $0xd8] sm:$0xff]
    %v4386 = vld [vmem:[%s3433 + $0xe0] sm:$0xff]
    %v4387 = vld [vmem:[%s3433 + $0xe8] sm:$0xff]
    %v4388 = vld [vmem:[%s3433 + $0xf0] sm:$0xff]
    %v4389 = vld [vmem:[%s3433 + $0xf8] sm:$0xff]
    %v4422 = vunpack.c.l.b16 %v4358
    %v4423 = vunpack.c.h.b16 %v4358
    %v4424 = vunpack.c.l.b16 %v4359
    %v4425 = vunpack.c.h.b16 %v4359
    %v4426 = vunpack.c.l.b16 %v4360
    %v4427 = vunpack.c.h.b16 %v4360
    %v4428 = vunpack.c.l.b16 %v4361
    %v4429 = vunpack.c.h.b16 %v4361
    %v4430 = vunpack.c.l.b16 %v4362
    %v4431 = vunpack.c.h.b16 %v4362
    %v4432 = vunpack.c.l.b16 %v4363
    %v4433 = vunpack.c.h.b16 %v4363
    %v4434 = vunpack.c.l.b16 %v4364
    %v4435 = vunpack.c.h.b16 %v4364
    %v4436 = vunpack.c.l.b16 %v4365
    %v4437 = vunpack.c.h.b16 %v4365
    %v4438 = vunpack.c.l.b16 %v4366
    %v4439 = vunpack.c.h.b16 %v4366
    %v4440 = vunpack.c.l.b16 %v4367
    %v4441 = vunpack.c.h.b16 %v4367
    %v4442 = vunpack.c.l.b16 %v4368
    %v4443 = vunpack.c.h.b16 %v4368
    %v4444 = vunpack.c.l.b16 %v4369
    %v4445 = vunpack.c.h.b16 %v4369
    %v4446 = vunpack.c.l.b16 %v4370
    %v4447 = vunpack.c.h.b16 %v4370
    %v4448 = vunpack.c.l.b16 %v4371
    %v4449 = vunpack.c.h.b16 %v4371
    %v4450 = vunpack.c.l.b16 %v4372
    %v4451 = vunpack.c.h.b16 %v4372
    %v4452 = vunpack.c.l.b16 %v4373
    %v4453 = vunpack.c.h.b16 %v4373
    %v4454 = vunpack.c.l.b16 %v4374
    %v4455 = vunpack.c.h.b16 %v4374
    %v4456 = vunpack.c.l.b16 %v4375
    %v4457 = vunpack.c.h.b16 %v4375
    %v4458 = vunpack.c.l.b16 %v4376
    %v4459 = vunpack.c.h.b16 %v4376
    %v4460 = vunpack.c.l.b16 %v4377
    %v4461 = vunpack.c.h.b16 %v4377
    %v4462 = vunpack.c.l.b16 %v4378
    %v4463 = vunpack.c.h.b16 %v4378
    %v4464 = vunpack.c.l.b16 %v4379
    %v4465 = vunpack.c.h.b16 %v4379
    %v4466 = vunpack.c.l.b16 %v4380
    %v4467 = vunpack.c.h.b16 %v4380
    %v4468 = vunpack.c.l.b16 %v4381
    %v4469 = vunpack.c.h.b16 %v4381
    %v4470 = vunpack.c.l.b16 %v4382
    %v4471 = vunpack.c.h.b16 %v4382
    %v4472 = vunpack.c.l.b16 %v4383
    %v4473 = vunpack.c.h.b16 %v4383
    %v4474 = vunpack.c.l.b16 %v4384
    %v4475 = vunpack.c.h.b16 %v4384
    %v4476 = vunpack.c.l.b16 %v4385
    %v4477 = vunpack.c.h.b16 %v4385
    %v4478 = vunpack.c.l.b16 %v4386
    %v4479 = vunpack.c.h.b16 %v4386
    %v4480 = vunpack.c.l.b16 %v4387
    %v4481 = vunpack.c.h.b16 %v4387
    %v4482 = vunpack.c.l.b16 %v4388
    %v4483 = vunpack.c.h.b16 %v4388
    %v4484 = vunpack.c.l.b16 %v4389
    %v4485 = vunpack.c.h.b16 %v4389
    %v4486 = vpack.c.b16 %v4426, %v4422
    %v4487 = vpack.c.b16 %v4427, %v4423
    %v4488 = vpack.c.b16 %v4428, %v4424
    %v4489 = vpack.c.b16 %v4429, %v4425
    %v4490 = vpack.c.b16 %v4434, %v4430
    %v4491 = vpack.c.b16 %v4435, %v4431
    %v4492 = vpack.c.b16 %v4436, %v4432
    %v4493 = vpack.c.b16 %v4437, %v4433
    %v4494 = vpack.c.b16 %v4442, %v4438
    %v4495 = vpack.c.b16 %v4443, %v4439
    %v4496 = vpack.c.b16 %v4444, %v4440
    %v4497 = vpack.c.b16 %v4445, %v4441
    %v4498 = vpack.c.b16 %v4450, %v4446
    %v4499 = vpack.c.b16 %v4451, %v4447
    %v4500 = vpack.c.b16 %v4452, %v4448
    %v4501 = vpack.c.b16 %v4453, %v4449
    %v4502 = vpack.c.b16 %v4458, %v4454
    %v4503 = vpack.c.b16 %v4459, %v4455
    %v4504 = vpack.c.b16 %v4460, %v4456
    %v4505 = vpack.c.b16 %v4461, %v4457
    %v4506 = vpack.c.b16 %v4466, %v4462
    %v4507 = vpack.c.b16 %v4467, %v4463
    %v4508 = vpack.c.b16 %v4468, %v4464
    %v4509 = vpack.c.b16 %v4469, %v4465
    %v4510 = vpack.c.b16 %v4474, %v4470
    %v4511 = vpack.c.b16 %v4475, %v4471
    %v4512 = vpack.c.b16 %v4476, %v4472
    %v4513 = vpack.c.b16 %v4477, %v4473
    %v4514 = vpack.c.b16 %v4482, %v4478
    %v4515 = vpack.c.b16 %v4483, %v4479
    %v4516 = vpack.c.b16 %v4484, %v4480
    %v4517 = vpack.c.b16 %v4485, %v4481
    %4550 = vmatprep.subr.bf16.mxu0 %v4487
    %4551 = vmatpush1.bf16.msra.mxu0 %v4486
    %4552 = vmatprep.subr.bf16.mxu0 %v4491
    %4553 = vmatpush1.bf16.msra.mxu0 %v4490
    %4554 = vmatprep.subr.bf16.mxu0 %v4495
    %4555 = vmatpush1.bf16.msra.mxu0 %v4494
    %4556 = vmatprep.subr.bf16.mxu0 %v4499
    %4557 = vmatpush1.bf16.msra.mxu0 %v4498
    %4558 = vmatprep.subr.bf16.mxu0 %v4503
    %4559 = vmatpush1.bf16.msra.mxu0 %v4502
    %4560 = vmatprep.subr.bf16.mxu0 %v4507
    %4561 = vmatpush1.bf16.msra.mxu0 %v4506
    %4562 = vmatprep.subr.bf16.mxu0 %v4511
    %4563 = vmatpush1.bf16.msra.mxu0 %v4510
    %4564 = vmatprep.subr.bf16.mxu0 %v4515
    %4565 = vmatpush1.bf16.msra.mxu0 %v4514
    %4566 = vmatprep.subr.bf16.mxu0 0
    %4567 = vmatpush1.bf16.msra.mxu0 0
    %4568 = vmatprep.subr.bf16.mxu0 0
    %4569 = vmatpush1.bf16.msra.mxu0 0
    %4570 = vmatprep.subr.bf16.mxu0 0
    %4571 = vmatpush1.bf16.msra.mxu0 0
    %4572 = vmatprep.subr.bf16.mxu0 0
    %4573 = vmatpush1.bf16.msra.mxu0 0
    %4574 = vmatprep.subr.bf16.mxu0 0
    %4575 = vmatpush1.bf16.msra.mxu0 0
    %4576 = vmatprep.subr.bf16.mxu0 0
    %4577 = vmatpush1.bf16.msra.mxu0 0
    %4578 = vmatprep.subr.bf16.mxu0 0
    %4579 = vmatpush1.bf16.msra.mxu0 0
    %4580 = vmatprep.subr.bf16.mxu0 0
    %4581 = vmatpush1.bf16.msra.mxu0 0
    %4582 = vmatprep.mubr.bf16.mxu0 0
    %4583 = vmatmul.mubr.bf16.gmra.mrb[0].mxu0 %v4357
    %v4584 = vpop.f32.mrb[0].mxu0
    %v4585 = vadd.f32 0.0, %v4584
    %v4586 = vpop.f32.mrb[0].mxu0
    %v4587 = vadd.f32 0.0, %v4586
    %v4588 = vpop.f32.mrb[0].mxu0
    %v4589 = vpop.f32.mrb[0].mxu0
    %4590 = vdwg.mxu0
    %4591 = vmatprep.subr.bf16.mxu0 %v4489
    %4592 = vmatpush1.bf16.msra.mxu0 %v4488
    %4593 = vmatprep.subr.bf16.mxu0 %v4493
    %4594 = vmatpush1.bf16.msra.mxu0 %v4492
    %4595 = vmatprep.subr.bf16.mxu0 %v4497
    %4596 = vmatpush1.bf16.msra.mxu0 %v4496
    %4597 = vmatprep.subr.bf16.mxu0 %v4501
    %4598 = vmatpush1.bf16.msra.mxu0 %v4500
    %4599 = vmatprep.subr.bf16.mxu0 %v4505
    %4600 = vmatpush1.bf16.msra.mxu0 %v4504
    %4601 = vmatprep.subr.bf16.mxu0 %v4509
    %4602 = vmatpush1.bf16.msra.mxu0 %v4508
    %4603 = vmatprep.subr.bf16.mxu0 %v4513
    %4604 = vmatpush1.bf16.msra.mxu0 %v4512
    %4605 = vmatprep.subr.bf16.mxu0 %v4517
    %4606 = vmatpush1.bf16.msra.mxu0 %v4516
    %4607 = vmatprep.subr.bf16.mxu0 0
    %4608 = vmatpush1.bf16.msra.mxu0 0
    %4609 = vmatprep.subr.bf16.mxu0 0
    %4610 = vmatpush1.bf16.msra.mxu0 0
    %4611 = vmatprep.subr.bf16.mxu0 0
    %4612 = vmatpush1.bf16.msra.mxu0 0
    %4613 = vmatprep.subr.bf16.mxu0 0
    %4614 = vmatpush1.bf16.msra.mxu0 0
    %4615 = vmatprep.subr.bf16.mxu0 0
    %4616 = vmatpush1.bf16.msra.mxu0 0
    %4617 = vmatprep.subr.bf16.mxu0 0
    %4618 = vmatpush1.bf16.msra.mxu0 0
    %4619 = vmatprep.subr.bf16.mxu0 0
    %4620 = vmatpush1.bf16.msra.mxu0 0
    %4621 = vmatprep.subr.bf16.mxu0 0
    %4622 = vmatpush1.bf16.msra.mxu0 0
    %4623 = vmatprep.mubr.bf16.mxu0 0
    %4624 = vmatmul.mubr.bf16.gmra.mrb[0].mxu0 %v4357
    %v4625 = vpop.f32.mrb[0].mxu0
    %v4626 = vadd.f32 0.0, %v4625
    %v4627 = vpop.f32.mrb[0].mxu0
    %v4628 = vadd.f32 0.0, %v4627
    %v4629 = vpop.f32.mrb[0].mxu0
    %v4630 = vpop.f32.mrb[0].mxu0
    %4631 = vdwg.mxu0
    %v4632 = vadd.f32 %v4353, %v4585
    %v4633 = vadd.f32 %v4354, %v4587
    %v4634 = vadd.f32 %v4355, %v4626
    %v4635 = vadd.f32 %v4356, %v4628
    %v4636 = vxor.u32 %v4632, 2147483648
    %v4637 = vxor.u32 %v4633, 2147483648
    %v4638 = vxor.u32 %v4634, 2147483648
    %v4639 = vmul.f32 %v4636, 1.442695
    %v4640 = vpow.pop %v4639
    %v4641 = vmul.f32 %v4637, 1.442695
    %v4642 = vpow.pop %v4641
    %v4643 = vmul.f32 %v4638, 1.442695
    %v4644 = vpow.pop %v4643
    %v4645 = vadd.f32 %v4640, 1.0
    %v4646 = vadd.f32 %v4642, 1.0
    %v4647 = vadd.f32 %v4644, 1.0
    %v4648 = vrcp.pop %v4645
    %v4649 = vmul.f32 1.0, %v4648
    %v4650 = vrcp.pop %v4646
    %v4651 = vmul.f32 1.0, %v4650
    %v4652 = vrcp.pop %v4647
    %v4653 = vmul.f32 1.0, %v4652
    %v4654 = vtanh.pop %v4635
    %v4655 = vmul.f32 %v4651, %v4349
    %v4656 = vmul.f32 %v4649, %v4654
    %v4657 = vadd.f32 %v4655, %v4656
    %v4658 = vtanh.pop %v4657
    %v4659 = vmul.f32 %v4653, %v4658
    %4660 = vst [vmem:[%s1775] sm:$0xff] %v4659
    %v4661 = vld [vmem:[%s1777] sm:$0xff]
    %v4662 = vld [vmem:[%s1777 + $0x8] sm:$0xff]
    %v4663 = vld [vmem:[%s1777 + $0x10] sm:$0xff]
    %v4664 = vld [vmem:[%s1777 + $0x18] sm:$0xff]
    %v4665 = vpack.c.bf16 %v4659, %v4659
    %v4666 = vld [vmem:[%s3433] sm:$0xff]
    %v4667 = vld [vmem:[%s3433 + $0x8] sm:$0xff]
    %v4668 = vld [vmem:[%s3433 + $0x10] sm:$0xff]
    %v4669 = vld [vmem:[%s3433 + $0x18] sm:$0xff]
    %v4670 = vld [vmem:[%s3433 + $0x20] sm:$0xff]
    %v4671 = vld [vmem:[%s3433 + $0x28] sm:$0xff]
    %v4672 = vld [vmem:[%s3433 + $0x30] sm:$0xff]
    %v4673 = vld [vmem:[%s3433 + $0x38] sm:$0xff]
    %v4674 = vld [vmem:[%s3433 + $0x40] sm:$0xff]
    %v4675 = vld [vmem:[%s3433 + $0x48] sm:$0xff]
    %v4676 = vld [vmem:[%s3433 + $0x50] sm:$0xff]
    %v4677 = vld [vmem:[%s3433 + $0x58] sm:$0xff]
    %v4678 = vld [vmem:[%s3433 + $0x60] sm:$0xff]
    %v4679 = vld [vmem:[%s3433 + $0x68] sm:$0xff]
    %v4680 = vld [vmem:[%s3433 + $0x70] sm:$0xff]
    %v4681 = vld [vmem:[%s3433 + $0x78] sm:$0xff]
    %v4682 = vld [vmem:[%s3433 + $0x80] sm:$0xff]
    %v4683 = vld [vmem:[%s3433 + $0x88] sm:$0xff]
    %v4684 = vld [vmem:[%s3433 + $0x90] sm:$0xff]
    %v4685 = vld [vmem:[%s3433 + $0x98] sm:$0xff]
    %v4686 = vld [vmem:[%s3433 + $0xa0] sm:$0xff]
    %v4687 = vld [vmem:[%s3433 + $0xa8] sm:$0xff]
    %v4688 = vld [vmem:[%s3433 + $0xb0] sm:$0xff]
    %v4689 = vld [vmem:[%s3433 + $0xb8] sm:$0xff]
    %v4690 = vld [vmem:[%s3433 + $0xc0] sm:$0xff]
    %v4691 = vld [vmem:[%s3433 + $0xc8] sm:$0xff]
    %v4692 = vld [vmem:[%s3433 + $0xd0] sm:$0xff]
    %v4693 = vld [vmem:[%s3433 + $0xd8] sm:$0xff]
    %v4694 = vld [vmem:[%s3433 + $0xe0] sm:$0xff]
    %v4695 = vld [vmem:[%s3433 + $0xe8] sm:$0xff]
    %v4696 = vld [vmem:[%s3433 + $0xf0] sm:$0xff]
    %v4697 = vld [vmem:[%s3433 + $0xf8] sm:$0xff]
    %v4730 = vunpack.c.l.b16 %v4666
    %v4731 = vunpack.c.h.b16 %v4666
    %v4732 = vunpack.c.l.b16 %v4667
    %v4733 = vunpack.c.h.b16 %v4667
    %v4734 = vunpack.c.l.b16 %v4668
    %v4735 = vunpack.c.h.b16 %v4668
    %v4736 = vunpack.c.l.b16 %v4669
    %v4737 = vunpack.c.h.b16 %v4669
    %v4738 = vunpack.c.l.b16 %v4670
    %v4739 = vunpack.c.h.b16 %v4670
    %v4740 = vunpack.c.l.b16 %v4671
    %v4741 = vunpack.c.h.b16 %v4671
    %v4742 = vunpack.c.l.b16 %v4672
    %v4743 = vunpack.c.h.b16 %v4672
    %v4744 = vunpack.c.l.b16 %v4673
    %v4745 = vunpack.c.h.b16 %v4673
    %v4746 = vunpack.c.l.b16 %v4674
    %v4747 = vunpack.c.h.b16 %v4674
    %v4748 = vunpack.c.l.b16 %v4675
    %v4749 = vunpack.c.h.b16 %v4675
    %v4750 = vunpack.c.l.b16 %v4676
    %v4751 = vunpack.c.h.b16 %v4676
    %v4752 = vunpack.c.l.b16 %v4677
    %v4753 = vunpack.c.h.b16 %v4677
    %v4754 = vunpack.c.l.b16 %v4678
    %v4755 = vunpack.c.h.b16 %v4678
    %v4756 = vunpack.c.l.b16 %v4679
    %v4757 = vunpack.c.h.b16 %v4679
    %v4758 = vunpack.c.l.b16 %v4680
    %v4759 = vunpack.c.h.b16 %v4680
    %v4760 = vunpack.c.l.b16 %v4681
    %v4761 = vunpack.c.h.b16 %v4681
    %v4762 = vunpack.c.l.b16 %v4682
    %v4763 = vunpack.c.h.b16 %v4682
    %v4764 = vunpack.c.l.b16 %v4683
    %v4765 = vunpack.c.h.b16 %v4683
    %v4766 = vunpack.c.l.b16 %v4684
    %v4767 = vunpack.c.h.b16 %v4684
    %v4768 = vunpack.c.l.b16 %v4685
    %v4769 = vunpack.c.h.b16 %v4685
    %v4770 = vunpack.c.l.b16 %v4686
    %v4771 = vunpack.c.h.b16 %v4686
    %v4772 = vunpack.c.l.b16 %v4687
    %v4773 = vunpack.c.h.b16 %v4687
    %v4774 = vunpack.c.l.b16 %v4688
    %v4775 = vunpack.c.h.b16 %v4688
    %v4776 = vunpack.c.l.b16 %v4689
    %v4777 = vunpack.c.h.b16 %v4689
    %v4778 = vunpack.c.l.b16 %v4690
    %v4779 = vunpack.c.h.b16 %v4690
    %v4780 = vunpack.c.l.b16 %v4691
    %v4781 = vunpack.c.h.b16 %v4691
    %v4782 = vunpack.c.l.b16 %v4692
    %v4783 = vunpack.c.h.b16 %v4692
    %v4784 = vunpack.c.l.b16 %v4693
    %v4785 = vunpack.c.h.b16 %v4693
    %v4786 = vunpack.c.l.b16 %v4694
    %v4787 = vunpack.c.h.b16 %v4694
    %v4788 = vunpack.c.l.b16 %v4695
    %v4789 = vunpack.c.h.b16 %v4695
    %v4790 = vunpack.c.l.b16 %v4696
    %v4791 = vunpack.c.h.b16 %v4696
    %v4792 = vunpack.c.l.b16 %v4697
    %v4793 = vunpack.c.h.b16 %v4697
    %v4794 = vpack.c.b16 %v4734, %v4730
    %v4795 = vpack.c.b16 %v4735, %v4731
    %v4796 = vpack.c.b16 %v4736, %v4732
    %v4797 = vpack.c.b16 %v4737, %v4733
    %v4798 = vpack.c.b16 %v4742, %v4738
    %v4799 = vpack.c.b16 %v4743, %v4739
    %v4800 = vpack.c.b16 %v4744, %v4740
    %v4801 = vpack.c.b16 %v4745, %v4741
    %v4802 = vpack.c.b16 %v4750, %v4746
    %v4803 = vpack.c.b16 %v4751, %v4747
    %v4804 = vpack.c.b16 %v4752, %v4748
    %v4805 = vpack.c.b16 %v4753, %v4749
    %v4806 = vpack.c.b16 %v4758, %v4754
    %v4807 = vpack.c.b16 %v4759, %v4755
    %v4808 = vpack.c.b16 %v4760, %v4756
    %v4809 = vpack.c.b16 %v4761, %v4757
    %v4810 = vpack.c.b16 %v4766, %v4762
    %v4811 = vpack.c.b16 %v4767, %v4763
    %v4812 = vpack.c.b16 %v4768, %v4764
    %v4813 = vpack.c.b16 %v4769, %v4765
    %v4814 = vpack.c.b16 %v4774, %v4770
    %v4815 = vpack.c.b16 %v4775, %v4771
    %v4816 = vpack.c.b16 %v4776, %v4772
    %v4817 = vpack.c.b16 %v4777, %v4773
    %v4818 = vpack.c.b16 %v4782, %v4778
    %v4819 = vpack.c.b16 %v4783, %v4779
    %v4820 = vpack.c.b16 %v4784, %v4780
    %v4821 = vpack.c.b16 %v4785, %v4781
    %v4822 = vpack.c.b16 %v4790, %v4786
    %v4823 = vpack.c.b16 %v4791, %v4787
    %v4824 = vpack.c.b16 %v4792, %v4788
    %v4825 = vpack.c.b16 %v4793, %v4789
    %4858 = vmatprep.subr.bf16.mxu0 %v4795
    %4859 = vmatpush1.bf16.msra.mxu0 %v4794
    %4860 = vmatprep.subr.bf16.mxu0 %v4799
    %4861 = vmatpush1.bf16.msra.mxu0 %v4798
    %4862 = vmatprep.subr.bf16.mxu0 %v4803
    %4863 = vmatpush1.bf16.msra.mxu0 %v4802
    %4864 = vmatprep.subr.bf16.mxu0 %v4807
    %4865 = vmatpush1.bf16.msra.mxu0 %v4806
    %4866 = vmatprep.subr.bf16.mxu0 %v4811
    %4867 = vmatpush1.bf16.msra.mxu0 %v4810
    %4868 = vmatprep.subr.bf16.mxu0 %v4815
    %4869 = vmatpush1.bf16.msra.mxu0 %v4814
    %4870 = vmatprep.subr.bf16.mxu0 %v4819
    %4871 = vmatpush1.bf16.msra.mxu0 %v4818
    %4872 = vmatprep.subr.bf16.mxu0 %v4823
    %4873 = vmatpush1.bf16.msra.mxu0 %v4822
    %4874 = vmatprep.subr.bf16.mxu0 0
    %4875 = vmatpush1.bf16.msra.mxu0 0
    %4876 = vmatprep.subr.bf16.mxu0 0
    %4877 = vmatpush1.bf16.msra.mxu0 0
    %4878 = vmatprep.subr.bf16.mxu0 0
    %4879 = vmatpush1.bf16.msra.mxu0 0
    %4880 = vmatprep.subr.bf16.mxu0 0
    %4881 = vmatpush1.bf16.msra.mxu0 0
    %4882 = vmatprep.subr.bf16.mxu0 0
    %4883 = vmatpush1.bf16.msra.mxu0 0
    %4884 = vmatprep.subr.bf16.mxu0 0
    %4885 = vmatpush1.bf16.msra.mxu0 0
    %4886 = vmatprep.subr.bf16.mxu0 0
    %4887 = vmatpush1.bf16.msra.mxu0 0
    %4888 = vmatprep.subr.bf16.mxu0 0
    %4889 = vmatpush1.bf16.msra.mxu0 0
    %4890 = vmatprep.mubr.bf16.mxu0 0
    %4891 = vmatmul.mubr.bf16.gmra.mrb[0].mxu0 %v4665
    %v4892 = vpop.f32.mrb[0].mxu0
    %v4893 = vadd.f32 0.0, %v4892
    %v4894 = vpop.f32.mrb[0].mxu0
    %v4895 = vadd.f32 0.0, %v4894
    %v4896 = vpop.f32.mrb[0].mxu0
    %v4897 = vpop.f32.mrb[0].mxu0
    %4898 = vdwg.mxu0
    %4899 = vmatprep.subr.bf16.mxu0 %v4797
    %4900 = vmatpush1.bf16.msra.mxu0 %v4796
    %4901 = vmatprep.subr.bf16.mxu0 %v4801
    %4902 = vmatpush1.bf16.msra.mxu0 %v4800
    %4903 = vmatprep.subr.bf16.mxu0 %v4805
    %4904 = vmatpush1.bf16.msra.mxu0 %v4804
    %4905 = vmatprep.subr.bf16.mxu0 %v4809
    %4906 = vmatpush1.bf16.msra.mxu0 %v4808
    %4907 = vmatprep.subr.bf16.mxu0 %v4813
    %4908 = vmatpush1.bf16.msra.mxu0 %v4812
    %4909 = vmatprep.subr.bf16.mxu0 %v4817
    %4910 = vmatpush1.bf16.msra.mxu0 %v4816
    %4911 = vmatprep.subr.bf16.mxu0 %v4821
    %4912 = vmatpush1.bf16.msra.mxu0 %v4820
    %4913 = vmatprep.subr.bf16.mxu0 %v4825
    %4914 = vmatpush1.bf16.msra.mxu0 %v4824
    %4915 = vmatprep.subr.bf16.mxu0 0
    %4916 = vmatpush1.bf16.msra.mxu0 0
    %4917 = vmatprep.subr.bf16.mxu0 0
    %4918 = vmatpush1.bf16.msra.mxu0 0
    %4919 = vmatprep.subr.bf16.mxu0 0
    %4920 = vmatpush1.bf16.msra.mxu0 0
    %4921 = vmatprep.subr.bf16.mxu0 0
    %4922 = vmatpush1.bf16.msra.mxu0 0
    %4923 = vmatprep.subr.bf16.mxu0 0
    %4924 = vmatpush1.bf16.msra.mxu0 0
    %4925 = vmatprep.subr.bf16.mxu0 0
    %4926 = vmatpush1.bf16.msra.mxu0 0
    %4927 = vmatprep.subr.bf16.mxu0 0
    %4928 = vmatpush1.bf16.msra.mxu0 0
    %4929 = vmatprep.subr.bf16.mxu0 0
    %4930 = vmatpush1.bf16.msra.mxu0 0
    %4931 = vmatprep.mubr.bf16.mxu0 0
    %4932 = vmatmul.mubr.bf16.gmra.mrb[0].mxu0 %v4665
    %v4933 = vpop.f32.mrb[0].mxu0
    %v4934 = vadd.f32 0.0, %v4933
    %v4935 = vpop.f32.mrb[0].mxu0
    %v4936 = vadd.f32 0.0, %v4935
    %v4937 = vpop.f32.mrb[0].mxu0
    %v4938 = vpop.f32.mrb[0].mxu0
    %4939 = vdwg.mxu0
    %v4940 = vadd.f32 %v4661, %v4893
    %v4941 = vadd.f32 %v4662, %v4895
    %v4942 = vadd.f32 %v4663, %v4934
    %v4943 = vadd.f32 %v4664, %v4936
    %v4944 = vxor.u32 %v4940, 2147483648
    %v4945 = vxor.u32 %v4941, 2147483648
    %v4946 = vxor.u32 %v4942, 2147483648
    %v4947 = vmul.f32 %v4944, 1.442695
    %v4948 = vpow.pop %v4947
    %v4949 = vmul.f32 %v4945, 1.442695
    %v4950 = vpow.pop %v4949
    %v4951 = vmul.f32 %v4946, 1.442695
    %v4952 = vpow.pop %v4951
    %v4953 = vadd.f32 %v4948, 1.0
    %v4954 = vadd.f32 %v4950, 1.0
    %v4955 = vadd.f32 %v4952, 1.0
    %v4956 = vrcp.pop %v4953
    %v4957 = vmul.f32 1.0, %v4956
    %v4958 = vrcp.pop %v4954
    %v4959 = vmul.f32 1.0, %v4958
    %v4960 = vrcp.pop %v4955
    %v4961 = vmul.f32 1.0, %v4960
    %v4962 = vtanh.pop %v4943
    %v4963 = vmul.f32 %v4959, %v4657
    %v4964 = vmul.f32 %v4957, %v4962
    %v4965 = vadd.f32 %v4963, %v4964
    %v4966 = vtanh.pop %v4965
    %v4967 = vmul.f32 %v4961, %v4966
    %4968 = vst [vmem:[%s2085] sm:$0xff] %v4967
    %v4969 = vld [vmem:[%s2087] sm:$0xff]
    %v4970 = vld [vmem:[%s2087 + $0x8] sm:$0xff]
    %v4971 = vld [vmem:[%s2087 + $0x10] sm:$0xff]
    %v4972 = vld [vmem:[%s2087 + $0x18] sm:$0xff]
    %v4973 = vpack.c.bf16 %v4967, %v4967
    %v4974 = vld [vmem:[%s3433] sm:$0xff]
    %v4975 = vld [vmem:[%s3433 + $0x8] sm:$0xff]
    %v4976 = vld [vmem:[%s3433 + $0x10] sm:$0xff]
    %v4977 = vld [vmem:[%s3433 + $0x18] sm:$0xff]
    %v4978 = vld [vmem:[%s3433 + $0x20] sm:$0xff]
    %v4979 = vld [vmem:[%s3433 + $0x28] sm:$0xff]
    %v4980 = vld [vmem:[%s3433 + $0x30] sm:$0xff]
    %v4981 = vld [vmem:[%s3433 + $0x38] sm:$0xff]
    %v4982 = vld [vmem:[%s3433 + $0x40] sm:$0xff]
    %v4983 = vld [vmem:[%s3433 + $0x48] sm:$0xff]
    %v4984 = vld [vmem:[%s3433 + $0x50] sm:$0xff]
    %v4985 = vld [vmem:[%s3433 + $0x58] sm:$0xff]
    %v4986 = vld [vmem:[%s3433 + $0x60] sm:$0xff]
    %v4987 = vld [vmem:[%s3433 + $0x68] sm:$0xff]
    %v4988 = vld [vmem:[%s3433 + $0x70] sm:$0xff]
    %v4989 = vld [vmem:[%s3433 + $0x78] sm:$0xff]
    %v4990 = vld [vmem:[%s3433 + $0x80] sm:$0xff]
    %v4991 = vld [vmem:[%s3433 + $0x88] sm:$0xff]
    %v4992 = vld [vmem:[%s3433 + $0x90] sm:$0xff]
    %v4993 = vld [vmem:[%s3433 + $0x98] sm:$0xff]
    %v4994 = vld [vmem:[%s3433 + $0xa0] sm:$0xff]
    %v4995 = vld [vmem:[%s3433 + $0xa8] sm:$0xff]
    %v4996 = vld [vmem:[%s3433 + $0xb0] sm:$0xff]
    %v4997 = vld [vmem:[%s3433 + $0xb8] sm:$0xff]
    %v4998 = vld [vmem:[%s3433 + $0xc0] sm:$0xff]
    %v4999 = vld [vmem:[%s3433 + $0xc8] sm:$0xff]
    %v5000 = vld [vmem:[%s3433 + $0xd0] sm:$0xff]
    %v5001 = vld [vmem:[%s3433 + $0xd8] sm:$0xff]
    %v5002 = vld [vmem:[%s3433 + $0xe0] sm:$0xff]
    %v5003 = vld [vmem:[%s3433 + $0xe8] sm:$0xff]
    %v5004 = vld [vmem:[%s3433 + $0xf0] sm:$0xff]
    %v5005 = vld [vmem:[%s3433 + $0xf8] sm:$0xff]
    %v5038 = vunpack.c.l.b16 %v4974
    %v5039 = vunpack.c.h.b16 %v4974
    %v5040 = vunpack.c.l.b16 %v4975
    %v5041 = vunpack.c.h.b16 %v4975
    %v5042 = vunpack.c.l.b16 %v4976
    %v5043 = vunpack.c.h.b16 %v4976
    %v5044 = vunpack.c.l.b16 %v4977
    %v5045 = vunpack.c.h.b16 %v4977
    %v5046 = vunpack.c.l.b16 %v4978
    %v5047 = vunpack.c.h.b16 %v4978
    %v5048 = vunpack.c.l.b16 %v4979
    %v5049 = vunpack.c.h.b16 %v4979
    %v5050 = vunpack.c.l.b16 %v4980
    %v5051 = vunpack.c.h.b16 %v4980
    %v5052 = vunpack.c.l.b16 %v4981
    %v5053 = vunpack.c.h.b16 %v4981
    %v5054 = vunpack.c.l.b16 %v4982
    %v5055 = vunpack.c.h.b16 %v4982
    %v5056 = vunpack.c.l.b16 %v4983
    %v5057 = vunpack.c.h.b16 %v4983
    %v5058 = vunpack.c.l.b16 %v4984
    %v5059 = vunpack.c.h.b16 %v4984
    %v5060 = vunpack.c.l.b16 %v4985
    %v5061 = vunpack.c.h.b16 %v4985
    %v5062 = vunpack.c.l.b16 %v4986
    %v5063 = vunpack.c.h.b16 %v4986
    %v5064 = vunpack.c.l.b16 %v4987
    %v5065 = vunpack.c.h.b16 %v4987
    %v5066 = vunpack.c.l.b16 %v4988
    %v5067 = vunpack.c.h.b16 %v4988
    %v5068 = vunpack.c.l.b16 %v4989
    %v5069 = vunpack.c.h.b16 %v4989
    %v5070 = vunpack.c.l.b16 %v4990
    %v5071 = vunpack.c.h.b16 %v4990
    %v5072 = vunpack.c.l.b16 %v4991
    %v5073 = vunpack.c.h.b16 %v4991
    %v5074 = vunpack.c.l.b16 %v4992
    %v5075 = vunpack.c.h.b16 %v4992
    %v5076 = vunpack.c.l.b16 %v4993
    %v5077 = vunpack.c.h.b16 %v4993
    %v5078 = vunpack.c.l.b16 %v4994
    %v5079 = vunpack.c.h.b16 %v4994
    %v5080 = vunpack.c.l.b16 %v4995
    %v5081 = vunpack.c.h.b16 %v4995
    %v5082 = vunpack.c.l.b16 %v4996
    %v5083 = vunpack.c.h.b16 %v4996
    %v5084 = vunpack.c.l.b16 %v4997
    %v5085 = vunpack.c.h.b16 %v4997
    %v5086 = vunpack.c.l.b16 %v4998
    %v5087 = vunpack.c.h.b16 %v4998
    %v5088 = vunpack.c.l.b16 %v4999
    %v5089 = vunpack.c.h.b16 %v4999
    %v5090 = vunpack.c.l.b16 %v5000
    %v5091 = vunpack.c.h.b16 %v5000
    %v5092 = vunpack.c.l.b16 %v5001
    %v5093 = vunpack.c.h.b16 %v5001
    %v5094 = vunpack.c.l.b16 %v5002
    %v5095 = vunpack.c.h.b16 %v5002
    %v5096 = vunpack.c.l.b16 %v5003
    %v5097 = vunpack.c.h.b16 %v5003
    %v5098 = vunpack.c.l.b16 %v5004
    %v5099 = vunpack.c.h.b16 %v5004
    %v5100 = vunpack.c.l.b16 %v5005
    %v5101 = vunpack.c.h.b16 %v5005
    %v5102 = vpack.c.b16 %v5042, %v5038
    %v5103 = vpack.c.b16 %v5043, %v5039
    %v5104 = vpack.c.b16 %v5044, %v5040
    %v5105 = vpack.c.b16 %v5045, %v5041
    %v5106 = vpack.c.b16 %v5050, %v5046
    %v5107 = vpack.c.b16 %v5051, %v5047
    %v5108 = vpack.c.b16 %v5052, %v5048
    %v5109 = vpack.c.b16 %v5053, %v5049
    %v5110 = vpack.c.b16 %v5058, %v5054
    %v5111 = vpack.c.b16 %v5059, %v5055
    %v5112 = vpack.c.b16 %v5060, %v5056
    %v5113 = vpack.c.b16 %v5061, %v5057
    %v5114 = vpack.c.b16 %v5066, %v5062
    %v5115 = vpack.c.b16 %v5067, %v5063
    %v5116 = vpack.c.b16 %v5068, %v5064
    %v5117 = vpack.c.b16 %v5069, %v5065
    %v5118 = vpack.c.b16 %v5074, %v5070
    %v5119 = vpack.c.b16 %v5075, %v5071
    %v5120 = vpack.c.b16 %v5076, %v5072
    %v5121 = vpack.c.b16 %v5077, %v5073
    %v5122 = vpack.c.b16 %v5082, %v5078
    %v5123 = vpack.c.b16 %v5083, %v5079
    %v5124 = vpack.c.b16 %v5084, %v5080
    %v5125 = vpack.c.b16 %v5085, %v5081
    %v5126 = vpack.c.b16 %v5090, %v5086
    %v5127 = vpack.c.b16 %v5091, %v5087
    %v5128 = vpack.c.b16 %v5092, %v5088
    %v5129 = vpack.c.b16 %v5093, %v5089
    %v5130 = vpack.c.b16 %v5098, %v5094
    %v5131 = vpack.c.b16 %v5099, %v5095
    %v5132 = vpack.c.b16 %v5100, %v5096
    %v5133 = vpack.c.b16 %v5101, %v5097
    %5166 = vmatprep.subr.bf16.mxu0 %v5103
    %5167 = vmatpush1.bf16.msra.mxu0 %v5102
    %5168 = vmatprep.subr.bf16.mxu0 %v5107
    %5169 = vmatpush1.bf16.msra.mxu0 %v5106
    %5170 = vmatprep.subr.bf16.mxu0 %v5111
    %5171 = vmatpush1.bf16.msra.mxu0 %v5110
    %5172 = vmatprep.subr.bf16.mxu0 %v5115
    %5173 = vmatpush1.bf16.msra.mxu0 %v5114
    %5174 = vmatprep.subr.bf16.mxu0 %v5119
    %5175 = vmatpush1.bf16.msra.mxu0 %v5118
    %5176 = vmatprep.subr.bf16.mxu0 %v5123
    %5177 = vmatpush1.bf16.msra.mxu0 %v5122
    %5178 = vmatprep.subr.bf16.mxu0 %v5127
    %5179 = vmatpush1.bf16.msra.mxu0 %v5126
    %5180 = vmatprep.subr.bf16.mxu0 %v5131
    %5181 = vmatpush1.bf16.msra.mxu0 %v5130
    %5182 = vmatprep.subr.bf16.mxu0 0
    %5183 = vmatpush1.bf16.msra.mxu0 0
    %5184 = vmatprep.subr.bf16.mxu0 0
    %5185 = vmatpush1.bf16.msra.mxu0 0
    %5186 = vmatprep.subr.bf16.mxu0 0
    %5187 = vmatpush1.bf16.msra.mxu0 0
    %5188 = vmatprep.subr.bf16.mxu0 0
    %5189 = vmatpush1.bf16.msra.mxu0 0
    %5190 = vmatprep.subr.bf16.mxu0 0
    %5191 = vmatpush1.bf16.msra.mxu0 0
    %5192 = vmatprep.subr.bf16.mxu0 0
    %5193 = vmatpush1.bf16.msra.mxu0 0
    %5194 = vmatprep.subr.bf16.mxu0 0
    %5195 = vmatpush1.bf16.msra.mxu0 0
    %5196 = vmatprep.subr.bf16.mxu0 0
    %5197 = vmatpush1.bf16.msra.mxu0 0
    %5198 = vmatprep.mubr.bf16.mxu0 0
    %5199 = vmatmul.mubr.bf16.gmra.mrb[0].mxu0 %v4973
    %v5200 = vpop.f32.mrb[0].mxu0
    %v5201 = vadd.f32 0.0, %v5200
    %v5202 = vpop.f32.mrb[0].mxu0
    %v5203 = vadd.f32 0.0, %v5202
    %v5204 = vpop.f32.mrb[0].mxu0
    %v5205 = vpop.f32.mrb[0].mxu0
    %5206 = vdwg.mxu0
    %5207 = vmatprep.subr.bf16.mxu0 %v5105
    %5208 = vmatpush1.bf16.msra.mxu0 %v5104
    %5209 = vmatprep.subr.bf16.mxu0 %v5109
    %5210 = vmatpush1.bf16.msra.mxu0 %v5108
    %5211 = vmatprep.subr.bf16.mxu0 %v5113
    %5212 = vmatpush1.bf16.msra.mxu0 %v5112
    %5213 = vmatprep.subr.bf16.mxu0 %v5117
    %5214 = vmatpush1.bf16.msra.mxu0 %v5116
    %5215 = vmatprep.subr.bf16.mxu0 %v5121
    %5216 = vmatpush1.bf16.msra.mxu0 %v5120
    %5217 = vmatprep.subr.bf16.mxu0 %v5125
    %5218 = vmatpush1.bf16.msra.mxu0 %v5124
    %5219 = vmatprep.subr.bf16.mxu0 %v5129
    %5220 = vmatpush1.bf16.msra.mxu0 %v5128
    %5221 = vmatprep.subr.bf16.mxu0 %v5133
    %5222 = vmatpush1.bf16.msra.mxu0 %v5132
    %5223 = vmatprep.subr.bf16.mxu0 0
    %5224 = vmatpush1.bf16.msra.mxu0 0
    %5225 = vmatprep.subr.bf16.mxu0 0
    %5226 = vmatpush1.bf16.msra.mxu0 0
    %5227 = vmatprep.subr.bf16.mxu0 0
    %5228 = vmatpush1.bf16.msra.mxu0 0
    %5229 = vmatprep.subr.bf16.mxu0 0
    %5230 = vmatpush1.bf16.msra.mxu0 0
    %5231 = vmatprep.subr.bf16.mxu0 0
    %5232 = vmatpush1.bf16.msra.mxu0 0
    %5233 = vmatprep.subr.bf16.mxu0 0
    %5234 = vmatpush1.bf16.msra.mxu0 0
    %5235 = vmatprep.subr.bf16.mxu0 0
    %5236 = vmatpush1.bf16.msra.mxu0 0
    %5237 = vmatprep.subr.bf16.mxu0 0
    %5238 = vmatpush1.bf16.msra.mxu0 0
    %5239 = vmatprep.mubr.bf16.mxu0 0
    %5240 = vmatmul.mubr.bf16.gmra.mrb[0].mxu0 %v4973
    %v5241 = vpop.f32.mrb[0].mxu0
    %v5242 = vadd.f32 0.0, %v5241
    %v5243 = vpop.f32.mrb[0].mxu0
    %v5244 = vadd.f32 0.0, %v5243
    %v5245 = vpop.f32.mrb[0].mxu0
    %v5246 = vpop.f32.mrb[0].mxu0
    %5247 = vdwg.mxu0
    %v5248 = vadd.f32 %v4969, %v5201
    %v5249 = vadd.f32 %v4970, %v5203
    %v5250 = vadd.f32 %v4971, %v5242
    %v5251 = vadd.f32 %v4972, %v5244
    %v5252 = vxor.u32 %v5248, 2147483648
    %v5253 = vxor.u32 %v5249, 2147483648
    %v5254 = vxor.u32 %v5250, 2147483648
    %v5255 = vmul.f32 %v5252, 1.442695
    %v5256 = vpow.pop %v5255
    %v5257 = vmul.f32 %v5253, 1.442695
    %v5258 = vpow.pop %v5257
    %v5259 = vmul.f32 %v5254, 1.442695
    %v5260 = vpow.pop %v5259
    %v5261 = vadd.f32 %v5256, 1.0
    %v5262 = vadd.f32 %v5258, 1.0
    %v5263 = vadd.f32 %v5260, 1.0
    %v5264 = vrcp.pop %v5261
    %v5265 = vmul.f32 1.0, %v5264
    %v5266 = vrcp.pop %v5262
    %v5267 = vmul.f32 1.0, %v5266
    %v5268 = vrcp.pop %v5263
    %v5269 = vmul.f32 1.0, %v5268
    %v5270 = vtanh.pop %v5251
    %v5271 = vmul.f32 %v5267, %v4965
    %v5272 = vmul.f32 %v5265, %v5270
    %v5273 = vadd.f32 %v5271, %v5272
    %v5274 = vtanh.pop %v5273
    %v5275 = vmul.f32 %v5269, %v5274
    %5276 = vst [vmem:[%s2395] sm:$0xff] %v5275
    %v5277 = vld [vmem:[%s2397] sm:$0xff]
    %v5278 = vld [vmem:[%s2397 + $0x8] sm:$0xff]
    %v5279 = vld [vmem:[%s2397 + $0x10] sm:$0xff]
    %v5280 = vld [vmem:[%s2397 + $0x18] sm:$0xff]
    %v5281 = vpack.c.bf16 %v5275, %v5275
    %v5282 = vld [vmem:[%s3433] sm:$0xff]
    %v5283 = vld [vmem:[%s3433 + $0x8] sm:$0xff]
    %v5284 = vld [vmem:[%s3433 + $0x10] sm:$0xff]
    %v5285 = vld [vmem:[%s3433 + $0x18] sm:$0xff]
    %v5286 = vld [vmem:[%s3433 + $0x20] sm:$0xff]
    %v5287 = vld [vmem:[%s3433 + $0x28] sm:$0xff]
    %v5288 = vld [vmem:[%s3433 + $0x30] sm:$0xff]
    %v5289 = vld [vmem:[%s3433 + $0x38] sm:$0xff]
    %v5290 = vld [vmem:[%s3433 + $0x40] sm:$0xff]
    %v5291 = vld [vmem:[%s3433 + $0x48] sm:$0xff]
    %v5292 = vld [vmem:[%s3433 + $0x50] sm:$0xff]
    %v5293 = vld [vmem:[%s3433 + $0x58] sm:$0xff]
    %v5294 = vld [vmem:[%s3433 + $0x60] sm:$0xff]
    %v5295 = vld [vmem:[%s3433 + $0x68] sm:$0xff]
    %v5296 = vld [vmem:[%s3433 + $0x70] sm:$0xff]
    %v5297 = vld [vmem:[%s3433 + $0x78] sm:$0xff]
    %v5298 = vld [vmem:[%s3433 + $0x80] sm:$0xff]
    %v5299 = vld [vmem:[%s3433 + $0x88] sm:$0xff]
    %v5300 = vld [vmem:[%s3433 + $0x90] sm:$0xff]
    %v5301 = vld [vmem:[%s3433 + $0x98] sm:$0xff]
    %v5302 = vld [vmem:[%s3433 + $0xa0] sm:$0xff]
    %v5303 = vld [vmem:[%s3433 + $0xa8] sm:$0xff]
    %v5304 = vld [vmem:[%s3433 + $0xb0] sm:$0xff]
    %v5305 = vld [vmem:[%s3433 + $0xb8] sm:$0xff]
    %v5306 = vld [vmem:[%s3433 + $0xc0] sm:$0xff]
    %v5307 = vld [vmem:[%s3433 + $0xc8] sm:$0xff]
    %v5308 = vld [vmem:[%s3433 + $0xd0] sm:$0xff]
    %v5309 = vld [vmem:[%s3433 + $0xd8] sm:$0xff]
    %v5310 = vld [vmem:[%s3433 + $0xe0] sm:$0xff]
    %v5311 = vld [vmem:[%s3433 + $0xe8] sm:$0xff]
    %v5312 = vld [vmem:[%s3433 + $0xf0] sm:$0xff]
    %v5313 = vld [vmem:[%s3433 + $0xf8] sm:$0xff]
    %v5346 = vunpack.c.l.b16 %v5282
    %v5347 = vunpack.c.h.b16 %v5282
    %v5348 = vunpack.c.l.b16 %v5283
    %v5349 = vunpack.c.h.b16 %v5283
    %v5350 = vunpack.c.l.b16 %v5284
    %v5351 = vunpack.c.h.b16 %v5284
    %v5352 = vunpack.c.l.b16 %v5285
    %v5353 = vunpack.c.h.b16 %v5285
    %v5354 = vunpack.c.l.b16 %v5286
    %v5355 = vunpack.c.h.b16 %v5286
    %v5356 = vunpack.c.l.b16 %v5287
    %v5357 = vunpack.c.h.b16 %v5287
    %v5358 = vunpack.c.l.b16 %v5288
    %v5359 = vunpack.c.h.b16 %v5288
    %v5360 = vunpack.c.l.b16 %v5289
    %v5361 = vunpack.c.h.b16 %v5289
    %v5362 = vunpack.c.l.b16 %v5290
    %v5363 = vunpack.c.h.b16 %v5290
    %v5364 = vunpack.c.l.b16 %v5291
    %v5365 = vunpack.c.h.b16 %v5291
    %v5366 = vunpack.c.l.b16 %v5292
    %v5367 = vunpack.c.h.b16 %v5292
    %v5368 = vunpack.c.l.b16 %v5293
    %v5369 = vunpack.c.h.b16 %v5293
    %v5370 = vunpack.c.l.b16 %v5294
    %v5371 = vunpack.c.h.b16 %v5294
    %v5372 = vunpack.c.l.b16 %v5295
    %v5373 = vunpack.c.h.b16 %v5295
    %v5374 = vunpack.c.l.b16 %v5296
    %v5375 = vunpack.c.h.b16 %v5296
    %v5376 = vunpack.c.l.b16 %v5297
    %v5377 = vunpack.c.h.b16 %v5297
    %v5378 = vunpack.c.l.b16 %v5298
    %v5379 = vunpack.c.h.b16 %v5298
    %v5380 = vunpack.c.l.b16 %v5299
    %v5381 = vunpack.c.h.b16 %v5299
    %v5382 = vunpack.c.l.b16 %v5300
    %v5383 = vunpack.c.h.b16 %v5300
    %v5384 = vunpack.c.l.b16 %v5301
    %v5385 = vunpack.c.h.b16 %v5301
    %v5386 = vunpack.c.l.b16 %v5302
    %v5387 = vunpack.c.h.b16 %v5302
    %v5388 = vunpack.c.l.b16 %v5303
    %v5389 = vunpack.c.h.b16 %v5303
    %v5390 = vunpack.c.l.b16 %v5304
    %v5391 = vunpack.c.h.b16 %v5304
    %v5392 = vunpack.c.l.b16 %v5305
    %v5393 = vunpack.c.h.b16 %v5305
    %v5394 = vunpack.c.l.b16 %v5306
    %v5395 = vunpack.c.h.b16 %v5306
    %v5396 = vunpack.c.l.b16 %v5307
    %v5397 = vunpack.c.h.b16 %v5307
    %v5398 = vunpack.c.l.b16 %v5308
    %v5399 = vunpack.c.h.b16 %v5308
    %v5400 = vunpack.c.l.b16 %v5309
    %v5401 = vunpack.c.h.b16 %v5309
    %v5402 = vunpack.c.l.b16 %v5310
    %v5403 = vunpack.c.h.b16 %v5310
    %v5404 = vunpack.c.l.b16 %v5311
    %v5405 = vunpack.c.h.b16 %v5311
    %v5406 = vunpack.c.l.b16 %v5312
    %v5407 = vunpack.c.h.b16 %v5312
    %v5408 = vunpack.c.l.b16 %v5313
    %v5409 = vunpack.c.h.b16 %v5313
    %v5410 = vpack.c.b16 %v5350, %v5346
    %v5411 = vpack.c.b16 %v5351, %v5347
    %v5412 = vpack.c.b16 %v5352, %v5348
    %v5413 = vpack.c.b16 %v5353, %v5349
    %v5414 = vpack.c.b16 %v5358, %v5354
    %v5415 = vpack.c.b16 %v5359, %v5355
    %v5416 = vpack.c.b16 %v5360, %v5356
    %v5417 = vpack.c.b16 %v5361, %v5357
    %v5418 = vpack.c.b16 %v5366, %v5362
    %v5419 = vpack.c.b16 %v5367, %v5363
    %v5420 = vpack.c.b16 %v5368, %v5364
    %v5421 = vpack.c.b16 %v5369, %v5365
    %v5422 = vpack.c.b16 %v5374, %v5370
    %v5423 = vpack.c.b16 %v5375, %v5371
    %v5424 = vpack.c.b16 %v5376, %v5372
    %v5425 = vpack.c.b16 %v5377, %v5373
    %v5426 = vpack.c.b16 %v5382, %v5378
    %v5427 = vpack.c.b16 %v5383, %v5379
    %v5428 = vpack.c.b16 %v5384, %v5380
    %v5429 = vpack.c.b16 %v5385, %v5381
    %v5430 = vpack.c.b16 %v5390, %v5386
    %v5431 = vpack.c.b16 %v5391, %v5387
    %v5432 = vpack.c.b16 %v5392, %v5388
    %v5433 = vpack.c.b16 %v5393, %v5389
    %v5434 = vpack.c.b16 %v5398, %v5394
    %v5435 = vpack.c.b16 %v5399, %v5395
    %v5436 = vpack.c.b16 %v5400, %v5396
    %v5437 = vpack.c.b16 %v5401, %v5397
    %v5438 = vpack.c.b16 %v5406, %v5402
    %v5439 = vpack.c.b16 %v5407, %v5403
    %v5440 = vpack.c.b16 %v5408, %v5404
    %v5441 = vpack.c.b16 %v5409, %v5405
    %5474 = vmatprep.subr.bf16.mxu0 %v5411
    %5475 = vmatpush1.bf16.msra.mxu0 %v5410
    %5476 = vmatprep.subr.bf16.mxu0 %v5415
    %5477 = vmatpush1.bf16.msra.mxu0 %v5414
    %5478 = vmatprep.subr.bf16.mxu0 %v5419
    %5479 = vmatpush1.bf16.msra.mxu0 %v5418
    %5480 = vmatprep.subr.bf16.mxu0 %v5423
    %5481 = vmatpush1.bf16.msra.mxu0 %v5422
    %5482 = vmatprep.subr.bf16.mxu0 %v5427
    %5483 = vmatpush1.bf16.msra.mxu0 %v5426
    %5484 = vmatprep.subr.bf16.mxu0 %v5431
    %5485 = vmatpush1.bf16.msra.mxu0 %v5430
    %5486 = vmatprep.subr.bf16.mxu0 %v5435
    %5487 = vmatpush1.bf16.msra.mxu0 %v5434
    %5488 = vmatprep.subr.bf16.mxu0 %v5439
    %5489 = vmatpush1.bf16.msra.mxu0 %v5438
    %5490 = vmatprep.subr.bf16.mxu0 0
    %5491 = vmatpush1.bf16.msra.mxu0 0
    %5492 = vmatprep.subr.bf16.mxu0 0
    %5493 = vmatpush1.bf16.msra.mxu0 0
    %5494 = vmatprep.subr.bf16.mxu0 0
    %5495 = vmatpush1.bf16.msra.mxu0 0
    %5496 = vmatprep.subr.bf16.mxu0 0
    %5497 = vmatpush1.bf16.msra.mxu0 0
    %5498 = vmatprep.subr.bf16.mxu0 0
    %5499 = vmatpush1.bf16.msra.mxu0 0
    %5500 = vmatprep.subr.bf16.mxu0 0
    %5501 = vmatpush1.bf16.msra.mxu0 0
    %5502 = vmatprep.subr.bf16.mxu0 0
    %5503 = vmatpush1.bf16.msra.mxu0 0
    %5504 = vmatprep.subr.bf16.mxu0 0
    %5505 = vmatpush1.bf16.msra.mxu0 0
    %5506 = vmatprep.mubr.bf16.mxu0 0
    %5507 = vmatmul.mubr.bf16.gmra.mrb[0].mxu0 %v5281
    %v5508 = vpop.f32.mrb[0].mxu0
    %v5509 = vadd.f32 0.0, %v5508
    %v5510 = vpop.f32.mrb[0].mxu0
    %v5511 = vadd.f32 0.0, %v5510
    %v5512 = vpop.f32.mrb[0].mxu0
    %v5513 = vpop.f32.mrb[0].mxu0
    %5514 = vdwg.mxu0
    %5515 = vmatprep.subr.bf16.mxu0 %v5413
    %5516 = vmatpush1.bf16.msra.mxu0 %v5412
    %5517 = vmatprep.subr.bf16.mxu0 %v5417
    %5518 = vmatpush1.bf16.msra.mxu0 %v5416
    %5519 = vmatprep.subr.bf16.mxu0 %v5421
    %5520 = vmatpush1.bf16.msra.mxu0 %v5420
    %5521 = vmatprep.subr.bf16.mxu0 %v5425
    %5522 = vmatpush1.bf16.msra.mxu0 %v5424
    %5523 = vmatprep.subr.bf16.mxu0 %v5429
    %5524 = vmatpush1.bf16.msra.mxu0 %v5428
    %5525 = vmatprep.subr.bf16.mxu0 %v5433
    %5526 = vmatpush1.bf16.msra.mxu0 %v5432
    %5527 = vmatprep.subr.bf16.mxu0 %v5437
    %5528 = vmatpush1.bf16.msra.mxu0 %v5436
    %5529 = vmatprep.subr.bf16.mxu0 %v5441
    %5530 = vmatpush1.bf16.msra.mxu0 %v5440
    %5531 = vmatprep.subr.bf16.mxu0 0
    %5532 = vmatpush1.bf16.msra.mxu0 0
    %5533 = vmatprep.subr.bf16.mxu0 0
    %5534 = vmatpush1.bf16.msra.mxu0 0
    %5535 = vmatprep.subr.bf16.mxu0 0
    %5536 = vmatpush1.bf16.msra.mxu0 0
    %5537 = vmatprep.subr.bf16.mxu0 0
    %5538 = vmatpush1.bf16.msra.mxu0 0
    %5539 = vmatprep.subr.bf16.mxu0 0
    %5540 = vmatpush1.bf16.msra.mxu0 0
    %5541 = vmatprep.subr.bf16.mxu0 0
    %5542 = vmatpush1.bf16.msra.mxu0 0
    %5543 = vmatprep.subr.bf16.mxu0 0
    %5544 = vmatpush1.bf16.msra.mxu0 0
    %5545 = vmatprep.subr.bf16.mxu0 0
    %5546 = vmatpush1.bf16.msra.mxu0 0
    %5547 = vmatprep.mubr.bf16.mxu0 0
    %5548 = vmatmul.mubr.bf16.gmra.mrb[0].mxu0 %v5281
    %v5549 = vpop.f32.mrb[0].mxu0
    %v5550 = vadd.f32 0.0, %v5549
    %v5551 = vpop.f32.mrb[0].mxu0
    %v5552 = vadd.f32 0.0, %v5551
    %v5553 = vpop.f32.mrb[0].mxu0
    %v5554 = vpop.f32.mrb[0].mxu0
    %5555 = vdwg.mxu0
    %v5556 = vadd.f32 %v5277, %v5509
    %v5557 = vadd.f32 %v5278, %v5511
    %v5558 = vadd.f32 %v5279, %v5550
    %v5559 = vadd.f32 %v5280, %v5552
    %v5560 = vxor.u32 %v5556, 2147483648
    %v5561 = vxor.u32 %v5557, 2147483648
    %v5562 = vxor.u32 %v5558, 2147483648
    %v5563 = vmul.f32 %v5560, 1.442695
    %v5564 = vpow.pop %v5563
    %v5565 = vmul.f32 %v5561, 1.442695
    %v5566 = vpow.pop %v5565
    %v5567 = vmul.f32 %v5562, 1.442695
    %v5568 = vpow.pop %v5567
    %v5569 = vadd.f32 %v5564, 1.0
    %v5570 = vadd.f32 %v5566, 1.0
    %v5571 = vadd.f32 %v5568, 1.0
    %v5572 = vrcp.pop %v5569
    %v5573 = vmul.f32 1.0, %v5572
    %v5574 = vrcp.pop %v5570
    %v5575 = vmul.f32 1.0, %v5574
    %v5576 = vrcp.pop %v5571
    %v5577 = vmul.f32 1.0, %v5576
    %v5578 = vtanh.pop %v5559
    %v5579 = vmul.f32 %v5575, %v5273
    %v5580 = vmul.f32 %v5573, %v5578
    %v5581 = vadd.f32 %v5579, %v5580
    %v5582 = vtanh.pop %v5581
    %v5583 = vmul.f32 %v5577, %v5582
    %5584 = vst [vmem:[%s2705] sm:$0xff] %v5583
    %v5585 = vld [vmem:[%s2707] sm:$0xff]
    %v5586 = vld [vmem:[%s2707 + $0x8] sm:$0xff]
    %v5587 = vld [vmem:[%s2707 + $0x10] sm:$0xff]
    %v5588 = vld [vmem:[%s2707 + $0x18] sm:$0xff]
    %v5589 = vpack.c.bf16 %v5583, %v5583
    %v5590 = vld [vmem:[%s3433] sm:$0xff]
    %v5591 = vld [vmem:[%s3433 + $0x8] sm:$0xff]
    %v5592 = vld [vmem:[%s3433 + $0x10] sm:$0xff]
    %v5593 = vld [vmem:[%s3433 + $0x18] sm:$0xff]
    %v5594 = vld [vmem:[%s3433 + $0x20] sm:$0xff]
    %v5595 = vld [vmem:[%s3433 + $0x28] sm:$0xff]
    %v5596 = vld [vmem:[%s3433 + $0x30] sm:$0xff]
    %v5597 = vld [vmem:[%s3433 + $0x38] sm:$0xff]
    %v5598 = vld [vmem:[%s3433 + $0x40] sm:$0xff]
    %v5599 = vld [vmem:[%s3433 + $0x48] sm:$0xff]
    %v5600 = vld [vmem:[%s3433 + $0x50] sm:$0xff]
    %v5601 = vld [vmem:[%s3433 + $0x58] sm:$0xff]
    %v5602 = vld [vmem:[%s3433 + $0x60] sm:$0xff]
    %v5603 = vld [vmem:[%s3433 + $0x68] sm:$0xff]
    %v5604 = vld [vmem:[%s3433 + $0x70] sm:$0xff]
    %v5605 = vld [vmem:[%s3433 + $0x78] sm:$0xff]
    %v5606 = vld [vmem:[%s3433 + $0x80] sm:$0xff]
    %v5607 = vld [vmem:[%s3433 + $0x88] sm:$0xff]
    %v5608 = vld [vmem:[%s3433 + $0x90] sm:$0xff]
    %v5609 = vld [vmem:[%s3433 + $0x98] sm:$0xff]
    %v5610 = vld [vmem:[%s3433 + $0xa0] sm:$0xff]
    %v5611 = vld [vmem:[%s3433 + $0xa8] sm:$0xff]
    %v5612 = vld [vmem:[%s3433 + $0xb0] sm:$0xff]
    %v5613 = vld [vmem:[%s3433 + $0xb8] sm:$0xff]
    %v5614 = vld [vmem:[%s3433 + $0xc0] sm:$0xff]
    %v5615 = vld [vmem:[%s3433 + $0xc8] sm:$0xff]
    %v5616 = vld [vmem:[%s3433 + $0xd0] sm:$0xff]
    %v5617 = vld [vmem:[%s3433 + $0xd8] sm:$0xff]
    %v5618 = vld [vmem:[%s3433 + $0xe0] sm:$0xff]
    %v5619 = vld [vmem:[%s3433 + $0xe8] sm:$0xff]
    %v5620 = vld [vmem:[%s3433 + $0xf0] sm:$0xff]
    %v5621 = vld [vmem:[%s3433 + $0xf8] sm:$0xff]
    %v5654 = vunpack.c.l.b16 %v5590
    %v5655 = vunpack.c.h.b16 %v5590
    %v5656 = vunpack.c.l.b16 %v5591
    %v5657 = vunpack.c.h.b16 %v5591
    %v5658 = vunpack.c.l.b16 %v5592
    %v5659 = vunpack.c.h.b16 %v5592
    %v5660 = vunpack.c.l.b16 %v5593
    %v5661 = vunpack.c.h.b16 %v5593
    %v5662 = vunpack.c.l.b16 %v5594
    %v5663 = vunpack.c.h.b16 %v5594
    %v5664 = vunpack.c.l.b16 %v5595
    %v5665 = vunpack.c.h.b16 %v5595
    %v5666 = vunpack.c.l.b16 %v5596
    %v5667 = vunpack.c.h.b16 %v5596
    %v5668 = vunpack.c.l.b16 %v5597
    %v5669 = vunpack.c.h.b16 %v5597
    %v5670 = vunpack.c.l.b16 %v5598
    %v5671 = vunpack.c.h.b16 %v5598
    %v5672 = vunpack.c.l.b16 %v5599
    %v5673 = vunpack.c.h.b16 %v5599
    %v5674 = vunpack.c.l.b16 %v5600
    %v5675 = vunpack.c.h.b16 %v5600
    %v5676 = vunpack.c.l.b16 %v5601
    %v5677 = vunpack.c.h.b16 %v5601
    %v5678 = vunpack.c.l.b16 %v5602
    %v5679 = vunpack.c.h.b16 %v5602
    %v5680 = vunpack.c.l.b16 %v5603
    %v5681 = vunpack.c.h.b16 %v5603
    %v5682 = vunpack.c.l.b16 %v5604
    %v5683 = vunpack.c.h.b16 %v5604
    %v5684 = vunpack.c.l.b16 %v5605
    %v5685 = vunpack.c.h.b16 %v5605
    %v5686 = vunpack.c.l.b16 %v5606
    %v5687 = vunpack.c.h.b16 %v5606
    %v5688 = vunpack.c.l.b16 %v5607
    %v5689 = vunpack.c.h.b16 %v5607
    %v5690 = vunpack.c.l.b16 %v5608
    %v5691 = vunpack.c.h.b16 %v5608
    %v5692 = vunpack.c.l.b16 %v5609
    %v5693 = vunpack.c.h.b16 %v5609
    %v5694 = vunpack.c.l.b16 %v5610
    %v5695 = vunpack.c.h.b16 %v5610
    %v5696 = vunpack.c.l.b16 %v5611
    %v5697 = vunpack.c.h.b16 %v5611
    %v5698 = vunpack.c.l.b16 %v5612
    %v5699 = vunpack.c.h.b16 %v5612
    %v5700 = vunpack.c.l.b16 %v5613
    %v5701 = vunpack.c.h.b16 %v5613
    %v5702 = vunpack.c.l.b16 %v5614
    %v5703 = vunpack.c.h.b16 %v5614
    %v5704 = vunpack.c.l.b16 %v5615
    %v5705 = vunpack.c.h.b16 %v5615
    %v5706 = vunpack.c.l.b16 %v5616
    %v5707 = vunpack.c.h.b16 %v5616
    %v5708 = vunpack.c.l.b16 %v5617
    %v5709 = vunpack.c.h.b16 %v5617
    %v5710 = vunpack.c.l.b16 %v5618
    %v5711 = vunpack.c.h.b16 %v5618
    %v5712 = vunpack.c.l.b16 %v5619
    %v5713 = vunpack.c.h.b16 %v5619
    %v5714 = vunpack.c.l.b16 %v5620
    %v5715 = vunpack.c.h.b16 %v5620
    %v5716 = vunpack.c.l.b16 %v5621
    %v5717 = vunpack.c.h.b16 %v5621
    %v5718 = vpack.c.b16 %v5658, %v5654
    %v5719 = vpack.c.b16 %v5659, %v5655
    %v5720 = vpack.c.b16 %v5660, %v5656
    %v5721 = vpack.c.b16 %v5661, %v5657
    %v5722 = vpack.c.b16 %v5666, %v5662
    %v5723 = vpack.c.b16 %v5667, %v5663
    %v5724 = vpack.c.b16 %v5668, %v5664
    %v5725 = vpack.c.b16 %v5669, %v5665
    %v5726 = vpack.c.b16 %v5674, %v5670
    %v5727 = vpack.c.b16 %v5675, %v5671
    %v5728 = vpack.c.b16 %v5676, %v5672
    %v5729 = vpack.c.b16 %v5677, %v5673
    %v5730 = vpack.c.b16 %v5682, %v5678
    %v5731 = vpack.c.b16 %v5683, %v5679
    %v5732 = vpack.c.b16 %v5684, %v5680
    %v5733 = vpack.c.b16 %v5685, %v5681
    %v5734 = vpack.c.b16 %v5690, %v5686
    %v5735 = vpack.c.b16 %v5691, %v5687
    %v5736 = vpack.c.b16 %v5692, %v5688
    %v5737 = vpack.c.b16 %v5693, %v5689
    %v5738 = vpack.c.b16 %v5698, %v5694
    %v5739 = vpack.c.b16 %v5699, %v5695
    %v5740 = vpack.c.b16 %v5700, %v5696
    %v5741 = vpack.c.b16 %v5701, %v5697
    %v5742 = vpack.c.b16 %v5706, %v5702
    %v5743 = vpack.c.b16 %v5707, %v5703
    %v5744 = vpack.c.b16 %v5708, %v5704
    %v5745 = vpack.c.b16 %v5709, %v5705
    %v5746 = vpack.c.b16 %v5714, %v5710
    %v5747 = vpack.c.b16 %v5715, %v5711
    %v5748 = vpack.c.b16 %v5716, %v5712
    %v5749 = vpack.c.b16 %v5717, %v5713
    %5782 = vmatprep.subr.bf16.mxu0 %v5719
    %5783 = vmatpush1.bf16.msra.mxu0 %v5718
    %5784 = vmatprep.subr.bf16.mxu0 %v5723
    %5785 = vmatpush1.bf16.msra.mxu0 %v5722
    %5786 = vmatprep.subr.bf16.mxu0 %v5727
    %5787 = vmatpush1.bf16.msra.mxu0 %v5726
    %5788 = vmatprep.subr.bf16.mxu0 %v5731
    %5789 = vmatpush1.bf16.msra.mxu0 %v5730
    %5790 = vmatprep.subr.bf16.mxu0 %v5735
    %5791 = vmatpush1.bf16.msra.mxu0 %v5734
    %5792 = vmatprep.subr.bf16.mxu0 %v5739
    %5793 = vmatpush1.bf16.msra.mxu0 %v5738
    %5794 = vmatprep.subr.bf16.mxu0 %v5743
    %5795 = vmatpush1.bf16.msra.mxu0 %v5742
    %5796 = vmatprep.subr.bf16.mxu0 %v5747
    %5797 = vmatpush1.bf16.msra.mxu0 %v5746
    %5798 = vmatprep.subr.bf16.mxu0 0
    %5799 = vmatpush1.bf16.msra.mxu0 0
    %5800 = vmatprep.subr.bf16.mxu0 0
    %5801 = vmatpush1.bf16.msra.mxu0 0
    %5802 = vmatprep.subr.bf16.mxu0 0
    %5803 = vmatpush1.bf16.msra.mxu0 0
    %5804 = vmatprep.subr.bf16.mxu0 0
    %5805 = vmatpush1.bf16.msra.mxu0 0
    %5806 = vmatprep.subr.bf16.mxu0 0
    %5807 = vmatpush1.bf16.msra.mxu0 0
    %5808 = vmatprep.subr.bf16.mxu0 0
    %5809 = vmatpush1.bf16.msra.mxu0 0
    %5810 = vmatprep.subr.bf16.mxu0 0
    %5811 = vmatpush1.bf16.msra.mxu0 0
    %5812 = vmatprep.subr.bf16.mxu0 0
    %5813 = vmatpush1.bf16.msra.mxu0 0
    %5814 = vmatprep.mubr.bf16.mxu0 0
    %5815 = vmatmul.mubr.bf16.gmra.mrb[0].mxu0 %v5589
    %v5816 = vpop.f32.mrb[0].mxu0
    %v5817 = vadd.f32 0.0, %v5816
    %v5818 = vpop.f32.mrb[0].mxu0
    %v5819 = vadd.f32 0.0, %v5818
    %v5820 = vpop.f32.mrb[0].mxu0
    %v5821 = vpop.f32.mrb[0].mxu0
    %5822 = vdwg.mxu0
    %5823 = vmatprep.subr.bf16.mxu0 %v5721
    %5824 = vmatpush1.bf16.msra.mxu0 %v5720
    %5825 = vmatprep.subr.bf16.mxu0 %v5725
    %5826 = vmatpush1.bf16.msra.mxu0 %v5724
    %5827 = vmatprep.subr.bf16.mxu0 %v5729
    %5828 = vmatpush1.bf16.msra.mxu0 %v5728
    %5829 = vmatprep.subr.bf16.mxu0 %v5733
    %5830 = vmatpush1.bf16.msra.mxu0 %v5732
    %5831 = vmatprep.subr.bf16.mxu0 %v5737
    %5832 = vmatpush1.bf16.msra.mxu0 %v5736
    %5833 = vmatprep.subr.bf16.mxu0 %v5741
    %5834 = vmatpush1.bf16.msra.mxu0 %v5740
    %5835 = vmatprep.subr.bf16.mxu0 %v5745
    %5836 = vmatpush1.bf16.msra.mxu0 %v5744
    %5837 = vmatprep.subr.bf16.mxu0 %v5749
    %5838 = vmatpush1.bf16.msra.mxu0 %v5748
    %5839 = vmatprep.subr.bf16.mxu0 0
    %5840 = vmatpush1.bf16.msra.mxu0 0
    %5841 = vmatprep.subr.bf16.mxu0 0
    %5842 = vmatpush1.bf16.msra.mxu0 0
    %5843 = vmatprep.subr.bf16.mxu0 0
    %5844 = vmatpush1.bf16.msra.mxu0 0
    %5845 = vmatprep.subr.bf16.mxu0 0
    %5846 = vmatpush1.bf16.msra.mxu0 0
    %5847 = vmatprep.subr.bf16.mxu0 0
    %5848 = vmatpush1.bf16.msra.mxu0 0
    %5849 = vmatprep.subr.bf16.mxu0 0
    %5850 = vmatpush1.bf16.msra.mxu0 0
    %5851 = vmatprep.subr.bf16.mxu0 0
    %5852 = vmatpush1.bf16.msra.mxu0 0
    %5853 = vmatprep.subr.bf16.mxu0 0
    %5854 = vmatpush1.bf16.msra.mxu0 0
    %5855 = vmatprep.mubr.bf16.mxu0 0
    %5856 = vmatmul.mubr.bf16.gmra.mrb[0].mxu0 %v5589
    %v5857 = vpop.f32.mrb[0].mxu0
    %v5858 = vadd.f32 0.0, %v5857
    %v5859 = vpop.f32.mrb[0].mxu0
    %v5860 = vadd.f32 0.0, %v5859
    %v5861 = vpop.f32.mrb[0].mxu0
    %v5862 = vpop.f32.mrb[0].mxu0
    %5863 = vdwg.mxu0
    %v5864 = vadd.f32 %v5585, %v5817
    %v5865 = vadd.f32 %v5586, %v5819
    %v5866 = vadd.f32 %v5587, %v5858
    %v5867 = vadd.f32 %v5588, %v5860
    %v5868 = vxor.u32 %v5864, 2147483648
    %v5869 = vxor.u32 %v5865, 2147483648
    %v5870 = vxor.u32 %v5866, 2147483648
    %v5871 = vmul.f32 %v5868, 1.442695
    %v5872 = vpow.pop %v5871
    %v5873 = vmul.f32 %v5869, 1.442695
    %v5874 = vpow.pop %v5873
    %v5875 = vmul.f32 %v5870, 1.442695
    %v5876 = vpow.pop %v5875
    %v5877 = vadd.f32 %v5872, 1.0
    %v5878 = vadd.f32 %v5874, 1.0
    %v5879 = vadd.f32 %v5876, 1.0
    %v5880 = vrcp.pop %v5877
    %v5881 = vmul.f32 1.0, %v5880
    %v5882 = vrcp.pop %v5878
    %v5883 = vmul.f32 1.0, %v5882
    %v5884 = vrcp.pop %v5879
    %v5885 = vmul.f32 1.0, %v5884
    %v5886 = vtanh.pop %v5867
    %v5887 = vmul.f32 %v5883, %v5581
    %v5888 = vmul.f32 %v5881, %v5886
    %v5889 = vadd.f32 %v5887, %v5888
    %v5890 = vtanh.pop %v5889
    %v5891 = vmul.f32 %v5885, %v5890
    %5892 = vst [vmem:[%s3015] sm:$0xff] %v5891
    %s5893 = scalar_lea.vmem [#allocation18], 8
    %5894 = vst [vmem:[%s5893] sm:$0xff] %v5891
    %s5895 = scalar_lea.vmem [#allocation20], 8
    %5896 = vst [vmem:[%s5895] sm:$0xff] %v5889
    %v5897 = vld [vmem:[#allocation3] sm:$0xff]
    %5898 = vst [vmem:[#allocation4] sm:$0xff] %v5897
    %v5899 = vld [vmem:[%s1155] sm:$0xff]
    %5900 = vst [vmem:[#allocation4 + $0x8] sm:$0xff] %v5899
    %v5901 = vld [vmem:[%s1465] sm:$0xff]
    %5902 = vst [vmem:[#allocation4 + $0x10] sm:$0xff] %v5901
    %v5903 = vld [vmem:[%s1775] sm:$0xff]
    %5904 = vst [vmem:[#allocation4 + $0x18] sm:$0xff] %v5903
    %v5905 = vld [vmem:[%s2085] sm:$0xff]
    %5906 = vst [vmem:[#allocation4 + $0x20] sm:$0xff] %v5905
    %v5907 = vld [vmem:[%s2395] sm:$0xff]
    %5908 = vst [vmem:[#allocation4 + $0x28] sm:$0xff] %v5907
    %v5909 = vld [vmem:[%s2705] sm:$0xff]
    %5910 = vst [vmem:[#allocation4 + $0x30] sm:$0xff] %v5909
    %v5911 = vld [vmem:[%s3015] sm:$0xff]
    %5912 = vst [vmem:[#allocation4 + $0x38] sm:$0xff] %v5911
    %v5913 = vld [vmem:[#allocation4] sm:$0xff]
    %v5914 = vld [vmem:[#allocation4 + $0x8] sm:$0xff]
    %v5915 = vld [vmem:[#allocation4 + $0x10] sm:$0xff]
    %v5916 = vld [vmem:[#allocation4 + $0x18] sm:$0xff]
    %v5917 = vld [vmem:[#allocation4 + $0x20] sm:$0xff]
    %v5918 = vld [vmem:[#allocation4 + $0x28] sm:$0xff]
    %v5919 = vld [vmem:[#allocation4 + $0x30] sm:$0xff]
    %v5920 = vld [vmem:[#allocation4 + $0x38] sm:$0xff]
    %v5921 = vpack.c.bf16 %v5913, %v5913
    %v5922 = vpack.c.bf16 %v5914, %v5914
    %v5923 = vpack.c.bf16 %v5915, %v5915
    %v5924 = vpack.c.bf16 %v5916, %v5916
    %v5925 = vpack.c.bf16 %v5917, %v5917
    %v5926 = vpack.c.bf16 %v5918, %v5918
    %v5927 = vpack.c.bf16 %v5919, %v5919
    %v5928 = vpack.c.bf16 %v5920, %v5920
    %v5929 = vld [vmem:[#allocation16] sm:$0xf]
    %v5930 = vld [vmem:[#allocation16 + $0x4] sm:$0xf]
    %v5931 = vld [vmem:[#allocation16 + $0x8] sm:$0xf]
    %v5932 = vld [vmem:[#allocation16 + $0xc] sm:$0xf]
    %v5933 = vld [vmem:[#allocation16 + $0x10] sm:$0xf]
    %v5934 = vld [vmem:[#allocation16 + $0x14] sm:$0xf]
    %v5935 = vld [vmem:[#allocation16 + $0x18] sm:$0xf]
    %v5936 = vld [vmem:[#allocation16 + $0x1c] sm:$0xf]
    %v5937 = vld [vmem:[#allocation16 + $0x20] sm:$0xf]
    %v5938 = vld [vmem:[#allocation16 + $0x24] sm:$0xf]
    %v5939 = vld [vmem:[#allocation16 + $0x28] sm:$0xf]
    %v5940 = vld [vmem:[#allocation16 + $0x2c] sm:$0xf]
    %v5941 = vld [vmem:[#allocation16 + $0x30] sm:$0xf]
    %v5942 = vld [vmem:[#allocation16 + $0x34] sm:$0xf]
    %v5943 = vld [vmem:[#allocation16 + $0x38] sm:$0xf]
    %v5944 = vld [vmem:[#allocation16 + $0x3c] sm:$0xf]
    %v5945 = vld [vmem:[#allocation16 + $0x40] sm:$0xf]
    %v5946 = vld [vmem:[#allocation16 + $0x44] sm:$0xf]
    %v5947 = vld [vmem:[#allocation16 + $0x48] sm:$0xf]
    %v5948 = vld [vmem:[#allocation16 + $0x4c] sm:$0xf]
    %v5949 = vld [vmem:[#allocation16 + $0x50] sm:$0xf]
    %v5950 = vld [vmem:[#allocation16 + $0x54] sm:$0xf]
    %v5951 = vld [vmem:[#allocation16 + $0x58] sm:$0xf]
    %v5952 = vld [vmem:[#allocation16 + $0x5c] sm:$0xf]
    %v5953 = vld [vmem:[#allocation16 + $0x60] sm:$0xf]
    %v5954 = vld [vmem:[#allocation16 + $0x64] sm:$0xf]
    %v5955 = vld [vmem:[#allocation16 + $0x68] sm:$0xf]
    %v5956 = vld [vmem:[#allocation16 + $0x6c] sm:$0xf]
    %v5957 = vld [vmem:[#allocation16 + $0x70] sm:$0xf]
    %v5958 = vld [vmem:[#allocation16 + $0x74] sm:$0xf]
    %v5959 = vld [vmem:[#allocation16 + $0x78] sm:$0xf]
    %v5960 = vld [vmem:[#allocation16 + $0x7c] sm:$0xf]
    %v5961 = vld [vmem:[#allocation16 + $0x80] sm:$0xf]
    %v5962 = vld [vmem:[#allocation16 + $0x84] sm:$0xf]
    %v5963 = vld [vmem:[#allocation16 + $0x88] sm:$0xf]
    %v5964 = vld [vmem:[#allocation16 + $0x8c] sm:$0xf]
    %v5965 = vld [vmem:[#allocation16 + $0x90] sm:$0xf]
    %v5966 = vld [vmem:[#allocation16 + $0x94] sm:$0xf]
    %v5967 = vld [vmem:[#allocation16 + $0x98] sm:$0xf]
    %v5968 = vld [vmem:[#allocation16 + $0x9c] sm:$0xf]
    %v5969 = vld [vmem:[#allocation16 + $0xa0] sm:$0xf]
    %v5970 = vld [vmem:[#allocation16 + $0xa4] sm:$0xf]
    %v5971 = vld [vmem:[#allocation16 + $0xa8] sm:$0xf]
    %v5972 = vld [vmem:[#allocation16 + $0xac] sm:$0xf]
    %v5973 = vld [vmem:[#allocation16 + $0xb0] sm:$0xf]
    %v5974 = vld [vmem:[#allocation16 + $0xb4] sm:$0xf]
    %v5975 = vld [vmem:[#allocation16 + $0xb8] sm:$0xf]
    %v5976 = vld [vmem:[#allocation16 + $0xbc] sm:$0xf]
    %v5977 = vld [vmem:[#allocation16 + $0xc0] sm:$0xf]
    %v5978 = vld [vmem:[#allocation16 + $0xc4] sm:$0xf]
    %v5979 = vld [vmem:[#allocation16 + $0xc8] sm:$0xf]
    %v5980 = vld [vmem:[#allocation16 + $0xcc] sm:$0xf]
    %v5981 = vld [vmem:[#allocation16 + $0xd0] sm:$0xf]
    %v5982 = vld [vmem:[#allocation16 + $0xd4] sm:$0xf]
    %v5983 = vld [vmem:[#allocation16 + $0xd8] sm:$0xf]
    %v5984 = vld [vmem:[#allocation16 + $0xdc] sm:$0xf]
    %v5985 = vld [vmem:[#allocation16 + $0xe0] sm:$0xf]
    %v5986 = vld [vmem:[#allocation16 + $0xe4] sm:$0xf]
    %v5987 = vld [vmem:[#allocation16 + $0xe8] sm:$0xf]
    %v5988 = vld [vmem:[#allocation16 + $0xec] sm:$0xf]
    %v5989 = vld [vmem:[#allocation16 + $0xf0] sm:$0xf]
    %v5990 = vld [vmem:[#allocation16 + $0xf4] sm:$0xf]
    %v5991 = vld [vmem:[#allocation16 + $0xf8] sm:$0xf]
    %v5992 = vld [vmem:[#allocation16 + $0xfc] sm:$0xf]
    %v5993 = vld [vmem:[#allocation16 + $0x100] sm:$0xf]
    %v5994 = vld [vmem:[#allocation16 + $0x104] sm:$0xf]
    %v5995 = vld [vmem:[#allocation16 + $0x108] sm:$0xf]
    %v5996 = vld [vmem:[#allocation16 + $0x10c] sm:$0xf]
    %v5997 = vld [vmem:[#allocation16 + $0x110] sm:$0xf]
    %v5998 = vld [vmem:[#allocation16 + $0x114] sm:$0xf]
    %v5999 = vld [vmem:[#allocation16 + $0x118] sm:$0xf]
    %v6000 = vld [vmem:[#allocation16 + $0x11c] sm:$0xf]
    %v6001 = vld [vmem:[#allocation16 + $0x120] sm:$0xf]
    %v6002 = vld [vmem:[#allocation16 + $0x124] sm:$0xf]
    %v6003 = vld [vmem:[#allocation16 + $0x128] sm:$0xf]
    %v6004 = vld [vmem:[#allocation16 + $0x12c] sm:$0xf]
    %v6005 = vld [vmem:[#allocation16 + $0x130] sm:$0xf]
    %v6006 = vld [vmem:[#allocation16 + $0x134] sm:$0xf]
    %v6007 = vld [vmem:[#allocation16 + $0x138] sm:$0xf]
    %v6008 = vld [vmem:[#allocation16 + $0x13c] sm:$0xf]
    %v6009 = vld [vmem:[#allocation16 + $0x140] sm:$0xf]
    %v6010 = vld [vmem:[#allocation16 + $0x144] sm:$0xf]
    %v6011 = vld [vmem:[#allocation16 + $0x148] sm:$0xf]
    %v6012 = vld [vmem:[#allocation16 + $0x14c] sm:$0xf]
    %v6013 = vld [vmem:[#allocation16 + $0x150] sm:$0xf]
    %v6014 = vld [vmem:[#allocation16 + $0x154] sm:$0xf]
    %v6015 = vld [vmem:[#allocation16 + $0x158] sm:$0xf]
    %v6016 = vld [vmem:[#allocation16 + $0x15c] sm:$0xf]
    %v6017 = vld [vmem:[#allocation16 + $0x160] sm:$0xf]
    %v6018 = vld [vmem:[#allocation16 + $0x164] sm:$0xf]
    %v6019 = vld [vmem:[#allocation16 + $0x168] sm:$0xf]
    %v6020 = vld [vmem:[#allocation16 + $0x16c] sm:$0xf]
    %v6021 = vld [vmem:[#allocation16 + $0x170] sm:$0xf]
    %v6022 = vld [vmem:[#allocation16 + $0x174] sm:$0xf]
    %v6023 = vld [vmem:[#allocation16 + $0x178] sm:$0xf]
    %v6024 = vld [vmem:[#allocation16 + $0x17c] sm:$0xf]
    %v6025 = vld [vmem:[#allocation16 + $0x180] sm:$0xf]
    %v6026 = vld [vmem:[#allocation16 + $0x184] sm:$0xf]
    %v6027 = vld [vmem:[#allocation16 + $0x188] sm:$0xf]
    %v6028 = vld [vmem:[#allocation16 + $0x18c] sm:$0xf]
    %v6029 = vld [vmem:[#allocation16 + $0x190] sm:$0xf]
    %v6030 = vld [vmem:[#allocation16 + $0x194] sm:$0xf]
    %v6031 = vld [vmem:[#allocation16 + $0x198] sm:$0xf]
    %v6032 = vld [vmem:[#allocation16 + $0x19c] sm:$0xf]
    %v6033 = vld [vmem:[#allocation16 + $0x1a0] sm:$0xf]
    %v6034 = vld [vmem:[#allocation16 + $0x1a4] sm:$0xf]
    %v6035 = vld [vmem:[#allocation16 + $0x1a8] sm:$0xf]
    %v6036 = vld [vmem:[#allocation16 + $0x1ac] sm:$0xf]
    %v6037 = vld [vmem:[#allocation16 + $0x1b0] sm:$0xf]
    %v6038 = vld [vmem:[#allocation16 + $0x1b4] sm:$0xf]
    %v6039 = vld [vmem:[#allocation16 + $0x1b8] sm:$0xf]
    %v6040 = vld [vmem:[#allocation16 + $0x1bc] sm:$0xf]
    %v6041 = vld [vmem:[#allocation16 + $0x1c0] sm:$0xf]
    %v6042 = vld [vmem:[#allocation16 + $0x1c4] sm:$0xf]
    %v6043 = vld [vmem:[#allocation16 + $0x1c8] sm:$0xf]
    %v6044 = vld [vmem:[#allocation16 + $0x1cc] sm:$0xf]
    %v6045 = vld [vmem:[#allocation16 + $0x1d0] sm:$0xf]
    %v6046 = vld [vmem:[#allocation16 + $0x1d4] sm:$0xf]
    %v6047 = vld [vmem:[#allocation16 + $0x1d8] sm:$0xf]
    %v6048 = vld [vmem:[#allocation16 + $0x1dc] sm:$0xf]
    %v6049 = vld [vmem:[#allocation16 + $0x1e0] sm:$0xf]
    %v6050 = vld [vmem:[#allocation16 + $0x1e4] sm:$0xf]
    %v6051 = vld [vmem:[#allocation16 + $0x1e8] sm:$0xf]
    %v6052 = vld [vmem:[#allocation16 + $0x1ec] sm:$0xf]
    %v6053 = vld [vmem:[#allocation16 + $0x1f0] sm:$0xf]
    %v6054 = vld [vmem:[#allocation16 + $0x1f4] sm:$0xf]
    %v6055 = vld [vmem:[#allocation16 + $0x1f8] sm:$0xf]
    %v6056 = vld [vmem:[#allocation16 + $0x1fc] sm:$0xf]
    %v6057 = vld [vmem:[%s8] sm:$0x1]
    %v6059 = vlaneseq
    %v6060 = vshrl.u32 %v6059, 7
    %v6061 = vsub.s32 0, %v6060
    %v6062 = vrot.slane %v6057, %v6061
    %v6192 = vunpack.c.l.b16 %v5929
    %v6193 = vunpack.c.l.b16 %v5930
    %v6194 = vunpack.c.l.b16 %v5931
    %v6195 = vunpack.c.l.b16 %v5932
    %v6196 = vunpack.c.l.b16 %v5933
    %v6197 = vunpack.c.l.b16 %v5934
    %v6198 = vunpack.c.l.b16 %v5935
    %v6199 = vunpack.c.l.b16 %v5936
    %v6200 = vunpack.c.l.b16 %v5937
    %v6201 = vunpack.c.l.b16 %v5938
    %v6202 = vunpack.c.l.b16 %v5939
    %v6203 = vunpack.c.l.b16 %v5940
    %v6204 = vunpack.c.l.b16 %v5941
    %v6205 = vunpack.c.l.b16 %v5942
    %v6206 = vunpack.c.l.b16 %v5943
    %v6207 = vunpack.c.l.b16 %v5944
    %v6208 = vunpack.c.l.b16 %v5945
    %v6209 = vunpack.c.l.b16 %v5946
    %v6210 = vunpack.c.l.b16 %v5947
    %v6211 = vunpack.c.l.b16 %v5948
    %v6212 = vunpack.c.l.b16 %v5949
    %v6213 = vunpack.c.l.b16 %v5950
    %v6214 = vunpack.c.l.b16 %v5951
    %v6215 = vunpack.c.l.b16 %v5952
    %v6216 = vunpack.c.l.b16 %v5953
    %v6217 = vunpack.c.l.b16 %v5954
    %v6218 = vunpack.c.l.b16 %v5955
    %v6219 = vunpack.c.l.b16 %v5956
    %v6220 = vunpack.c.l.b16 %v5957
    %v6221 = vunpack.c.l.b16 %v5958
    %v6222 = vunpack.c.l.b16 %v5959
    %v6223 = vunpack.c.l.b16 %v5960
    %v6224 = vunpack.c.l.b16 %v5961
    %v6225 = vunpack.c.l.b16 %v5962
    %v6226 = vunpack.c.l.b16 %v5963
    %v6227 = vunpack.c.l.b16 %v5964
    %v6228 = vunpack.c.l.b16 %v5965
    %v6229 = vunpack.c.l.b16 %v5966
    %v6230 = vunpack.c.l.b16 %v5967
    %v6231 = vunpack.c.l.b16 %v5968
    %v6232 = vunpack.c.l.b16 %v5969
    %v6233 = vunpack.c.l.b16 %v5970
    %v6234 = vunpack.c.l.b16 %v5971
    %v6235 = vunpack.c.l.b16 %v5972
    %v6236 = vunpack.c.l.b16 %v5973
    %v6237 = vunpack.c.l.b16 %v5974
    %v6238 = vunpack.c.l.b16 %v5975
    %v6239 = vunpack.c.l.b16 %v5976
    %v6240 = vunpack.c.l.b16 %v5977
    %v6241 = vunpack.c.l.b16 %v5978
    %v6242 = vunpack.c.l.b16 %v5979
    %v6243 = vunpack.c.l.b16 %v5980
    %v6244 = vunpack.c.l.b16 %v5981
    %v6245 = vunpack.c.l.b16 %v5982
    %v6246 = vunpack.c.l.b16 %v5983
    %v6247 = vunpack.c.l.b16 %v5984
    %v6248 = vunpack.c.l.b16 %v5985
    %v6249 = vunpack.c.l.b16 %v5986
    %v6250 = vunpack.c.l.b16 %v5987
    %v6251 = vunpack.c.l.b16 %v5988
    %v6252 = vunpack.c.l.b16 %v5989
    %v6253 = vunpack.c.l.b16 %v5990
    %v6254 = vunpack.c.l.b16 %v5991
    %v6255 = vunpack.c.l.b16 %v5992
    %v6256 = vunpack.c.l.b16 %v5993
    %v6257 = vunpack.c.l.b16 %v5994
    %v6258 = vunpack.c.l.b16 %v5995
    %v6259 = vunpack.c.l.b16 %v5996
    %v6260 = vunpack.c.l.b16 %v5997
    %v6261 = vunpack.c.l.b16 %v5998
    %v6262 = vunpack.c.l.b16 %v5999
    %v6263 = vunpack.c.l.b16 %v6000
    %v6264 = vunpack.c.l.b16 %v6001
    %v6265 = vunpack.c.l.b16 %v6002
    %v6266 = vunpack.c.l.b16 %v6003
    %v6267 = vunpack.c.l.b16 %v6004
    %v6268 = vunpack.c.l.b16 %v6005
    %v6269 = vunpack.c.l.b16 %v6006
    %v6270 = vunpack.c.l.b16 %v6007
    %v6271 = vunpack.c.l.b16 %v6008
    %v6272 = vunpack.c.l.b16 %v6009
    %v6273 = vunpack.c.l.b16 %v6010
    %v6274 = vunpack.c.l.b16 %v6011
    %v6275 = vunpack.c.l.b16 %v6012
    %v6276 = vunpack.c.l.b16 %v6013
    %v6277 = vunpack.c.l.b16 %v6014
    %v6278 = vunpack.c.l.b16 %v6015
    %v6279 = vunpack.c.l.b16 %v6016
    %v6280 = vunpack.c.l.b16 %v6017
    %v6281 = vunpack.c.l.b16 %v6018
    %v6282 = vunpack.c.l.b16 %v6019
    %v6283 = vunpack.c.l.b16 %v6020
    %v6284 = vunpack.c.l.b16 %v6021
    %v6285 = vunpack.c.l.b16 %v6022
    %v6286 = vunpack.c.l.b16 %v6023
    %v6287 = vunpack.c.l.b16 %v6024
    %v6288 = vunpack.c.l.b16 %v6025
    %v6289 = vunpack.c.l.b16 %v6026
    %v6290 = vunpack.c.l.b16 %v6027
    %v6291 = vunpack.c.l.b16 %v6028
    %v6292 = vunpack.c.l.b16 %v6029
    %v6293 = vunpack.c.l.b16 %v6030
    %v6294 = vunpack.c.l.b16 %v6031
    %v6295 = vunpack.c.l.b16 %v6032
    %v6296 = vunpack.c.l.b16 %v6033
    %v6297 = vunpack.c.l.b16 %v6034
    %v6298 = vunpack.c.l.b16 %v6035
    %v6299 = vunpack.c.l.b16 %v6036
    %v6300 = vunpack.c.l.b16 %v6037
    %v6301 = vunpack.c.l.b16 %v6038
    %v6302 = vunpack.c.l.b16 %v6039
    %v6303 = vunpack.c.l.b16 %v6040
    %v6304 = vunpack.c.l.b16 %v6041
    %v6305 = vunpack.c.l.b16 %v6042
    %v6306 = vunpack.c.l.b16 %v6043
    %v6307 = vunpack.c.l.b16 %v6044
    %v6308 = vunpack.c.l.b16 %v6045
    %v6309 = vunpack.c.l.b16 %v6046
    %v6310 = vunpack.c.l.b16 %v6047
    %v6311 = vunpack.c.l.b16 %v6048
    %v6312 = vunpack.c.l.b16 %v6049
    %v6313 = vunpack.c.l.b16 %v6050
    %v6314 = vunpack.c.l.b16 %v6051
    %v6315 = vunpack.c.l.b16 %v6052
    %v6316 = vunpack.c.l.b16 %v6053
    %v6317 = vunpack.c.l.b16 %v6054
    %v6318 = vunpack.c.l.b16 %v6055
    %v6319 = vunpack.c.l.b16 %v6056
    %v6320 = vpack.c.b16 %v6193, %v6192
    %v6321 = vpack.c.b16 %v6195, %v6194
    %v6322 = vpack.c.b16 %v6197, %v6196
    %v6323 = vpack.c.b16 %v6199, %v6198
    %v6324 = vpack.c.b16 %v6201, %v6200
    %v6325 = vpack.c.b16 %v6203, %v6202
    %v6326 = vpack.c.b16 %v6205, %v6204
    %v6327 = vpack.c.b16 %v6207, %v6206
    %v6328 = vpack.c.b16 %v6209, %v6208
    %v6329 = vpack.c.b16 %v6211, %v6210
    %v6330 = vpack.c.b16 %v6213, %v6212
    %v6331 = vpack.c.b16 %v6215, %v6214
    %v6332 = vpack.c.b16 %v6217, %v6216
    %v6333 = vpack.c.b16 %v6219, %v6218
    %v6334 = vpack.c.b16 %v6221, %v6220
    %v6335 = vpack.c.b16 %v6223, %v6222
    %v6336 = vpack.c.b16 %v6225, %v6224
    %v6337 = vpack.c.b16 %v6227, %v6226
    %v6338 = vpack.c.b16 %v6229, %v6228
    %v6339 = vpack.c.b16 %v6231, %v6230
    %v6340 = vpack.c.b16 %v6233, %v6232
    %v6341 = vpack.c.b16 %v6235, %v6234
    %v6342 = vpack.c.b16 %v6237, %v6236
    %v6343 = vpack.c.b16 %v6239, %v6238
    %v6344 = vpack.c.b16 %v6241, %v6240
    %v6345 = vpack.c.b16 %v6243, %v6242
    %v6346 = vpack.c.b16 %v6245, %v6244
    %v6347 = vpack.c.b16 %v6247, %v6246
    %v6348 = vpack.c.b16 %v6249, %v6248
    %v6349 = vpack.c.b16 %v6251, %v6250
    %v6350 = vpack.c.b16 %v6253, %v6252
    %v6351 = vpack.c.b16 %v6255, %v6254
    %v6352 = vpack.c.b16 %v6257, %v6256
    %v6353 = vpack.c.b16 %v6259, %v6258
    %v6354 = vpack.c.b16 %v6261, %v6260
    %v6355 = vpack.c.b16 %v6263, %v6262
    %v6356 = vpack.c.b16 %v6265, %v6264
    %v6357 = vpack.c.b16 %v6267, %v6266
    %v6358 = vpack.c.b16 %v6269, %v6268
    %v6359 = vpack.c.b16 %v6271, %v6270
    %v6360 = vpack.c.b16 %v6273, %v6272
    %v6361 = vpack.c.b16 %v6275, %v6274
    %v6362 = vpack.c.b16 %v6277, %v6276
    %v6363 = vpack.c.b16 %v6279, %v6278
    %v6364 = vpack.c.b16 %v6281, %v6280
    %v6365 = vpack.c.b16 %v6283, %v6282
    %v6366 = vpack.c.b16 %v6285, %v6284
    %v6367 = vpack.c.b16 %v6287, %v6286
    %v6368 = vpack.c.b16 %v6289, %v6288
    %v6369 = vpack.c.b16 %v6291, %v6290
    %v6370 = vpack.c.b16 %v6293, %v6292
    %v6371 = vpack.c.b16 %v6295, %v6294
    %v6372 = vpack.c.b16 %v6297, %v6296
    %v6373 = vpack.c.b16 %v6299, %v6298
    %v6374 = vpack.c.b16 %v6301, %v6300
    %v6375 = vpack.c.b16 %v6303, %v6302
    %v6376 = vpack.c.b16 %v6305, %v6304
    %v6377 = vpack.c.b16 %v6307, %v6306
    %v6378 = vpack.c.b16 %v6309, %v6308
    %v6379 = vpack.c.b16 %v6311, %v6310
    %v6380 = vpack.c.b16 %v6313, %v6312
    %v6381 = vpack.c.b16 %v6315, %v6314
    %v6382 = vpack.c.b16 %v6317, %v6316
    %v6383 = vpack.c.b16 %v6319, %v6318
    %6448 = vmatprep.subr.bf16.mxu0 0
    %6449 = vmatpush1.bf16.msra.mxu0 %v6320
    %6450 = vmatprep.subr.bf16.mxu0 0
    %6451 = vmatpush1.bf16.msra.mxu0 %v6321
    %6452 = vmatprep.subr.bf16.mxu0 0
    %6453 = vmatpush1.bf16.msra.mxu0 %v6322
    %6454 = vmatprep.subr.bf16.mxu0 0
    %6455 = vmatpush1.bf16.msra.mxu0 %v6323
    %6456 = vmatprep.subr.bf16.mxu0 0
    %6457 = vmatpush1.bf16.msra.mxu0 %v6324
    %6458 = vmatprep.subr.bf16.mxu0 0
    %6459 = vmatpush1.bf16.msra.mxu0 %v6325
    %6460 = vmatprep.subr.bf16.mxu0 0
    %6461 = vmatpush1.bf16.msra.mxu0 %v6326
    %6462 = vmatprep.subr.bf16.mxu0 0
    %6463 = vmatpush1.bf16.msra.mxu0 %v6327
    %6464 = vmatprep.subr.bf16.mxu0 0
    %6465 = vmatpush1.bf16.msra.mxu0 %v6328
    %6466 = vmatprep.subr.bf16.mxu0 0
    %6467 = vmatpush1.bf16.msra.mxu0 %v6329
    %6468 = vmatprep.subr.bf16.mxu0 0
    %6469 = vmatpush1.bf16.msra.mxu0 %v6330
    %6470 = vmatprep.subr.bf16.mxu0 0
    %6471 = vmatpush1.bf16.msra.mxu0 %v6331
    %6472 = vmatprep.subr.bf16.mxu0 0
    %6473 = vmatpush1.bf16.msra.mxu0 %v6332
    %6474 = vmatprep.subr.bf16.mxu0 0
    %6475 = vmatpush1.bf16.msra.mxu0 %v6333
    %6476 = vmatprep.subr.bf16.mxu0 0
    %6477 = vmatpush1.bf16.msra.mxu0 %v6334
    %6478 = vmatprep.subr.bf16.mxu0 0
    %6479 = vmatpush1.bf16.msra.mxu0 %v6335
    %6480 = vmatprep.mubr.bf16.mxu0 %v5922
    %6481 = vmatmul.mubr.bf16.gmra.mrb[0].mxu0 %v5921
    %v6482 = vpop.f32.mrb[0].mxu0
    %v6483 = vadd.f32 %v6062, %v6482
    %v6484 = vpop.f32.mrb[0].mxu0
    %v6485 = vpop.f32.mrb[0].mxu0
    %v6486 = vpop.f32.mrb[0].mxu0
    %6487 = vdwg.mxu0
    %6488 = vmatprep.subr.bf16.mxu0 0
    %6489 = vmatpush1.bf16.msra.mxu0 %v6336
    %6490 = vmatprep.subr.bf16.mxu0 0
    %6491 = vmatpush1.bf16.msra.mxu0 %v6337
    %6492 = vmatprep.subr.bf16.mxu0 0
    %6493 = vmatpush1.bf16.msra.mxu0 %v6338
    %6494 = vmatprep.subr.bf16.mxu0 0
    %6495 = vmatpush1.bf16.msra.mxu0 %v6339
    %6496 = vmatprep.subr.bf16.mxu0 0
    %6497 = vmatpush1.bf16.msra.mxu0 %v6340
    %6498 = vmatprep.subr.bf16.mxu0 0
    %6499 = vmatpush1.bf16.msra.mxu0 %v6341
    %6500 = vmatprep.subr.bf16.mxu0 0
    %6501 = vmatpush1.bf16.msra.mxu0 %v6342
    %6502 = vmatprep.subr.bf16.mxu0 0
    %6503 = vmatpush1.bf16.msra.mxu0 %v6343
    %6504 = vmatprep.subr.bf16.mxu0 0
    %6505 = vmatpush1.bf16.msra.mxu0 %v6344
    %6506 = vmatprep.subr.bf16.mxu0 0
    %6507 = vmatpush1.bf16.msra.mxu0 %v6345
    %6508 = vmatprep.subr.bf16.mxu0 0
    %6509 = vmatpush1.bf16.msra.mxu0 %v6346
    %6510 = vmatprep.subr.bf16.mxu0 0
    %6511 = vmatpush1.bf16.msra.mxu0 %v6347
    %6512 = vmatprep.subr.bf16.mxu0 0
    %6513 = vmatpush1.bf16.msra.mxu0 %v6348
    %6514 = vmatprep.subr.bf16.mxu0 0
    %6515 = vmatpush1.bf16.msra.mxu0 %v6349
    %6516 = vmatprep.subr.bf16.mxu0 0
    %6517 = vmatpush1.bf16.msra.mxu0 %v6350
    %6518 = vmatprep.subr.bf16.mxu0 0
    %6519 = vmatpush1.bf16.msra.mxu0 %v6351
    %6520 = vmatprep.mubr.bf16.mxu0 %v5924
    %6521 = vmatmul.mubr.bf16.gmra.mrb[0].mxu0 %v5923
    %v6522 = vpop.f32.mrb[0].mxu0
    %v6523 = vadd.f32 %v6483, %v6522
    %v6524 = vpop.f32.mrb[0].mxu0
    %v6525 = vpop.f32.mrb[0].mxu0
    %v6526 = vpop.f32.mrb[0].mxu0
    %6527 = vdwg.mxu0
    %6528 = vmatprep.subr.bf16.mxu0 0
    %6529 = vmatpush1.bf16.msra.mxu0 %v6352
    %6530 = vmatprep.subr.bf16.mxu0 0
    %6531 = vmatpush1.bf16.msra.mxu0 %v6353
    %6532 = vmatprep.subr.bf16.mxu0 0
    %6533 = vmatpush1.bf16.msra.mxu0 %v6354
    %6534 = vmatprep.subr.bf16.mxu0 0
    %6535 = vmatpush1.bf16.msra.mxu0 %v6355
    %6536 = vmatprep.subr.bf16.mxu0 0
    %6537 = vmatpush1.bf16.msra.mxu0 %v6356
    %6538 = vmatprep.subr.bf16.mxu0 0
    %6539 = vmatpush1.bf16.msra.mxu0 %v6357
    %6540 = vmatprep.subr.bf16.mxu0 0
    %6541 = vmatpush1.bf16.msra.mxu0 %v6358
    %6542 = vmatprep.subr.bf16.mxu0 0
    %6543 = vmatpush1.bf16.msra.mxu0 %v6359
    %6544 = vmatprep.subr.bf16.mxu0 0
    %6545 = vmatpush1.bf16.msra.mxu0 %v6360
    %6546 = vmatprep.subr.bf16.mxu0 0
    %6547 = vmatpush1.bf16.msra.mxu0 %v6361
    %6548 = vmatprep.subr.bf16.mxu0 0
    %6549 = vmatpush1.bf16.msra.mxu0 %v6362
    %6550 = vmatprep.subr.bf16.mxu0 0
    %6551 = vmatpush1.bf16.msra.mxu0 %v6363
    %6552 = vmatprep.subr.bf16.mxu0 0
    %6553 = vmatpush1.bf16.msra.mxu0 %v6364
    %6554 = vmatprep.subr.bf16.mxu0 0
    %6555 = vmatpush1.bf16.msra.mxu0 %v6365
    %6556 = vmatprep.subr.bf16.mxu0 0
    %6557 = vmatpush1.bf16.msra.mxu0 %v6366
    %6558 = vmatprep.subr.bf16.mxu0 0
    %6559 = vmatpush1.bf16.msra.mxu0 %v6367
    %6560 = vmatprep.mubr.bf16.mxu0 %v5926
    %6561 = vmatmul.mubr.bf16.gmra.mrb[0].mxu0 %v5925
    %v6562 = vpop.f32.mrb[0].mxu0
    %v6563 = vadd.f32 %v6523, %v6562
    %v6564 = vpop.f32.mrb[0].mxu0
    %v6565 = vpop.f32.mrb[0].mxu0
    %v6566 = vpop.f32.mrb[0].mxu0
    %6567 = vdwg.mxu0
    %6568 = vmatprep.subr.bf16.mxu0 0
    %6569 = vmatpush1.bf16.msra.mxu0 %v6368
    %6570 = vmatprep.subr.bf16.mxu0 0
    %6571 = vmatpush1.bf16.msra.mxu0 %v6369
    %6572 = vmatprep.subr.bf16.mxu0 0
    %6573 = vmatpush1.bf16.msra.mxu0 %v6370
    %6574 = vmatprep.subr.bf16.mxu0 0
    %6575 = vmatpush1.bf16.msra.mxu0 %v6371
    %6576 = vmatprep.subr.bf16.mxu0 0
    %6577 = vmatpush1.bf16.msra.mxu0 %v6372
    %6578 = vmatprep.subr.bf16.mxu0 0
    %6579 = vmatpush1.bf16.msra.mxu0 %v6373
    %6580 = vmatprep.subr.bf16.mxu0 0
    %6581 = vmatpush1.bf16.msra.mxu0 %v6374
    %6582 = vmatprep.subr.bf16.mxu0 0
    %6583 = vmatpush1.bf16.msra.mxu0 %v6375
    %6584 = vmatprep.subr.bf16.mxu0 0
    %6585 = vmatpush1.bf16.msra.mxu0 %v6376
    %6586 = vmatprep.subr.bf16.mxu0 0
    %6587 = vmatpush1.bf16.msra.mxu0 %v6377
    %6588 = vmatprep.subr.bf16.mxu0 0
    %6589 = vmatpush1.bf16.msra.mxu0 %v6378
    %6590 = vmatprep.subr.bf16.mxu0 0
    %6591 = vmatpush1.bf16.msra.mxu0 %v6379
    %6592 = vmatprep.subr.bf16.mxu0 0
    %6593 = vmatpush1.bf16.msra.mxu0 %v6380
    %6594 = vmatprep.subr.bf16.mxu0 0
    %6595 = vmatpush1.bf16.msra.mxu0 %v6381
    %6596 = vmatprep.subr.bf16.mxu0 0
    %6597 = vmatpush1.bf16.msra.mxu0 %v6382
    %6598 = vmatprep.subr.bf16.mxu0 0
    %6599 = vmatpush1.bf16.msra.mxu0 %v6383
    %6600 = vmatprep.mubr.bf16.mxu0 %v5928
    %6601 = vmatmul.mubr.bf16.gmra.mrb[0].mxu0 %v5927
    %v6602 = vpop.f32.mrb[0].mxu0
    %v6603 = vadd.f32 %v6563, %v6602
    %v6604 = vpop.f32.mrb[0].mxu0
    %v6605 = vpop.f32.mrb[0].mxu0
    %v6606 = vpop.f32.mrb[0].mxu0
    %6607 = vdwg.mxu0
    %6608 = vst [vmem:[#allocation17] sm:$0xff] %v6603
    // Predicated region
    $region66: #{tpu_custom_call.1} parent=1 // pred_check
      _
    $region67: #{tpu_custom_call.1} parent=1 // pred_check_branch
      %6610 = sbr.rel (0) target = $region69
    $region68: #{tpu_custom_call.1} parent=1 // pred_region
      %s6612 = ssub.s32 128, 128
      %6613 = vsyncadd [#allocation7], %s6612
      %s6615 = sshll.u32 [#allocation17], 4
      %s6616 = int_to_ptr.vmem [resolvable:$true] %s6615
      %6618 = dma.vmem_to_hbm [thread:$0]  %s6616, 128, %s9, [#allocation7]
    $region69: #{tpu_custom_call.1} parent=1 // pred_fallthru
      _
    // Predicated region
    $region70: #{tpu_custom_call.1} parent=1 // pred_check
      _
    $region71: #{tpu_custom_call.1} parent=1 // pred_check_branch
      %6620 = sbr.rel (0) target = $region73
    $region72: #{tpu_custom_call.1} parent=1 // pred_region
      %s6622 = ssub.s32 256, 256
      %6623 = vsyncadd [#allocation19], %s6622
      %s6624 = sshll.u32 [#allocation18], 4
      %s6625 = int_to_ptr.vmem [resolvable:$true] %s6624
      %6630 = dma.vmem_to_hbm [thread:$0]  %s6625, 256, %s10, [#allocation19], 128, 128, 8
    $region73: #{tpu_custom_call.1} parent=1 // pred_fallthru
      _
    // Predicated region
    $region74: #{tpu_custom_call.1} parent=1 // pred_check
      _
    $region75: #{tpu_custom_call.1} parent=1 // pred_check_branch
      %6632 = sbr.rel (0) target = $region77
    $region76: #{tpu_custom_call.1} parent=1 // pred_region
      %s6634 = ssub.s32 256, 256
      %6635 = vsyncadd [#allocation19], %s6634
      %s6636 = sshll.u32 [#allocation20], 4
      %s6637 = int_to_ptr.vmem [resolvable:$true] %s6636
      %6642 = dma.vmem_to_hbm [thread:$0]  %s6637, 256, %s11, [#allocation19], 128, 128, 8
    $region77: #{tpu_custom_call.1} parent=1 // pred_fallthru
      _
    // Predicated region
    $region78: #{tpu_custom_call.1} parent=1 // pred_check
      _
    $region79: #{tpu_custom_call.1} parent=1 // pred_check_branch
      %6644 = sbr.rel (0) target = $region81
    $region80: #{tpu_custom_call.1} parent=1 // pred_region
      %6645 = dma.done [#allocation7], 128
    $region81: #{tpu_custom_call.1} parent=1 // pred_fallthru
      _
    // Predicated region
    $region82: #{tpu_custom_call.1} parent=1 // pred_check
      _
    $region83: #{tpu_custom_call.1} parent=1 // pred_check_branch
      %6647 = sbr.rel (0) target = $region85
    $region84: #{tpu_custom_call.1} parent=1 // pred_region
      %6648 = dma.done [#allocation19], 256
    $region85: #{tpu_custom_call.1} parent=1 // pred_fallthru
      _
    // Predicated region
    $region86: #{tpu_custom_call.1} parent=1 // pred_check
      _
    $region87: #{tpu_custom_call.1} parent=1 // pred_check_branch
      %6650 = sbr.rel (0) target = $region89
    $region88: #{tpu_custom_call.1} parent=1 // pred_region
      %6651 = dma.done [#allocation19], 256
    $region89: #{tpu_custom_call.1} parent=1 // pred_fallthru
      _
    %6652 = vsyncpa [#allocation6], 1
    %6653 = vsyncpa [#allocation9], 1
    %6654 = vsyncpa [#allocation12], 1
    %6655 = vsyncpa [#allocation15], 1
    %6656 = vsyncpa [#allocation7], 1
    %6657 = vsyncpa [#allocation19], 1

</llo_original>
